<compile_context>
chip_gen: v7x
topology: tpu7x:2x2x1
jax: 0.10.0
libtpu: 0.0.40
codegen_flags: <defaults>
</compile_context>

<pallas_src>
import functools

import jax
import jax.numpy as jnp
import numpy as np
from jax.experimental import pallas as pl
from jax.experimental.pallas import tpu as pltpu


def _round_up(x, m):
    return (x + m - 1) // m * m


def _default_vmem_limit_bytes():
    """Per-generation scoped-VMEM knob (review: 64+ MiB on v5e/v6e, <=48 on v7x)."""
    kind = ""
    try:
        kind = jax.devices()[0].device_kind.lower()
    except Exception:
        pass
    if "v5" in kind or "v6" in kind:
        return 64 * 1024 * 1024      # 128 MiB physical VMEM: large tiles are cheap
    if "7" in kind:
        return 48 * 1024 * 1024      # v7x: 64 MiB / TensorCore, leave headroom
    return 32 * 1024 * 1024          # unknown chip: conservative


def _accum_conv3x3(acc_ref, tap_fn, w_ref, b_ref, c_in_p, c_out_p, m_out, tap_group):
    """acc_ref[:m_out] = bias + sum_taps tap(dh,dw) @ W[dh,dw]   (f32 accumulation).

    Taps are processed in groups of `tap_group` (lane-concatenated) so the MXU
    K-depth is a multiple of C_p (1 -> K=C_p for v5e, 2/3 -> K=2C_p/3C_p for
    v6e/v7x 256-deep passes).  No 9x im2col buffer is ever materialized.
    """
    acc_ref[pl.ds(0, m_out), :] = jnp.broadcast_to(b_ref[...], (m_out, c_out_p))
    taps = [(dh, dw) for dh in range(3) for dw in range(3)]
    for t0 in range(0, 9, tap_group):
        grp = taps[t0:t0 + tap_group]
        xs = [tap_fn(dh, dw).reshape(m_out, c_in_p) for dh, dw in grp]
        xg = xs[0] if len(xs) == 1 else jnp.concatenate(xs, axis=-1)
        wg = w_ref[pl.ds(t0 * c_in_p, len(grp) * c_in_p), :]
        acc_ref[pl.ds(0, m_out), :] += jnp.dot(
            xg, wg, preferred_element_type=jnp.float32)


# ------------------------------ Pallas kernel ------------------------------ #

def _fused_resblock_kernel(x_body_ref, x_halo_ref, w1_ref, b1_ref, w2_ref,
                           b2_ref, *rest, slope, tile_h, w_y1, w_out,
                           img_h, img_w, use_adaptor, tap_group):
    """Fused ResidualBlock forward for one (batch, H-tile) grid step.

    x_body_ref: (tile_h, w_p, cin_p) bf16 -- padded-input rows [i*tile_h, +tile_h)
    x_halo_ref: (4,      w_p, cin_p) bf16 -- padded-input rows [(i+1)*tile_h, +4)
    w1_ref: (9*cin_p,  cout_p) bf16   b1_ref: (1, cout_p) f32
    w2_ref: (9*cout_p, cout_p) bf16   b2_ref: (1, cout_p) f32
    rest = ([wa_ref (cin_p, cout_p) bf16, ba_ref (1, cout_p) f32,]
            o_ref (tile_h, w_out, cout_p) bf16,
            xwin_ref (tile_h+4, w_p, cin_p) bf16 scratch,
            acc_ref ((tile_h+2)*w_y1, cout_p) f32 scratch)
    """
    if use_adaptor:
        wa_ref, ba_ref, o_ref, xwin_ref, acc_ref = rest
    else:
        o_ref, xwin_ref, acc_ref = rest

    i = pl.program_id(1)                 # H-tile index within the image
    h_y1 = tile_h + 2                    # conv1 evaluated on a 1-row/col halo
    cin_p = x_body_ref.shape[-1]
    cout_p = o_ref.shape[-1]
    m1 = h_y1 * w_y1
    m2 = tile_h * w_out

    # Assemble the overlapping (tile_h+4)-row window once in VMEM scratch so
    # every 3x3 tap slice below is a static-offset read of one buffer.
    xwin_ref[pl.ds(0, tile_h), :, :] = x_body_ref[...]
    xwin_ref[pl.ds(tile_h, 4), :, :] = x_halo_ref[...]

    # ---- conv1 + bias: per-tap-group MXU matmuls, f32 scratch accumulation ----
    def x_tap(dh, dw):
        return xwin_ref[pl.ds(dh, h_y1), pl.ds(dw, w_y1), :]

    _accum_conv3x3(acc_ref, x_tap, w1_ref, b1_ref, cin_p, cout_p, m1, tap_group)

    # LeakyReLU (f32), then exact-zero masking of positions outside the real
    # image (image border + H/W alignment padding) -- this is conv2's padding.
    y1 = acc_ref[pl.ds(0, m1), :]
    y1 = jnp.where(y1 >= 0.0, y1, slope * y1).reshape(h_y1, w_y1, cout_p)
    row = jax.lax.broadcasted_iota(jnp.int32, (h_y1, w_y1, 1), 0) + (i * tile_h - 1)
    col = jax.lax.broadcasted_iota(jnp.int32, (h_y1, w_y1, 1), 1) - 1
    valid = (row >= 0) & (row < img_h) & (col >= 0) & (col < img_w)
    y1 = jnp.where(valid, y1, 0.0).astype(jnp.bfloat16)

    # ---- conv2 + bias: same scheme; the f32 scratch accumulator is reused ----
    def y_tap(dh, dw):
        return y1[dh:dh + tile_h, dw:dw + w_out, :]

    _accum_conv3x3(acc_ref, y_tap, w2_ref, b2_ref, cout_p, cout_p, m2, tap_group)

    out = acc_ref[pl.ds(0, m2), :]
    out = jnp.where(out >= 0.0, out, slope * out)      # LeakyReLU in f32

    # ---- identity / 1x1 adaptor + residual add (f32) ----
    xc = xwin_ref[pl.ds(2, tile_h), pl.ds(2, w_out), :].reshape(m2, cin_p)
    if use_adaptor:
        ident = jnp.dot(xc, wa_ref[...], preferred_element_type=jnp.float32)
        ident = ident + ba_ref[...]
    else:                                # compressai contract: Cin == Cout here
        # TODO(synk): feed an un-cast f32 identity slab if tighter-than-bf16
        # accuracy on the skip path is ever required.
        ident = xc.astype(jnp.float32)
    out = out + ident

    o_ref[...] = out.reshape(tile_h, w_out, cout_p).astype(o_ref.dtype)


# ------------------------------- wrapper (JAX) ------------------------------ #

def residual_block_pallas(x_nchw, params, slope=0.01, tile_h=32, tap_group=3,
                          vmem_limit_bytes=None):
    w1, b1, w2, b2 = params["w1"], params["b1"], params["w2"], params["b2"]
    wa, ba = params.get("wa"), params.get("ba")
    use_adaptor = wa is not None

    B, Cin, H, W = x_nchw.shape
    Cout = w1.shape[0]
    if not use_adaptor and Cin != Cout:
        raise ValueError("adaptor (1x1 conv) is required when in_ch != out_ch")
    assert 1 <= tap_group <= 9

    LANE = 128
    cin_p, cout_p = _round_up(Cin, LANE), _round_up(Cout, LANE)

    # tile_h: bigger tiles cut the 4/tile_h halo re-read and amortize per-step
    # overhead; clamp to the (4-aligned) image height.  The 4-row halo block
    # index map below requires tile_h % 4 == 0.
    # TODO(synk): add a third "parallel" W-tile grid axis for very wide images
    # on v7x (64 MiB VMEM/TC) instead of shrinking tile_h.
    tile_h = max(4, min(int(tile_h), _round_up(H, 4)))
    tile_h = _round_up(tile_h, 4)
    assert tile_h >= 4 and tile_h % 4 == 0

    h_r = _round_up(H, tile_h)           # padded output height
    n_tiles = h_r // tile_h
    w_out = _round_up(W, 8)              # padded output width
    w_y1 = _round_up(w_out + 2, 8)       # intermediate width (conv1, 1-halo)
    w_p = w_y1 + 2                       # input tile width (2-halo)
    h_y1 = tile_h + 2

    # NCHW -> NHWC bf16, zero-pad: 2-halo (+ alignment) on H/W, lanes on C.
    # TODO(synk): in a fully-NHWC pipeline this transpose disappears and the
    # 2-px halo pad could be folded into the in-kernel validity mask, removing
    # this HBM round-trip of the input.
    x_nhwc = jnp.transpose(x_nchw, (0, 2, 3, 1)).astype(jnp.bfloat16)
    x_pad = jnp.pad(x_nhwc, ((0, 0), (2, h_r + 2 - H), (2, w_p - 2 - W),
                             (0, cin_p - Cin)))             # (B, h_r+4, w_p, cin_p)

    def conv3x3_w(w):                    # OIHW -> (9*Cin_pad, Cout_pad), tap-major
        ci = w.shape[1]
        ci_p = _round_up(ci, LANE)
        wt = jnp.transpose(w, (2, 3, 1, 0))                 # (3, 3, ci, co)
        wt = jnp.pad(wt, ((0, 0), (0, 0), (0, ci_p - ci), (0, cout_p - Cout)))
        return wt.reshape(9 * ci_p, cout_p).astype(jnp.bfloat16)

    def pad_bias(b):
        return jnp.pad(b, (0, cout_p - Cout)).reshape(1, cout_p).astype(jnp.float32)

    w1_p, w2_p = conv3x3_w(w1), conv3x3_w(w2)
    b1_p, b2_p = pad_bias(b1), pad_bias(b2)

    def full(r, c):
        # Grid-invariant operand (weights/bias): constant index_map, never
        # re-DMA'd across the grid.
        # TODO(synk): pipeline_mode=pl.Buffered(1) would also drop the unused
        # second pipeline buffer for these on VMEM-tight v7x.
        return pl.BlockSpec((r, c), lambda b, i: (0, 0))

    in_specs = [
        # body rows [i*tile_h, i*tile_h + tile_h) of the padded input
        pl.BlockSpec((None, tile_h, w_p, cin_p), lambda b, i: (b, i, 0, 0)),
        # bottom-halo rows [(i+1)*tile_h, (i+1)*tile_h + 4)
        pl.BlockSpec((None, 4, w_p, cin_p),
                     lambda b, i: (b, (i + 1) * (tile_h // 4), 0, 0)),
        full(9 * cin_p, cout_p), full(1, cout_p),
        full(9 * cout_p, cout_p), full(1, cout_p),
    ]
    args = [x_pad, x_pad, w1_p, b1_p, w2_p, b2_p]
    if use_adaptor:
        wa_p = jnp.pad(wa[:, :, 0, 0].T,
                       ((0, cin_p - Cin), (0, cout_p - Cout))).astype(jnp.bfloat16)
        in_specs += [full(cin_p, cout_p), full(1, cout_p)]
        args += [wa_p, pad_bias(ba)]

    kernel = functools.partial(
        _fused_resblock_kernel, slope=slope, tile_h=tile_h, w_y1=w_y1,
        w_out=w_out, img_h=H, img_w=W, use_adaptor=use_adaptor,
        tap_group=tap_group)

    if vmem_limit_bytes is None:
        vmem_limit_bytes = _default_vmem_limit_bytes()

    y = pl.pallas_call(
        kernel,
        grid=(B, n_tiles),
        in_specs=in_specs,
        out_specs=pl.BlockSpec((None, tile_h, w_out, cout_p),
                               lambda b, i: (b, i, 0, 0)),
        # bf16 output halves HBM writeback; residual add itself stays f32.
        out_shape=jax.ShapeDtypeStruct((B, h_r, w_out, cout_p), jnp.bfloat16),
        scratch_shapes=[
            pltpu.VMEM((tile_h + 4, w_p, cin_p), jnp.bfloat16),   # halo window
            pltpu.VMEM((h_y1 * w_y1, cout_p), jnp.float32),       # f32 conv acc
        ],
        compiler_params=pltpu.CompilerParams(
            # fully data-parallel grid -> dual-TensorCore sharding on v7x
            dimension_semantics=("parallel", "parallel"),
            vmem_limit_bytes=vmem_limit_bytes),
    )(*args)

    # TODO(synk): a fully NHWC downstream pipeline should consume `y` directly
    # (bf16 NHWC, uncropped); crop + transpose + f32 cast kept only to match
    # the NCHW f32 PyTorch module.
    y = y[:, :H, :W, :Cout]              # crop alignment / lane padding
    return jnp.transpose(y, (0, 3, 1, 2)).astype(jnp.float32)


# ---------------------------- pure-JAX reference ---------------------------- #

def residual_block_ref(x, params, slope=0.01):
    def conv(x, w, b, pad):
        y = jax.lax.conv_general_dilated(
            x, w, (1, 1), pad, dimension_numbers=("NCHW", "OIHW", "NCHW"))
        return y + b[None, :, None, None]

    identity = x
    if params.get("wa") is not None:
        identity = conv(x, params["wa"], params["ba"], "VALID")
    out = conv(x, params["w1"], params["b1"], ((1, 1), (1, 1)))
    out = jnp.where(out >= 0, out, slope * out)
    out = conv(out, params["w2"], params["b2"], ((1, 1), (1, 1)))
    out = jnp.where(out >= 0, out, slope * out)
    return out + identity


def _make_params(key, in_ch, out_ch):
    ks = jax.random.split(key, 6)
    p = {
        "w1": 0.1 * jax.random.normal(ks[0], (out_ch, in_ch, 3, 3), jnp.float32),
        "b1": 0.1 * jax.random.normal(ks[1], (out_ch,), jnp.float32),
        "w2": 0.1 * jax.random.normal(ks[2], (out_ch, out_ch, 3, 3), jnp.float32),
        "b2": 0.1 * jax.random.normal(ks[3], (out_ch,), jnp.float32),
        "wa": None, "ba": None,
    }
    if in_ch != out_ch:   # compressai: adaptor only when the channel count changes
        p["wa"] = 0.1 * jax.random.normal(ks[4], (out_ch, in_ch, 1, 1), jnp.float32)
        p["ba"] = 0.1 * jax.random.normal(ks[5], (out_ch,), jnp.float32)
    return p


# ----------------------------------- main ----------------------------------- #

if __name__ == "__main__":
    slope = 0.01
    key = jax.random.PRNGKey(0)
    k1, k2, k3, k4 = jax.random.split(key, 4)

    # case 1: in_ch != out_ch -> 1x1 adaptor on the identity path
    x1 = jax.random.normal(k1, (2, 4, 16, 16), jnp.float32)
    p1 = _make_params(k2, 4, 8)
    # case 2: in_ch == out_ch (no adaptor), H/W not multiples of the tile sizes
    x2 = jax.random.normal(k3, (2, 8, 12, 10), jnp.float32)
    p2 = _make_params(k4, 8, 8)

    for x, p in ((x1, p1), (x2, p2)):
        y = jax.block_until_ready(residual_block_pallas(x, p, slope))
        y_ref = jax.block_until_ready(residual_block_ref(x, p, slope))
        assert y.shape == y_ref.shape
        # bf16 activations/weights/output with f32 accumulation vs. a pure-f32
        # reference -> loosened tolerance.
        np.testing.assert_allclose(np.asarray(y), np.asarray(y_ref),
                                   rtol=5e-2, atol=5e-2)

    print("KERNEL_OK")
</pallas_src>

<mosaic_0001>
module attributes {stable_mosaic.version = 11 : i64} {
  func.func @_fused_resblock_kernel(%arg0: i32, %arg1: i32, %arg2: memref<1x16x26x128xbf16, #tpu.memory_space<vmem>>, %arg3: memref<1x4x26x128xbf16, #tpu.memory_space<vmem>>, %arg4: memref<1152x128xbf16, #tpu.memory_space<vmem>>, %arg5: memref<1x128xf32, #tpu.memory_space<vmem>>, %arg6: memref<1152x128xbf16, #tpu.memory_space<vmem>>, %arg7: memref<1x128xf32, #tpu.memory_space<vmem>>, %arg8: memref<128x128xbf16, #tpu.memory_space<vmem>>, %arg9: memref<1x128xf32, #tpu.memory_space<vmem>>, %arg10: memref<1x16x16x128xbf16, #tpu.memory_space<vmem>>, %arg11: memref<20x26x128xbf16, #tpu.memory_space<vmem>>, %arg12: memref<432x128xf32, #tpu.memory_space<vmem>>) attributes {dimension_semantics = [#tpu.dimension_semantics<parallel>, #tpu.dimension_semantics<parallel>], iteration_bounds = array<i64: 2, 1>, scalar_prefetch = 0 : i64, scratch_operands = 2 : i64, tpu.core_type = #tpu.core_type<tc>, window_params = [{transform_indices = @transform_0, window_bounds = array<i64: 1, 16, 26, 128>}, {transform_indices = @transform_1, window_bounds = array<i64: 1, 4, 26, 128>}, {pipeline_mode = #tpu.pipeline_mode<synchronous>, transform_indices = @transform_2, window_bounds = array<i64: 1152, 128>}, {pipeline_mode = #tpu.pipeline_mode<synchronous>, transform_indices = @transform_3, window_bounds = array<i64: 1, 128>}, {pipeline_mode = #tpu.pipeline_mode<synchronous>, transform_indices = @transform_4, window_bounds = array<i64: 1152, 128>}, {pipeline_mode = #tpu.pipeline_mode<synchronous>, transform_indices = @transform_5, window_bounds = array<i64: 1, 128>}, {pipeline_mode = #tpu.pipeline_mode<synchronous>, transform_indices = @transform_6, window_bounds = array<i64: 128, 128>}, {pipeline_mode = #tpu.pipeline_mode<synchronous>, transform_indices = @transform_7, window_bounds = array<i64: 1, 128>}, {transform_indices = @transform_8, window_bounds = array<i64: 1, 16, 16, 128>}]} {
    %c0 = arith.constant 0 : index
    %c0_0 = arith.constant 0 : index
    %c0_1 = arith.constant 0 : index
    %c0_2 = arith.constant 0 : index
    %0 = vector.load %arg2[%c0, %c0_0, %c0_1, %c0_2] : memref<1x16x26x128xbf16, #tpu.memory_space<vmem>>, vector<1x16x26x128xbf16>
    %1 = vector.shape_cast %0 : vector<1x16x26x128xbf16> to vector<16x26x128xbf16>
    %c0_3 = arith.constant 0 : index
    %c0_4 = arith.constant 0 : index
    %c0_5 = arith.constant 0 : index
    %2 = vector.load %arg11[%c0_3, %c0_4, %c0_5] : memref<20x26x128xbf16, #tpu.memory_space<vmem>>, vector<16x26x128xbf16>
    tpu.vector_store %arg11[%c0_3, %c0_4, %c0_5], %1 {strides = array<i32>} : memref<20x26x128xbf16, #tpu.memory_space<vmem>>, vector<16x26x128xbf16>,
    %c0_6 = arith.constant 0 : index
    %c0_7 = arith.constant 0 : index
    %c0_8 = arith.constant 0 : index
    %c0_9 = arith.constant 0 : index
    %3 = vector.load %arg3[%c0_6, %c0_7, %c0_8, %c0_9] : memref<1x4x26x128xbf16, #tpu.memory_space<vmem>>, vector<1x4x26x128xbf16>
    %4 = vector.shape_cast %3 : vector<1x4x26x128xbf16> to vector<4x26x128xbf16>
    %c16 = arith.constant 16 : index
    %c0_10 = arith.constant 0 : index
    %c0_11 = arith.constant 0 : index
    %5 = vector.load %arg11[%c16, %c0_10, %c0_11] : memref<20x26x128xbf16, #tpu.memory_space<vmem>>, vector<4x26x128xbf16>
    tpu.vector_store %arg11[%c16, %c0_10, %c0_11], %4 {strides = array<i32>} : memref<20x26x128xbf16, #tpu.memory_space<vmem>>, vector<4x26x128xbf16>,
    %c0_12 = arith.constant 0 : index
    %c0_13 = arith.constant 0 : index
    %6 = vector.load %arg5[%c0_12, %c0_13] : memref<1x128xf32, #tpu.memory_space<vmem>>, vector<1x128xf32>
    %7 = vector.shape_cast %6 : vector<1x128xf32> to vector<1x128xf32>
    %8 = vector.broadcast %7 : vector<1x128xf32> to vector<432x128xf32>
    %c0_14 = arith.constant 0 : index
    %c0_15 = arith.constant 0 : index
    %9 = vector.load %arg12[%c0_14, %c0_15] : memref<432x128xf32, #tpu.memory_space<vmem>>, vector<432x128xf32>
    tpu.vector_store %arg12[%c0_14, %c0_15], %8 {strides = array<i32>} : memref<432x128xf32, #tpu.memory_space<vmem>>, vector<432x128xf32>,
    %c0_16 = arith.constant 0 : index
    %c0_17 = arith.constant 0 : index
    %c0_18 = arith.constant 0 : index
    %10 = vector.load %arg11[%c0_16, %c0_17, %c0_18] : memref<20x26x128xbf16, #tpu.memory_space<vmem>>, vector<18x24x128xbf16>
    %11 = vector.shape_cast %10 : vector<18x24x128xbf16> to vector<432x128xbf16>
    %c0_19 = arith.constant 0 : index
    %c1 = arith.constant 1 : index
    %c0_20 = arith.constant 0 : index
    %12 = vector.load %arg11[%c0_19, %c1, %c0_20] : memref<20x26x128xbf16, #tpu.memory_space<vmem>>, vector<18x24x128xbf16>
    %13 = vector.shape_cast %12 : vector<18x24x128xbf16> to vector<432x128xbf16>
    %c0_21 = arith.constant 0 : index
    %c2 = arith.constant 2 : index
    %c0_22 = arith.constant 0 : index
    %14 = vector.load %arg11[%c0_21, %c2, %c0_22] : memref<20x26x128xbf16, #tpu.memory_space<vmem>>, vector<18x24x128xbf16>
    %15 = vector.shape_cast %14 : vector<18x24x128xbf16> to vector<432x128xbf16>
    %16 = tpu.concatenate %11, %13, %15 in 1 : vector<432x128xbf16>, vector<432x128xbf16>, vector<432x128xbf16> -> vector<432x384xbf16>
    %c0_23 = arith.constant 0 : index
    %c0_24 = arith.constant 0 : index
    %17 = vector.load %arg4[%c0_23, %c0_24] : memref<1152x128xbf16, #tpu.memory_space<vmem>>, vector<384x128xbf16>
    %c0_25 = arith.constant 0 : index
    %c0_26 = arith.constant 0 : index
    %18 = vector.load %arg12[%c0_25, %c0_26] : memref<432x128xf32, #tpu.memory_space<vmem>>, vector<432x128xf32>
    %cst = arith.constant dense<0.000000e+00> : vector<432x128xf32>
    %19 = tpu.matmul %16, %17, %cst {dimension_numbers = #tpu.dot_dimension_numbers<[1], [0], [0], [1], [0, 0, 1, 1], [], []>} : vector<432x384xbf16>, vector<384x128xbf16>, vector<432x128xf32> -> vector<432x128xf32>
    %20 = arith.addf %18, %19 : vector<432x128xf32>
    %c0_27 = arith.constant 0 : index
    %c0_28 = arith.constant 0 : index
    %21 = vector.load %arg12[%c0_27, %c0_28] : memref<432x128xf32, #tpu.memory_space<vmem>>, vector<432x128xf32>
    tpu.vector_store %arg12[%c0_27, %c0_28], %20 {strides = array<i32>} : memref<432x128xf32, #tpu.memory_space<vmem>>, vector<432x128xf32>,
    %c1_29 = arith.constant 1 : index
    %c0_30 = arith.constant 0 : index
    %c0_31 = arith.constant 0 : index
    %22 = vector.load %arg11[%c1_29, %c0_30, %c0_31] : memref<20x26x128xbf16, #tpu.memory_space<vmem>>, vector<18x24x128xbf16>
    %23 = vector.shape_cast %22 : vector<18x24x128xbf16> to vector<432x128xbf16>
    %c1_32 = arith.constant 1 : index
    %c1_33 = arith.constant 1 : index
    %c0_34 = arith.constant 0 : index
    %24 = vector.load %arg11[%c1_32, %c1_33, %c0_34] : memref<20x26x128xbf16, #tpu.memory_space<vmem>>, vector<18x24x128xbf16>
    %25 = vector.shape_cast %24 : vector<18x24x128xbf16> to vector<432x128xbf16>
    %c1_35 = arith.constant 1 : index
    %c2_36 = arith.constant 2 : index
    %c0_37 = arith.constant 0 : index
    %26 = vector.load %arg11[%c1_35, %c2_36, %c0_37] : memref<20x26x128xbf16, #tpu.memory_space<vmem>>, vector<18x24x128xbf16>
    %27 = vector.shape_cast %26 : vector<18x24x128xbf16> to vector<432x128xbf16>
    %28 = tpu.concatenate %23, %25, %27 in 1 : vector<432x128xbf16>, vector<432x128xbf16>, vector<432x128xbf16> -> vector<432x384xbf16>
    %c384 = arith.constant 384 : index
    %c0_38 = arith.constant 0 : index
    %29 = vector.load %arg4[%c384, %c0_38] : memref<1152x128xbf16, #tpu.memory_space<vmem>>, vector<384x128xbf16>
    %c0_39 = arith.constant 0 : index
    %c0_40 = arith.constant 0 : index
    %30 = vector.load %arg12[%c0_39, %c0_40] : memref<432x128xf32, #tpu.memory_space<vmem>>, vector<432x128xf32>
    %cst_41 = arith.constant dense<0.000000e+00> : vector<432x128xf32>
    %31 = tpu.matmul %28, %29, %cst_41 {dimension_numbers = #tpu.dot_dimension_numbers<[1], [0], [0], [1], [0, 0, 1, 1], [], []>} : vector<432x384xbf16>, vector<384x128xbf16>, vector<432x128xf32> -> vector<432x128xf32>
    %32 = arith.addf %30, %31 : vector<432x128xf32>
    %c0_42 = arith.constant 0 : index
    %c0_43 = arith.constant 0 : index
    %33 = vector.load %arg12[%c0_42, %c0_43] : memref<432x128xf32, #tpu.memory_space<vmem>>, vector<432x128xf32>
    tpu.vector_store %arg12[%c0_42, %c0_43], %32 {strides = array<i32>} : memref<432x128xf32, #tpu.memory_space<vmem>>, vector<432x128xf32>,
    %c2_44 = arith.constant 2 : index
    %c0_45 = arith.constant 0 : index
    %c0_46 = arith.constant 0 : index
    %34 = vector.load %arg11[%c2_44, %c0_45, %c0_46] : memref<20x26x128xbf16, #tpu.memory_space<vmem>>, vector<18x24x128xbf16>
    %35 = vector.shape_cast %34 : vector<18x24x128xbf16> to vector<432x128xbf16>
    %c2_47 = arith.constant 2 : index
    %c1_48 = arith.constant 1 : index
    %c0_49 = arith.constant 0 : index
    %36 = vector.load %arg11[%c2_47, %c1_48, %c0_49] : memref<20x26x128xbf16, #tpu.memory_space<vmem>>, vector<18x24x128xbf16>
    %37 = vector.shape_cast %36 : vector<18x24x128xbf16> to vector<432x128xbf16>
    %c2_50 = arith.constant 2 : index
    %c2_51 = arith.constant 2 : index
    %c0_52 = arith.constant 0 : index
    %38 = vector.load %arg11[%c2_50, %c2_51, %c0_52] : memref<20x26x128xbf16, #tpu.memory_space<vmem>>, vector<18x24x128xbf16>
    %39 = vector.shape_cast %38 : vector<18x24x128xbf16> to vector<432x128xbf16>
    %40 = tpu.concatenate %35, %37, %39 in 1 : vector<432x128xbf16>, vector<432x128xbf16>, vector<432x128xbf16> -> vector<432x384xbf16>
    %c768 = arith.constant 768 : index
    %c0_53 = arith.constant 0 : index
    %41 = vector.load %arg4[%c768, %c0_53] : memref<1152x128xbf16, #tpu.memory_space<vmem>>, vector<384x128xbf16>
    %c0_54 = arith.constant 0 : index
    %c0_55 = arith.constant 0 : index
    %42 = vector.load %arg12[%c0_54, %c0_55] : memref<432x128xf32, #tpu.memory_space<vmem>>, vector<432x128xf32>
    %cst_56 = arith.constant dense<0.000000e+00> : vector<432x128xf32>
    %43 = tpu.matmul %40, %41, %cst_56 {dimension_numbers = #tpu.dot_dimension_numbers<[1], [0], [0], [1], [0, 0, 1, 1], [], []>} : vector<432x384xbf16>, vector<384x128xbf16>, vector<432x128xf32> -> vector<432x128xf32>
    %44 = arith.addf %42, %43 : vector<432x128xf32>
    %c0_57 = arith.constant 0 : index
    %c0_58 = arith.constant 0 : index
    %45 = vector.load %arg12[%c0_57, %c0_58] : memref<432x128xf32, #tpu.memory_space<vmem>>, vector<432x128xf32>
    tpu.vector_store %arg12[%c0_57, %c0_58], %44 {strides = array<i32>} : memref<432x128xf32, #tpu.memory_space<vmem>>, vector<432x128xf32>,
    %c0_59 = arith.constant 0 : index
    %c0_60 = arith.constant 0 : index
    %46 = vector.load %arg12[%c0_59, %c0_60] : memref<432x128xf32, #tpu.memory_space<vmem>>, vector<432x128xf32>
    %cst_61 = arith.constant 0.000000e+00 : f32
    %47 = vector.broadcast %cst_61 : f32 to vector<432x128xf32>
    %48 = arith.cmpf oge, %46, %47 : vector<432x128xf32>
    %cst_62 = arith.constant 0.00999999977 : f32
    %49 = vector.broadcast %cst_62 : f32 to vector<432x128xf32>
    %50 = arith.mulf %49, %46 : vector<432x128xf32>
    %51 = arith.select %48, %46, %50 : vector<432x128xi1>, vector<432x128xf32>
    %52 = vector.shape_cast %51 : vector<432x128xf32> to vector<18x24x128xf32>
    %53 = tpu.iota {dimensions = array<i32: 0>} : vector<18x24x1xi32>
    %c16_i32 = arith.constant 16 : i32
    %54 = arith.muli %arg1, %c16_i32 : i32
    %c1_i32 = arith.constant 1 : i32
    %55 = arith.subi %54, %c1_i32 : i32
    %56 = vector.broadcast %55 : i32 to vector<18x24x1xi32>
    %57 = arith.addi %53, %56 : vector<18x24x1xi32>
    %58 = tpu.iota {dimensions = array<i32: 1>} : vector<18x24x1xi32>
    %c1_i32_63 = arith.constant 1 : i32
    %59 = vector.broadcast %c1_i32_63 : i32 to vector<18x24x1xi32>
    %60 = arith.subi %58, %59 : vector<18x24x1xi32>
    %c0_i32 = arith.constant 0 : i32
    %61 = vector.broadcast %c0_i32 : i32 to vector<18x24x1xi32>
    %62 = arith.cmpi sge, %57, %61 : vector<18x24x1xi32>
    %c16_i32_64 = arith.constant 16 : i32
    %63 = vector.broadcast %c16_i32_64 : i32 to vector<18x24x1xi32>
    %64 = arith.cmpi slt, %57, %63 : vector<18x24x1xi32>
    %65 = arith.andi %62, %64 : vector<18x24x1xi1>
    %c0_i32_65 = arith.constant 0 : i32
    %66 = vector.broadcast %c0_i32_65 : i32 to vector<18x24x1xi32>
    %67 = arith.cmpi sge, %60, %66 : vector<18x24x1xi32>
    %68 = arith.andi %65, %67 : vector<18x24x1xi1>
    %c16_i32_66 = arith.constant 16 : i32
    %69 = vector.broadcast %c16_i32_66 : i32 to vector<18x24x1xi32>
    %70 = arith.cmpi slt, %60, %69 : vector<18x24x1xi32>
    %71 = arith.andi %68, %70 : vector<18x24x1xi1>
    %cst_67 = arith.constant 0.000000e+00 : f32
    %72 = vector.shape_cast %71 : vector<18x24x1xi1> to vector<18x24x1xi1>
    %73 = vector.broadcast %72 : vector<18x24x1xi1> to vector<18x24x128xi1>
    %74 = vector.broadcast %cst_67 : f32 to vector<18x24x128xf32>
    %75 = arith.select %73, %52, %74 : vector<18x24x128xi1>, vector<18x24x128xf32>
    %76 = arith.truncf %75 : vector<18x24x128xf32> to vector<18x24x128xbf16>
    %c0_68 = arith.constant 0 : index
    %c0_69 = arith.constant 0 : index
    %77 = vector.load %arg7[%c0_68, %c0_69] : memref<1x128xf32, #tpu.memory_space<vmem>>, vector<1x128xf32>
    %78 = vector.shape_cast %77 : vector<1x128xf32> to vector<1x128xf32>
    %79 = vector.broadcast %78 : vector<1x128xf32> to vector<256x128xf32>
    %c0_70 = arith.constant 0 : index
    %c0_71 = arith.constant 0 : index
    %80 = vector.load %arg12[%c0_70, %c0_71] : memref<432x128xf32, #tpu.memory_space<vmem>>, vector<256x128xf32>
    tpu.vector_store %arg12[%c0_70, %c0_71], %79 {strides = array<i32>} : memref<432x128xf32, #tpu.memory_space<vmem>>, vector<256x128xf32>,
    %81 = vector.extract_strided_slice %76 {offsets = [0, 0, 0], sizes = [16, 16, 128], strides = [1, 1, 1]} : vector<18x24x128xbf16> to vector<16x16x128xbf16>
    %82 = vector.shape_cast %81 : vector<16x16x128xbf16> to vector<256x128xbf16>
    %83 = vector.extract_strided_slice %76 {offsets = [0, 1, 0], sizes = [16, 16, 128], strides = [1, 1, 1]} : vector<18x24x128xbf16> to vector<16x16x128xbf16>
    %84 = vector.shape_cast %83 : vector<16x16x128xbf16> to vector<256x128xbf16>
    %85 = vector.extract_strided_slice %76 {offsets = [0, 2, 0], sizes = [16, 16, 128], strides = [1, 1, 1]} : vector<18x24x128xbf16> to vector<16x16x128xbf16>
    %86 = vector.shape_cast %85 : vector<16x16x128xbf16> to vector<256x128xbf16>
    %87 = tpu.concatenate %82, %84, %86 in 1 : vector<256x128xbf16>, vector<256x128xbf16>, vector<256x128xbf16> -> vector<256x384xbf16>
    %c0_72 = arith.constant 0 : index
    %c0_73 = arith.constant 0 : index
    %88 = vector.load %arg6[%c0_72, %c0_73] : memref<1152x128xbf16, #tpu.memory_space<vmem>>, vector<384x128xbf16>
    %c0_74 = arith.constant 0 : index
    %c0_75 = arith.constant 0 : index
    %89 = vector.load %arg12[%c0_74, %c0_75] : memref<432x128xf32, #tpu.memory_space<vmem>>, vector<256x128xf32>
    %cst_76 = arith.constant dense<0.000000e+00> : vector<256x128xf32>
    %90 = tpu.matmul %87, %88, %cst_76 {dimension_numbers = #tpu.dot_dimension_numbers<[1], [0], [0], [1], [0, 0, 1, 1], [], []>} : vector<256x384xbf16>, vector<384x128xbf16>, vector<256x128xf32> -> vector<256x128xf32>
    %91 = arith.addf %89, %90 : vector<256x128xf32>
    %c0_77 = arith.constant 0 : index
    %c0_78 = arith.constant 0 : index
    %92 = vector.load %arg12[%c0_77, %c0_78] : memref<432x128xf32, #tpu.memory_space<vmem>>, vector<256x128xf32>
    tpu.vector_store %arg12[%c0_77, %c0_78], %91 {strides = array<i32>} : memref<432x128xf32, #tpu.memory_space<vmem>>, vector<256x128xf32>,
    %93 = vector.extract_strided_slice %76 {offsets = [1, 0, 0], sizes = [16, 16, 128], strides = [1, 1, 1]} : vector<18x24x128xbf16> to vector<16x16x128xbf16>
    %94 = vector.shape_cast %93 : vector<16x16x128xbf16> to vector<256x128xbf16>
    %95 = vector.extract_strided_slice %76 {offsets = [1, 1, 0], sizes = [16, 16, 128], strides = [1, 1, 1]} : vector<18x24x128xbf16> to vector<16x16x128xbf16>
    %96 = vector.shape_cast %95 : vector<16x16x128xbf16> to vector<256x128xbf16>
    %97 = vector.extract_strided_slice %76 {offsets = [1, 2, 0], sizes = [16, 16, 128], strides = [1, 1, 1]} : vector<18x24x128xbf16> to vector<16x16x128xbf16>
    %98 = vector.shape_cast %97 : vector<16x16x128xbf16> to vector<256x128xbf16>
    %99 = tpu.concatenate %94, %96, %98 in 1 : vector<256x128xbf16>, vector<256x128xbf16>, vector<256x128xbf16> -> vector<256x384xbf16>
    %c384_79 = arith.constant 384 : index
    %c0_80 = arith.constant 0 : index
    %100 = vector.load %arg6[%c384_79, %c0_80] : memref<1152x128xbf16, #tpu.memory_space<vmem>>, vector<384x128xbf16>
    %c0_81 = arith.constant 0 : index
    %c0_82 = arith.constant 0 : index
    %101 = vector.load %arg12[%c0_81, %c0_82] : memref<432x128xf32, #tpu.memory_space<vmem>>, vector<256x128xf32>
    %cst_83 = arith.constant dense<0.000000e+00> : vector<256x128xf32>
    %102 = tpu.matmul %99, %100, %cst_83 {dimension_numbers = #tpu.dot_dimension_numbers<[1], [0], [0], [1], [0, 0, 1, 1], [], []>} : vector<256x384xbf16>, vector<384x128xbf16>, vector<256x128xf32> -> vector<256x128xf32>
    %103 = arith.addf %101, %102 : vector<256x128xf32>
    %c0_84 = arith.constant 0 : index
    %c0_85 = arith.constant 0 : index
    %104 = vector.load %arg12[%c0_84, %c0_85] : memref<432x128xf32, #tpu.memory_space<vmem>>, vector<256x128xf32>
    tpu.vector_store %arg12[%c0_84, %c0_85], %103 {strides = array<i32>} : memref<432x128xf32, #tpu.memory_space<vmem>>, vector<256x128xf32>,
    %105 = vector.extract_strided_slice %76 {offsets = [2, 0, 0], sizes = [16, 16, 128], strides = [1, 1, 1]} : vector<18x24x128xbf16> to vector<16x16x128xbf16>
    %106 = vector.shape_cast %105 : vector<16x16x128xbf16> to vector<256x128xbf16>
    %107 = vector.extract_strided_slice %76 {offsets = [2, 1, 0], sizes = [16, 16, 128], strides = [1, 1, 1]} : vector<18x24x128xbf16> to vector<16x16x128xbf16>
    %108 = vector.shape_cast %107 : vector<16x16x128xbf16> to vector<256x128xbf16>
    %109 = vector.extract_strided_slice %76 {offsets = [2, 2, 0], sizes = [16, 16, 128], strides = [1, 1, 1]} : vector<18x24x128xbf16> to vector<16x16x128xbf16>
    %110 = vector.shape_cast %109 : vector<16x16x128xbf16> to vector<256x128xbf16>
    %111 = tpu.concatenate %106, %108, %110 in 1 : vector<256x128xbf16>, vector<256x128xbf16>, vector<256x128xbf16> -> vector<256x384xbf16>
    %c768_86 = arith.constant 768 : index
    %c0_87 = arith.constant 0 : index
    %112 = vector.load %arg6[%c768_86, %c0_87] : memref<1152x128xbf16, #tpu.memory_space<vmem>>, vector<384x128xbf16>
    %c0_88 = arith.constant 0 : index
    %c0_89 = arith.constant 0 : index
    %113 = vector.load %arg12[%c0_88, %c0_89] : memref<432x128xf32, #tpu.memory_space<vmem>>, vector<256x128xf32>
    %cst_90 = arith.constant dense<0.000000e+00> : vector<256x128xf32>
    %114 = tpu.matmul %111, %112, %cst_90 {dimension_numbers = #tpu.dot_dimension_numbers<[1], [0], [0], [1], [0, 0, 1, 1], [], []>} : vector<256x384xbf16>, vector<384x128xbf16>, vector<256x128xf32> -> vector<256x128xf32>
    %115 = arith.addf %113, %114 : vector<256x128xf32>
    %c0_91 = arith.constant 0 : index
    %c0_92 = arith.constant 0 : index
    %116 = vector.load %arg12[%c0_91, %c0_92] : memref<432x128xf32, #tpu.memory_space<vmem>>, vector<256x128xf32>
    tpu.vector_store %arg12[%c0_91, %c0_92], %115 {strides = array<i32>} : memref<432x128xf32, #tpu.memory_space<vmem>>, vector<256x128xf32>,
    %c0_93 = arith.constant 0 : index
    %c0_94 = arith.constant 0 : index
    %117 = vector.load %arg12[%c0_93, %c0_94] : memref<432x128xf32, #tpu.memory_space<vmem>>, vector<256x128xf32>
    %cst_95 = arith.constant 0.000000e+00 : f32
    %118 = vector.broadcast %cst_95 : f32 to vector<256x128xf32>
    %119 = arith.cmpf oge, %117, %118 : vector<256x128xf32>
    %cst_96 = arith.constant 0.00999999977 : f32
    %120 = vector.broadcast %cst_96 : f32 to vector<256x128xf32>
    %121 = arith.mulf %120, %117 : vector<256x128xf32>
    %122 = arith.select %119, %117, %121 : vector<256x128xi1>, vector<256x128xf32>
    %c2_97 = arith.constant 2 : index
    %c2_98 = arith.constant 2 : index
    %c0_99 = arith.constant 0 : index
    %123 = vector.load %arg11[%c2_97, %c2_98, %c0_99] : memref<20x26x128xbf16, #tpu.memory_space<vmem>>, vector<16x16x128xbf16>
    %124 = vector.shape_cast %123 : vector<16x16x128xbf16> to vector<256x128xbf16>
    %c0_100 = arith.constant 0 : index
    %c0_101 = arith.constant 0 : index
    %125 = vector.load %arg8[%c0_100, %c0_101] : memref<128x128xbf16, #tpu.memory_space<vmem>>, vector<128x128xbf16>
    %cst_102 = arith.constant dense<0.000000e+00> : vector<256x128xf32>
    %126 = tpu.matmul %124, %125, %cst_102 {dimension_numbers = #tpu.dot_dimension_numbers<[1], [0], [0], [1], [0, 0, 1, 1], [], []>} : vector<256x128xbf16>, vector<128x128xbf16>, vector<256x128xf32> -> vector<256x128xf32>
    %c0_103 = arith.constant 0 : index
    %c0_104 = arith.constant 0 : index
    %127 = vector.load %arg9[%c0_103, %c0_104] : memref<1x128xf32, #tpu.memory_space<vmem>>, vector<1x128xf32>
    %128 = vector.broadcast %127 : vector<1x128xf32> to vector<256x128xf32>
    %129 = arith.addf %126, %128 : vector<256x128xf32>
    %130 = arith.addf %122, %129 : vector<256x128xf32>
    %131 = vector.shape_cast %130 : vector<256x128xf32> to vector<16x16x128xf32>
    %132 = arith.truncf %131 : vector<16x16x128xf32> to vector<16x16x128xbf16>
    %c0_105 = arith.constant 0 : index
    %c0_106 = arith.constant 0 : index
    %c0_107 = arith.constant 0 : index
    %c0_108 = arith.constant 0 : index
    %133 = vector.load %arg10[%c0_105, %c0_106, %c0_107, %c0_108] : memref<1x16x16x128xbf16, #tpu.memory_space<vmem>>, vector<1x16x16x128xbf16>
    %134 = vector.shape_cast %133 : vector<1x16x16x128xbf16> to vector<16x16x128xbf16>
    %135 = vector.shape_cast %132 : vector<16x16x128xbf16> to vector<1x16x16x128xbf16>
    tpu.vector_store %arg10[%c0_105, %c0_106, %c0_107, %c0_108], %135 {strides = array<i32>} : memref<1x16x16x128xbf16, #tpu.memory_space<vmem>>, vector<1x16x16x128xbf16>,
    return
  }
  func.func @transform_0(%arg0: i32, %arg1: i32) -> (i32, i32, i32, i32) {
    %c0_i32 = arith.constant 0 : i32
    %c0_i32_0 = arith.constant 0 : i32
    %c0_i32_1 = arith.constant 0 : i32
    return %arg0, %arg1, %c0_i32, %c0_i32_0 : i32, i32, i32, i32
  }
  func.func @transform_1(%arg0: i32, %arg1: i32) -> (i32, i32, i32, i32) {
    %c1_i32 = arith.constant 1 : i32
    %0 = arith.addi %arg1, %c1_i32 : i32
    %c4_i32 = arith.constant 4 : i32
    %1 = arith.muli %0, %c4_i32 : i32
    %c0_i32 = arith.constant 0 : i32
    %c0_i32_0 = arith.constant 0 : i32
    %c0_i32_1 = arith.constant 0 : i32
    return %arg0, %1, %c0_i32, %c0_i32_0 : i32, i32, i32, i32
  }
  func.func @transform_2(%arg0: i32, %arg1: i32) -> (i32, i32) {
    %c0_i32 = arith.constant 0 : i32
    %c0_i32_0 = arith.constant 0 : i32
    %c0_i32_1 = arith.constant 0 : i32
    return %c0_i32, %c0_i32_0 : i32, i32
  }
  func.func @transform_3(%arg0: i32, %arg1: i32) -> (i32, i32) {
    %c0_i32 = arith.constant 0 : i32
    %c0_i32_0 = arith.constant 0 : i32
    %c0_i32_1 = arith.constant 0 : i32
    return %c0_i32, %c0_i32_0 : i32, i32
  }
  func.func @transform_4(%arg0: i32, %arg1: i32) -> (i32, i32) {
    %c0_i32 = arith.constant 0 : i32
    %c0_i32_0 = arith.constant 0 : i32
    %c0_i32_1 = arith.constant 0 : i32
    return %c0_i32, %c0_i32_0 : i32, i32
  }
  func.func @transform_5(%arg0: i32, %arg1: i32) -> (i32, i32) {
    %c0_i32 = arith.constant 0 : i32
    %c0_i32_0 = arith.constant 0 : i32
    %c0_i32_1 = arith.constant 0 : i32
    return %c0_i32, %c0_i32_0 : i32, i32
  }
  func.func @transform_6(%arg0: i32, %arg1: i32) -> (i32, i32) {
    %c0_i32 = arith.constant 0 : i32
    %c0_i32_0 = arith.constant 0 : i32
    %c0_i32_1 = arith.constant 0 : i32
    return %c0_i32, %c0_i32_0 : i32, i32
  }
  func.func @transform_7(%arg0: i32, %arg1: i32) -> (i32, i32) {
    %c0_i32 = arith.constant 0 : i32
    %c0_i32_0 = arith.constant 0 : i32
    %c0_i32_1 = arith.constant 0 : i32
    return %c0_i32, %c0_i32_0 : i32, i32
  }
  func.func @transform_8(%arg0: i32, %arg1: i32) -> (i32, i32, i32, i32) {
    %c0_i32 = arith.constant 0 : i32
    %c0_i32_0 = arith.constant 0 : i32
    %c0_i32_1 = arith.constant 0 : i32
    return %arg0, %arg1, %c0_i32, %c0_i32_0 : i32, i32, i32, i32
  }
}

</mosaic_0001>

<llo_original>
// kernel: tpu_custom_call.1
$region0: #{tpu_custom_call.1}
  #allocation0 [shape = 'u32[]', space=smem, size = 0x4, offset = 0x4, fixed_abs, tag = 'smem constant byte address 0x4 - core index']
  #allocation1 [shape = 'u32[144,128]{1,0:T(1,128)}', space=vmem, size = 0x12000, scoped, tag = 'internal scratch']
  #allocation2 [shape = 'bf16[20,26,128]{2,1,0:T(8,128)(2,1)}', space=vmem, size = 0x28000, scoped, tag = 'scratch operand']
  #allocation3 [shape = 'f32[432,128]{1,0:T(8,128)}', space=vmem, size = 0x36000, scoped, tag = 'scratch operand']
  %s0 = inlined_call_operand.vmem [shape: bf16[2,20,26,128], index: 0, kind: input, shape index: {}]
  %s1 = inlined_call_operand.vmem [shape: bf16[2,20,26,128], index: 1, kind: input, shape index: {}]
  %s2 = inlined_call_operand.vmem [shape: bf16[1152,128], index: 2, kind: input, shape index: {}]
  %s3 = inlined_call_operand.vmem [shape: f32[1,128], index: 3, kind: input, shape index: {}]
  %s4 = inlined_call_operand.vmem [shape: bf16[1152,128], index: 4, kind: input, shape index: {}]
  %s5 = inlined_call_operand.vmem [shape: f32[1,128], index: 5, kind: input, shape index: {}]
  %s6 = inlined_call_operand.vmem [shape: bf16[128,128], index: 6, kind: input, shape index: {}]
  %s7 = inlined_call_operand.vmem [shape: f32[1,128], index: 7, kind: input, shape index: {}]
  %s8 = inlined_call_operand.hbm [shape: bf16[2,16,16,128], index: 8, kind: output, shape index: {}]
  %s9 = sld [smem:[#allocation0]]
  $region65: #{tpu_custom_call.1} parent=0
    _
  %s11 = ssub.s32 1, %s9
  %s12 = scalar_select 0, %s11, %s9
  $region1: #{tpu_custom_call.1} parent=0
    #allocation4 [shape = 'u8[131072]{0}', space=vmem, size = 0x20000, scoped, tag = 'output window, operand 0']
    #allocation5 [shape = 's32[2]{0}', space=sflag, size = 0x8, scoped, tag = 'scoped memory for tpu_custom_call.1']
    %13 = vsyncpa [#allocation5], 0
    %s14 = scalar_lea.sflag [#allocation5], 1
    %15 = vsyncpa %s14, 0
    loop: start=0, step=1, limit=4
    $region2: #{tpu_custom_call.1} parent=1 // loop_pre_header
      _
    $region3: #{tpu_custom_call.1} parent=1 // loop_header
      %s17 = sphi 0, %s21
      %p18 = scmp.ge.s32.totalorder %s17, 4
      %s24 = sphi 0, %s36
      %s25 = sphi 0, %s32
      %s26 = sphi 0, %s24
      %s27 = sphi 0, %s25
      %s28 = sphi 0, %s26
      %s29 = sphi 0, %s27
      %s41 = sphi 0, %s43
      %s44 = sphi 0, %s41
      %s45 = sphi 0, %s44
      %s61 = sphi 0, %s45
      %s73 = sphi 0, %s75
      %s76 = sphi 0, %s73
      %s77 = sphi 0, %s76
      %s93 = sphi 0, %s77
      %s97 = sphi 0, %s97
      %s99 = sphi 0, %s97
      %s100 = sphi 0, %s99
      %s114 = sphi 0, %s100
      %s118 = sphi 0, %s118
      %s120 = sphi 0, %s118
      %s121 = sphi 0, %s120
      %s135 = sphi 0, %s121
      %s139 = sphi 0, %s139
      %s141 = sphi 0, %s139
      %s142 = sphi 0, %s141
      %s156 = sphi 0, %s142
      %s160 = sphi 0, %s160
      %s162 = sphi 0, %s160
      %s163 = sphi 0, %s162
      %s177 = sphi 0, %s163
      %s181 = sphi 0, %s181
      %s183 = sphi 0, %s181
      %s184 = sphi 0, %s183
      %s198 = sphi 0, %s184
      %s202 = sphi 0, %s202
      %s204 = sphi 0, %s202
      %s205 = sphi 0, %s204
      %s219 = sphi 0, %s205
      %s227 = sphi 0, %s229
      %s230 = sphi 0, %s227
      %s231 = sphi 0, %s230
      %s247 = sphi 0, %s231
    $region4: #{tpu_custom_call.1} parent=1 // loop_header_branch
      %20 = sbr.rel (%p18) target = $region8
    $region5: #{tpu_custom_call.1} parent=1 // loop_body
      %s22 = ssub.s32 %s17, 1
      %s23 = ssub.s32 %s17, 2
      %s30 = sadd.s32 1, %s25
      %p31 = scmp.ge.s32.totalorder %s30, 1
      %s32 = scalar_select %p31, 0, %s30
      %s33 = sadd.s32 1, %s24
      %s34 = scalar_select %p31, %s33, %s24
      %p35 = scmp.ge.s32.totalorder %s34, 2
      %s36 = scalar_select %p35, 0, %s34
      %s37 = ssub.s32 %s24, %s36
      %s38 = ssub.s32 %s25, %s32
      %s39 = sor.u32 %s37, %s38
      %p40 = scmp.eq.s32.totalorder %s39, 0
      %s42 = sadd.s32 %s41, 1
      %s43 = scalar_select %p40, %s41, %s42
      %p46 = pneg %p40
      %p47 = scmp.eq.s32.totalorder %s17, 1
      %p48 = por %p46, %p47
      %p49 = scmp.ne.s32.totalorder %s41, %s44
      %p50 = scmp.eq.s32.totalorder %s17, 0
      %p51 = por %p49, %p50
      %p52 = scmp.ne.s32.totalorder %s41, %s44
      %p53 = scmp.eq.s32.totalorder %s22, 1
      %p54 = por %p52, %p53
      %p55 = scmp.ne.s32.totalorder %s44, %s45
      %p56 = scmp.eq.s32.totalorder %s22, 0
      %p57 = por %p55, %p56
      %p58 = scmp.ne.s32.totalorder %s44, %s45
      %p59 = scmp.eq.s32.totalorder %s23, 1
      %p60 = por %p58, %p59
      %p62 = scmp.ne.s32.totalorder %s45, %s61
      %p63 = scmp.eq.s32.totalorder %s23, 0
      %p64 = por %p62, %p63
      %s65 = sadd.s32 %s25, 1
      %s66 = smul.u32 %s65, 4
      %s67 = sadd.s32 %s32, 1
      %s68 = smul.u32 %s67, 4
      %s69 = ssub.s32 %s24, %s36
      %s70 = ssub.s32 %s66, %s68
      %s71 = sor.u32 %s69, %s70
      %p72 = scmp.eq.s32.totalorder %s71, 0
      %s74 = sadd.s32 %s73, 1
      %s75 = scalar_select %p72, %s73, %s74
      %p78 = pneg %p72
      %p79 = scmp.eq.s32.totalorder %s17, 1
      %p80 = por %p78, %p79
      %p81 = scmp.ne.s32.totalorder %s73, %s76
      %p82 = scmp.eq.s32.totalorder %s17, 0
      %p83 = por %p81, %p82
      %p84 = scmp.ne.s32.totalorder %s73, %s76
      %p85 = scmp.eq.s32.totalorder %s22, 1
      %p86 = por %p84, %p85
      %p87 = scmp.ne.s32.totalorder %s76, %s77
      %p88 = scmp.eq.s32.totalorder %s22, 0
      %p89 = por %p87, %p88
      %p90 = scmp.ne.s32.totalorder %s76, %s77
      %p91 = scmp.eq.s32.totalorder %s23, 1
      %p92 = por %p90, %p91
      %p94 = scmp.ne.s32.totalorder %s77, %s93
      %p95 = scmp.eq.s32.totalorder %s23, 0
      %p96 = por %p94, %p95
      %s98 = sadd.s32 %s97, 1
      %p101 = scmp.eq.s32.totalorder %s17, 1
      %p102 = scmp.ne.s32.totalorder %s97, %s99
      %p103 = scmp.eq.s32.totalorder %s17, 0
      %p104 = por %p102, %p103
      %p105 = scmp.ne.s32.totalorder %s97, %s99
      %p106 = scmp.eq.s32.totalorder %s22, 1
      %p107 = por %p105, %p106
      %p108 = scmp.ne.s32.totalorder %s99, %s100
      %p109 = scmp.eq.s32.totalorder %s22, 0
      %p110 = por %p108, %p109
      %p111 = scmp.ne.s32.totalorder %s99, %s100
      %p112 = scmp.eq.s32.totalorder %s23, 1
      %p113 = por %p111, %p112
      %p115 = scmp.ne.s32.totalorder %s100, %s114
      %p116 = scmp.eq.s32.totalorder %s23, 0
      %p117 = por %p115, %p116
      %s119 = sadd.s32 %s118, 1
      %p122 = scmp.eq.s32.totalorder %s17, 1
      %p123 = scmp.ne.s32.totalorder %s118, %s120
      %p124 = scmp.eq.s32.totalorder %s17, 0
      %p125 = por %p123, %p124
      %p126 = scmp.ne.s32.totalorder %s118, %s120
      %p127 = scmp.eq.s32.totalorder %s22, 1
      %p128 = por %p126, %p127
      %p129 = scmp.ne.s32.totalorder %s120, %s121
      %p130 = scmp.eq.s32.totalorder %s22, 0
      %p131 = por %p129, %p130
      %p132 = scmp.ne.s32.totalorder %s120, %s121
      %p133 = scmp.eq.s32.totalorder %s23, 1
      %p134 = por %p132, %p133
      %p136 = scmp.ne.s32.totalorder %s121, %s135
      %p137 = scmp.eq.s32.totalorder %s23, 0
      %p138 = por %p136, %p137
      %s140 = sadd.s32 %s139, 1
      %p143 = scmp.eq.s32.totalorder %s17, 1
      %p144 = scmp.ne.s32.totalorder %s139, %s141
      %p145 = scmp.eq.s32.totalorder %s17, 0
      %p146 = por %p144, %p145
      %p147 = scmp.ne.s32.totalorder %s139, %s141
      %p148 = scmp.eq.s32.totalorder %s22, 1
      %p149 = por %p147, %p148
      %p150 = scmp.ne.s32.totalorder %s141, %s142
      %p151 = scmp.eq.s32.totalorder %s22, 0
      %p152 = por %p150, %p151
      %p153 = scmp.ne.s32.totalorder %s141, %s142
      %p154 = scmp.eq.s32.totalorder %s23, 1
      %p155 = por %p153, %p154
      %p157 = scmp.ne.s32.totalorder %s142, %s156
      %p158 = scmp.eq.s32.totalorder %s23, 0
      %p159 = por %p157, %p158
      %s161 = sadd.s32 %s160, 1
      %p164 = scmp.eq.s32.totalorder %s17, 1
      %p165 = scmp.ne.s32.totalorder %s160, %s162
      %p166 = scmp.eq.s32.totalorder %s17, 0
      %p167 = por %p165, %p166
      %p168 = scmp.ne.s32.totalorder %s160, %s162
      %p169 = scmp.eq.s32.totalorder %s22, 1
      %p170 = por %p168, %p169
      %p171 = scmp.ne.s32.totalorder %s162, %s163
      %p172 = scmp.eq.s32.totalorder %s22, 0
      %p173 = por %p171, %p172
      %p174 = scmp.ne.s32.totalorder %s162, %s163
      %p175 = scmp.eq.s32.totalorder %s23, 1
      %p176 = por %p174, %p175
      %p178 = scmp.ne.s32.totalorder %s163, %s177
      %p179 = scmp.eq.s32.totalorder %s23, 0
      %p180 = por %p178, %p179
      %s182 = sadd.s32 %s181, 1
      %p185 = scmp.eq.s32.totalorder %s17, 1
      %p186 = scmp.ne.s32.totalorder %s181, %s183
      %p187 = scmp.eq.s32.totalorder %s17, 0
      %p188 = por %p186, %p187
      %p189 = scmp.ne.s32.totalorder %s181, %s183
      %p190 = scmp.eq.s32.totalorder %s22, 1
      %p191 = por %p189, %p190
      %p192 = scmp.ne.s32.totalorder %s183, %s184
      %p193 = scmp.eq.s32.totalorder %s22, 0
      %p194 = por %p192, %p193
      %p195 = scmp.ne.s32.totalorder %s183, %s184
      %p196 = scmp.eq.s32.totalorder %s23, 1
      %p197 = por %p195, %p196
      %p199 = scmp.ne.s32.totalorder %s184, %s198
      %p200 = scmp.eq.s32.totalorder %s23, 0
      %p201 = por %p199, %p200
      %s203 = sadd.s32 %s202, 1
      %p206 = scmp.eq.s32.totalorder %s17, 1
      %p207 = scmp.ne.s32.totalorder %s202, %s204
      %p208 = scmp.eq.s32.totalorder %s17, 0
      %p209 = por %p207, %p208
      %p210 = scmp.ne.s32.totalorder %s202, %s204
      %p211 = scmp.eq.s32.totalorder %s22, 1
      %p212 = por %p210, %p211
      %p213 = scmp.ne.s32.totalorder %s204, %s205
      %p214 = scmp.eq.s32.totalorder %s22, 0
      %p215 = por %p213, %p214
      %p216 = scmp.ne.s32.totalorder %s204, %s205
      %p217 = scmp.eq.s32.totalorder %s23, 1
      %p218 = por %p216, %p217
      %p220 = scmp.ne.s32.totalorder %s205, %s219
      %p221 = scmp.eq.s32.totalorder %s23, 0
      %p222 = por %p220, %p221
      %s223 = ssub.s32 %s24, %s36
      %s224 = ssub.s32 %s25, %s32
      %s225 = sor.u32 %s223, %s224
      %p226 = scmp.eq.s32.totalorder %s225, 0
      %s228 = sadd.s32 %s227, 1
      %s229 = scalar_select %p226, %s227, %s228
      %p232 = pneg %p226
      %p233 = scmp.eq.s32.totalorder %s17, 1
      %p234 = por %p232, %p233
      %p235 = scmp.ne.s32.totalorder %s227, %s230
      %p236 = scmp.eq.s32.totalorder %s17, 0
      %p237 = por %p235, %p236
      %p238 = scmp.ne.s32.totalorder %s227, %s230
      %p239 = scmp.eq.s32.totalorder %s22, 1
      %p240 = por %p238, %p239
      %p241 = scmp.ne.s32.totalorder %s230, %s231
      %p242 = scmp.eq.s32.totalorder %s22, 0
      %p243 = por %p241, %p242
      %p244 = scmp.ne.s32.totalorder %s230, %s231
      %p245 = scmp.eq.s32.totalorder %s23, 1
      %p246 = por %p244, %p245
      %p248 = scmp.ne.s32.totalorder %s231, %s247
      %p249 = scmp.eq.s32.totalorder %s23, 0
      %p250 = por %p248, %p249
      %p251 = scmp.le.s32.totalorder 1, %s17
      %p252 = scmp.lt.s32.totalorder %s17, 3
      %p253 = pnand %p251, %p252
      %p254 = pneg %p253
      // Predicated region
      $region9: #{tpu_custom_call.1} parent=5 // pred_check
        _
      $region10: #{tpu_custom_call.1} parent=5 // pred_check_branch
        %256 = sbr.rel (%p253) target = $region12
      $region11: #{tpu_custom_call.1} parent=5 // pred_region
        %s257 = ssub.s32 %s17, 1
        // Predicated region
        $region13: #{tpu_custom_call.1} parent=11 // pred_check
          %p258 = pneg %p110
        $region14: #{tpu_custom_call.1} parent=11 // pred_check_branch
          %260 = sbr.rel (%p258) target = $region16
        $region15: #{tpu_custom_call.1} parent=11 // pred_region
          _
        $region16: #{tpu_custom_call.1} parent=11 // pred_fallthru
          _
        // Predicated region
        $region17: #{tpu_custom_call.1} parent=11 // pred_check
          %p261 = pneg %p131
        $region18: #{tpu_custom_call.1} parent=11 // pred_check_branch
          %263 = sbr.rel (%p261) target = $region20
        $region19: #{tpu_custom_call.1} parent=11 // pred_region
          _
        $region20: #{tpu_custom_call.1} parent=11 // pred_fallthru
          _
        // Predicated region
        $region21: #{tpu_custom_call.1} parent=11 // pred_check
          %p264 = pneg %p152
        $region22: #{tpu_custom_call.1} parent=11 // pred_check_branch
          %266 = sbr.rel (%p264) target = $region24
        $region23: #{tpu_custom_call.1} parent=11 // pred_region
          _
        $region24: #{tpu_custom_call.1} parent=11 // pred_fallthru
          _
        // Predicated region
        $region25: #{tpu_custom_call.1} parent=11 // pred_check
          %p267 = pneg %p173
        $region26: #{tpu_custom_call.1} parent=11 // pred_check_branch
          %269 = sbr.rel (%p267) target = $region28
        $region27: #{tpu_custom_call.1} parent=11 // pred_region
          _
        $region28: #{tpu_custom_call.1} parent=11 // pred_fallthru
          _
        // Predicated region
        $region29: #{tpu_custom_call.1} parent=11 // pred_check
          %p270 = pneg %p194
        $region30: #{tpu_custom_call.1} parent=11 // pred_check_branch
          %272 = sbr.rel (%p270) target = $region32
        $region31: #{tpu_custom_call.1} parent=11 // pred_region
          _
        $region32: #{tpu_custom_call.1} parent=11 // pred_fallthru
          _
        // Predicated region
        $region33: #{tpu_custom_call.1} parent=11 // pred_check
          %p273 = pneg %p215
        $region34: #{tpu_custom_call.1} parent=11 // pred_check_branch
          %275 = sbr.rel (%p273) target = $region36
        $region35: #{tpu_custom_call.1} parent=11 // pred_region
          _
        $region36: #{tpu_custom_call.1} parent=11 // pred_fallthru
          _
      $region12: #{tpu_custom_call.1} parent=5 // pred_fallthru
        _
      %p276 = scmp.lt.s32.totalorder %s17, 2
      // Predicated region
      $region37: #{tpu_custom_call.1} parent=5 // pred_check
        %p277 = pneg %p276
      $region38: #{tpu_custom_call.1} parent=5 // pred_check_branch
        %279 = sbr.rel (%p277) target = $region40
      $region39: #{tpu_custom_call.1} parent=5 // pred_region
        // Predicated region
        $region41: #{tpu_custom_call.1} parent=39 // pred_check
          %p280 = pneg %p51
        $region42: #{tpu_custom_call.1} parent=39 // pred_check_branch
          %282 = sbr.rel (%p280) target = $region44
        $region43: #{tpu_custom_call.1} parent=39 // pred_region
          %s283 = smul.u32 16, %s25
          %s284 = ssub.s32 20, %s283
          %p285 = scmp.lt.s32.totalorder %s284, 16
          %s286 = scalar_select %p285, %s284, 16
          %s287 = smul.u32 64, %s286
          %s288 = smul.u32 %s287, 4
          %p289 = scmp.lt.s32.totalorder %s24, 1
          %s290 = scalar_select %p289, %s24, 1
          %p291 = scmp.lt.s32.totalorder %s283, 19
          %s292 = scalar_select %p291, %s283, 19
          %s293 = smul.addr %s292, 4
          %s294 = smul.addr %s290, 80
          %s295 = sadd.s32 %s293, %s294
          %s296 = smul.addr %s295, 4
          %s297 = scalar_lea.vmem %s0, %s296
          %s298 = smul.u32 16, %s25
          %s299 = ssub.s32 20, %s298
          %p300 = scmp.lt.s32.totalorder %s299, 16
          %s301 = scalar_select %p300, %s299, 16
          %s302 = smul.u32 64, %s301
          %s303 = smul.u32 %s302, 4
        $region44: #{tpu_custom_call.1} parent=39 // pred_fallthru
          _
        // Predicated region
        $region45: #{tpu_custom_call.1} parent=39 // pred_check
          %p304 = pneg %p83
        $region46: #{tpu_custom_call.1} parent=39 // pred_check_branch
          %306 = sbr.rel (%p304) target = $region48
        $region47: #{tpu_custom_call.1} parent=39 // pred_region
          %s307 = sadd.s32 %s25, 1
          %s308 = smul.u32 %s307, 4
          %s309 = smul.u32 4, %s308
          %p310 = scmp.lt.s32.totalorder %s24, 1
          %s311 = scalar_select %p310, %s24, 1
          %p312 = scmp.lt.s32.totalorder %s309, 19
          %s313 = scalar_select %p312, %s309, 19
          %s314 = smul.addr %s313, 4
          %s315 = smul.addr %s311, 80
          %s316 = sadd.s32 %s314, %s315
          %s317 = smul.addr %s316, 4
          %s318 = scalar_lea.vmem %s1, %s317
          %s319 = sadd.s32 %s25, 1
          %s320 = smul.u32 %s319, 4
          %s321 = smul.u32 4, %s320
        $region48: #{tpu_custom_call.1} parent=39 // pred_fallthru
          _
      $region40: #{tpu_custom_call.1} parent=5 // pred_fallthru
        _
      %p322 = scmp.le.s32.totalorder 1, %s17
      %p323 = scmp.lt.s32.totalorder %s17, 3
      %p324 = pnand %p322, %p323
      %p325 = pneg %p324
      // Predicated region
      $region49: #{tpu_custom_call.1} parent=5 // pred_check
        _
      $region50: #{tpu_custom_call.1} parent=5 // pred_check_branch
        %327 = sbr.rel (%p324) target = $region52
      $region51: #{tpu_custom_call.1} parent=5 // pred_region
        %s328 = ssub.s32 %s17, 1
        %s329 = smul.u32 16, %s27
        %s330 = ssub.s32 20, %s329
        %p331 = scmp.lt.s32.totalorder %s330, 16
        %s332 = scalar_select %p331, %s330, 16
        %s333 = smul.u32 64, %s332
        %s334 = smul.u32 %s333, 4
        %p335 = scmp.lt.s32.totalorder %s26, 1
        %s336 = scalar_select %p335, %s26, 1
        %p337 = scmp.lt.s32.totalorder %s329, 19
        %s338 = scalar_select %p337, %s329, 19
        %s339 = smul.addr %s338, 4
        %s340 = smul.addr %s336, 80
        %s341 = sadd.s32 %s339, %s340
        %s342 = smul.addr %s341, 4
        %s343 = scalar_lea.vmem %s0, %s342
        %p344 = pneg %p57
        %p345 = pneg %p54
        %s346 = sadd.s32 %s27, 1
        %s347 = smul.u32 %s346, 4
        %s348 = smul.u32 4, %s347
        %p349 = scmp.lt.s32.totalorder %s26, 1
        %s350 = scalar_select %p349, %s26, 1
        %p351 = scmp.lt.s32.totalorder %s348, 19
        %s352 = scalar_select %p351, %s348, 19
        %s353 = smul.addr %s352, 4
        %s354 = smul.addr %s350, 80
        %s355 = sadd.s32 %s353, %s354
        %s356 = smul.addr %s355, 4
        %s357 = scalar_lea.vmem %s1, %s356
        %p358 = pneg %p89
        %p359 = pneg %p86
        %p360 = pneg %p110
        %p361 = pneg %p107
        %p362 = pneg %p131
        %p363 = pneg %p128
        %p364 = pneg %p152
        %p365 = pneg %p149
        %p366 = pneg %p173
        %p367 = pneg %p170
        %p368 = pneg %p194
        %p369 = pneg %p191
        %p370 = pneg %p215
        %p371 = pneg %p212
        %p372 = pneg %p243
        %p373 = pneg %p240
        %s374 = sand.u32 %s230, 1
        %s375 = scalar_lea.sflag [#allocation5], %s374
        %s376 = sand.u32 %s230, 1
        %s377 = smul.addr %s376, 128
        %s378 = scalar_lea.vmem [#allocation4], %s377
        %s379 = smul.u32 16, %s27
        %s380 = ssub.s32 20, %s379
        %p381 = scmp.lt.s32.totalorder %s380, 16
        %s382 = scalar_select %p381, %s380, 16
        %s383 = smul.u32 64, %s382
        %s384 = smul.u32 %s383, 4
        %p385 = scmp.lt.s32.totalorder %s26, 1
        %s386 = scalar_select %p385, %s26, 1
        %p387 = scmp.lt.s32.totalorder %s379, 19
        %s388 = scalar_select %p387, %s379, 19
        %s389 = smul.addr %s388, 4
        %s390 = smul.addr %s386, 80
        %s391 = sadd.s32 %s389, %s390
        %s392 = smul.addr %s391, 4
        %s393 = scalar_lea.vmem %s0, %s392
        %s394 = smul.u32 16, %s27
        %s395 = ssub.s32 20, %s394
        %p396 = scmp.lt.s32.totalorder %s395, 16
        %s397 = scalar_select %p396, %s395, 16
        %s398 = smul.u32 64, %s397
        %s399 = smul.u32 %s398, 4
        %s400 = sadd.s32 %s27, 1
        %s401 = smul.u32 %s400, 4
        %s402 = smul.u32 4, %s401
        %p403 = scmp.lt.s32.totalorder %s26, 1
        %s404 = scalar_select %p403, %s26, 1
        %p405 = scmp.lt.s32.totalorder %s402, 19
        %s406 = scalar_select %p405, %s402, 19
        %s407 = smul.addr %s406, 4
        %s408 = smul.addr %s404, 80
        %s409 = sadd.s32 %s407, %s408
        %s410 = smul.addr %s409, 4
        %s411 = scalar_lea.vmem %s1, %s410
        %s412 = sadd.s32 %s27, 1
        %s413 = smul.u32 %s412, 4
        %s414 = smul.u32 4, %s413
        %s415 = smul.u32 16, %s27
        %v417 = vld [vmem:[%s393] sm:$0xf]
        %v418 = vld [vmem:[%s393 + $0x4] sm:$0xf]
        %v419 = vld [vmem:[%s393 + $0x8] sm:$0xf]
        %v420 = vld [vmem:[%s393 + $0xc] sm:$0x1]
        %v421 = vld [vmem:[%s393 + $0x10] sm:$0xf]
        %v422 = vld [vmem:[%s393 + $0x14] sm:$0xf]
        %v423 = vld [vmem:[%s393 + $0x18] sm:$0xf]
        %v424 = vld [vmem:[%s393 + $0x1c] sm:$0x1]
        %v425 = vld [vmem:[%s393 + $0x20] sm:$0xf]
        %v426 = vld [vmem:[%s393 + $0x24] sm:$0xf]
        %v427 = vld [vmem:[%s393 + $0x28] sm:$0xf]
        %v428 = vld [vmem:[%s393 + $0x2c] sm:$0x1]
        %v429 = vld [vmem:[%s393 + $0x30] sm:$0xf]
        %v430 = vld [vmem:[%s393 + $0x34] sm:$0xf]
        %v431 = vld [vmem:[%s393 + $0x38] sm:$0xf]
        %v432 = vld [vmem:[%s393 + $0x3c] sm:$0x1]
        %v433 = vld [vmem:[%s393 + $0x40] sm:$0xf]
        %v434 = vld [vmem:[%s393 + $0x44] sm:$0xf]
        %v435 = vld [vmem:[%s393 + $0x48] sm:$0xf]
        %v436 = vld [vmem:[%s393 + $0x4c] sm:$0x1]
        %v437 = vld [vmem:[%s393 + $0x50] sm:$0xf]
        %v438 = vld [vmem:[%s393 + $0x54] sm:$0xf]
        %v439 = vld [vmem:[%s393 + $0x58] sm:$0xf]
        %v440 = vld [vmem:[%s393 + $0x5c] sm:$0x1]
        %v441 = vld [vmem:[%s393 + $0x60] sm:$0xf]
        %v442 = vld [vmem:[%s393 + $0x64] sm:$0xf]
        %v443 = vld [vmem:[%s393 + $0x68] sm:$0xf]
        %v444 = vld [vmem:[%s393 + $0x6c] sm:$0x1]
        %v445 = vld [vmem:[%s393 + $0x70] sm:$0xf]
        %v446 = vld [vmem:[%s393 + $0x74] sm:$0xf]
        %v447 = vld [vmem:[%s393 + $0x78] sm:$0xf]
        %v448 = vld [vmem:[%s393 + $0x7c] sm:$0x1]
        %v449 = vld [vmem:[%s393 + $0x80] sm:$0xf]
        %v450 = vld [vmem:[%s393 + $0x84] sm:$0xf]
        %v451 = vld [vmem:[%s393 + $0x88] sm:$0xf]
        %v452 = vld [vmem:[%s393 + $0x8c] sm:$0x1]
        %v453 = vld [vmem:[%s393 + $0x90] sm:$0xf]
        %v454 = vld [vmem:[%s393 + $0x94] sm:$0xf]
        %v455 = vld [vmem:[%s393 + $0x98] sm:$0xf]
        %v456 = vld [vmem:[%s393 + $0x9c] sm:$0x1]
        %v457 = vld [vmem:[%s393 + $0xa0] sm:$0xf]
        %v458 = vld [vmem:[%s393 + $0xa4] sm:$0xf]
        %v459 = vld [vmem:[%s393 + $0xa8] sm:$0xf]
        %v460 = vld [vmem:[%s393 + $0xac] sm:$0x1]
        %v461 = vld [vmem:[%s393 + $0xb0] sm:$0xf]
        %v462 = vld [vmem:[%s393 + $0xb4] sm:$0xf]
        %v463 = vld [vmem:[%s393 + $0xb8] sm:$0xf]
        %v464 = vld [vmem:[%s393 + $0xbc] sm:$0x1]
        %v465 = vld [vmem:[%s393 + $0xc0] sm:$0xf]
        %v466 = vld [vmem:[%s393 + $0xc4] sm:$0xf]
        %v467 = vld [vmem:[%s393 + $0xc8] sm:$0xf]
        %v468 = vld [vmem:[%s393 + $0xcc] sm:$0x1]
        %v469 = vld [vmem:[%s393 + $0xd0] sm:$0xf]
        %v470 = vld [vmem:[%s393 + $0xd4] sm:$0xf]
        %v471 = vld [vmem:[%s393 + $0xd8] sm:$0xf]
        %v472 = vld [vmem:[%s393 + $0xdc] sm:$0x1]
        %v473 = vld [vmem:[%s393 + $0xe0] sm:$0xf]
        %v474 = vld [vmem:[%s393 + $0xe4] sm:$0xf]
        %v475 = vld [vmem:[%s393 + $0xe8] sm:$0xf]
        %v476 = vld [vmem:[%s393 + $0xec] sm:$0x1]
        %v477 = vld [vmem:[%s393 + $0xf0] sm:$0xf]
        %v478 = vld [vmem:[%s393 + $0xf4] sm:$0xf]
        %v479 = vld [vmem:[%s393 + $0xf8] sm:$0xf]
        %v480 = vld [vmem:[%s393 + $0xfc] sm:$0x1]
        %481 = vst [vmem:[#allocation2] sm:$0xf] %v417
        %482 = vst [vmem:[#allocation2 + $0x4] sm:$0xf] %v418
        %483 = vst [vmem:[#allocation2 + $0x8] sm:$0xf] %v419
        %484 = vst [vmem:[#allocation2 + $0xc] sm:$0x1] %v420
        %485 = vst [vmem:[#allocation2 + $0x10] sm:$0xf] %v421
        %486 = vst [vmem:[#allocation2 + $0x14] sm:$0xf] %v422
        %487 = vst [vmem:[#allocation2 + $0x18] sm:$0xf] %v423
        %488 = vst [vmem:[#allocation2 + $0x1c] sm:$0x1] %v424
        %489 = vst [vmem:[#allocation2 + $0x20] sm:$0xf] %v425
        %490 = vst [vmem:[#allocation2 + $0x24] sm:$0xf] %v426
        %491 = vst [vmem:[#allocation2 + $0x28] sm:$0xf] %v427
        %492 = vst [vmem:[#allocation2 + $0x2c] sm:$0x1] %v428
        %493 = vst [vmem:[#allocation2 + $0x30] sm:$0xf] %v429
        %494 = vst [vmem:[#allocation2 + $0x34] sm:$0xf] %v430
        %495 = vst [vmem:[#allocation2 + $0x38] sm:$0xf] %v431
        %496 = vst [vmem:[#allocation2 + $0x3c] sm:$0x1] %v432
        %497 = vst [vmem:[#allocation2 + $0x40] sm:$0xf] %v433
        %498 = vst [vmem:[#allocation2 + $0x44] sm:$0xf] %v434
        %499 = vst [vmem:[#allocation2 + $0x48] sm:$0xf] %v435
        %500 = vst [vmem:[#allocation2 + $0x4c] sm:$0x1] %v436
        %501 = vst [vmem:[#allocation2 + $0x50] sm:$0xf] %v437
        %502 = vst [vmem:[#allocation2 + $0x54] sm:$0xf] %v438
        %503 = vst [vmem:[#allocation2 + $0x58] sm:$0xf] %v439
        %504 = vst [vmem:[#allocation2 + $0x5c] sm:$0x1] %v440
        %505 = vst [vmem:[#allocation2 + $0x60] sm:$0xf] %v441
        %506 = vst [vmem:[#allocation2 + $0x64] sm:$0xf] %v442
        %507 = vst [vmem:[#allocation2 + $0x68] sm:$0xf] %v443
        %508 = vst [vmem:[#allocation2 + $0x6c] sm:$0x1] %v444
        %509 = vst [vmem:[#allocation2 + $0x70] sm:$0xf] %v445
        %510 = vst [vmem:[#allocation2 + $0x74] sm:$0xf] %v446
        %511 = vst [vmem:[#allocation2 + $0x78] sm:$0xf] %v447
        %512 = vst [vmem:[#allocation2 + $0x7c] sm:$0x1] %v448
        %513 = vst [vmem:[#allocation2 + $0x80] sm:$0xf] %v449
        %514 = vst [vmem:[#allocation2 + $0x84] sm:$0xf] %v450
        %515 = vst [vmem:[#allocation2 + $0x88] sm:$0xf] %v451
        %516 = vst [vmem:[#allocation2 + $0x8c] sm:$0x1] %v452
        %517 = vst [vmem:[#allocation2 + $0x90] sm:$0xf] %v453
        %518 = vst [vmem:[#allocation2 + $0x94] sm:$0xf] %v454
        %519 = vst [vmem:[#allocation2 + $0x98] sm:$0xf] %v455
        %520 = vst [vmem:[#allocation2 + $0x9c] sm:$0x1] %v456
        %521 = vst [vmem:[#allocation2 + $0xa0] sm:$0xf] %v457
        %522 = vst [vmem:[#allocation2 + $0xa4] sm:$0xf] %v458
        %523 = vst [vmem:[#allocation2 + $0xa8] sm:$0xf] %v459
        %524 = vst [vmem:[#allocation2 + $0xac] sm:$0x1] %v460
        %525 = vst [vmem:[#allocation2 + $0xb0] sm:$0xf] %v461
        %526 = vst [vmem:[#allocation2 + $0xb4] sm:$0xf] %v462
        %527 = vst [vmem:[#allocation2 + $0xb8] sm:$0xf] %v463
        %528 = vst [vmem:[#allocation2 + $0xbc] sm:$0x1] %v464
        %529 = vst [vmem:[#allocation2 + $0xc0] sm:$0xf] %v465
        %530 = vst [vmem:[#allocation2 + $0xc4] sm:$0xf] %v466
        %531 = vst [vmem:[#allocation2 + $0xc8] sm:$0xf] %v467
        %532 = vst [vmem:[#allocation2 + $0xcc] sm:$0x1] %v468
        %533 = vst [vmem:[#allocation2 + $0xd0] sm:$0xf] %v469
        %534 = vst [vmem:[#allocation2 + $0xd4] sm:$0xf] %v470
        %535 = vst [vmem:[#allocation2 + $0xd8] sm:$0xf] %v471
        %536 = vst [vmem:[#allocation2 + $0xdc] sm:$0x1] %v472
        %537 = vst [vmem:[#allocation2 + $0xe0] sm:$0xf] %v473
        %538 = vst [vmem:[#allocation2 + $0xe4] sm:$0xf] %v474
        %539 = vst [vmem:[#allocation2 + $0xe8] sm:$0xf] %v475
        %540 = vst [vmem:[#allocation2 + $0xec] sm:$0x1] %v476
        %541 = vst [vmem:[#allocation2 + $0xf0] sm:$0xf] %v477
        %542 = vst [vmem:[#allocation2 + $0xf4] sm:$0xf] %v478
        %543 = vst [vmem:[#allocation2 + $0xf8] sm:$0xf] %v479
        %544 = vst [vmem:[#allocation2 + $0xfc] sm:$0x1] %v480
        %v545 = vld [vmem:[%s411] sm:$0xf]
        %v546 = vld [vmem:[%s411 + $0x4] sm:$0xf]
        %v547 = vld [vmem:[%s411 + $0x8] sm:$0xf]
        %v548 = vld [vmem:[%s411 + $0xc] sm:$0x1]
        %v549 = vld [vmem:[%s411 + $0x10] sm:$0xf]
        %v550 = vld [vmem:[%s411 + $0x14] sm:$0xf]
        %v551 = vld [vmem:[%s411 + $0x18] sm:$0xf]
        %v552 = vld [vmem:[%s411 + $0x1c] sm:$0x1]
        %v553 = vld [vmem:[%s411 + $0x20] sm:$0xf]
        %v554 = vld [vmem:[%s411 + $0x24] sm:$0xf]
        %v555 = vld [vmem:[%s411 + $0x28] sm:$0xf]
        %v556 = vld [vmem:[%s411 + $0x2c] sm:$0x1]
        %v557 = vld [vmem:[%s411 + $0x30] sm:$0xf]
        %v558 = vld [vmem:[%s411 + $0x34] sm:$0xf]
        %v559 = vld [vmem:[%s411 + $0x38] sm:$0xf]
        %v560 = vld [vmem:[%s411 + $0x3c] sm:$0x1]
        %s561 = scalar_lea.vmem [#allocation2], 256
        %562 = vst [vmem:[%s561] sm:$0xf] %v545
        %563 = vst [vmem:[%s561 + $0x4] sm:$0xf] %v546
        %564 = vst [vmem:[%s561 + $0x8] sm:$0xf] %v547
        %565 = vst [vmem:[%s561 + $0xc] sm:$0x1] %v548
        %566 = vst [vmem:[%s561 + $0x10] sm:$0xf] %v549
        %567 = vst [vmem:[%s561 + $0x14] sm:$0xf] %v550
        %568 = vst [vmem:[%s561 + $0x18] sm:$0xf] %v551
        %569 = vst [vmem:[%s561 + $0x1c] sm:$0x1] %v552
        %570 = vst [vmem:[%s561 + $0x20] sm:$0xf] %v553
        %571 = vst [vmem:[%s561 + $0x24] sm:$0xf] %v554
        %572 = vst [vmem:[%s561 + $0x28] sm:$0xf] %v555
        %573 = vst [vmem:[%s561 + $0x2c] sm:$0x1] %v556
        %574 = vst [vmem:[%s561 + $0x30] sm:$0xf] %v557
        %575 = vst [vmem:[%s561 + $0x34] sm:$0xf] %v558
        %576 = vst [vmem:[%s561 + $0x38] sm:$0xf] %v559
        %577 = vst [vmem:[%s561 + $0x3c] sm:$0x1] %v560
        %v578 = vld [vmem:[%s3] sm:$0x1]
        %v580 = vlaneseq
        %v581 = vshrl.u32 %v580, 7
        %v582 = vsub.s32 0, %v581
        %v583 = vrot.slane %v578, %v582
        %585 = vst [vmem:[#allocation3] sm:$0xff] %v583
        %586 = vst [vmem:[#allocation3 + $0x8] sm:$0xff] %v583
        %587 = vst [vmem:[#allocation3 + $0x10] sm:$0xff] %v583
        %588 = vst [vmem:[#allocation3 + $0x18] sm:$0xff] %v583
        %589 = vst [vmem:[#allocation3 + $0x20] sm:$0xff] %v583
        %590 = vst [vmem:[#allocation3 + $0x28] sm:$0xff] %v583
        %591 = vst [vmem:[#allocation3 + $0x30] sm:$0xff] %v583
        %592 = vst [vmem:[#allocation3 + $0x38] sm:$0xff] %v583
        %593 = vst [vmem:[#allocation3 + $0x40] sm:$0xff] %v583
        %594 = vst [vmem:[#allocation3 + $0x48] sm:$0xff] %v583
        %595 = vst [vmem:[#allocation3 + $0x50] sm:$0xff] %v583
        %596 = vst [vmem:[#allocation3 + $0x58] sm:$0xff] %v583
        %597 = vst [vmem:[#allocation3 + $0x60] sm:$0xff] %v583
        %598 = vst [vmem:[#allocation3 + $0x68] sm:$0xff] %v583
        %599 = vst [vmem:[#allocation3 + $0x70] sm:$0xff] %v583
        %600 = vst [vmem:[#allocation3 + $0x78] sm:$0xff] %v583
        %601 = vst [vmem:[#allocation3 + $0x80] sm:$0xff] %v583
        %602 = vst [vmem:[#allocation3 + $0x88] sm:$0xff] %v583
        %603 = vst [vmem:[#allocation3 + $0x90] sm:$0xff] %v583
        %604 = vst [vmem:[#allocation3 + $0x98] sm:$0xff] %v583
        %605 = vst [vmem:[#allocation3 + $0xa0] sm:$0xff] %v583
        %606 = vst [vmem:[#allocation3 + $0xa8] sm:$0xff] %v583
        %607 = vst [vmem:[#allocation3 + $0xb0] sm:$0xff] %v583
        %608 = vst [vmem:[#allocation3 + $0xb8] sm:$0xff] %v583
        %609 = vst [vmem:[#allocation3 + $0xc0] sm:$0xff] %v583
        %610 = vst [vmem:[#allocation3 + $0xc8] sm:$0xff] %v583
        %611 = vst [vmem:[#allocation3 + $0xd0] sm:$0xff] %v583
        %612 = vst [vmem:[#allocation3 + $0xd8] sm:$0xff] %v583
        %613 = vst [vmem:[#allocation3 + $0xe0] sm:$0xff] %v583
        %614 = vst [vmem:[#allocation3 + $0xe8] sm:$0xff] %v583
        %615 = vst [vmem:[#allocation3 + $0xf0] sm:$0xff] %v583
        %616 = vst [vmem:[#allocation3 + $0xf8] sm:$0xff] %v583
        %617 = vst [vmem:[#allocation3 + $0x100] sm:$0xff] %v583
        %618 = vst [vmem:[#allocation3 + $0x108] sm:$0xff] %v583
        %619 = vst [vmem:[#allocation3 + $0x110] sm:$0xff] %v583
        %620 = vst [vmem:[#allocation3 + $0x118] sm:$0xff] %v583
        %621 = vst [vmem:[#allocation3 + $0x120] sm:$0xff] %v583
        %622 = vst [vmem:[#allocation3 + $0x128] sm:$0xff] %v583
        %623 = vst [vmem:[#allocation3 + $0x130] sm:$0xff] %v583
        %624 = vst [vmem:[#allocation3 + $0x138] sm:$0xff] %v583
        %625 = vst [vmem:[#allocation3 + $0x140] sm:$0xff] %v583
        %626 = vst [vmem:[#allocation3 + $0x148] sm:$0xff] %v583
        %627 = vst [vmem:[#allocation3 + $0x150] sm:$0xff] %v583
        %628 = vst [vmem:[#allocation3 + $0x158] sm:$0xff] %v583
        %629 = vst [vmem:[#allocation3 + $0x160] sm:$0xff] %v583
        %630 = vst [vmem:[#allocation3 + $0x168] sm:$0xff] %v583
        %631 = vst [vmem:[#allocation3 + $0x170] sm:$0xff] %v583
        %632 = vst [vmem:[#allocation3 + $0x178] sm:$0xff] %v583
        %633 = vst [vmem:[#allocation3 + $0x180] sm:$0xff] %v583
        %634 = vst [vmem:[#allocation3 + $0x188] sm:$0xff] %v583
        %635 = vst [vmem:[#allocation3 + $0x190] sm:$0xff] %v583
        %636 = vst [vmem:[#allocation3 + $0x198] sm:$0xff] %v583
        %637 = vst [vmem:[#allocation3 + $0x1a0] sm:$0xff] %v583
        %638 = vst [vmem:[#allocation3 + $0x1a8] sm:$0xff] %v583
        %v639 = vld [vmem:[#allocation2] sm:$0xf]
        %v640 = vld [vmem:[#allocation2 + $0x4] sm:$0xf]
        %v641 = vld [vmem:[#allocation2 + $0x8] sm:$0xf]
        %v642 = vld [vmem:[#allocation2 + $0x10] sm:$0xf]
        %v643 = vld [vmem:[#allocation2 + $0x14] sm:$0xf]
        %v644 = vld [vmem:[#allocation2 + $0x18] sm:$0xf]
        %v645 = vld [vmem:[#allocation2 + $0x20] sm:$0xf]
        %v646 = vld [vmem:[#allocation2 + $0x24] sm:$0xf]
        %v647 = vld [vmem:[#allocation2 + $0x28] sm:$0xf]
        %v648 = vld [vmem:[#allocation2 + $0x30] sm:$0xf]
        %v649 = vld [vmem:[#allocation2 + $0x34] sm:$0xf]
        %v650 = vld [vmem:[#allocation2 + $0x38] sm:$0xf]
        %v651 = vld [vmem:[#allocation2 + $0x40] sm:$0xf]
        %v652 = vld [vmem:[#allocation2 + $0x44] sm:$0xf]
        %v653 = vld [vmem:[#allocation2 + $0x48] sm:$0xf]
        %v654 = vld [vmem:[#allocation2 + $0x50] sm:$0xf]
        %v655 = vld [vmem:[#allocation2 + $0x54] sm:$0xf]
        %v656 = vld [vmem:[#allocation2 + $0x58] sm:$0xf]
        %v657 = vld [vmem:[#allocation2 + $0x60] sm:$0xf]
        %v658 = vld [vmem:[#allocation2 + $0x64] sm:$0xf]
        %v659 = vld [vmem:[#allocation2 + $0x68] sm:$0xf]
        %v660 = vld [vmem:[#allocation2 + $0x70] sm:$0xf]
        %v661 = vld [vmem:[#allocation2 + $0x74] sm:$0xf]
        %v662 = vld [vmem:[#allocation2 + $0x78] sm:$0xf]
        %v663 = vld [vmem:[#allocation2 + $0x80] sm:$0xf]
        %v664 = vld [vmem:[#allocation2 + $0x84] sm:$0xf]
        %v665 = vld [vmem:[#allocation2 + $0x88] sm:$0xf]
        %v666 = vld [vmem:[#allocation2 + $0x90] sm:$0xf]
        %v667 = vld [vmem:[#allocation2 + $0x94] sm:$0xf]
        %v668 = vld [vmem:[#allocation2 + $0x98] sm:$0xf]
        %v669 = vld [vmem:[#allocation2 + $0xa0] sm:$0xf]
        %v670 = vld [vmem:[#allocation2 + $0xa4] sm:$0xf]
        %v671 = vld [vmem:[#allocation2 + $0xa8] sm:$0xf]
        %v672 = vld [vmem:[#allocation2 + $0xb0] sm:$0xf]
        %v673 = vld [vmem:[#allocation2 + $0xb4] sm:$0xf]
        %v674 = vld [vmem:[#allocation2 + $0xb8] sm:$0xf]
        %v675 = vld [vmem:[#allocation2 + $0xc0] sm:$0xf]
        %v676 = vld [vmem:[#allocation2 + $0xc4] sm:$0xf]
        %v677 = vld [vmem:[#allocation2 + $0xc8] sm:$0xf]
        %v678 = vld [vmem:[#allocation2 + $0xd0] sm:$0xf]
        %v679 = vld [vmem:[#allocation2 + $0xd4] sm:$0xf]
        %v680 = vld [vmem:[#allocation2 + $0xd8] sm:$0xf]
        %v681 = vld [vmem:[#allocation2 + $0xe0] sm:$0xf]
        %v682 = vld [vmem:[#allocation2 + $0xe4] sm:$0xf]
        %v683 = vld [vmem:[#allocation2 + $0xe8] sm:$0xf]
        %v684 = vld [vmem:[#allocation2 + $0xf0] sm:$0xf]
        %v685 = vld [vmem:[#allocation2 + $0xf4] sm:$0xf]
        %v686 = vld [vmem:[#allocation2 + $0xf8] sm:$0xf]
        %v687 = vld [vmem:[#allocation2 + $0x100] sm:$0xf]
        %v688 = vld [vmem:[#allocation2 + $0x104] sm:$0xf]
        %v689 = vld [vmem:[#allocation2 + $0x108] sm:$0xf]
        %v690 = vld [vmem:[#allocation2 + $0x110] sm:$0xf]
        %v691 = vld [vmem:[#allocation2 + $0x114] sm:$0xf]
        %v692 = vld [vmem:[#allocation2 + $0x118] sm:$0xf]
        %v693 = vld [vmem:[#allocation2 + $0xc] sm:$0x1]
        %v694 = vld [vmem:[#allocation2 + $0x1c] sm:$0x1]
        %v695 = vld [vmem:[#allocation2 + $0x2c] sm:$0x1]
        %v696 = vld [vmem:[#allocation2 + $0x3c] sm:$0x1]
        %v697 = vld [vmem:[#allocation2 + $0x4c] sm:$0x1]
        %v698 = vld [vmem:[#allocation2 + $0x5c] sm:$0x1]
        %v699 = vld [vmem:[#allocation2 + $0x6c] sm:$0x1]
        %v700 = vld [vmem:[#allocation2 + $0x7c] sm:$0x1]
        %v701 = vld [vmem:[#allocation2 + $0x8c] sm:$0x1]
        %v702 = vld [vmem:[#allocation2 + $0x9c] sm:$0x1]
        %v703 = vld [vmem:[#allocation2 + $0xac] sm:$0x1]
        %v704 = vld [vmem:[#allocation2 + $0xbc] sm:$0x1]
        %v705 = vld [vmem:[#allocation2 + $0xcc] sm:$0x1]
        %v706 = vld [vmem:[#allocation2 + $0xdc] sm:$0x1]
        %v707 = vld [vmem:[#allocation2 + $0xec] sm:$0x1]
        %v708 = vld [vmem:[#allocation2 + $0xfc] sm:$0x1]
        %v709 = vld [vmem:[#allocation2 + $0x10c] sm:$0x1]
        %v710 = vld [vmem:[#allocation2 + $0x11c] sm:$0x1]
        %vm711 = vsmask.f32 3328
        %vm712 = vsmask.f32 7440
        %vm713 = vmor %vm711, %vm712
        %v715 = vshrl.u32 %v639, 16
        %v717 = vrot.slane %v715, 4
        %v718 = vshll.u32 %v639, 16
        %v720 = vrot.slane %v718, 5
        %v721 = vor.u32 %v717, %v720
        %v722 = vrot.slane %v721, 4
        %v724 = vshll.u32 %v640, 16
        %v726 = vrot.slane %v724, 5
        %v727 = vsel %vm713, %v722, %v726
        %v728 = vshrl.u32 %v640, 16
        %v730 = vrot.slane %v728, 4
        %v731 = vor.u32 %v730, %v726
        %v732 = vrot.slane %v731, 4
        %v734 = vshll.u32 %v641, 16
        %v736 = vrot.slane %v734, 5
        %v737 = vsel %vm713, %v732, %v736
        %v738 = vshrl.u32 %v641, 16
        %v740 = vrot.slane %v738, 4
        %v741 = vor.u32 %v740, %v736
        %v742 = vrot.slane %v741, 4
        %v744 = vshll.u32 %v693, 16
        %v746 = vrot.slane %v744, 5
        %v747 = vsel %vm713, %v742, %v746
        %v749 = vshrl.u32 %v642, 16
        %v751 = vrot.slane %v749, 4
        %v752 = vshll.u32 %v642, 16
        %v754 = vrot.slane %v752, 5
        %v755 = vor.u32 %v751, %v754
        %v756 = vrot.slane %v755, 4
        %v758 = vshll.u32 %v643, 16
        %v760 = vrot.slane %v758, 5
        %v761 = vsel %vm713, %v756, %v760
        %v762 = vshrl.u32 %v643, 16
        %v764 = vrot.slane %v762, 4
        %v765 = vor.u32 %v764, %v760
        %v766 = vrot.slane %v765, 4
        %v768 = vshll.u32 %v644, 16
        %v770 = vrot.slane %v768, 5
        %v771 = vsel %vm713, %v766, %v770
        %v772 = vshrl.u32 %v644, 16
        %v774 = vrot.slane %v772, 4
        %v775 = vor.u32 %v774, %v770
        %v776 = vrot.slane %v775, 4
        %v778 = vshll.u32 %v694, 16
        %v780 = vrot.slane %v778, 5
        %v781 = vsel %vm713, %v776, %v780
        %v783 = vshrl.u32 %v645, 16
        %v785 = vrot.slane %v783, 4
        %v786 = vshll.u32 %v645, 16
        %v788 = vrot.slane %v786, 5
        %v789 = vor.u32 %v785, %v788
        %v790 = vrot.slane %v789, 4
        %v792 = vshll.u32 %v646, 16
        %v794 = vrot.slane %v792, 5
        %v795 = vsel %vm713, %v790, %v794
        %v796 = vshrl.u32 %v646, 16
        %v798 = vrot.slane %v796, 4
        %v799 = vor.u32 %v798, %v794
        %v800 = vrot.slane %v799, 4
        %v802 = vshll.u32 %v647, 16
        %v804 = vrot.slane %v802, 5
        %v805 = vsel %vm713, %v800, %v804
        %v806 = vshrl.u32 %v647, 16
        %v808 = vrot.slane %v806, 4
        %v809 = vor.u32 %v808, %v804
        %v810 = vrot.slane %v809, 4
        %v812 = vshll.u32 %v695, 16
        %v814 = vrot.slane %v812, 5
        %v815 = vsel %vm713, %v810, %v814
        %v817 = vshrl.u32 %v648, 16
        %v819 = vrot.slane %v817, 4
        %v820 = vshll.u32 %v648, 16
        %v822 = vrot.slane %v820, 5
        %v823 = vor.u32 %v819, %v822
        %v824 = vrot.slane %v823, 4
        %v826 = vshll.u32 %v649, 16
        %v828 = vrot.slane %v826, 5
        %v829 = vsel %vm713, %v824, %v828
        %v830 = vshrl.u32 %v649, 16
        %v832 = vrot.slane %v830, 4
        %v833 = vor.u32 %v832, %v828
        %v834 = vrot.slane %v833, 4
        %v836 = vshll.u32 %v650, 16
        %v838 = vrot.slane %v836, 5
        %v839 = vsel %vm713, %v834, %v838
        %v840 = vshrl.u32 %v650, 16
        %v842 = vrot.slane %v840, 4
        %v843 = vor.u32 %v842, %v838
        %v844 = vrot.slane %v843, 4
        %v846 = vshll.u32 %v696, 16
        %v848 = vrot.slane %v846, 5
        %v849 = vsel %vm713, %v844, %v848
        %v851 = vshrl.u32 %v651, 16
        %v853 = vrot.slane %v851, 4
        %v854 = vshll.u32 %v651, 16
        %v856 = vrot.slane %v854, 5
        %v857 = vor.u32 %v853, %v856
        %v858 = vrot.slane %v857, 4
        %v860 = vshll.u32 %v652, 16
        %v862 = vrot.slane %v860, 5
        %v863 = vsel %vm713, %v858, %v862
        %v864 = vshrl.u32 %v652, 16
        %v866 = vrot.slane %v864, 4
        %v867 = vor.u32 %v866, %v862
        %v868 = vrot.slane %v867, 4
        %v870 = vshll.u32 %v653, 16
        %v872 = vrot.slane %v870, 5
        %v873 = vsel %vm713, %v868, %v872
        %v874 = vshrl.u32 %v653, 16
        %v876 = vrot.slane %v874, 4
        %v877 = vor.u32 %v876, %v872
        %v878 = vrot.slane %v877, 4
        %v880 = vshll.u32 %v697, 16
        %v882 = vrot.slane %v880, 5
        %v883 = vsel %vm713, %v878, %v882
        %v885 = vshrl.u32 %v654, 16
        %v887 = vrot.slane %v885, 4
        %v888 = vshll.u32 %v654, 16
        %v890 = vrot.slane %v888, 5
        %v891 = vor.u32 %v887, %v890
        %v892 = vrot.slane %v891, 4
        %v894 = vshll.u32 %v655, 16
        %v896 = vrot.slane %v894, 5
        %v897 = vsel %vm713, %v892, %v896
        %v898 = vshrl.u32 %v655, 16
        %v900 = vrot.slane %v898, 4
        %v901 = vor.u32 %v900, %v896
        %v902 = vrot.slane %v901, 4
        %v904 = vshll.u32 %v656, 16
        %v906 = vrot.slane %v904, 5
        %v907 = vsel %vm713, %v902, %v906
        %v908 = vshrl.u32 %v656, 16
        %v910 = vrot.slane %v908, 4
        %v911 = vor.u32 %v910, %v906
        %v912 = vrot.slane %v911, 4
        %v914 = vshll.u32 %v698, 16
        %v916 = vrot.slane %v914, 5
        %v917 = vsel %vm713, %v912, %v916
        %v919 = vshrl.u32 %v657, 16
        %v921 = vrot.slane %v919, 4
        %v922 = vshll.u32 %v657, 16
        %v924 = vrot.slane %v922, 5
        %v925 = vor.u32 %v921, %v924
        %v926 = vrot.slane %v925, 4
        %v928 = vshll.u32 %v658, 16
        %v930 = vrot.slane %v928, 5
        %v931 = vsel %vm713, %v926, %v930
        %v932 = vshrl.u32 %v658, 16
        %v934 = vrot.slane %v932, 4
        %v935 = vor.u32 %v934, %v930
        %v936 = vrot.slane %v935, 4
        %v938 = vshll.u32 %v659, 16
        %v940 = vrot.slane %v938, 5
        %v941 = vsel %vm713, %v936, %v940
        %v942 = vshrl.u32 %v659, 16
        %v944 = vrot.slane %v942, 4
        %v945 = vor.u32 %v944, %v940
        %v946 = vrot.slane %v945, 4
        %v948 = vshll.u32 %v699, 16
        %v950 = vrot.slane %v948, 5
        %v951 = vsel %vm713, %v946, %v950
        %v953 = vshrl.u32 %v660, 16
        %v955 = vrot.slane %v953, 4
        %v956 = vshll.u32 %v660, 16
        %v958 = vrot.slane %v956, 5
        %v959 = vor.u32 %v955, %v958
        %v960 = vrot.slane %v959, 4
        %v962 = vshll.u32 %v661, 16
        %v964 = vrot.slane %v962, 5
        %v965 = vsel %vm713, %v960, %v964
        %v966 = vshrl.u32 %v661, 16
        %v968 = vrot.slane %v966, 4
        %v969 = vor.u32 %v968, %v964
        %v970 = vrot.slane %v969, 4
        %v972 = vshll.u32 %v662, 16
        %v974 = vrot.slane %v972, 5
        %v975 = vsel %vm713, %v970, %v974
        %v976 = vshrl.u32 %v662, 16
        %v978 = vrot.slane %v976, 4
        %v979 = vor.u32 %v978, %v974
        %v980 = vrot.slane %v979, 4
        %v982 = vshll.u32 %v700, 16
        %v984 = vrot.slane %v982, 5
        %v985 = vsel %vm713, %v980, %v984
        %v987 = vshrl.u32 %v663, 16
        %v989 = vrot.slane %v987, 4
        %v990 = vshll.u32 %v663, 16
        %v992 = vrot.slane %v990, 5
        %v993 = vor.u32 %v989, %v992
        %v994 = vrot.slane %v993, 4
        %v996 = vshll.u32 %v664, 16
        %v998 = vrot.slane %v996, 5
        %v999 = vsel %vm713, %v994, %v998
        %v1000 = vshrl.u32 %v664, 16
        %v1002 = vrot.slane %v1000, 4
        %v1003 = vor.u32 %v1002, %v998
        %v1004 = vrot.slane %v1003, 4
        %v1006 = vshll.u32 %v665, 16
        %v1008 = vrot.slane %v1006, 5
        %v1009 = vsel %vm713, %v1004, %v1008
        %v1010 = vshrl.u32 %v665, 16
        %v1012 = vrot.slane %v1010, 4
        %v1013 = vor.u32 %v1012, %v1008
        %v1014 = vrot.slane %v1013, 4
        %v1016 = vshll.u32 %v701, 16
        %v1018 = vrot.slane %v1016, 5
        %v1019 = vsel %vm713, %v1014, %v1018
        %v1021 = vshrl.u32 %v666, 16
        %v1023 = vrot.slane %v1021, 4
        %v1024 = vshll.u32 %v666, 16
        %v1026 = vrot.slane %v1024, 5
        %v1027 = vor.u32 %v1023, %v1026
        %v1028 = vrot.slane %v1027, 4
        %v1030 = vshll.u32 %v667, 16
        %v1032 = vrot.slane %v1030, 5
        %v1033 = vsel %vm713, %v1028, %v1032
        %v1034 = vshrl.u32 %v667, 16
        %v1036 = vrot.slane %v1034, 4
        %v1037 = vor.u32 %v1036, %v1032
        %v1038 = vrot.slane %v1037, 4
        %v1040 = vshll.u32 %v668, 16
        %v1042 = vrot.slane %v1040, 5
        %v1043 = vsel %vm713, %v1038, %v1042
        %v1044 = vshrl.u32 %v668, 16
        %v1046 = vrot.slane %v1044, 4
        %v1047 = vor.u32 %v1046, %v1042
        %v1048 = vrot.slane %v1047, 4
        %v1050 = vshll.u32 %v702, 16
        %v1052 = vrot.slane %v1050, 5
        %v1053 = vsel %vm713, %v1048, %v1052
        %v1055 = vshrl.u32 %v669, 16
        %v1057 = vrot.slane %v1055, 4
        %v1058 = vshll.u32 %v669, 16
        %v1060 = vrot.slane %v1058, 5
        %v1061 = vor.u32 %v1057, %v1060
        %v1062 = vrot.slane %v1061, 4
        %v1064 = vshll.u32 %v670, 16
        %v1066 = vrot.slane %v1064, 5
        %v1067 = vsel %vm713, %v1062, %v1066
        %v1068 = vshrl.u32 %v670, 16
        %v1070 = vrot.slane %v1068, 4
        %v1071 = vor.u32 %v1070, %v1066
        %v1072 = vrot.slane %v1071, 4
        %v1074 = vshll.u32 %v671, 16
        %v1076 = vrot.slane %v1074, 5
        %v1077 = vsel %vm713, %v1072, %v1076
        %v1078 = vshrl.u32 %v671, 16
        %v1080 = vrot.slane %v1078, 4
        %v1081 = vor.u32 %v1080, %v1076
        %v1082 = vrot.slane %v1081, 4
        %v1084 = vshll.u32 %v703, 16
        %v1086 = vrot.slane %v1084, 5
        %v1087 = vsel %vm713, %v1082, %v1086
        %v1089 = vshrl.u32 %v672, 16
        %v1091 = vrot.slane %v1089, 4
        %v1092 = vshll.u32 %v672, 16
        %v1094 = vrot.slane %v1092, 5
        %v1095 = vor.u32 %v1091, %v1094
        %v1096 = vrot.slane %v1095, 4
        %v1098 = vshll.u32 %v673, 16
        %v1100 = vrot.slane %v1098, 5
        %v1101 = vsel %vm713, %v1096, %v1100
        %v1102 = vshrl.u32 %v673, 16
        %v1104 = vrot.slane %v1102, 4
        %v1105 = vor.u32 %v1104, %v1100
        %v1106 = vrot.slane %v1105, 4
        %v1108 = vshll.u32 %v674, 16
        %v1110 = vrot.slane %v1108, 5
        %v1111 = vsel %vm713, %v1106, %v1110
        %v1112 = vshrl.u32 %v674, 16
        %v1114 = vrot.slane %v1112, 4
        %v1115 = vor.u32 %v1114, %v1110
        %v1116 = vrot.slane %v1115, 4
        %v1118 = vshll.u32 %v704, 16
        %v1120 = vrot.slane %v1118, 5
        %v1121 = vsel %vm713, %v1116, %v1120
        %v1123 = vshrl.u32 %v675, 16
        %v1125 = vrot.slane %v1123, 4
        %v1126 = vshll.u32 %v675, 16
        %v1128 = vrot.slane %v1126, 5
        %v1129 = vor.u32 %v1125, %v1128
        %v1130 = vrot.slane %v1129, 4
        %v1132 = vshll.u32 %v676, 16
        %v1134 = vrot.slane %v1132, 5
        %v1135 = vsel %vm713, %v1130, %v1134
        %v1136 = vshrl.u32 %v676, 16
        %v1138 = vrot.slane %v1136, 4
        %v1139 = vor.u32 %v1138, %v1134
        %v1140 = vrot.slane %v1139, 4
        %v1142 = vshll.u32 %v677, 16
        %v1144 = vrot.slane %v1142, 5
        %v1145 = vsel %vm713, %v1140, %v1144
        %v1146 = vshrl.u32 %v677, 16
        %v1148 = vrot.slane %v1146, 4
        %v1149 = vor.u32 %v1148, %v1144
        %v1150 = vrot.slane %v1149, 4
        %v1152 = vshll.u32 %v705, 16
        %v1154 = vrot.slane %v1152, 5
        %v1155 = vsel %vm713, %v1150, %v1154
        %v1157 = vshrl.u32 %v678, 16
        %v1159 = vrot.slane %v1157, 4
        %v1160 = vshll.u32 %v678, 16
        %v1162 = vrot.slane %v1160, 5
        %v1163 = vor.u32 %v1159, %v1162
        %v1164 = vrot.slane %v1163, 4
        %v1166 = vshll.u32 %v679, 16
        %v1168 = vrot.slane %v1166, 5
        %v1169 = vsel %vm713, %v1164, %v1168
        %v1170 = vshrl.u32 %v679, 16
        %v1172 = vrot.slane %v1170, 4
        %v1173 = vor.u32 %v1172, %v1168
        %v1174 = vrot.slane %v1173, 4
        %v1176 = vshll.u32 %v680, 16
        %v1178 = vrot.slane %v1176, 5
        %v1179 = vsel %vm713, %v1174, %v1178
        %v1180 = vshrl.u32 %v680, 16
        %v1182 = vrot.slane %v1180, 4
        %v1183 = vor.u32 %v1182, %v1178
        %v1184 = vrot.slane %v1183, 4
        %v1186 = vshll.u32 %v706, 16
        %v1188 = vrot.slane %v1186, 5
        %v1189 = vsel %vm713, %v1184, %v1188
        %v1191 = vshrl.u32 %v681, 16
        %v1193 = vrot.slane %v1191, 4
        %v1194 = vshll.u32 %v681, 16
        %v1196 = vrot.slane %v1194, 5
        %v1197 = vor.u32 %v1193, %v1196
        %v1198 = vrot.slane %v1197, 4
        %v1200 = vshll.u32 %v682, 16
        %v1202 = vrot.slane %v1200, 5
        %v1203 = vsel %vm713, %v1198, %v1202
        %v1204 = vshrl.u32 %v682, 16
        %v1206 = vrot.slane %v1204, 4
        %v1207 = vor.u32 %v1206, %v1202
        %v1208 = vrot.slane %v1207, 4
        %v1210 = vshll.u32 %v683, 16
        %v1212 = vrot.slane %v1210, 5
        %v1213 = vsel %vm713, %v1208, %v1212
        %v1214 = vshrl.u32 %v683, 16
        %v1216 = vrot.slane %v1214, 4
        %v1217 = vor.u32 %v1216, %v1212
        %v1218 = vrot.slane %v1217, 4
        %v1220 = vshll.u32 %v707, 16
        %v1222 = vrot.slane %v1220, 5
        %v1223 = vsel %vm713, %v1218, %v1222
        %v1225 = vshrl.u32 %v684, 16
        %v1227 = vrot.slane %v1225, 4
        %v1228 = vshll.u32 %v684, 16
        %v1230 = vrot.slane %v1228, 5
        %v1231 = vor.u32 %v1227, %v1230
        %v1232 = vrot.slane %v1231, 4
        %v1234 = vshll.u32 %v685, 16
        %v1236 = vrot.slane %v1234, 5
        %v1237 = vsel %vm713, %v1232, %v1236
        %v1238 = vshrl.u32 %v685, 16
        %v1240 = vrot.slane %v1238, 4
        %v1241 = vor.u32 %v1240, %v1236
        %v1242 = vrot.slane %v1241, 4
        %v1244 = vshll.u32 %v686, 16
        %v1246 = vrot.slane %v1244, 5
        %v1247 = vsel %vm713, %v1242, %v1246
        %v1248 = vshrl.u32 %v686, 16
        %v1250 = vrot.slane %v1248, 4
        %v1251 = vor.u32 %v1250, %v1246
        %v1252 = vrot.slane %v1251, 4
        %v1254 = vshll.u32 %v708, 16
        %v1256 = vrot.slane %v1254, 5
        %v1257 = vsel %vm713, %v1252, %v1256
        %v1259 = vshrl.u32 %v687, 16
        %v1261 = vrot.slane %v1259, 4
        %v1262 = vshll.u32 %v687, 16
        %v1264 = vrot.slane %v1262, 5
        %v1265 = vor.u32 %v1261, %v1264
        %v1266 = vrot.slane %v1265, 4
        %v1268 = vshll.u32 %v688, 16
        %v1270 = vrot.slane %v1268, 5
        %v1271 = vsel %vm713, %v1266, %v1270
        %v1272 = vshrl.u32 %v688, 16
        %v1274 = vrot.slane %v1272, 4
        %v1275 = vor.u32 %v1274, %v1270
        %v1276 = vrot.slane %v1275, 4
        %v1278 = vshll.u32 %v689, 16
        %v1280 = vrot.slane %v1278, 5
        %v1281 = vsel %vm713, %v1276, %v1280
        %v1282 = vshrl.u32 %v689, 16
        %v1284 = vrot.slane %v1282, 4
        %v1285 = vor.u32 %v1284, %v1280
        %v1286 = vrot.slane %v1285, 4
        %v1288 = vshll.u32 %v709, 16
        %v1290 = vrot.slane %v1288, 5
        %v1291 = vsel %vm713, %v1286, %v1290
        %v1293 = vshrl.u32 %v690, 16
        %v1295 = vrot.slane %v1293, 4
        %v1296 = vshll.u32 %v690, 16
        %v1298 = vrot.slane %v1296, 5
        %v1299 = vor.u32 %v1295, %v1298
        %v1300 = vrot.slane %v1299, 4
        %v1302 = vshll.u32 %v691, 16
        %v1304 = vrot.slane %v1302, 5
        %v1305 = vsel %vm713, %v1300, %v1304
        %v1306 = vshrl.u32 %v691, 16
        %v1308 = vrot.slane %v1306, 4
        %v1309 = vor.u32 %v1308, %v1304
        %v1310 = vrot.slane %v1309, 4
        %v1312 = vshll.u32 %v692, 16
        %v1314 = vrot.slane %v1312, 5
        %v1315 = vsel %vm713, %v1310, %v1314
        %v1316 = vshrl.u32 %v692, 16
        %v1318 = vrot.slane %v1316, 4
        %v1319 = vor.u32 %v1318, %v1314
        %v1320 = vrot.slane %v1319, 4
        %v1322 = vshll.u32 %v710, 16
        %v1324 = vrot.slane %v1322, 5
        %v1325 = vsel %vm713, %v1320, %v1324
        %v1326 = vld [vmem:[#allocation2] sm:$0xe]
        %v1327 = vld [vmem:[#allocation2 + $0x10] sm:$0xe]
        %v1328 = vld [vmem:[#allocation2 + $0x20] sm:$0xe]
        %v1329 = vld [vmem:[#allocation2 + $0x30] sm:$0xe]
        %v1330 = vld [vmem:[#allocation2 + $0x40] sm:$0xe]
        %v1331 = vld [vmem:[#allocation2 + $0x50] sm:$0xe]
        %v1332 = vld [vmem:[#allocation2 + $0x60] sm:$0xe]
        %v1333 = vld [vmem:[#allocation2 + $0x70] sm:$0xe]
        %v1334 = vld [vmem:[#allocation2 + $0x80] sm:$0xe]
        %v1335 = vld [vmem:[#allocation2 + $0x90] sm:$0xe]
        %v1336 = vld [vmem:[#allocation2 + $0xa0] sm:$0xe]
        %v1337 = vld [vmem:[#allocation2 + $0xb0] sm:$0xe]
        %v1338 = vld [vmem:[#allocation2 + $0xc0] sm:$0xe]
        %v1339 = vld [vmem:[#allocation2 + $0xd0] sm:$0xe]
        %v1340 = vld [vmem:[#allocation2 + $0xe0] sm:$0xe]
        %v1341 = vld [vmem:[#allocation2 + $0xf0] sm:$0xe]
        %v1342 = vld [vmem:[#allocation2 + $0x100] sm:$0xe]
        %v1343 = vld [vmem:[#allocation2 + $0x110] sm:$0xe]
        %vm1416 = vcmask 1042432
        %vm1417 = vcmask 1046532
        %vm1418 = vmor %vm1416, %vm1417
        %v1419 = vrot.slane %v1326, 5
        %v1420 = vrot.slane %v1419, 4
        %v1421 = vrot.slane %v640, 5
        %v1422 = vsel %vm1418, %v1420, %v1421
        %v1423 = vrot.slane %v1421, 4
        %v1424 = vrot.slane %v641, 5
        %v1425 = vsel %vm1418, %v1423, %v1424
        %v1426 = vrot.slane %v1424, 4
        %v1427 = vrot.slane %v693, 5
        %v1428 = vsel %vm1418, %v1426, %v1427
        %v1429 = vrot.slane %v1327, 5
        %v1430 = vrot.slane %v1429, 4
        %v1431 = vrot.slane %v643, 5
        %v1432 = vsel %vm1418, %v1430, %v1431
        %v1433 = vrot.slane %v1431, 4
        %v1434 = vrot.slane %v644, 5
        %v1435 = vsel %vm1418, %v1433, %v1434
        %v1436 = vrot.slane %v1434, 4
        %v1437 = vrot.slane %v694, 5
        %v1438 = vsel %vm1418, %v1436, %v1437
        %v1439 = vrot.slane %v1328, 5
        %v1440 = vrot.slane %v1439, 4
        %v1441 = vrot.slane %v646, 5
        %v1442 = vsel %vm1418, %v1440, %v1441
        %v1443 = vrot.slane %v1441, 4
        %v1444 = vrot.slane %v647, 5
        %v1445 = vsel %vm1418, %v1443, %v1444
        %v1446 = vrot.slane %v1444, 4
        %v1447 = vrot.slane %v695, 5
        %v1448 = vsel %vm1418, %v1446, %v1447
        %v1449 = vrot.slane %v1329, 5
        %v1450 = vrot.slane %v1449, 4
        %v1451 = vrot.slane %v649, 5
        %v1452 = vsel %vm1418, %v1450, %v1451
        %v1453 = vrot.slane %v1451, 4
        %v1454 = vrot.slane %v650, 5
        %v1455 = vsel %vm1418, %v1453, %v1454
        %v1456 = vrot.slane %v1454, 4
        %v1457 = vrot.slane %v696, 5
        %v1458 = vsel %vm1418, %v1456, %v1457
        %v1459 = vrot.slane %v1330, 5
        %v1460 = vrot.slane %v1459, 4
        %v1461 = vrot.slane %v652, 5
        %v1462 = vsel %vm1418, %v1460, %v1461
        %v1463 = vrot.slane %v1461, 4
        %v1464 = vrot.slane %v653, 5
        %v1465 = vsel %vm1418, %v1463, %v1464
        %v1466 = vrot.slane %v1464, 4
        %v1467 = vrot.slane %v697, 5
        %v1468 = vsel %vm1418, %v1466, %v1467
        %v1469 = vrot.slane %v1331, 5
        %v1470 = vrot.slane %v1469, 4
        %v1471 = vrot.slane %v655, 5
        %v1472 = vsel %vm1418, %v1470, %v1471
        %v1473 = vrot.slane %v1471, 4
        %v1474 = vrot.slane %v656, 5
        %v1475 = vsel %vm1418, %v1473, %v1474
        %v1476 = vrot.slane %v1474, 4
        %v1477 = vrot.slane %v698, 5
        %v1478 = vsel %vm1418, %v1476, %v1477
        %v1479 = vrot.slane %v1332, 5
        %v1480 = vrot.slane %v1479, 4
        %v1481 = vrot.slane %v658, 5
        %v1482 = vsel %vm1418, %v1480, %v1481
        %v1483 = vrot.slane %v1481, 4
        %v1484 = vrot.slane %v659, 5
        %v1485 = vsel %vm1418, %v1483, %v1484
        %v1486 = vrot.slane %v1484, 4
        %v1487 = vrot.slane %v699, 5
        %v1488 = vsel %vm1418, %v1486, %v1487
        %v1489 = vrot.slane %v1333, 5
        %v1490 = vrot.slane %v1489, 4
        %v1491 = vrot.slane %v661, 5
        %v1492 = vsel %vm1418, %v1490, %v1491
        %v1493 = vrot.slane %v1491, 4
        %v1494 = vrot.slane %v662, 5
        %v1495 = vsel %vm1418, %v1493, %v1494
        %v1496 = vrot.slane %v1494, 4
        %v1497 = vrot.slane %v700, 5
        %v1498 = vsel %vm1418, %v1496, %v1497
        %v1499 = vrot.slane %v1334, 5
        %v1500 = vrot.slane %v1499, 4
        %v1501 = vrot.slane %v664, 5
        %v1502 = vsel %vm1418, %v1500, %v1501
        %v1503 = vrot.slane %v1501, 4
        %v1504 = vrot.slane %v665, 5
        %v1505 = vsel %vm1418, %v1503, %v1504
        %v1506 = vrot.slane %v1504, 4
        %v1507 = vrot.slane %v701, 5
        %v1508 = vsel %vm1418, %v1506, %v1507
        %v1509 = vrot.slane %v1335, 5
        %v1510 = vrot.slane %v1509, 4
        %v1511 = vrot.slane %v667, 5
        %v1512 = vsel %vm1418, %v1510, %v1511
        %v1513 = vrot.slane %v1511, 4
        %v1514 = vrot.slane %v668, 5
        %v1515 = vsel %vm1418, %v1513, %v1514
        %v1516 = vrot.slane %v1514, 4
        %v1517 = vrot.slane %v702, 5
        %v1518 = vsel %vm1418, %v1516, %v1517
        %v1519 = vrot.slane %v1336, 5
        %v1520 = vrot.slane %v1519, 4
        %v1521 = vrot.slane %v670, 5
        %v1522 = vsel %vm1418, %v1520, %v1521
        %v1523 = vrot.slane %v1521, 4
        %v1524 = vrot.slane %v671, 5
        %v1525 = vsel %vm1418, %v1523, %v1524
        %v1526 = vrot.slane %v1524, 4
        %v1527 = vrot.slane %v703, 5
        %v1528 = vsel %vm1418, %v1526, %v1527
        %v1529 = vrot.slane %v1337, 5
        %v1530 = vrot.slane %v1529, 4
        %v1531 = vrot.slane %v673, 5
        %v1532 = vsel %vm1418, %v1530, %v1531
        %v1533 = vrot.slane %v1531, 4
        %v1534 = vrot.slane %v674, 5
        %v1535 = vsel %vm1418, %v1533, %v1534
        %v1536 = vrot.slane %v1534, 4
        %v1537 = vrot.slane %v704, 5
        %v1538 = vsel %vm1418, %v1536, %v1537
        %v1539 = vrot.slane %v1338, 5
        %v1540 = vrot.slane %v1539, 4
        %v1541 = vrot.slane %v676, 5
        %v1542 = vsel %vm1418, %v1540, %v1541
        %v1543 = vrot.slane %v1541, 4
        %v1544 = vrot.slane %v677, 5
        %v1545 = vsel %vm1418, %v1543, %v1544
        %v1546 = vrot.slane %v1544, 4
        %v1547 = vrot.slane %v705, 5
        %v1548 = vsel %vm1418, %v1546, %v1547
        %v1549 = vrot.slane %v1339, 5
        %v1550 = vrot.slane %v1549, 4
        %v1551 = vrot.slane %v679, 5
        %v1552 = vsel %vm1418, %v1550, %v1551
        %v1553 = vrot.slane %v1551, 4
        %v1554 = vrot.slane %v680, 5
        %v1555 = vsel %vm1418, %v1553, %v1554
        %v1556 = vrot.slane %v1554, 4
        %v1557 = vrot.slane %v706, 5
        %v1558 = vsel %vm1418, %v1556, %v1557
        %v1559 = vrot.slane %v1340, 5
        %v1560 = vrot.slane %v1559, 4
        %v1561 = vrot.slane %v682, 5
        %v1562 = vsel %vm1418, %v1560, %v1561
        %v1563 = vrot.slane %v1561, 4
        %v1564 = vrot.slane %v683, 5
        %v1565 = vsel %vm1418, %v1563, %v1564
        %v1566 = vrot.slane %v1564, 4
        %v1567 = vrot.slane %v707, 5
        %v1568 = vsel %vm1418, %v1566, %v1567
        %v1569 = vrot.slane %v1341, 5
        %v1570 = vrot.slane %v1569, 4
        %v1571 = vrot.slane %v685, 5
        %v1572 = vsel %vm1418, %v1570, %v1571
        %v1573 = vrot.slane %v1571, 4
        %v1574 = vrot.slane %v686, 5
        %v1575 = vsel %vm1418, %v1573, %v1574
        %v1576 = vrot.slane %v1574, 4
        %v1577 = vrot.slane %v708, 5
        %v1578 = vsel %vm1418, %v1576, %v1577
        %v1579 = vrot.slane %v1342, 5
        %v1580 = vrot.slane %v1579, 4
        %v1581 = vrot.slane %v688, 5
        %v1582 = vsel %vm1418, %v1580, %v1581
        %v1583 = vrot.slane %v1581, 4
        %v1584 = vrot.slane %v689, 5
        %v1585 = vsel %vm1418, %v1583, %v1584
        %v1586 = vrot.slane %v1584, 4
        %v1587 = vrot.slane %v709, 5
        %v1588 = vsel %vm1418, %v1586, %v1587
        %v1589 = vrot.slane %v1343, 5
        %v1590 = vrot.slane %v1589, 4
        %v1591 = vrot.slane %v691, 5
        %v1592 = vsel %vm1418, %v1590, %v1591
        %v1593 = vrot.slane %v1591, 4
        %v1594 = vrot.slane %v692, 5
        %v1595 = vsel %vm1418, %v1593, %v1594
        %v1596 = vrot.slane %v1594, 4
        %v1597 = vrot.slane %v710, 5
        %v1598 = vsel %vm1418, %v1596, %v1597
        %v1617 = vunpack.c.l.b16 %v639
        %v1618 = vunpack.c.l.b16 %v640
        %v1619 = vunpack.c.l.b16 %v641
        %v1620 = vunpack.c.l.b16 %v642
        %v1621 = vunpack.c.l.b16 %v643
        %v1622 = vunpack.c.l.b16 %v644
        %v1623 = vunpack.c.l.b16 %v645
        %v1624 = vunpack.c.l.b16 %v646
        %v1625 = vunpack.c.l.b16 %v647
        %v1626 = vunpack.c.l.b16 %v648
        %v1627 = vunpack.c.l.b16 %v649
        %v1628 = vunpack.c.l.b16 %v650
        %v1629 = vunpack.c.l.b16 %v651
        %v1630 = vunpack.c.l.b16 %v652
        %v1631 = vunpack.c.l.b16 %v653
        %v1632 = vunpack.c.l.b16 %v654
        %v1633 = vunpack.c.l.b16 %v655
        %v1634 = vunpack.c.l.b16 %v656
        %v1635 = vunpack.c.l.b16 %v657
        %v1636 = vunpack.c.l.b16 %v658
        %v1637 = vunpack.c.l.b16 %v659
        %v1638 = vunpack.c.l.b16 %v660
        %v1639 = vunpack.c.l.b16 %v661
        %v1640 = vunpack.c.l.b16 %v662
        %v1641 = vunpack.c.l.b16 %v663
        %v1642 = vunpack.c.l.b16 %v664
        %v1643 = vunpack.c.l.b16 %v665
        %v1644 = vunpack.c.l.b16 %v666
        %v1645 = vunpack.c.l.b16 %v667
        %v1646 = vunpack.c.l.b16 %v668
        %v1647 = vunpack.c.l.b16 %v669
        %v1648 = vunpack.c.l.b16 %v670
        %v1649 = vunpack.c.l.b16 %v671
        %v1650 = vunpack.c.l.b16 %v672
        %v1651 = vunpack.c.l.b16 %v673
        %v1652 = vunpack.c.l.b16 %v674
        %v1653 = vunpack.c.l.b16 %v675
        %v1654 = vunpack.c.l.b16 %v676
        %v1655 = vunpack.c.l.b16 %v677
        %v1656 = vunpack.c.l.b16 %v678
        %v1657 = vunpack.c.l.b16 %v679
        %v1658 = vunpack.c.l.b16 %v680
        %v1659 = vunpack.c.l.b16 %v681
        %v1660 = vunpack.c.l.b16 %v682
        %v1661 = vunpack.c.l.b16 %v683
        %v1662 = vunpack.c.l.b16 %v684
        %v1663 = vunpack.c.l.b16 %v685
        %v1664 = vunpack.c.l.b16 %v686
        %v1665 = vunpack.c.l.b16 %v687
        %v1666 = vunpack.c.l.b16 %v688
        %v1667 = vunpack.c.l.b16 %v689
        %v1668 = vunpack.c.l.b16 %v690
        %v1669 = vunpack.c.l.b16 %v691
        %v1670 = vunpack.c.l.b16 %v692
        %v1671 = vpack.c.b16 %v1618, %v1617
        %v1672 = vpack.c.b16 %v1620, %v1619
        %v1673 = vpack.c.b16 %v1622, %v1621
        %v1674 = vpack.c.b16 %v1624, %v1623
        %v1675 = vpack.c.b16 %v1626, %v1625
        %v1676 = vpack.c.b16 %v1628, %v1627
        %v1677 = vpack.c.b16 %v1630, %v1629
        %v1678 = vpack.c.b16 %v1632, %v1631
        %v1679 = vpack.c.b16 %v1634, %v1633
        %v1680 = vpack.c.b16 %v1636, %v1635
        %v1681 = vpack.c.b16 %v1638, %v1637
        %v1682 = vpack.c.b16 %v1640, %v1639
        %v1683 = vpack.c.b16 %v1642, %v1641
        %v1684 = vpack.c.b16 %v1644, %v1643
        %v1685 = vpack.c.b16 %v1646, %v1645
        %v1686 = vpack.c.b16 %v1648, %v1647
        %v1687 = vpack.c.b16 %v1650, %v1649
        %v1688 = vpack.c.b16 %v1652, %v1651
        %v1689 = vpack.c.b16 %v1654, %v1653
        %v1690 = vpack.c.b16 %v1656, %v1655
        %v1691 = vpack.c.b16 %v1658, %v1657
        %v1692 = vpack.c.b16 %v1660, %v1659
        %v1693 = vpack.c.b16 %v1662, %v1661
        %v1694 = vpack.c.b16 %v1664, %v1663
        %v1695 = vpack.c.b16 %v1666, %v1665
        %v1696 = vpack.c.b16 %v1668, %v1667
        %v1697 = vpack.c.b16 %v1670, %v1669
        %v1725 = vunpack.c.l.b16 %v727
        %v1726 = vunpack.c.l.b16 %v737
        %v1727 = vunpack.c.l.b16 %v747
        %v1728 = vunpack.c.l.b16 %v761
        %v1729 = vunpack.c.l.b16 %v771
        %v1730 = vunpack.c.l.b16 %v781
        %v1731 = vunpack.c.l.b16 %v795
        %v1732 = vunpack.c.l.b16 %v805
        %v1733 = vunpack.c.l.b16 %v815
        %v1734 = vunpack.c.l.b16 %v829
        %v1735 = vunpack.c.l.b16 %v839
        %v1736 = vunpack.c.l.b16 %v849
        %v1737 = vunpack.c.l.b16 %v863
        %v1738 = vunpack.c.l.b16 %v873
        %v1739 = vunpack.c.l.b16 %v883
        %v1740 = vunpack.c.l.b16 %v897
        %v1741 = vunpack.c.l.b16 %v907
        %v1742 = vunpack.c.l.b16 %v917
        %v1743 = vunpack.c.l.b16 %v931
        %v1744 = vunpack.c.l.b16 %v941
        %v1745 = vunpack.c.l.b16 %v951
        %v1746 = vunpack.c.l.b16 %v965
        %v1747 = vunpack.c.l.b16 %v975
        %v1748 = vunpack.c.l.b16 %v985
        %v1749 = vunpack.c.l.b16 %v999
        %v1750 = vunpack.c.l.b16 %v1009
        %v1751 = vunpack.c.l.b16 %v1019
        %v1752 = vunpack.c.l.b16 %v1033
        %v1753 = vunpack.c.l.b16 %v1043
        %v1754 = vunpack.c.l.b16 %v1053
        %v1755 = vunpack.c.l.b16 %v1067
        %v1756 = vunpack.c.l.b16 %v1077
        %v1757 = vunpack.c.l.b16 %v1087
        %v1758 = vunpack.c.l.b16 %v1101
        %v1759 = vunpack.c.l.b16 %v1111
        %v1760 = vunpack.c.l.b16 %v1121
        %v1761 = vunpack.c.l.b16 %v1135
        %v1762 = vunpack.c.l.b16 %v1145
        %v1763 = vunpack.c.l.b16 %v1155
        %v1764 = vunpack.c.l.b16 %v1169
        %v1765 = vunpack.c.l.b16 %v1179
        %v1766 = vunpack.c.l.b16 %v1189
        %v1767 = vunpack.c.l.b16 %v1203
        %v1768 = vunpack.c.l.b16 %v1213
        %v1769 = vunpack.c.l.b16 %v1223
        %v1770 = vunpack.c.l.b16 %v1237
        %v1771 = vunpack.c.l.b16 %v1247
        %v1772 = vunpack.c.l.b16 %v1257
        %v1773 = vunpack.c.l.b16 %v1271
        %v1774 = vunpack.c.l.b16 %v1281
        %v1775 = vunpack.c.l.b16 %v1291
        %v1776 = vunpack.c.l.b16 %v1305
        %v1777 = vunpack.c.l.b16 %v1315
        %v1778 = vunpack.c.l.b16 %v1325
        %v1779 = vpack.c.b16 %v1726, %v1725
        %v1780 = vpack.c.b16 %v1728, %v1727
        %v1781 = vpack.c.b16 %v1730, %v1729
        %v1782 = vpack.c.b16 %v1732, %v1731
        %v1783 = vpack.c.b16 %v1734, %v1733
        %v1784 = vpack.c.b16 %v1736, %v1735
        %v1785 = vpack.c.b16 %v1738, %v1737
        %v1786 = vpack.c.b16 %v1740, %v1739
        %v1787 = vpack.c.b16 %v1742, %v1741
        %v1788 = vpack.c.b16 %v1744, %v1743
        %v1789 = vpack.c.b16 %v1746, %v1745
        %v1790 = vpack.c.b16 %v1748, %v1747
        %v1791 = vpack.c.b16 %v1750, %v1749
        %v1792 = vpack.c.b16 %v1752, %v1751
        %v1793 = vpack.c.b16 %v1754, %v1753
        %v1794 = vpack.c.b16 %v1756, %v1755
        %v1795 = vpack.c.b16 %v1758, %v1757
        %v1796 = vpack.c.b16 %v1760, %v1759
        %v1797 = vpack.c.b16 %v1762, %v1761
        %v1798 = vpack.c.b16 %v1764, %v1763
        %v1799 = vpack.c.b16 %v1766, %v1765
        %v1800 = vpack.c.b16 %v1768, %v1767
        %v1801 = vpack.c.b16 %v1770, %v1769
        %v1802 = vpack.c.b16 %v1772, %v1771
        %v1803 = vpack.c.b16 %v1774, %v1773
        %v1804 = vpack.c.b16 %v1776, %v1775
        %v1805 = vpack.c.b16 %v1778, %v1777
        %v1833 = vunpack.c.l.b16 %v1422
        %v1834 = vunpack.c.l.b16 %v1425
        %v1835 = vunpack.c.l.b16 %v1428
        %v1836 = vunpack.c.l.b16 %v1432
        %v1837 = vunpack.c.l.b16 %v1435
        %v1838 = vunpack.c.l.b16 %v1438
        %v1839 = vunpack.c.l.b16 %v1442
        %v1840 = vunpack.c.l.b16 %v1445
        %v1841 = vunpack.c.l.b16 %v1448
        %v1842 = vunpack.c.l.b16 %v1452
        %v1843 = vunpack.c.l.b16 %v1455
        %v1844 = vunpack.c.l.b16 %v1458
        %v1845 = vunpack.c.l.b16 %v1462
        %v1846 = vunpack.c.l.b16 %v1465
        %v1847 = vunpack.c.l.b16 %v1468
        %v1848 = vunpack.c.l.b16 %v1472
        %v1849 = vunpack.c.l.b16 %v1475
        %v1850 = vunpack.c.l.b16 %v1478
        %v1851 = vunpack.c.l.b16 %v1482
        %v1852 = vunpack.c.l.b16 %v1485
        %v1853 = vunpack.c.l.b16 %v1488
        %v1854 = vunpack.c.l.b16 %v1492
        %v1855 = vunpack.c.l.b16 %v1495
        %v1856 = vunpack.c.l.b16 %v1498
        %v1857 = vunpack.c.l.b16 %v1502
        %v1858 = vunpack.c.l.b16 %v1505
        %v1859 = vunpack.c.l.b16 %v1508
        %v1860 = vunpack.c.l.b16 %v1512
        %v1861 = vunpack.c.l.b16 %v1515
        %v1862 = vunpack.c.l.b16 %v1518
        %v1863 = vunpack.c.l.b16 %v1522
        %v1864 = vunpack.c.l.b16 %v1525
        %v1865 = vunpack.c.l.b16 %v1528
        %v1866 = vunpack.c.l.b16 %v1532
        %v1867 = vunpack.c.l.b16 %v1535
        %v1868 = vunpack.c.l.b16 %v1538
        %v1869 = vunpack.c.l.b16 %v1542
        %v1870 = vunpack.c.l.b16 %v1545
        %v1871 = vunpack.c.l.b16 %v1548
        %v1872 = vunpack.c.l.b16 %v1552
        %v1873 = vunpack.c.l.b16 %v1555
        %v1874 = vunpack.c.l.b16 %v1558
        %v1875 = vunpack.c.l.b16 %v1562
        %v1876 = vunpack.c.l.b16 %v1565
        %v1877 = vunpack.c.l.b16 %v1568
        %v1878 = vunpack.c.l.b16 %v1572
        %v1879 = vunpack.c.l.b16 %v1575
        %v1880 = vunpack.c.l.b16 %v1578
        %v1881 = vunpack.c.l.b16 %v1582
        %v1882 = vunpack.c.l.b16 %v1585
        %v1883 = vunpack.c.l.b16 %v1588
        %v1884 = vunpack.c.l.b16 %v1592
        %v1885 = vunpack.c.l.b16 %v1595
        %v1886 = vunpack.c.l.b16 %v1598
        %v1887 = vpack.c.b16 %v1834, %v1833
        %v1888 = vpack.c.b16 %v1836, %v1835
        %v1889 = vpack.c.b16 %v1838, %v1837
        %v1890 = vpack.c.b16 %v1840, %v1839
        %v1891 = vpack.c.b16 %v1842, %v1841
        %v1892 = vpack.c.b16 %v1844, %v1843
        %v1893 = vpack.c.b16 %v1846, %v1845
        %v1894 = vpack.c.b16 %v1848, %v1847
        %v1895 = vpack.c.b16 %v1850, %v1849
        %v1896 = vpack.c.b16 %v1852, %v1851
        %v1897 = vpack.c.b16 %v1854, %v1853
        %v1898 = vpack.c.b16 %v1856, %v1855
        %v1899 = vpack.c.b16 %v1858, %v1857
        %v1900 = vpack.c.b16 %v1860, %v1859
        %v1901 = vpack.c.b16 %v1862, %v1861
        %v1902 = vpack.c.b16 %v1864, %v1863
        %v1903 = vpack.c.b16 %v1866, %v1865
        %v1904 = vpack.c.b16 %v1868, %v1867
        %v1905 = vpack.c.b16 %v1870, %v1869
        %v1906 = vpack.c.b16 %v1872, %v1871
        %v1907 = vpack.c.b16 %v1874, %v1873
        %v1908 = vpack.c.b16 %v1876, %v1875
        %v1909 = vpack.c.b16 %v1878, %v1877
        %v1910 = vpack.c.b16 %v1880, %v1879
        %v1911 = vpack.c.b16 %v1882, %v1881
        %v1912 = vpack.c.b16 %v1884, %v1883
        %v1913 = vpack.c.b16 %v1886, %v1885
        %v1941 = vld [vmem:[%s2] sm:$0xf]
        %v1942 = vld [vmem:[%s2 + $0x4] sm:$0xf]
        %v1943 = vld [vmem:[%s2 + $0x8] sm:$0xf]
        %v1944 = vld [vmem:[%s2 + $0xc] sm:$0xf]
        %v1945 = vld [vmem:[%s2 + $0x10] sm:$0xf]
        %v1946 = vld [vmem:[%s2 + $0x14] sm:$0xf]
        %v1947 = vld [vmem:[%s2 + $0x18] sm:$0xf]
        %v1948 = vld [vmem:[%s2 + $0x1c] sm:$0xf]
        %v1949 = vld [vmem:[%s2 + $0x20] sm:$0xf]
        %v1950 = vld [vmem:[%s2 + $0x24] sm:$0xf]
        %v1951 = vld [vmem:[%s2 + $0x28] sm:$0xf]
        %v1952 = vld [vmem:[%s2 + $0x2c] sm:$0xf]
        %v1953 = vld [vmem:[%s2 + $0x30] sm:$0xf]
        %v1954 = vld [vmem:[%s2 + $0x34] sm:$0xf]
        %v1955 = vld [vmem:[%s2 + $0x38] sm:$0xf]
        %v1956 = vld [vmem:[%s2 + $0x3c] sm:$0xf]
        %v1957 = vld [vmem:[%s2 + $0x40] sm:$0xf]
        %v1958 = vld [vmem:[%s2 + $0x44] sm:$0xf]
        %v1959 = vld [vmem:[%s2 + $0x48] sm:$0xf]
        %v1960 = vld [vmem:[%s2 + $0x4c] sm:$0xf]
        %v1961 = vld [vmem:[%s2 + $0x50] sm:$0xf]
        %v1962 = vld [vmem:[%s2 + $0x54] sm:$0xf]
        %v1963 = vld [vmem:[%s2 + $0x58] sm:$0xf]
        %v1964 = vld [vmem:[%s2 + $0x5c] sm:$0xf]
        %v1965 = vld [vmem:[%s2 + $0x60] sm:$0xf]
        %v1966 = vld [vmem:[%s2 + $0x64] sm:$0xf]
        %v1967 = vld [vmem:[%s2 + $0x68] sm:$0xf]
        %v1968 = vld [vmem:[%s2 + $0x6c] sm:$0xf]
        %v1969 = vld [vmem:[%s2 + $0x70] sm:$0xf]
        %v1970 = vld [vmem:[%s2 + $0x74] sm:$0xf]
        %v1971 = vld [vmem:[%s2 + $0x78] sm:$0xf]
        %v1972 = vld [vmem:[%s2 + $0x7c] sm:$0xf]
        %v1973 = vld [vmem:[%s2 + $0x80] sm:$0xf]
        %v1974 = vld [vmem:[%s2 + $0x84] sm:$0xf]
        %v1975 = vld [vmem:[%s2 + $0x88] sm:$0xf]
        %v1976 = vld [vmem:[%s2 + $0x8c] sm:$0xf]
        %v1977 = vld [vmem:[%s2 + $0x90] sm:$0xf]
        %v1978 = vld [vmem:[%s2 + $0x94] sm:$0xf]
        %v1979 = vld [vmem:[%s2 + $0x98] sm:$0xf]
        %v1980 = vld [vmem:[%s2 + $0x9c] sm:$0xf]
        %v1981 = vld [vmem:[%s2 + $0xa0] sm:$0xf]
        %v1982 = vld [vmem:[%s2 + $0xa4] sm:$0xf]
        %v1983 = vld [vmem:[%s2 + $0xa8] sm:$0xf]
        %v1984 = vld [vmem:[%s2 + $0xac] sm:$0xf]
        %v1985 = vld [vmem:[%s2 + $0xb0] sm:$0xf]
        %v1986 = vld [vmem:[%s2 + $0xb4] sm:$0xf]
        %v1987 = vld [vmem:[%s2 + $0xb8] sm:$0xf]
        %v1988 = vld [vmem:[%s2 + $0xbc] sm:$0xf]
        %v1989 = vld [vmem:[#allocation3] sm:$0xff]
        %v1990 = vld [vmem:[#allocation3 + $0x8] sm:$0xff]
        %v1991 = vld [vmem:[#allocation3 + $0x10] sm:$0xff]
        %v1992 = vld [vmem:[#allocation3 + $0x18] sm:$0xff]
        %v1993 = vld [vmem:[#allocation3 + $0x20] sm:$0xff]
        %v1994 = vld [vmem:[#allocation3 + $0x28] sm:$0xff]
        %v1995 = vld [vmem:[#allocation3 + $0x30] sm:$0xff]
        %v1996 = vld [vmem:[#allocation3 + $0x38] sm:$0xff]
        %v1997 = vld [vmem:[#allocation3 + $0x40] sm:$0xff]
        %v1998 = vld [vmem:[#allocation3 + $0x48] sm:$0xff]
        %v1999 = vld [vmem:[#allocation3 + $0x50] sm:$0xff]
        %v2000 = vld [vmem:[#allocation3 + $0x58] sm:$0xff]
        %v2001 = vld [vmem:[#allocation3 + $0x60] sm:$0xff]
        %v2002 = vld [vmem:[#allocation3 + $0x68] sm:$0xff]
        %v2003 = vld [vmem:[#allocation3 + $0x70] sm:$0xff]
        %v2004 = vld [vmem:[#allocation3 + $0x78] sm:$0xff]
        %v2005 = vld [vmem:[#allocation3 + $0x80] sm:$0xff]
        %v2006 = vld [vmem:[#allocation3 + $0x88] sm:$0xff]
        %v2007 = vld [vmem:[#allocation3 + $0x90] sm:$0xff]
        %v2008 = vld [vmem:[#allocation3 + $0x98] sm:$0xff]
        %v2009 = vld [vmem:[#allocation3 + $0xa0] sm:$0xff]
        %v2010 = vld [vmem:[#allocation3 + $0xa8] sm:$0xff]
        %v2011 = vld [vmem:[#allocation3 + $0xb0] sm:$0xff]
        %v2012 = vld [vmem:[#allocation3 + $0xb8] sm:$0xff]
        %v2013 = vld [vmem:[#allocation3 + $0xc0] sm:$0xff]
        %v2014 = vld [vmem:[#allocation3 + $0xc8] sm:$0xff]
        %v2015 = vld [vmem:[#allocation3 + $0xd0] sm:$0xff]
        %v2016 = vld [vmem:[#allocation3 + $0xd8] sm:$0xff]
        %v2017 = vld [vmem:[#allocation3 + $0xe0] sm:$0xff]
        %v2018 = vld [vmem:[#allocation3 + $0xe8] sm:$0xff]
        %v2019 = vld [vmem:[#allocation3 + $0xf0] sm:$0xff]
        %v2020 = vld [vmem:[#allocation3 + $0xf8] sm:$0xff]
        %v2021 = vld [vmem:[#allocation3 + $0x100] sm:$0xff]
        %v2022 = vld [vmem:[#allocation3 + $0x108] sm:$0xff]
        %v2023 = vld [vmem:[#allocation3 + $0x110] sm:$0xff]
        %v2024 = vld [vmem:[#allocation3 + $0x118] sm:$0xff]
        %v2025 = vld [vmem:[#allocation3 + $0x120] sm:$0xff]
        %v2026 = vld [vmem:[#allocation3 + $0x128] sm:$0xff]
        %v2027 = vld [vmem:[#allocation3 + $0x130] sm:$0xff]
        %v2028 = vld [vmem:[#allocation3 + $0x138] sm:$0xff]
        %v2029 = vld [vmem:[#allocation3 + $0x140] sm:$0xff]
        %v2030 = vld [vmem:[#allocation3 + $0x148] sm:$0xff]
        %v2031 = vld [vmem:[#allocation3 + $0x150] sm:$0xff]
        %v2032 = vld [vmem:[#allocation3 + $0x158] sm:$0xff]
        %v2033 = vld [vmem:[#allocation3 + $0x160] sm:$0xff]
        %v2034 = vld [vmem:[#allocation3 + $0x168] sm:$0xff]
        %v2035 = vld [vmem:[#allocation3 + $0x170] sm:$0xff]
        %v2036 = vld [vmem:[#allocation3 + $0x178] sm:$0xff]
        %v2037 = vld [vmem:[#allocation3 + $0x180] sm:$0xff]
        %v2038 = vld [vmem:[#allocation3 + $0x188] sm:$0xff]
        %v2039 = vld [vmem:[#allocation3 + $0x190] sm:$0xff]
        %v2040 = vld [vmem:[#allocation3 + $0x198] sm:$0xff]
        %v2041 = vld [vmem:[#allocation3 + $0x1a0] sm:$0xff]
        %v2042 = vld [vmem:[#allocation3 + $0x1a8] sm:$0xff]
        %v2091 = vunpack.c.l.b16 %v1941
        %v2092 = vunpack.c.l.b16 %v1942
        %v2093 = vunpack.c.l.b16 %v1943
        %v2094 = vunpack.c.l.b16 %v1944
        %v2095 = vunpack.c.l.b16 %v1945
        %v2096 = vunpack.c.l.b16 %v1946
        %v2097 = vunpack.c.l.b16 %v1947
        %v2098 = vunpack.c.l.b16 %v1948
        %v2099 = vunpack.c.l.b16 %v1949
        %v2100 = vunpack.c.l.b16 %v1950
        %v2101 = vunpack.c.l.b16 %v1951
        %v2102 = vunpack.c.l.b16 %v1952
        %v2103 = vunpack.c.l.b16 %v1953
        %v2104 = vunpack.c.l.b16 %v1954
        %v2105 = vunpack.c.l.b16 %v1955
        %v2106 = vunpack.c.l.b16 %v1956
        %v2107 = vunpack.c.l.b16 %v1957
        %v2108 = vunpack.c.l.b16 %v1958
        %v2109 = vunpack.c.l.b16 %v1959
        %v2110 = vunpack.c.l.b16 %v1960
        %v2111 = vunpack.c.l.b16 %v1961
        %v2112 = vunpack.c.l.b16 %v1962
        %v2113 = vunpack.c.l.b16 %v1963
        %v2114 = vunpack.c.l.b16 %v1964
        %v2115 = vunpack.c.l.b16 %v1965
        %v2116 = vunpack.c.l.b16 %v1966
        %v2117 = vunpack.c.l.b16 %v1967
        %v2118 = vunpack.c.l.b16 %v1968
        %v2119 = vunpack.c.l.b16 %v1969
        %v2120 = vunpack.c.l.b16 %v1970
        %v2121 = vunpack.c.l.b16 %v1971
        %v2122 = vunpack.c.l.b16 %v1972
        %v2123 = vunpack.c.l.b16 %v1973
        %v2124 = vunpack.c.l.b16 %v1974
        %v2125 = vunpack.c.l.b16 %v1975
        %v2126 = vunpack.c.l.b16 %v1976
        %v2127 = vunpack.c.l.b16 %v1977
        %v2128 = vunpack.c.l.b16 %v1978
        %v2129 = vunpack.c.l.b16 %v1979
        %v2130 = vunpack.c.l.b16 %v1980
        %v2131 = vunpack.c.l.b16 %v1981
        %v2132 = vunpack.c.l.b16 %v1982
        %v2133 = vunpack.c.l.b16 %v1983
        %v2134 = vunpack.c.l.b16 %v1984
        %v2135 = vunpack.c.l.b16 %v1985
        %v2136 = vunpack.c.l.b16 %v1986
        %v2137 = vunpack.c.l.b16 %v1987
        %v2138 = vunpack.c.l.b16 %v1988
        %v2139 = vpack.c.b16 %v2092, %v2091
        %v2140 = vpack.c.b16 %v2094, %v2093
        %v2141 = vpack.c.b16 %v2096, %v2095
        %v2142 = vpack.c.b16 %v2098, %v2097
        %v2143 = vpack.c.b16 %v2100, %v2099
        %v2144 = vpack.c.b16 %v2102, %v2101
        %v2145 = vpack.c.b16 %v2104, %v2103
        %v2146 = vpack.c.b16 %v2106, %v2105
        %v2147 = vpack.c.b16 %v2108, %v2107
        %v2148 = vpack.c.b16 %v2110, %v2109
        %v2149 = vpack.c.b16 %v2112, %v2111
        %v2150 = vpack.c.b16 %v2114, %v2113
        %v2151 = vpack.c.b16 %v2116, %v2115
        %v2152 = vpack.c.b16 %v2118, %v2117
        %v2153 = vpack.c.b16 %v2120, %v2119
        %v2154 = vpack.c.b16 %v2122, %v2121
        %v2155 = vpack.c.b16 %v2124, %v2123
        %v2156 = vpack.c.b16 %v2126, %v2125
        %v2157 = vpack.c.b16 %v2128, %v2127
        %v2158 = vpack.c.b16 %v2130, %v2129
        %v2159 = vpack.c.b16 %v2132, %v2131
        %v2160 = vpack.c.b16 %v2134, %v2133
        %v2161 = vpack.c.b16 %v2136, %v2135
        %v2162 = vpack.c.b16 %v2138, %v2137
        %2187 = vmatprep.subr.bf16.mxu0 0
        %2188 = vmatpush1.bf16.msra.mxu0 %v2139
        %2189 = vmatprep.subr.bf16.mxu0 0
        %2190 = vmatpush1.bf16.msra.mxu0 %v2140
        %2191 = vmatprep.subr.bf16.mxu0 0
        %2192 = vmatpush1.bf16.msra.mxu0 %v2141
        %2193 = vmatprep.subr.bf16.mxu0 0
        %2194 = vmatpush1.bf16.msra.mxu0 %v2142
        %2195 = vmatprep.subr.bf16.mxu0 0
        %2196 = vmatpush1.bf16.msra.mxu0 %v2143
        %2197 = vmatprep.subr.bf16.mxu0 0
        %2198 = vmatpush1.bf16.msra.mxu0 %v2144
        %2199 = vmatprep.subr.bf16.mxu0 0
        %2200 = vmatpush1.bf16.msra.mxu0 %v2145
        %2201 = vmatprep.subr.bf16.mxu0 0
        %2202 = vmatpush1.bf16.msra.mxu0 %v2146
        %2203 = vmatprep.subr.bf16.mxu0 0
        %2204 = vmatpush1.bf16.msra.mxu0 %v2147
        %2205 = vmatprep.subr.bf16.mxu0 0
        %2206 = vmatpush1.bf16.msra.mxu0 %v2148
        %2207 = vmatprep.subr.bf16.mxu0 0
        %2208 = vmatpush1.bf16.msra.mxu0 %v2149
        %2209 = vmatprep.subr.bf16.mxu0 0
        %2210 = vmatpush1.bf16.msra.mxu0 %v2150
        %2211 = vmatprep.subr.bf16.mxu0 0
        %2212 = vmatpush1.bf16.msra.mxu0 %v2151
        %2213 = vmatprep.subr.bf16.mxu0 0
        %2214 = vmatpush1.bf16.msra.mxu0 %v2152
        %2215 = vmatprep.subr.bf16.mxu0 0
        %2216 = vmatpush1.bf16.msra.mxu0 %v2153
        %2217 = vmatprep.subr.bf16.mxu0 0
        %2218 = vmatpush1.bf16.msra.mxu0 %v2154
        %2219 = vmatprep.mubr.bf16.mxu0 %v1779
        %2220 = vmatmul.mubr.bf16.gmra.mrb[0].mxu0 %v1671
        %v2221 = vpop.f32.mrb[0].mxu0
        %v2222 = vadd.f32 0.0, %v2221
        %v2223 = vpop.f32.mrb[0].mxu0
        %v2224 = vpop.f32.mrb[0].mxu0
        %v2225 = vadd.f32 0.0, %v2224
        %v2226 = vpop.f32.mrb[0].mxu0
        %2227 = vmatprep.mubr.bf16.mxu0 %v1780
        %2228 = vmatmul.mubr.bf16.gmra.mrb[0].mxu0 %v1672
        %v2229 = vpop.f32.mrb[0].mxu0
        %v2230 = vadd.f32 0.0, %v2229
        %v2231 = vpop.f32.mrb[0].mxu0
        %v2232 = vpop.f32.mrb[0].mxu0
        %v2233 = vadd.f32 0.0, %v2232
        %v2234 = vpop.f32.mrb[0].mxu0
        %2235 = vmatprep.mubr.bf16.mxu0 %v1781
        %2236 = vmatmul.mubr.bf16.gmra.mrb[0].mxu0 %v1673
        %v2237 = vpop.f32.mrb[0].mxu0
        %v2238 = vadd.f32 0.0, %v2237
        %v2239 = vpop.f32.mrb[0].mxu0
        %v2240 = vpop.f32.mrb[0].mxu0
        %v2241 = vadd.f32 0.0, %v2240
        %v2242 = vpop.f32.mrb[0].mxu0
        %2243 = vmatprep.mubr.bf16.mxu0 %v1782
        %2244 = vmatmul.mubr.bf16.gmra.mrb[0].mxu0 %v1674
        %v2245 = vpop.f32.mrb[0].mxu0
        %v2246 = vadd.f32 0.0, %v2245
        %v2247 = vpop.f32.mrb[0].mxu0
        %v2248 = vpop.f32.mrb[0].mxu0
        %v2249 = vadd.f32 0.0, %v2248
        %v2250 = vpop.f32.mrb[0].mxu0
        %2251 = vmatprep.mubr.bf16.mxu0 %v1783
        %2252 = vmatmul.mubr.bf16.gmra.mrb[0].mxu0 %v1675
        %v2253 = vpop.f32.mrb[0].mxu0
        %v2254 = vadd.f32 0.0, %v2253
        %v2255 = vpop.f32.mrb[0].mxu0
        %v2256 = vpop.f32.mrb[0].mxu0
        %v2257 = vadd.f32 0.0, %v2256
        %v2258 = vpop.f32.mrb[0].mxu0
        %2259 = vmatprep.mubr.bf16.mxu0 %v1784
        %2260 = vmatmul.mubr.bf16.gmra.mrb[0].mxu0 %v1676
        %v2261 = vpop.f32.mrb[0].mxu0
        %v2262 = vadd.f32 0.0, %v2261
        %v2263 = vpop.f32.mrb[0].mxu0
        %v2264 = vpop.f32.mrb[0].mxu0
        %v2265 = vadd.f32 0.0, %v2264
        %v2266 = vpop.f32.mrb[0].mxu0
        %2267 = vmatprep.mubr.bf16.mxu0 %v1785
        %2268 = vmatmul.mubr.bf16.gmra.mrb[0].mxu0 %v1677
        %v2269 = vpop.f32.mrb[0].mxu0
        %v2270 = vadd.f32 0.0, %v2269
        %v2271 = vpop.f32.mrb[0].mxu0
        %v2272 = vpop.f32.mrb[0].mxu0
        %v2273 = vadd.f32 0.0, %v2272
        %v2274 = vpop.f32.mrb[0].mxu0
        %2275 = vmatprep.mubr.bf16.mxu0 %v1786
        %2276 = vmatmul.mubr.bf16.gmra.mrb[0].mxu0 %v1678
        %v2277 = vpop.f32.mrb[0].mxu0
        %v2278 = vadd.f32 0.0, %v2277
        %v2279 = vpop.f32.mrb[0].mxu0
        %v2280 = vpop.f32.mrb[0].mxu0
        %v2281 = vadd.f32 0.0, %v2280
        %v2282 = vpop.f32.mrb[0].mxu0
        %2283 = vmatprep.mubr.bf16.mxu0 %v1787
        %2284 = vmatmul.mubr.bf16.gmra.mrb[0].mxu0 %v1679
        %v2285 = vpop.f32.mrb[0].mxu0
        %v2286 = vadd.f32 0.0, %v2285
        %v2287 = vpop.f32.mrb[0].mxu0
        %v2288 = vpop.f32.mrb[0].mxu0
        %v2289 = vadd.f32 0.0, %v2288
        %v2290 = vpop.f32.mrb[0].mxu0
        %2291 = vmatprep.mubr.bf16.mxu0 %v1788
        %2292 = vmatmul.mubr.bf16.gmra.mrb[0].mxu0 %v1680
        %v2293 = vpop.f32.mrb[0].mxu0
        %v2294 = vadd.f32 0.0, %v2293
        %v2295 = vpop.f32.mrb[0].mxu0
        %v2296 = vpop.f32.mrb[0].mxu0
        %v2297 = vadd.f32 0.0, %v2296
        %v2298 = vpop.f32.mrb[0].mxu0
        %2299 = vmatprep.mubr.bf16.mxu0 %v1789
        %2300 = vmatmul.mubr.bf16.gmra.mrb[0].mxu0 %v1681
        %v2301 = vpop.f32.mrb[0].mxu0
        %v2302 = vadd.f32 0.0, %v2301
        %v2303 = vpop.f32.mrb[0].mxu0
        %v2304 = vpop.f32.mrb[0].mxu0
        %v2305 = vadd.f32 0.0, %v2304
        %v2306 = vpop.f32.mrb[0].mxu0
        %2307 = vmatprep.mubr.bf16.mxu0 %v1790
        %2308 = vmatmul.mubr.bf16.gmra.mrb[0].mxu0 %v1682
        %v2309 = vpop.f32.mrb[0].mxu0
        %v2310 = vadd.f32 0.0, %v2309
        %v2311 = vpop.f32.mrb[0].mxu0
        %v2312 = vpop.f32.mrb[0].mxu0
        %v2313 = vadd.f32 0.0, %v2312
        %v2314 = vpop.f32.mrb[0].mxu0
        %2315 = vmatprep.mubr.bf16.mxu0 %v1791
        %2316 = vmatmul.mubr.bf16.gmra.mrb[0].mxu0 %v1683
        %v2317 = vpop.f32.mrb[0].mxu0
        %v2318 = vadd.f32 0.0, %v2317
        %v2319 = vpop.f32.mrb[0].mxu0
        %v2320 = vpop.f32.mrb[0].mxu0
        %v2321 = vadd.f32 0.0, %v2320
        %v2322 = vpop.f32.mrb[0].mxu0
        %2323 = vmatprep.mubr.bf16.mxu0 %v1792
        %2324 = vmatmul.mubr.bf16.gmra.mrb[0].mxu0 %v1684
        %v2325 = vpop.f32.mrb[0].mxu0
        %v2326 = vadd.f32 0.0, %v2325
        %v2327 = vpop.f32.mrb[0].mxu0
        %v2328 = vpop.f32.mrb[0].mxu0
        %v2329 = vadd.f32 0.0, %v2328
        %v2330 = vpop.f32.mrb[0].mxu0
        %2331 = vmatprep.mubr.bf16.mxu0 %v1793
        %2332 = vmatmul.mubr.bf16.gmra.mrb[0].mxu0 %v1685
        %v2333 = vpop.f32.mrb[0].mxu0
        %v2334 = vadd.f32 0.0, %v2333
        %v2335 = vpop.f32.mrb[0].mxu0
        %v2336 = vpop.f32.mrb[0].mxu0
        %v2337 = vadd.f32 0.0, %v2336
        %v2338 = vpop.f32.mrb[0].mxu0
        %2339 = vmatprep.mubr.bf16.mxu0 %v1794
        %2340 = vmatmul.mubr.bf16.gmra.mrb[0].mxu0 %v1686
        %v2341 = vpop.f32.mrb[0].mxu0
        %v2342 = vadd.f32 0.0, %v2341
        %v2343 = vpop.f32.mrb[0].mxu0
        %v2344 = vpop.f32.mrb[0].mxu0
        %v2345 = vadd.f32 0.0, %v2344
        %v2346 = vpop.f32.mrb[0].mxu0
        %2347 = vmatprep.mubr.bf16.mxu0 %v1795
        %2348 = vmatmul.mubr.bf16.gmra.mrb[0].mxu0 %v1687
        %v2349 = vpop.f32.mrb[0].mxu0
        %v2350 = vadd.f32 0.0, %v2349
        %v2351 = vpop.f32.mrb[0].mxu0
        %v2352 = vpop.f32.mrb[0].mxu0
        %v2353 = vadd.f32 0.0, %v2352
        %v2354 = vpop.f32.mrb[0].mxu0
        %2355 = vmatprep.mubr.bf16.mxu0 %v1796
        %2356 = vmatmul.mubr.bf16.gmra.mrb[0].mxu0 %v1688
        %v2357 = vpop.f32.mrb[0].mxu0
        %v2358 = vadd.f32 0.0, %v2357
        %v2359 = vpop.f32.mrb[0].mxu0
        %v2360 = vpop.f32.mrb[0].mxu0
        %v2361 = vadd.f32 0.0, %v2360
        %v2362 = vpop.f32.mrb[0].mxu0
        %2363 = vmatprep.mubr.bf16.mxu0 %v1797
        %2364 = vmatmul.mubr.bf16.gmra.mrb[0].mxu0 %v1689
        %v2365 = vpop.f32.mrb[0].mxu0
        %v2366 = vadd.f32 0.0, %v2365
        %v2367 = vpop.f32.mrb[0].mxu0
        %v2368 = vpop.f32.mrb[0].mxu0
        %v2369 = vadd.f32 0.0, %v2368
        %v2370 = vpop.f32.mrb[0].mxu0
        %2371 = vmatprep.mubr.bf16.mxu0 %v1798
        %2372 = vmatmul.mubr.bf16.gmra.mrb[0].mxu0 %v1690
        %v2373 = vpop.f32.mrb[0].mxu0
        %v2374 = vadd.f32 0.0, %v2373
        %v2375 = vpop.f32.mrb[0].mxu0
        %v2376 = vpop.f32.mrb[0].mxu0
        %v2377 = vadd.f32 0.0, %v2376
        %v2378 = vpop.f32.mrb[0].mxu0
        %2379 = vmatprep.mubr.bf16.mxu0 %v1799
        %2380 = vmatmul.mubr.bf16.gmra.mrb[0].mxu0 %v1691
        %v2381 = vpop.f32.mrb[0].mxu0
        %v2382 = vadd.f32 0.0, %v2381
        %v2383 = vpop.f32.mrb[0].mxu0
        %v2384 = vpop.f32.mrb[0].mxu0
        %v2385 = vadd.f32 0.0, %v2384
        %v2386 = vpop.f32.mrb[0].mxu0
        %2387 = vmatprep.mubr.bf16.mxu0 %v1800
        %2388 = vmatmul.mubr.bf16.gmra.mrb[0].mxu0 %v1692
        %v2389 = vpop.f32.mrb[0].mxu0
        %v2390 = vadd.f32 0.0, %v2389
        %v2391 = vpop.f32.mrb[0].mxu0
        %v2392 = vpop.f32.mrb[0].mxu0
        %v2393 = vadd.f32 0.0, %v2392
        %v2394 = vpop.f32.mrb[0].mxu0
        %2395 = vmatprep.mubr.bf16.mxu0 %v1801
        %2396 = vmatmul.mubr.bf16.gmra.mrb[0].mxu0 %v1693
        %v2397 = vpop.f32.mrb[0].mxu0
        %v2398 = vadd.f32 0.0, %v2397
        %v2399 = vpop.f32.mrb[0].mxu0
        %v2400 = vpop.f32.mrb[0].mxu0
        %v2401 = vadd.f32 0.0, %v2400
        %v2402 = vpop.f32.mrb[0].mxu0
        %2403 = vmatprep.mubr.bf16.mxu0 %v1802
        %2404 = vmatmul.mubr.bf16.gmra.mrb[0].mxu0 %v1694
        %v2405 = vpop.f32.mrb[0].mxu0
        %v2406 = vadd.f32 0.0, %v2405
        %v2407 = vpop.f32.mrb[0].mxu0
        %v2408 = vpop.f32.mrb[0].mxu0
        %v2409 = vadd.f32 0.0, %v2408
        %v2410 = vpop.f32.mrb[0].mxu0
        %2411 = vmatprep.mubr.bf16.mxu0 %v1803
        %2412 = vmatmul.mubr.bf16.gmra.mrb[0].mxu0 %v1695
        %v2413 = vpop.f32.mrb[0].mxu0
        %v2414 = vadd.f32 0.0, %v2413
        %v2415 = vpop.f32.mrb[0].mxu0
        %v2416 = vpop.f32.mrb[0].mxu0
        %v2417 = vadd.f32 0.0, %v2416
        %v2418 = vpop.f32.mrb[0].mxu0
        %2419 = vmatprep.mubr.bf16.mxu0 %v1804
        %2420 = vmatmul.mubr.bf16.gmra.mrb[0].mxu0 %v1696
        %v2421 = vpop.f32.mrb[0].mxu0
        %v2422 = vadd.f32 0.0, %v2421
        %v2423 = vpop.f32.mrb[0].mxu0
        %v2424 = vpop.f32.mrb[0].mxu0
        %v2425 = vadd.f32 0.0, %v2424
        %v2426 = vpop.f32.mrb[0].mxu0
        %2427 = vmatprep.mubr.bf16.mxu0 %v1805
        %2428 = vmatmul.mubr.bf16.gmra.mrb[0].mxu0 %v1697
        %v2429 = vpop.f32.mrb[0].mxu0
        %v2430 = vadd.f32 0.0, %v2429
        %v2431 = vpop.f32.mrb[0].mxu0
        %v2432 = vpop.f32.mrb[0].mxu0
        %v2433 = vadd.f32 0.0, %v2432
        %v2434 = vpop.f32.mrb[0].mxu0
        %2435 = vdwg.mxu0
        %2436 = vmatprep.subr.bf16.mxu0 0
        %2437 = vmatpush1.bf16.msra.mxu0 %v2155
        %2438 = vmatprep.subr.bf16.mxu0 0
        %2439 = vmatpush1.bf16.msra.mxu0 %v2156
        %2440 = vmatprep.subr.bf16.mxu0 0
        %2441 = vmatpush1.bf16.msra.mxu0 %v2157
        %2442 = vmatprep.subr.bf16.mxu0 0
        %2443 = vmatpush1.bf16.msra.mxu0 %v2158
        %2444 = vmatprep.subr.bf16.mxu0 0
        %2445 = vmatpush1.bf16.msra.mxu0 %v2159
        %2446 = vmatprep.subr.bf16.mxu0 0
        %2447 = vmatpush1.bf16.msra.mxu0 %v2160
        %2448 = vmatprep.subr.bf16.mxu0 0
        %2449 = vmatpush1.bf16.msra.mxu0 %v2161
        %2450 = vmatprep.subr.bf16.mxu0 0
        %2451 = vmatpush1.bf16.msra.mxu0 %v2162
        %2452 = vmatprep.subr.bf16.mxu0 0
        %2453 = vmatpush1.bf16.msra.mxu0 0
        %2454 = vmatprep.subr.bf16.mxu0 0
        %2455 = vmatpush1.bf16.msra.mxu0 0
        %2456 = vmatprep.subr.bf16.mxu0 0
        %2457 = vmatpush1.bf16.msra.mxu0 0
        %2458 = vmatprep.subr.bf16.mxu0 0
        %2459 = vmatpush1.bf16.msra.mxu0 0
        %2460 = vmatprep.subr.bf16.mxu0 0
        %2461 = vmatpush1.bf16.msra.mxu0 0
        %2462 = vmatprep.subr.bf16.mxu0 0
        %2463 = vmatpush1.bf16.msra.mxu0 0
        %2464 = vmatprep.subr.bf16.mxu0 0
        %2465 = vmatpush1.bf16.msra.mxu0 0
        %2466 = vmatprep.subr.bf16.mxu0 0
        %2467 = vmatpush1.bf16.msra.mxu0 0
        %2468 = vmatprep.mubr.bf16.mxu0 0
        %2469 = vmatmul.mubr.bf16.gmra.mrb[0].mxu0 %v1887
        %v2470 = vpop.f32.mrb[0].mxu0
        %v2471 = vadd.f32 %v2222, %v2470
        %v2472 = vpop.f32.mrb[0].mxu0
        %v2473 = vpop.f32.mrb[0].mxu0
        %v2474 = vadd.f32 %v2225, %v2473
        %v2475 = vpop.f32.mrb[0].mxu0
        %2476 = vmatprep.mubr.bf16.mxu0 0
        %2477 = vmatmul.mubr.bf16.gmra.mrb[0].mxu0 %v1888
        %v2478 = vpop.f32.mrb[0].mxu0
        %v2479 = vadd.f32 %v2230, %v2478
        %v2480 = vpop.f32.mrb[0].mxu0
        %v2481 = vpop.f32.mrb[0].mxu0
        %v2482 = vadd.f32 %v2233, %v2481
        %v2483 = vpop.f32.mrb[0].mxu0
        %2484 = vmatprep.mubr.bf16.mxu0 0
        %2485 = vmatmul.mubr.bf16.gmra.mrb[0].mxu0 %v1889
        %v2486 = vpop.f32.mrb[0].mxu0
        %v2487 = vadd.f32 %v2238, %v2486
        %v2488 = vpop.f32.mrb[0].mxu0
        %v2489 = vpop.f32.mrb[0].mxu0
        %v2490 = vadd.f32 %v2241, %v2489
        %v2491 = vpop.f32.mrb[0].mxu0
        %2492 = vmatprep.mubr.bf16.mxu0 0
        %2493 = vmatmul.mubr.bf16.gmra.mrb[0].mxu0 %v1890
        %v2494 = vpop.f32.mrb[0].mxu0
        %v2495 = vadd.f32 %v2246, %v2494
        %v2496 = vpop.f32.mrb[0].mxu0
        %v2497 = vpop.f32.mrb[0].mxu0
        %v2498 = vadd.f32 %v2249, %v2497
        %v2499 = vpop.f32.mrb[0].mxu0
        %2500 = vmatprep.mubr.bf16.mxu0 0
        %2501 = vmatmul.mubr.bf16.gmra.mrb[0].mxu0 %v1891
        %v2502 = vpop.f32.mrb[0].mxu0
        %v2503 = vadd.f32 %v2254, %v2502
        %v2504 = vpop.f32.mrb[0].mxu0
        %v2505 = vpop.f32.mrb[0].mxu0
        %v2506 = vadd.f32 %v2257, %v2505
        %v2507 = vpop.f32.mrb[0].mxu0
        %2508 = vmatprep.mubr.bf16.mxu0 0
        %2509 = vmatmul.mubr.bf16.gmra.mrb[0].mxu0 %v1892
        %v2510 = vpop.f32.mrb[0].mxu0
        %v2511 = vadd.f32 %v2262, %v2510
        %v2512 = vpop.f32.mrb[0].mxu0
        %v2513 = vpop.f32.mrb[0].mxu0
        %v2514 = vadd.f32 %v2265, %v2513
        %v2515 = vpop.f32.mrb[0].mxu0
        %2516 = vmatprep.mubr.bf16.mxu0 0
        %2517 = vmatmul.mubr.bf16.gmra.mrb[0].mxu0 %v1893
        %v2518 = vpop.f32.mrb[0].mxu0
        %v2519 = vadd.f32 %v2270, %v2518
        %v2520 = vpop.f32.mrb[0].mxu0
        %v2521 = vpop.f32.mrb[0].mxu0
        %v2522 = vadd.f32 %v2273, %v2521
        %v2523 = vpop.f32.mrb[0].mxu0
        %2524 = vmatprep.mubr.bf16.mxu0 0
        %2525 = vmatmul.mubr.bf16.gmra.mrb[0].mxu0 %v1894
        %v2526 = vpop.f32.mrb[0].mxu0
        %v2527 = vadd.f32 %v2278, %v2526
        %v2528 = vpop.f32.mrb[0].mxu0
        %v2529 = vpop.f32.mrb[0].mxu0
        %v2530 = vadd.f32 %v2281, %v2529
        %v2531 = vpop.f32.mrb[0].mxu0
        %2532 = vmatprep.mubr.bf16.mxu0 0
        %2533 = vmatmul.mubr.bf16.gmra.mrb[0].mxu0 %v1895
        %v2534 = vpop.f32.mrb[0].mxu0
        %v2535 = vadd.f32 %v2286, %v2534
        %v2536 = vpop.f32.mrb[0].mxu0
        %v2537 = vpop.f32.mrb[0].mxu0
        %v2538 = vadd.f32 %v2289, %v2537
        %v2539 = vpop.f32.mrb[0].mxu0
        %2540 = vmatprep.mubr.bf16.mxu0 0
        %2541 = vmatmul.mubr.bf16.gmra.mrb[0].mxu0 %v1896
        %v2542 = vpop.f32.mrb[0].mxu0
        %v2543 = vadd.f32 %v2294, %v2542
        %v2544 = vpop.f32.mrb[0].mxu0
        %v2545 = vpop.f32.mrb[0].mxu0
        %v2546 = vadd.f32 %v2297, %v2545
        %v2547 = vpop.f32.mrb[0].mxu0
        %2548 = vmatprep.mubr.bf16.mxu0 0
        %2549 = vmatmul.mubr.bf16.gmra.mrb[0].mxu0 %v1897
        %v2550 = vpop.f32.mrb[0].mxu0
        %v2551 = vadd.f32 %v2302, %v2550
        %v2552 = vpop.f32.mrb[0].mxu0
        %v2553 = vpop.f32.mrb[0].mxu0
        %v2554 = vadd.f32 %v2305, %v2553
        %v2555 = vpop.f32.mrb[0].mxu0
        %2556 = vmatprep.mubr.bf16.mxu0 0
        %2557 = vmatmul.mubr.bf16.gmra.mrb[0].mxu0 %v1898
        %v2558 = vpop.f32.mrb[0].mxu0
        %v2559 = vadd.f32 %v2310, %v2558
        %v2560 = vpop.f32.mrb[0].mxu0
        %v2561 = vpop.f32.mrb[0].mxu0
        %v2562 = vadd.f32 %v2313, %v2561
        %v2563 = vpop.f32.mrb[0].mxu0
        %2564 = vmatprep.mubr.bf16.mxu0 0
        %2565 = vmatmul.mubr.bf16.gmra.mrb[0].mxu0 %v1899
        %v2566 = vpop.f32.mrb[0].mxu0
        %v2567 = vadd.f32 %v2318, %v2566
        %v2568 = vpop.f32.mrb[0].mxu0
        %v2569 = vpop.f32.mrb[0].mxu0
        %v2570 = vadd.f32 %v2321, %v2569
        %v2571 = vpop.f32.mrb[0].mxu0
        %2572 = vmatprep.mubr.bf16.mxu0 0
        %2573 = vmatmul.mubr.bf16.gmra.mrb[0].mxu0 %v1900
        %v2574 = vpop.f32.mrb[0].mxu0
        %v2575 = vadd.f32 %v2326, %v2574
        %v2576 = vpop.f32.mrb[0].mxu0
        %v2577 = vpop.f32.mrb[0].mxu0
        %v2578 = vadd.f32 %v2329, %v2577
        %v2579 = vpop.f32.mrb[0].mxu0
        %2580 = vmatprep.mubr.bf16.mxu0 0
        %2581 = vmatmul.mubr.bf16.gmra.mrb[0].mxu0 %v1901
        %v2582 = vpop.f32.mrb[0].mxu0
        %v2583 = vadd.f32 %v2334, %v2582
        %v2584 = vpop.f32.mrb[0].mxu0
        %v2585 = vpop.f32.mrb[0].mxu0
        %v2586 = vadd.f32 %v2337, %v2585
        %v2587 = vpop.f32.mrb[0].mxu0
        %2588 = vmatprep.mubr.bf16.mxu0 0
        %2589 = vmatmul.mubr.bf16.gmra.mrb[0].mxu0 %v1902
        %v2590 = vpop.f32.mrb[0].mxu0
        %v2591 = vadd.f32 %v2342, %v2590
        %v2592 = vpop.f32.mrb[0].mxu0
        %v2593 = vpop.f32.mrb[0].mxu0
        %v2594 = vadd.f32 %v2345, %v2593
        %v2595 = vpop.f32.mrb[0].mxu0
        %2596 = vmatprep.mubr.bf16.mxu0 0
        %2597 = vmatmul.mubr.bf16.gmra.mrb[0].mxu0 %v1903
        %v2598 = vpop.f32.mrb[0].mxu0
        %v2599 = vadd.f32 %v2350, %v2598
        %v2600 = vpop.f32.mrb[0].mxu0
        %v2601 = vpop.f32.mrb[0].mxu0
        %v2602 = vadd.f32 %v2353, %v2601
        %v2603 = vpop.f32.mrb[0].mxu0
        %2604 = vmatprep.mubr.bf16.mxu0 0
        %2605 = vmatmul.mubr.bf16.gmra.mrb[0].mxu0 %v1904
        %v2606 = vpop.f32.mrb[0].mxu0
        %v2607 = vadd.f32 %v2358, %v2606
        %v2608 = vpop.f32.mrb[0].mxu0
        %v2609 = vpop.f32.mrb[0].mxu0
        %v2610 = vadd.f32 %v2361, %v2609
        %v2611 = vpop.f32.mrb[0].mxu0
        %2612 = vmatprep.mubr.bf16.mxu0 0
        %2613 = vmatmul.mubr.bf16.gmra.mrb[0].mxu0 %v1905
        %v2614 = vpop.f32.mrb[0].mxu0
        %v2615 = vadd.f32 %v2366, %v2614
        %v2616 = vpop.f32.mrb[0].mxu0
        %v2617 = vpop.f32.mrb[0].mxu0
        %v2618 = vadd.f32 %v2369, %v2617
        %v2619 = vpop.f32.mrb[0].mxu0
        %2620 = vmatprep.mubr.bf16.mxu0 0
        %2621 = vmatmul.mubr.bf16.gmra.mrb[0].mxu0 %v1906
        %v2622 = vpop.f32.mrb[0].mxu0
        %v2623 = vadd.f32 %v2374, %v2622
        %v2624 = vpop.f32.mrb[0].mxu0
        %v2625 = vpop.f32.mrb[0].mxu0
        %v2626 = vadd.f32 %v2377, %v2625
        %v2627 = vpop.f32.mrb[0].mxu0
        %2628 = vmatprep.mubr.bf16.mxu0 0
        %2629 = vmatmul.mubr.bf16.gmra.mrb[0].mxu0 %v1907
        %v2630 = vpop.f32.mrb[0].mxu0
        %v2631 = vadd.f32 %v2382, %v2630
        %v2632 = vpop.f32.mrb[0].mxu0
        %v2633 = vpop.f32.mrb[0].mxu0
        %v2634 = vadd.f32 %v2385, %v2633
        %v2635 = vpop.f32.mrb[0].mxu0
        %2636 = vmatprep.mubr.bf16.mxu0 0
        %2637 = vmatmul.mubr.bf16.gmra.mrb[0].mxu0 %v1908
        %v2638 = vpop.f32.mrb[0].mxu0
        %v2639 = vadd.f32 %v2390, %v2638
        %v2640 = vpop.f32.mrb[0].mxu0
        %v2641 = vpop.f32.mrb[0].mxu0
        %v2642 = vadd.f32 %v2393, %v2641
        %v2643 = vpop.f32.mrb[0].mxu0
        %2644 = vmatprep.mubr.bf16.mxu0 0
        %2645 = vmatmul.mubr.bf16.gmra.mrb[0].mxu0 %v1909
        %v2646 = vpop.f32.mrb[0].mxu0
        %v2647 = vadd.f32 %v2398, %v2646
        %v2648 = vpop.f32.mrb[0].mxu0
        %v2649 = vpop.f32.mrb[0].mxu0
        %v2650 = vadd.f32 %v2401, %v2649
        %v2651 = vpop.f32.mrb[0].mxu0
        %2652 = vmatprep.mubr.bf16.mxu0 0
        %2653 = vmatmul.mubr.bf16.gmra.mrb[0].mxu0 %v1910
        %v2654 = vpop.f32.mrb[0].mxu0
        %v2655 = vadd.f32 %v2406, %v2654
        %v2656 = vpop.f32.mrb[0].mxu0
        %v2657 = vpop.f32.mrb[0].mxu0
        %v2658 = vadd.f32 %v2409, %v2657
        %v2659 = vpop.f32.mrb[0].mxu0
        %2660 = vmatprep.mubr.bf16.mxu0 0
        %2661 = vmatmul.mubr.bf16.gmra.mrb[0].mxu0 %v1911
        %v2662 = vpop.f32.mrb[0].mxu0
        %v2663 = vadd.f32 %v2414, %v2662
        %v2664 = vpop.f32.mrb[0].mxu0
        %v2665 = vpop.f32.mrb[0].mxu0
        %v2666 = vadd.f32 %v2417, %v2665
        %v2667 = vpop.f32.mrb[0].mxu0
        %2668 = vmatprep.mubr.bf16.mxu0 0
        %2669 = vmatmul.mubr.bf16.gmra.mrb[0].mxu0 %v1912
        %v2670 = vpop.f32.mrb[0].mxu0
        %v2671 = vadd.f32 %v2422, %v2670
        %v2672 = vpop.f32.mrb[0].mxu0
        %v2673 = vpop.f32.mrb[0].mxu0
        %v2674 = vadd.f32 %v2425, %v2673
        %v2675 = vpop.f32.mrb[0].mxu0
        %2676 = vmatprep.mubr.bf16.mxu0 0
        %2677 = vmatmul.mubr.bf16.gmra.mrb[0].mxu0 %v1913
        %v2678 = vpop.f32.mrb[0].mxu0
        %v2679 = vadd.f32 %v2430, %v2678
        %v2680 = vpop.f32.mrb[0].mxu0
        %v2681 = vpop.f32.mrb[0].mxu0
        %v2682 = vadd.f32 %v2433, %v2681
        %v2683 = vpop.f32.mrb[0].mxu0
        %2684 = vdwg.mxu0
        %v2685 = vadd.f32 %v1989, %v2471
        %v2686 = vadd.f32 %v1990, %v2474
        %v2687 = vadd.f32 %v1991, %v2479
        %v2688 = vadd.f32 %v1992, %v2482
        %v2689 = vadd.f32 %v1993, %v2487
        %v2690 = vadd.f32 %v1994, %v2490
        %v2691 = vadd.f32 %v1995, %v2495
        %v2692 = vadd.f32 %v1996, %v2498
        %v2693 = vadd.f32 %v1997, %v2503
        %v2694 = vadd.f32 %v1998, %v2506
        %v2695 = vadd.f32 %v1999, %v2511
        %v2696 = vadd.f32 %v2000, %v2514
        %v2697 = vadd.f32 %v2001, %v2519
        %v2698 = vadd.f32 %v2002, %v2522
        %v2699 = vadd.f32 %v2003, %v2527
        %v2700 = vadd.f32 %v2004, %v2530
        %v2701 = vadd.f32 %v2005, %v2535
        %v2702 = vadd.f32 %v2006, %v2538
        %v2703 = vadd.f32 %v2007, %v2543
        %v2704 = vadd.f32 %v2008, %v2546
        %v2705 = vadd.f32 %v2009, %v2551
        %v2706 = vadd.f32 %v2010, %v2554
        %v2707 = vadd.f32 %v2011, %v2559
        %v2708 = vadd.f32 %v2012, %v2562
        %v2709 = vadd.f32 %v2013, %v2567
        %v2710 = vadd.f32 %v2014, %v2570
        %v2711 = vadd.f32 %v2015, %v2575
        %v2712 = vadd.f32 %v2016, %v2578
        %v2713 = vadd.f32 %v2017, %v2583
        %v2714 = vadd.f32 %v2018, %v2586
        %v2715 = vadd.f32 %v2019, %v2591
        %v2716 = vadd.f32 %v2020, %v2594
        %v2717 = vadd.f32 %v2021, %v2599
        %v2718 = vadd.f32 %v2022, %v2602
        %v2719 = vadd.f32 %v2023, %v2607
        %v2720 = vadd.f32 %v2024, %v2610
        %v2721 = vadd.f32 %v2025, %v2615
        %v2722 = vadd.f32 %v2026, %v2618
        %v2723 = vadd.f32 %v2027, %v2623
        %v2724 = vadd.f32 %v2028, %v2626
        %v2725 = vadd.f32 %v2029, %v2631
        %v2726 = vadd.f32 %v2030, %v2634
        %v2727 = vadd.f32 %v2031, %v2639
        %v2728 = vadd.f32 %v2032, %v2642
        %v2729 = vadd.f32 %v2033, %v2647
        %v2730 = vadd.f32 %v2034, %v2650
        %v2731 = vadd.f32 %v2035, %v2655
        %v2732 = vadd.f32 %v2036, %v2658
        %v2733 = vadd.f32 %v2037, %v2663
        %v2734 = vadd.f32 %v2038, %v2666
        %v2735 = vadd.f32 %v2039, %v2671
        %v2736 = vadd.f32 %v2040, %v2674
        %v2737 = vadd.f32 %v2041, %v2679
        %v2738 = vadd.f32 %v2042, %v2682
        %2739 = vst [vmem:[#allocation3] sm:$0xff] %v2685
        %2740 = vst [vmem:[#allocation3 + $0x8] sm:$0xff] %v2686
        %2741 = vst [vmem:[#allocation3 + $0x10] sm:$0xff] %v2687
        %2742 = vst [vmem:[#allocation3 + $0x18] sm:$0xff] %v2688
        %2743 = vst [vmem:[#allocation3 + $0x20] sm:$0xff] %v2689
        %2744 = vst [vmem:[#allocation3 + $0x28] sm:$0xff] %v2690
        %2745 = vst [vmem:[#allocation3 + $0x30] sm:$0xff] %v2691
        %2746 = vst [vmem:[#allocation3 + $0x38] sm:$0xff] %v2692
        %2747 = vst [vmem:[#allocation3 + $0x40] sm:$0xff] %v2693
        %2748 = vst [vmem:[#allocation3 + $0x48] sm:$0xff] %v2694
        %2749 = vst [vmem:[#allocation3 + $0x50] sm:$0xff] %v2695
        %2750 = vst [vmem:[#allocation3 + $0x58] sm:$0xff] %v2696
        %2751 = vst [vmem:[#allocation3 + $0x60] sm:$0xff] %v2697
        %2752 = vst [vmem:[#allocation3 + $0x68] sm:$0xff] %v2698
        %2753 = vst [vmem:[#allocation3 + $0x70] sm:$0xff] %v2699
        %2754 = vst [vmem:[#allocation3 + $0x78] sm:$0xff] %v2700
        %2755 = vst [vmem:[#allocation3 + $0x80] sm:$0xff] %v2701
        %2756 = vst [vmem:[#allocation3 + $0x88] sm:$0xff] %v2702
        %2757 = vst [vmem:[#allocation3 + $0x90] sm:$0xff] %v2703
        %2758 = vst [vmem:[#allocation3 + $0x98] sm:$0xff] %v2704
        %2759 = vst [vmem:[#allocation3 + $0xa0] sm:$0xff] %v2705
        %2760 = vst [vmem:[#allocation3 + $0xa8] sm:$0xff] %v2706
        %2761 = vst [vmem:[#allocation3 + $0xb0] sm:$0xff] %v2707
        %2762 = vst [vmem:[#allocation3 + $0xb8] sm:$0xff] %v2708
        %2763 = vst [vmem:[#allocation3 + $0xc0] sm:$0xff] %v2709
        %2764 = vst [vmem:[#allocation3 + $0xc8] sm:$0xff] %v2710
        %2765 = vst [vmem:[#allocation3 + $0xd0] sm:$0xff] %v2711
        %2766 = vst [vmem:[#allocation3 + $0xd8] sm:$0xff] %v2712
        %2767 = vst [vmem:[#allocation3 + $0xe0] sm:$0xff] %v2713
        %2768 = vst [vmem:[#allocation3 + $0xe8] sm:$0xff] %v2714
        %2769 = vst [vmem:[#allocation3 + $0xf0] sm:$0xff] %v2715
        %2770 = vst [vmem:[#allocation3 + $0xf8] sm:$0xff] %v2716
        %2771 = vst [vmem:[#allocation3 + $0x100] sm:$0xff] %v2717
        %2772 = vst [vmem:[#allocation3 + $0x108] sm:$0xff] %v2718
        %2773 = vst [vmem:[#allocation3 + $0x110] sm:$0xff] %v2719
        %2774 = vst [vmem:[#allocation3 + $0x118] sm:$0xff] %v2720
        %2775 = vst [vmem:[#allocation3 + $0x120] sm:$0xff] %v2721
        %2776 = vst [vmem:[#allocation3 + $0x128] sm:$0xff] %v2722
        %2777 = vst [vmem:[#allocation3 + $0x130] sm:$0xff] %v2723
        %2778 = vst [vmem:[#allocation3 + $0x138] sm:$0xff] %v2724
        %2779 = vst [vmem:[#allocation3 + $0x140] sm:$0xff] %v2725
        %2780 = vst [vmem:[#allocation3 + $0x148] sm:$0xff] %v2726
        %2781 = vst [vmem:[#allocation3 + $0x150] sm:$0xff] %v2727
        %2782 = vst [vmem:[#allocation3 + $0x158] sm:$0xff] %v2728
        %2783 = vst [vmem:[#allocation3 + $0x160] sm:$0xff] %v2729
        %2784 = vst [vmem:[#allocation3 + $0x168] sm:$0xff] %v2730
        %2785 = vst [vmem:[#allocation3 + $0x170] sm:$0xff] %v2731
        %2786 = vst [vmem:[#allocation3 + $0x178] sm:$0xff] %v2732
        %2787 = vst [vmem:[#allocation3 + $0x180] sm:$0xff] %v2733
        %2788 = vst [vmem:[#allocation3 + $0x188] sm:$0xff] %v2734
        %2789 = vst [vmem:[#allocation3 + $0x190] sm:$0xff] %v2735
        %2790 = vst [vmem:[#allocation3 + $0x198] sm:$0xff] %v2736
        %2791 = vst [vmem:[#allocation3 + $0x1a0] sm:$0xff] %v2737
        %2792 = vst [vmem:[#allocation3 + $0x1a8] sm:$0xff] %v2738
        %s2793 = scalar_lea.vmem [#allocation2], 16
        %v2794 = vld [vmem:[%s2793] sm:$0xf]
        %v2795 = vld [vmem:[%s2793 + $0x4] sm:$0xf]
        %v2796 = vld [vmem:[%s2793 + $0x8] sm:$0xf]
        %v2797 = vld [vmem:[%s2793 + $0x10] sm:$0xf]
        %v2798 = vld [vmem:[%s2793 + $0x14] sm:$0xf]
        %v2799 = vld [vmem:[%s2793 + $0x18] sm:$0xf]
        %v2800 = vld [vmem:[%s2793 + $0x20] sm:$0xf]
        %v2801 = vld [vmem:[%s2793 + $0x24] sm:$0xf]
        %v2802 = vld [vmem:[%s2793 + $0x28] sm:$0xf]
        %v2803 = vld [vmem:[%s2793 + $0x30] sm:$0xf]
        %v2804 = vld [vmem:[%s2793 + $0x34] sm:$0xf]
        %v2805 = vld [vmem:[%s2793 + $0x38] sm:$0xf]
        %v2806 = vld [vmem:[%s2793 + $0x40] sm:$0xf]
        %v2807 = vld [vmem:[%s2793 + $0x44] sm:$0xf]
        %v2808 = vld [vmem:[%s2793 + $0x48] sm:$0xf]
        %v2809 = vld [vmem:[%s2793 + $0x50] sm:$0xf]
        %v2810 = vld [vmem:[%s2793 + $0x54] sm:$0xf]
        %v2811 = vld [vmem:[%s2793 + $0x58] sm:$0xf]
        %v2812 = vld [vmem:[%s2793 + $0x60] sm:$0xf]
        %v2813 = vld [vmem:[%s2793 + $0x64] sm:$0xf]
        %v2814 = vld [vmem:[%s2793 + $0x68] sm:$0xf]
        %v2815 = vld [vmem:[%s2793 + $0x70] sm:$0xf]
        %v2816 = vld [vmem:[%s2793 + $0x74] sm:$0xf]
        %v2817 = vld [vmem:[%s2793 + $0x78] sm:$0xf]
        %v2818 = vld [vmem:[%s2793 + $0x80] sm:$0xf]
        %v2819 = vld [vmem:[%s2793 + $0x84] sm:$0xf]
        %v2820 = vld [vmem:[%s2793 + $0x88] sm:$0xf]
        %v2821 = vld [vmem:[%s2793 + $0x90] sm:$0xf]
        %v2822 = vld [vmem:[%s2793 + $0x94] sm:$0xf]
        %v2823 = vld [vmem:[%s2793 + $0x98] sm:$0xf]
        %v2824 = vld [vmem:[%s2793 + $0xa0] sm:$0xf]
        %v2825 = vld [vmem:[%s2793 + $0xa4] sm:$0xf]
        %v2826 = vld [vmem:[%s2793 + $0xa8] sm:$0xf]
        %v2827 = vld [vmem:[%s2793 + $0xb0] sm:$0xf]
        %v2828 = vld [vmem:[%s2793 + $0xb4] sm:$0xf]
        %v2829 = vld [vmem:[%s2793 + $0xb8] sm:$0xf]
        %v2830 = vld [vmem:[%s2793 + $0xc0] sm:$0xf]
        %v2831 = vld [vmem:[%s2793 + $0xc4] sm:$0xf]
        %v2832 = vld [vmem:[%s2793 + $0xc8] sm:$0xf]
        %v2833 = vld [vmem:[%s2793 + $0xd0] sm:$0xf]
        %v2834 = vld [vmem:[%s2793 + $0xd4] sm:$0xf]
        %v2835 = vld [vmem:[%s2793 + $0xd8] sm:$0xf]
        %v2836 = vld [vmem:[%s2793 + $0xe0] sm:$0xf]
        %v2837 = vld [vmem:[%s2793 + $0xe4] sm:$0xf]
        %v2838 = vld [vmem:[%s2793 + $0xe8] sm:$0xf]
        %v2839 = vld [vmem:[%s2793 + $0xf0] sm:$0xf]
        %v2840 = vld [vmem:[%s2793 + $0xf4] sm:$0xf]
        %v2841 = vld [vmem:[%s2793 + $0xf8] sm:$0xf]
        %v2842 = vld [vmem:[%s2793 + $0x100] sm:$0xf]
        %v2843 = vld [vmem:[%s2793 + $0x104] sm:$0xf]
        %v2844 = vld [vmem:[%s2793 + $0x108] sm:$0xf]
        %v2845 = vld [vmem:[%s2793 + $0x110] sm:$0xf]
        %v2846 = vld [vmem:[%s2793 + $0x114] sm:$0xf]
        %v2847 = vld [vmem:[%s2793 + $0x118] sm:$0xf]
        %v2848 = vld [vmem:[%s2793 + $0xc] sm:$0x1]
        %v2849 = vld [vmem:[%s2793 + $0x1c] sm:$0x1]
        %v2850 = vld [vmem:[%s2793 + $0x2c] sm:$0x1]
        %v2851 = vld [vmem:[%s2793 + $0x3c] sm:$0x1]
        %v2852 = vld [vmem:[%s2793 + $0x4c] sm:$0x1]
        %v2853 = vld [vmem:[%s2793 + $0x5c] sm:$0x1]
        %v2854 = vld [vmem:[%s2793 + $0x6c] sm:$0x1]
        %v2855 = vld [vmem:[%s2793 + $0x7c] sm:$0x1]
        %v2856 = vld [vmem:[%s2793 + $0x8c] sm:$0x1]
        %v2857 = vld [vmem:[%s2793 + $0x9c] sm:$0x1]
        %v2858 = vld [vmem:[%s2793 + $0xac] sm:$0x1]
        %v2859 = vld [vmem:[%s2793 + $0xbc] sm:$0x1]
        %v2860 = vld [vmem:[%s2793 + $0xcc] sm:$0x1]
        %v2861 = vld [vmem:[%s2793 + $0xdc] sm:$0x1]
        %v2862 = vld [vmem:[%s2793 + $0xec] sm:$0x1]
        %v2863 = vld [vmem:[%s2793 + $0xfc] sm:$0x1]
        %v2864 = vld [vmem:[%s2793 + $0x10c] sm:$0x1]
        %v2865 = vld [vmem:[%s2793 + $0x11c] sm:$0x1]
        %v2867 = vshrl.u32 %v2794, 16
        %v2869 = vrot.slane %v2867, 4
        %v2870 = vshll.u32 %v2794, 16
        %v2872 = vrot.slane %v2870, 5
        %v2873 = vor.u32 %v2869, %v2872
        %v2874 = vrot.slane %v2873, 4
        %v2876 = vshll.u32 %v2795, 16
        %v2878 = vrot.slane %v2876, 5
        %v2879 = vsel %vm713, %v2874, %v2878
        %v2880 = vshrl.u32 %v2795, 16
        %v2882 = vrot.slane %v2880, 4
        %v2883 = vor.u32 %v2882, %v2878
        %v2884 = vrot.slane %v2883, 4
        %v2886 = vshll.u32 %v2796, 16
        %v2888 = vrot.slane %v2886, 5
        %v2889 = vsel %vm713, %v2884, %v2888
        %v2890 = vshrl.u32 %v2796, 16
        %v2892 = vrot.slane %v2890, 4
        %v2893 = vor.u32 %v2892, %v2888
        %v2894 = vrot.slane %v2893, 4
        %v2896 = vshll.u32 %v2848, 16
        %v2898 = vrot.slane %v2896, 5
        %v2899 = vsel %vm713, %v2894, %v2898
        %v2901 = vshrl.u32 %v2797, 16
        %v2903 = vrot.slane %v2901, 4
        %v2904 = vshll.u32 %v2797, 16
        %v2906 = vrot.slane %v2904, 5
        %v2907 = vor.u32 %v2903, %v2906
        %v2908 = vrot.slane %v2907, 4
        %v2910 = vshll.u32 %v2798, 16
        %v2912 = vrot.slane %v2910, 5
        %v2913 = vsel %vm713, %v2908, %v2912
        %v2914 = vshrl.u32 %v2798, 16
        %v2916 = vrot.slane %v2914, 4
        %v2917 = vor.u32 %v2916, %v2912
        %v2918 = vrot.slane %v2917, 4
        %v2920 = vshll.u32 %v2799, 16
        %v2922 = vrot.slane %v2920, 5
        %v2923 = vsel %vm713, %v2918, %v2922
        %v2924 = vshrl.u32 %v2799, 16
        %v2926 = vrot.slane %v2924, 4
        %v2927 = vor.u32 %v2926, %v2922
        %v2928 = vrot.slane %v2927, 4
        %v2930 = vshll.u32 %v2849, 16
        %v2932 = vrot.slane %v2930, 5
        %v2933 = vsel %vm713, %v2928, %v2932
        %v2935 = vshrl.u32 %v2800, 16
        %v2937 = vrot.slane %v2935, 4
        %v2938 = vshll.u32 %v2800, 16
        %v2940 = vrot.slane %v2938, 5
        %v2941 = vor.u32 %v2937, %v2940
        %v2942 = vrot.slane %v2941, 4
        %v2944 = vshll.u32 %v2801, 16
        %v2946 = vrot.slane %v2944, 5
        %v2947 = vsel %vm713, %v2942, %v2946
        %v2948 = vshrl.u32 %v2801, 16
        %v2950 = vrot.slane %v2948, 4
        %v2951 = vor.u32 %v2950, %v2946
        %v2952 = vrot.slane %v2951, 4
        %v2954 = vshll.u32 %v2802, 16
        %v2956 = vrot.slane %v2954, 5
        %v2957 = vsel %vm713, %v2952, %v2956
        %v2958 = vshrl.u32 %v2802, 16
        %v2960 = vrot.slane %v2958, 4
        %v2961 = vor.u32 %v2960, %v2956
        %v2962 = vrot.slane %v2961, 4
        %v2964 = vshll.u32 %v2850, 16
        %v2966 = vrot.slane %v2964, 5
        %v2967 = vsel %vm713, %v2962, %v2966
        %v2969 = vshrl.u32 %v2803, 16
        %v2971 = vrot.slane %v2969, 4
        %v2972 = vshll.u32 %v2803, 16
        %v2974 = vrot.slane %v2972, 5
        %v2975 = vor.u32 %v2971, %v2974
        %v2976 = vrot.slane %v2975, 4
        %v2978 = vshll.u32 %v2804, 16
        %v2980 = vrot.slane %v2978, 5
        %v2981 = vsel %vm713, %v2976, %v2980
        %v2982 = vshrl.u32 %v2804, 16
        %v2984 = vrot.slane %v2982, 4
        %v2985 = vor.u32 %v2984, %v2980
        %v2986 = vrot.slane %v2985, 4
        %v2988 = vshll.u32 %v2805, 16
        %v2990 = vrot.slane %v2988, 5
        %v2991 = vsel %vm713, %v2986, %v2990
        %v2992 = vshrl.u32 %v2805, 16
        %v2994 = vrot.slane %v2992, 4
        %v2995 = vor.u32 %v2994, %v2990
        %v2996 = vrot.slane %v2995, 4
        %v2998 = vshll.u32 %v2851, 16
        %v3000 = vrot.slane %v2998, 5
        %v3001 = vsel %vm713, %v2996, %v3000
        %v3003 = vshrl.u32 %v2806, 16
        %v3005 = vrot.slane %v3003, 4
        %v3006 = vshll.u32 %v2806, 16
        %v3008 = vrot.slane %v3006, 5
        %v3009 = vor.u32 %v3005, %v3008
        %v3010 = vrot.slane %v3009, 4
        %v3012 = vshll.u32 %v2807, 16
        %v3014 = vrot.slane %v3012, 5
        %v3015 = vsel %vm713, %v3010, %v3014
        %v3016 = vshrl.u32 %v2807, 16
        %v3018 = vrot.slane %v3016, 4
        %v3019 = vor.u32 %v3018, %v3014
        %v3020 = vrot.slane %v3019, 4
        %v3022 = vshll.u32 %v2808, 16
        %v3024 = vrot.slane %v3022, 5
        %v3025 = vsel %vm713, %v3020, %v3024
        %v3026 = vshrl.u32 %v2808, 16
        %v3028 = vrot.slane %v3026, 4
        %v3029 = vor.u32 %v3028, %v3024
        %v3030 = vrot.slane %v3029, 4
        %v3032 = vshll.u32 %v2852, 16
        %v3034 = vrot.slane %v3032, 5
        %v3035 = vsel %vm713, %v3030, %v3034
        %v3037 = vshrl.u32 %v2809, 16
        %v3039 = vrot.slane %v3037, 4
        %v3040 = vshll.u32 %v2809, 16
        %v3042 = vrot.slane %v3040, 5
        %v3043 = vor.u32 %v3039, %v3042
        %v3044 = vrot.slane %v3043, 4
        %v3046 = vshll.u32 %v2810, 16
        %v3048 = vrot.slane %v3046, 5
        %v3049 = vsel %vm713, %v3044, %v3048
        %v3050 = vshrl.u32 %v2810, 16
        %v3052 = vrot.slane %v3050, 4
        %v3053 = vor.u32 %v3052, %v3048
        %v3054 = vrot.slane %v3053, 4
        %v3056 = vshll.u32 %v2811, 16
        %v3058 = vrot.slane %v3056, 5
        %v3059 = vsel %vm713, %v3054, %v3058
        %v3060 = vshrl.u32 %v2811, 16
        %v3062 = vrot.slane %v3060, 4
        %v3063 = vor.u32 %v3062, %v3058
        %v3064 = vrot.slane %v3063, 4
        %v3066 = vshll.u32 %v2853, 16
        %v3068 = vrot.slane %v3066, 5
        %v3069 = vsel %vm713, %v3064, %v3068
        %v3071 = vshrl.u32 %v2812, 16
        %v3073 = vrot.slane %v3071, 4
        %v3074 = vshll.u32 %v2812, 16
        %v3076 = vrot.slane %v3074, 5
        %v3077 = vor.u32 %v3073, %v3076
        %v3078 = vrot.slane %v3077, 4
        %v3080 = vshll.u32 %v2813, 16
        %v3082 = vrot.slane %v3080, 5
        %v3083 = vsel %vm713, %v3078, %v3082
        %v3084 = vshrl.u32 %v2813, 16
        %v3086 = vrot.slane %v3084, 4
        %v3087 = vor.u32 %v3086, %v3082
        %v3088 = vrot.slane %v3087, 4
        %v3090 = vshll.u32 %v2814, 16
        %v3092 = vrot.slane %v3090, 5
        %v3093 = vsel %vm713, %v3088, %v3092
        %v3094 = vshrl.u32 %v2814, 16
        %v3096 = vrot.slane %v3094, 4
        %v3097 = vor.u32 %v3096, %v3092
        %v3098 = vrot.slane %v3097, 4
        %v3100 = vshll.u32 %v2854, 16
        %v3102 = vrot.slane %v3100, 5
        %v3103 = vsel %vm713, %v3098, %v3102
        %v3105 = vshrl.u32 %v2815, 16
        %v3107 = vrot.slane %v3105, 4
        %v3108 = vshll.u32 %v2815, 16
        %v3110 = vrot.slane %v3108, 5
        %v3111 = vor.u32 %v3107, %v3110
        %v3112 = vrot.slane %v3111, 4
        %v3114 = vshll.u32 %v2816, 16
        %v3116 = vrot.slane %v3114, 5
        %v3117 = vsel %vm713, %v3112, %v3116
        %v3118 = vshrl.u32 %v2816, 16
        %v3120 = vrot.slane %v3118, 4
        %v3121 = vor.u32 %v3120, %v3116
        %v3122 = vrot.slane %v3121, 4
        %v3124 = vshll.u32 %v2817, 16
        %v3126 = vrot.slane %v3124, 5
        %v3127 = vsel %vm713, %v3122, %v3126
        %v3128 = vshrl.u32 %v2817, 16
        %v3130 = vrot.slane %v3128, 4
        %v3131 = vor.u32 %v3130, %v3126
        %v3132 = vrot.slane %v3131, 4
        %v3134 = vshll.u32 %v2855, 16
        %v3136 = vrot.slane %v3134, 5
        %v3137 = vsel %vm713, %v3132, %v3136
        %v3139 = vshrl.u32 %v2818, 16
        %v3141 = vrot.slane %v3139, 4
        %v3142 = vshll.u32 %v2818, 16
        %v3144 = vrot.slane %v3142, 5
        %v3145 = vor.u32 %v3141, %v3144
        %v3146 = vrot.slane %v3145, 4
        %v3148 = vshll.u32 %v2819, 16
        %v3150 = vrot.slane %v3148, 5
        %v3151 = vsel %vm713, %v3146, %v3150
        %v3152 = vshrl.u32 %v2819, 16
        %v3154 = vrot.slane %v3152, 4
        %v3155 = vor.u32 %v3154, %v3150
        %v3156 = vrot.slane %v3155, 4
        %v3158 = vshll.u32 %v2820, 16
        %v3160 = vrot.slane %v3158, 5
        %v3161 = vsel %vm713, %v3156, %v3160
        %v3162 = vshrl.u32 %v2820, 16
        %v3164 = vrot.slane %v3162, 4
        %v3165 = vor.u32 %v3164, %v3160
        %v3166 = vrot.slane %v3165, 4
        %v3168 = vshll.u32 %v2856, 16
        %v3170 = vrot.slane %v3168, 5
        %v3171 = vsel %vm713, %v3166, %v3170
        %v3173 = vshrl.u32 %v2821, 16
        %v3175 = vrot.slane %v3173, 4
        %v3176 = vshll.u32 %v2821, 16
        %v3178 = vrot.slane %v3176, 5
        %v3179 = vor.u32 %v3175, %v3178
        %v3180 = vrot.slane %v3179, 4
        %v3182 = vshll.u32 %v2822, 16
        %v3184 = vrot.slane %v3182, 5
        %v3185 = vsel %vm713, %v3180, %v3184
        %v3186 = vshrl.u32 %v2822, 16
        %v3188 = vrot.slane %v3186, 4
        %v3189 = vor.u32 %v3188, %v3184
        %v3190 = vrot.slane %v3189, 4
        %v3192 = vshll.u32 %v2823, 16
        %v3194 = vrot.slane %v3192, 5
        %v3195 = vsel %vm713, %v3190, %v3194
        %v3196 = vshrl.u32 %v2823, 16
        %v3198 = vrot.slane %v3196, 4
        %v3199 = vor.u32 %v3198, %v3194
        %v3200 = vrot.slane %v3199, 4
        %v3202 = vshll.u32 %v2857, 16
        %v3204 = vrot.slane %v3202, 5
        %v3205 = vsel %vm713, %v3200, %v3204
        %v3207 = vshrl.u32 %v2824, 16
        %v3209 = vrot.slane %v3207, 4
        %v3210 = vshll.u32 %v2824, 16
        %v3212 = vrot.slane %v3210, 5
        %v3213 = vor.u32 %v3209, %v3212
        %v3214 = vrot.slane %v3213, 4
        %v3216 = vshll.u32 %v2825, 16
        %v3218 = vrot.slane %v3216, 5
        %v3219 = vsel %vm713, %v3214, %v3218
        %v3220 = vshrl.u32 %v2825, 16
        %v3222 = vrot.slane %v3220, 4
        %v3223 = vor.u32 %v3222, %v3218
        %v3224 = vrot.slane %v3223, 4
        %v3226 = vshll.u32 %v2826, 16
        %v3228 = vrot.slane %v3226, 5
        %v3229 = vsel %vm713, %v3224, %v3228
        %v3230 = vshrl.u32 %v2826, 16
        %v3232 = vrot.slane %v3230, 4
        %v3233 = vor.u32 %v3232, %v3228
        %v3234 = vrot.slane %v3233, 4
        %v3236 = vshll.u32 %v2858, 16
        %v3238 = vrot.slane %v3236, 5
        %v3239 = vsel %vm713, %v3234, %v3238
        %v3241 = vshrl.u32 %v2827, 16
        %v3243 = vrot.slane %v3241, 4
        %v3244 = vshll.u32 %v2827, 16
        %v3246 = vrot.slane %v3244, 5
        %v3247 = vor.u32 %v3243, %v3246
        %v3248 = vrot.slane %v3247, 4
        %v3250 = vshll.u32 %v2828, 16
        %v3252 = vrot.slane %v3250, 5
        %v3253 = vsel %vm713, %v3248, %v3252
        %v3254 = vshrl.u32 %v2828, 16
        %v3256 = vrot.slane %v3254, 4
        %v3257 = vor.u32 %v3256, %v3252
        %v3258 = vrot.slane %v3257, 4
        %v3260 = vshll.u32 %v2829, 16
        %v3262 = vrot.slane %v3260, 5
        %v3263 = vsel %vm713, %v3258, %v3262
        %v3264 = vshrl.u32 %v2829, 16
        %v3266 = vrot.slane %v3264, 4
        %v3267 = vor.u32 %v3266, %v3262
        %v3268 = vrot.slane %v3267, 4
        %v3270 = vshll.u32 %v2859, 16
        %v3272 = vrot.slane %v3270, 5
        %v3273 = vsel %vm713, %v3268, %v3272
        %v3275 = vshrl.u32 %v2830, 16
        %v3277 = vrot.slane %v3275, 4
        %v3278 = vshll.u32 %v2830, 16
        %v3280 = vrot.slane %v3278, 5
        %v3281 = vor.u32 %v3277, %v3280
        %v3282 = vrot.slane %v3281, 4
        %v3284 = vshll.u32 %v2831, 16
        %v3286 = vrot.slane %v3284, 5
        %v3287 = vsel %vm713, %v3282, %v3286
        %v3288 = vshrl.u32 %v2831, 16
        %v3290 = vrot.slane %v3288, 4
        %v3291 = vor.u32 %v3290, %v3286
        %v3292 = vrot.slane %v3291, 4
        %v3294 = vshll.u32 %v2832, 16
        %v3296 = vrot.slane %v3294, 5
        %v3297 = vsel %vm713, %v3292, %v3296
        %v3298 = vshrl.u32 %v2832, 16
        %v3300 = vrot.slane %v3298, 4
        %v3301 = vor.u32 %v3300, %v3296
        %v3302 = vrot.slane %v3301, 4
        %v3304 = vshll.u32 %v2860, 16
        %v3306 = vrot.slane %v3304, 5
        %v3307 = vsel %vm713, %v3302, %v3306
        %v3309 = vshrl.u32 %v2833, 16
        %v3311 = vrot.slane %v3309, 4
        %v3312 = vshll.u32 %v2833, 16
        %v3314 = vrot.slane %v3312, 5
        %v3315 = vor.u32 %v3311, %v3314
        %v3316 = vrot.slane %v3315, 4
        %v3318 = vshll.u32 %v2834, 16
        %v3320 = vrot.slane %v3318, 5
        %v3321 = vsel %vm713, %v3316, %v3320
        %v3322 = vshrl.u32 %v2834, 16
        %v3324 = vrot.slane %v3322, 4
        %v3325 = vor.u32 %v3324, %v3320
        %v3326 = vrot.slane %v3325, 4
        %v3328 = vshll.u32 %v2835, 16
        %v3330 = vrot.slane %v3328, 5
        %v3331 = vsel %vm713, %v3326, %v3330
        %v3332 = vshrl.u32 %v2835, 16
        %v3334 = vrot.slane %v3332, 4
        %v3335 = vor.u32 %v3334, %v3330
        %v3336 = vrot.slane %v3335, 4
        %v3338 = vshll.u32 %v2861, 16
        %v3340 = vrot.slane %v3338, 5
        %v3341 = vsel %vm713, %v3336, %v3340
        %v3343 = vshrl.u32 %v2836, 16
        %v3345 = vrot.slane %v3343, 4
        %v3346 = vshll.u32 %v2836, 16
        %v3348 = vrot.slane %v3346, 5
        %v3349 = vor.u32 %v3345, %v3348
        %v3350 = vrot.slane %v3349, 4
        %v3352 = vshll.u32 %v2837, 16
        %v3354 = vrot.slane %v3352, 5
        %v3355 = vsel %vm713, %v3350, %v3354
        %v3356 = vshrl.u32 %v2837, 16
        %v3358 = vrot.slane %v3356, 4
        %v3359 = vor.u32 %v3358, %v3354
        %v3360 = vrot.slane %v3359, 4
        %v3362 = vshll.u32 %v2838, 16
        %v3364 = vrot.slane %v3362, 5
        %v3365 = vsel %vm713, %v3360, %v3364
        %v3366 = vshrl.u32 %v2838, 16
        %v3368 = vrot.slane %v3366, 4
        %v3369 = vor.u32 %v3368, %v3364
        %v3370 = vrot.slane %v3369, 4
        %v3372 = vshll.u32 %v2862, 16
        %v3374 = vrot.slane %v3372, 5
        %v3375 = vsel %vm713, %v3370, %v3374
        %v3377 = vshrl.u32 %v2839, 16
        %v3379 = vrot.slane %v3377, 4
        %v3380 = vshll.u32 %v2839, 16
        %v3382 = vrot.slane %v3380, 5
        %v3383 = vor.u32 %v3379, %v3382
        %v3384 = vrot.slane %v3383, 4
        %v3386 = vshll.u32 %v2840, 16
        %v3388 = vrot.slane %v3386, 5
        %v3389 = vsel %vm713, %v3384, %v3388
        %v3390 = vshrl.u32 %v2840, 16
        %v3392 = vrot.slane %v3390, 4
        %v3393 = vor.u32 %v3392, %v3388
        %v3394 = vrot.slane %v3393, 4
        %v3396 = vshll.u32 %v2841, 16
        %v3398 = vrot.slane %v3396, 5
        %v3399 = vsel %vm713, %v3394, %v3398
        %v3400 = vshrl.u32 %v2841, 16
        %v3402 = vrot.slane %v3400, 4
        %v3403 = vor.u32 %v3402, %v3398
        %v3404 = vrot.slane %v3403, 4
        %v3406 = vshll.u32 %v2863, 16
        %v3408 = vrot.slane %v3406, 5
        %v3409 = vsel %vm713, %v3404, %v3408
        %v3411 = vshrl.u32 %v2842, 16
        %v3413 = vrot.slane %v3411, 4
        %v3414 = vshll.u32 %v2842, 16
        %v3416 = vrot.slane %v3414, 5
        %v3417 = vor.u32 %v3413, %v3416
        %v3418 = vrot.slane %v3417, 4
        %v3420 = vshll.u32 %v2843, 16
        %v3422 = vrot.slane %v3420, 5
        %v3423 = vsel %vm713, %v3418, %v3422
        %v3424 = vshrl.u32 %v2843, 16
        %v3426 = vrot.slane %v3424, 4
        %v3427 = vor.u32 %v3426, %v3422
        %v3428 = vrot.slane %v3427, 4
        %v3430 = vshll.u32 %v2844, 16
        %v3432 = vrot.slane %v3430, 5
        %v3433 = vsel %vm713, %v3428, %v3432
        %v3434 = vshrl.u32 %v2844, 16
        %v3436 = vrot.slane %v3434, 4
        %v3437 = vor.u32 %v3436, %v3432
        %v3438 = vrot.slane %v3437, 4
        %v3440 = vshll.u32 %v2864, 16
        %v3442 = vrot.slane %v3440, 5
        %v3443 = vsel %vm713, %v3438, %v3442
        %v3445 = vshrl.u32 %v2845, 16
        %v3447 = vrot.slane %v3445, 4
        %v3448 = vshll.u32 %v2845, 16
        %v3450 = vrot.slane %v3448, 5
        %v3451 = vor.u32 %v3447, %v3450
        %v3452 = vrot.slane %v3451, 4
        %v3454 = vshll.u32 %v2846, 16
        %v3456 = vrot.slane %v3454, 5
        %v3457 = vsel %vm713, %v3452, %v3456
        %v3458 = vshrl.u32 %v2846, 16
        %v3460 = vrot.slane %v3458, 4
        %v3461 = vor.u32 %v3460, %v3456
        %v3462 = vrot.slane %v3461, 4
        %v3464 = vshll.u32 %v2847, 16
        %v3466 = vrot.slane %v3464, 5
        %v3467 = vsel %vm713, %v3462, %v3466
        %v3468 = vshrl.u32 %v2847, 16
        %v3470 = vrot.slane %v3468, 4
        %v3471 = vor.u32 %v3470, %v3466
        %v3472 = vrot.slane %v3471, 4
        %v3474 = vshll.u32 %v2865, 16
        %v3476 = vrot.slane %v3474, 5
        %v3477 = vsel %vm713, %v3472, %v3476
        %v3478 = vld [vmem:[%s2793] sm:$0xe]
        %v3479 = vld [vmem:[%s2793 + $0x10] sm:$0xe]
        %v3480 = vld [vmem:[%s2793 + $0x20] sm:$0xe]
        %v3481 = vld [vmem:[%s2793 + $0x30] sm:$0xe]
        %v3482 = vld [vmem:[%s2793 + $0x40] sm:$0xe]
        %v3483 = vld [vmem:[%s2793 + $0x50] sm:$0xe]
        %v3484 = vld [vmem:[%s2793 + $0x60] sm:$0xe]
        %v3485 = vld [vmem:[%s2793 + $0x70] sm:$0xe]
        %v3486 = vld [vmem:[%s2793 + $0x80] sm:$0xe]
        %v3487 = vld [vmem:[%s2793 + $0x90] sm:$0xe]
        %v3488 = vld [vmem:[%s2793 + $0xa0] sm:$0xe]
        %v3489 = vld [vmem:[%s2793 + $0xb0] sm:$0xe]
        %v3490 = vld [vmem:[%s2793 + $0xc0] sm:$0xe]
        %v3491 = vld [vmem:[%s2793 + $0xd0] sm:$0xe]
        %v3492 = vld [vmem:[%s2793 + $0xe0] sm:$0xe]
        %v3493 = vld [vmem:[%s2793 + $0xf0] sm:$0xe]
        %v3494 = vld [vmem:[%s2793 + $0x100] sm:$0xe]
        %v3495 = vld [vmem:[%s2793 + $0x110] sm:$0xe]
        %v3568 = vrot.slane %v3478, 5
        %v3569 = vrot.slane %v3568, 4
        %v3570 = vrot.slane %v2795, 5
        %v3571 = vsel %vm1418, %v3569, %v3570
        %v3572 = vrot.slane %v3570, 4
        %v3573 = vrot.slane %v2796, 5
        %v3574 = vsel %vm1418, %v3572, %v3573
        %v3575 = vrot.slane %v3573, 4
        %v3576 = vrot.slane %v2848, 5
        %v3577 = vsel %vm1418, %v3575, %v3576
        %v3578 = vrot.slane %v3479, 5
        %v3579 = vrot.slane %v3578, 4
        %v3580 = vrot.slane %v2798, 5
        %v3581 = vsel %vm1418, %v3579, %v3580
        %v3582 = vrot.slane %v3580, 4
        %v3583 = vrot.slane %v2799, 5
        %v3584 = vsel %vm1418, %v3582, %v3583
        %v3585 = vrot.slane %v3583, 4
        %v3586 = vrot.slane %v2849, 5
        %v3587 = vsel %vm1418, %v3585, %v3586
        %v3588 = vrot.slane %v3480, 5
        %v3589 = vrot.slane %v3588, 4
        %v3590 = vrot.slane %v2801, 5
        %v3591 = vsel %vm1418, %v3589, %v3590
        %v3592 = vrot.slane %v3590, 4
        %v3593 = vrot.slane %v2802, 5
        %v3594 = vsel %vm1418, %v3592, %v3593
        %v3595 = vrot.slane %v3593, 4
        %v3596 = vrot.slane %v2850, 5
        %v3597 = vsel %vm1418, %v3595, %v3596
        %v3598 = vrot.slane %v3481, 5
        %v3599 = vrot.slane %v3598, 4
        %v3600 = vrot.slane %v2804, 5
        %v3601 = vsel %vm1418, %v3599, %v3600
        %v3602 = vrot.slane %v3600, 4
        %v3603 = vrot.slane %v2805, 5
        %v3604 = vsel %vm1418, %v3602, %v3603
        %v3605 = vrot.slane %v3603, 4
        %v3606 = vrot.slane %v2851, 5
        %v3607 = vsel %vm1418, %v3605, %v3606
        %v3608 = vrot.slane %v3482, 5
        %v3609 = vrot.slane %v3608, 4
        %v3610 = vrot.slane %v2807, 5
        %v3611 = vsel %vm1418, %v3609, %v3610
        %v3612 = vrot.slane %v3610, 4
        %v3613 = vrot.slane %v2808, 5
        %v3614 = vsel %vm1418, %v3612, %v3613
        %v3615 = vrot.slane %v3613, 4
        %v3616 = vrot.slane %v2852, 5
        %v3617 = vsel %vm1418, %v3615, %v3616
        %v3618 = vrot.slane %v3483, 5
        %v3619 = vrot.slane %v3618, 4
        %v3620 = vrot.slane %v2810, 5
        %v3621 = vsel %vm1418, %v3619, %v3620
        %v3622 = vrot.slane %v3620, 4
        %v3623 = vrot.slane %v2811, 5
        %v3624 = vsel %vm1418, %v3622, %v3623
        %v3625 = vrot.slane %v3623, 4
        %v3626 = vrot.slane %v2853, 5
        %v3627 = vsel %vm1418, %v3625, %v3626
        %v3628 = vrot.slane %v3484, 5
        %v3629 = vrot.slane %v3628, 4
        %v3630 = vrot.slane %v2813, 5
        %v3631 = vsel %vm1418, %v3629, %v3630
        %v3632 = vrot.slane %v3630, 4
        %v3633 = vrot.slane %v2814, 5
        %v3634 = vsel %vm1418, %v3632, %v3633
        %v3635 = vrot.slane %v3633, 4
        %v3636 = vrot.slane %v2854, 5
        %v3637 = vsel %vm1418, %v3635, %v3636
        %v3638 = vrot.slane %v3485, 5
        %v3639 = vrot.slane %v3638, 4
        %v3640 = vrot.slane %v2816, 5
        %v3641 = vsel %vm1418, %v3639, %v3640
        %v3642 = vrot.slane %v3640, 4
        %v3643 = vrot.slane %v2817, 5
        %v3644 = vsel %vm1418, %v3642, %v3643
        %v3645 = vrot.slane %v3643, 4
        %v3646 = vrot.slane %v2855, 5
        %v3647 = vsel %vm1418, %v3645, %v3646
        %v3648 = vrot.slane %v3486, 5
        %v3649 = vrot.slane %v3648, 4
        %v3650 = vrot.slane %v2819, 5
        %v3651 = vsel %vm1418, %v3649, %v3650
        %v3652 = vrot.slane %v3650, 4
        %v3653 = vrot.slane %v2820, 5
        %v3654 = vsel %vm1418, %v3652, %v3653
        %v3655 = vrot.slane %v3653, 4
        %v3656 = vrot.slane %v2856, 5
        %v3657 = vsel %vm1418, %v3655, %v3656
        %v3658 = vrot.slane %v3487, 5
        %v3659 = vrot.slane %v3658, 4
        %v3660 = vrot.slane %v2822, 5
        %v3661 = vsel %vm1418, %v3659, %v3660
        %v3662 = vrot.slane %v3660, 4
        %v3663 = vrot.slane %v2823, 5
        %v3664 = vsel %vm1418, %v3662, %v3663
        %v3665 = vrot.slane %v3663, 4
        %v3666 = vrot.slane %v2857, 5
        %v3667 = vsel %vm1418, %v3665, %v3666
        %v3668 = vrot.slane %v3488, 5
        %v3669 = vrot.slane %v3668, 4
        %v3670 = vrot.slane %v2825, 5
        %v3671 = vsel %vm1418, %v3669, %v3670
        %v3672 = vrot.slane %v3670, 4
        %v3673 = vrot.slane %v2826, 5
        %v3674 = vsel %vm1418, %v3672, %v3673
        %v3675 = vrot.slane %v3673, 4
        %v3676 = vrot.slane %v2858, 5
        %v3677 = vsel %vm1418, %v3675, %v3676
        %v3678 = vrot.slane %v3489, 5
        %v3679 = vrot.slane %v3678, 4
        %v3680 = vrot.slane %v2828, 5
        %v3681 = vsel %vm1418, %v3679, %v3680
        %v3682 = vrot.slane %v3680, 4
        %v3683 = vrot.slane %v2829, 5
        %v3684 = vsel %vm1418, %v3682, %v3683
        %v3685 = vrot.slane %v3683, 4
        %v3686 = vrot.slane %v2859, 5
        %v3687 = vsel %vm1418, %v3685, %v3686
        %v3688 = vrot.slane %v3490, 5
        %v3689 = vrot.slane %v3688, 4
        %v3690 = vrot.slane %v2831, 5
        %v3691 = vsel %vm1418, %v3689, %v3690
        %v3692 = vrot.slane %v3690, 4
        %v3693 = vrot.slane %v2832, 5
        %v3694 = vsel %vm1418, %v3692, %v3693
        %v3695 = vrot.slane %v3693, 4
        %v3696 = vrot.slane %v2860, 5
        %v3697 = vsel %vm1418, %v3695, %v3696
        %v3698 = vrot.slane %v3491, 5
        %v3699 = vrot.slane %v3698, 4
        %v3700 = vrot.slane %v2834, 5
        %v3701 = vsel %vm1418, %v3699, %v3700
        %v3702 = vrot.slane %v3700, 4
        %v3703 = vrot.slane %v2835, 5
        %v3704 = vsel %vm1418, %v3702, %v3703
        %v3705 = vrot.slane %v3703, 4
        %v3706 = vrot.slane %v2861, 5
        %v3707 = vsel %vm1418, %v3705, %v3706
        %v3708 = vrot.slane %v3492, 5
        %v3709 = vrot.slane %v3708, 4
        %v3710 = vrot.slane %v2837, 5
        %v3711 = vsel %vm1418, %v3709, %v3710
        %v3712 = vrot.slane %v3710, 4
        %v3713 = vrot.slane %v2838, 5
        %v3714 = vsel %vm1418, %v3712, %v3713
        %v3715 = vrot.slane %v3713, 4
        %v3716 = vrot.slane %v2862, 5
        %v3717 = vsel %vm1418, %v3715, %v3716
        %v3718 = vrot.slane %v3493, 5
        %v3719 = vrot.slane %v3718, 4
        %v3720 = vrot.slane %v2840, 5
        %v3721 = vsel %vm1418, %v3719, %v3720
        %v3722 = vrot.slane %v3720, 4
        %v3723 = vrot.slane %v2841, 5
        %v3724 = vsel %vm1418, %v3722, %v3723
        %v3725 = vrot.slane %v3723, 4
        %v3726 = vrot.slane %v2863, 5
        %v3727 = vsel %vm1418, %v3725, %v3726
        %v3728 = vrot.slane %v3494, 5
        %v3729 = vrot.slane %v3728, 4
        %v3730 = vrot.slane %v2843, 5
        %v3731 = vsel %vm1418, %v3729, %v3730
        %v3732 = vrot.slane %v3730, 4
        %v3733 = vrot.slane %v2844, 5
        %v3734 = vsel %vm1418, %v3732, %v3733
        %v3735 = vrot.slane %v3733, 4
        %v3736 = vrot.slane %v2864, 5
        %v3737 = vsel %vm1418, %v3735, %v3736
        %v3738 = vrot.slane %v3495, 5
        %v3739 = vrot.slane %v3738, 4
        %v3740 = vrot.slane %v2846, 5
        %v3741 = vsel %vm1418, %v3739, %v3740
        %v3742 = vrot.slane %v3740, 4
        %v3743 = vrot.slane %v2847, 5
        %v3744 = vsel %vm1418, %v3742, %v3743
        %v3745 = vrot.slane %v3743, 4
        %v3746 = vrot.slane %v2865, 5
        %v3747 = vsel %vm1418, %v3745, %v3746
        %v3766 = vunpack.c.l.b16 %v2794
        %v3767 = vunpack.c.l.b16 %v2795
        %v3768 = vunpack.c.l.b16 %v2796
        %v3769 = vunpack.c.l.b16 %v2797
        %v3770 = vunpack.c.l.b16 %v2798
        %v3771 = vunpack.c.l.b16 %v2799
        %v3772 = vunpack.c.l.b16 %v2800
        %v3773 = vunpack.c.l.b16 %v2801
        %v3774 = vunpack.c.l.b16 %v2802
        %v3775 = vunpack.c.l.b16 %v2803
        %v3776 = vunpack.c.l.b16 %v2804
        %v3777 = vunpack.c.l.b16 %v2805
        %v3778 = vunpack.c.l.b16 %v2806
        %v3779 = vunpack.c.l.b16 %v2807
        %v3780 = vunpack.c.l.b16 %v2808
        %v3781 = vunpack.c.l.b16 %v2809
        %v3782 = vunpack.c.l.b16 %v2810
        %v3783 = vunpack.c.l.b16 %v2811
        %v3784 = vunpack.c.l.b16 %v2812
        %v3785 = vunpack.c.l.b16 %v2813
        %v3786 = vunpack.c.l.b16 %v2814
        %v3787 = vunpack.c.l.b16 %v2815
        %v3788 = vunpack.c.l.b16 %v2816
        %v3789 = vunpack.c.l.b16 %v2817
        %v3790 = vunpack.c.l.b16 %v2818
        %v3791 = vunpack.c.l.b16 %v2819
        %v3792 = vunpack.c.l.b16 %v2820
        %v3793 = vunpack.c.l.b16 %v2821
        %v3794 = vunpack.c.l.b16 %v2822
        %v3795 = vunpack.c.l.b16 %v2823
        %v3796 = vunpack.c.l.b16 %v2824
        %v3797 = vunpack.c.l.b16 %v2825
        %v3798 = vunpack.c.l.b16 %v2826
        %v3799 = vunpack.c.l.b16 %v2827
        %v3800 = vunpack.c.l.b16 %v2828
        %v3801 = vunpack.c.l.b16 %v2829
        %v3802 = vunpack.c.l.b16 %v2830
        %v3803 = vunpack.c.l.b16 %v2831
        %v3804 = vunpack.c.l.b16 %v2832
        %v3805 = vunpack.c.l.b16 %v2833
        %v3806 = vunpack.c.l.b16 %v2834
        %v3807 = vunpack.c.l.b16 %v2835
        %v3808 = vunpack.c.l.b16 %v2836
        %v3809 = vunpack.c.l.b16 %v2837
        %v3810 = vunpack.c.l.b16 %v2838
        %v3811 = vunpack.c.l.b16 %v2839
        %v3812 = vunpack.c.l.b16 %v2840
        %v3813 = vunpack.c.l.b16 %v2841
        %v3814 = vunpack.c.l.b16 %v2842
        %v3815 = vunpack.c.l.b16 %v2843
        %v3816 = vunpack.c.l.b16 %v2844
        %v3817 = vunpack.c.l.b16 %v2845
        %v3818 = vunpack.c.l.b16 %v2846
        %v3819 = vunpack.c.l.b16 %v2847
        %v3820 = vpack.c.b16 %v3767, %v3766
        %v3821 = vpack.c.b16 %v3769, %v3768
        %v3822 = vpack.c.b16 %v3771, %v3770
        %v3823 = vpack.c.b16 %v3773, %v3772
        %v3824 = vpack.c.b16 %v3775, %v3774
        %v3825 = vpack.c.b16 %v3777, %v3776
        %v3826 = vpack.c.b16 %v3779, %v3778
        %v3827 = vpack.c.b16 %v3781, %v3780
        %v3828 = vpack.c.b16 %v3783, %v3782
        %v3829 = vpack.c.b16 %v3785, %v3784
        %v3830 = vpack.c.b16 %v3787, %v3786
        %v3831 = vpack.c.b16 %v3789, %v3788
        %v3832 = vpack.c.b16 %v3791, %v3790
        %v3833 = vpack.c.b16 %v3793, %v3792
        %v3834 = vpack.c.b16 %v3795, %v3794
        %v3835 = vpack.c.b16 %v3797, %v3796
        %v3836 = vpack.c.b16 %v3799, %v3798
        %v3837 = vpack.c.b16 %v3801, %v3800
        %v3838 = vpack.c.b16 %v3803, %v3802
        %v3839 = vpack.c.b16 %v3805, %v3804
        %v3840 = vpack.c.b16 %v3807, %v3806
        %v3841 = vpack.c.b16 %v3809, %v3808
        %v3842 = vpack.c.b16 %v3811, %v3810
        %v3843 = vpack.c.b16 %v3813, %v3812
        %v3844 = vpack.c.b16 %v3815, %v3814
        %v3845 = vpack.c.b16 %v3817, %v3816
        %v3846 = vpack.c.b16 %v3819, %v3818
        %v3874 = vunpack.c.l.b16 %v2879
        %v3875 = vunpack.c.l.b16 %v2889
        %v3876 = vunpack.c.l.b16 %v2899
        %v3877 = vunpack.c.l.b16 %v2913
        %v3878 = vunpack.c.l.b16 %v2923
        %v3879 = vunpack.c.l.b16 %v2933
        %v3880 = vunpack.c.l.b16 %v2947
        %v3881 = vunpack.c.l.b16 %v2957
        %v3882 = vunpack.c.l.b16 %v2967
        %v3883 = vunpack.c.l.b16 %v2981
        %v3884 = vunpack.c.l.b16 %v2991
        %v3885 = vunpack.c.l.b16 %v3001
        %v3886 = vunpack.c.l.b16 %v3015
        %v3887 = vunpack.c.l.b16 %v3025
        %v3888 = vunpack.c.l.b16 %v3035
        %v3889 = vunpack.c.l.b16 %v3049
        %v3890 = vunpack.c.l.b16 %v3059
        %v3891 = vunpack.c.l.b16 %v3069
        %v3892 = vunpack.c.l.b16 %v3083
        %v3893 = vunpack.c.l.b16 %v3093
        %v3894 = vunpack.c.l.b16 %v3103
        %v3895 = vunpack.c.l.b16 %v3117
        %v3896 = vunpack.c.l.b16 %v3127
        %v3897 = vunpack.c.l.b16 %v3137
        %v3898 = vunpack.c.l.b16 %v3151
        %v3899 = vunpack.c.l.b16 %v3161
        %v3900 = vunpack.c.l.b16 %v3171
        %v3901 = vunpack.c.l.b16 %v3185
        %v3902 = vunpack.c.l.b16 %v3195
        %v3903 = vunpack.c.l.b16 %v3205
        %v3904 = vunpack.c.l.b16 %v3219
        %v3905 = vunpack.c.l.b16 %v3229
        %v3906 = vunpack.c.l.b16 %v3239
        %v3907 = vunpack.c.l.b16 %v3253
        %v3908 = vunpack.c.l.b16 %v3263
        %v3909 = vunpack.c.l.b16 %v3273
        %v3910 = vunpack.c.l.b16 %v3287
        %v3911 = vunpack.c.l.b16 %v3297
        %v3912 = vunpack.c.l.b16 %v3307
        %v3913 = vunpack.c.l.b16 %v3321
        %v3914 = vunpack.c.l.b16 %v3331
        %v3915 = vunpack.c.l.b16 %v3341
        %v3916 = vunpack.c.l.b16 %v3355
        %v3917 = vunpack.c.l.b16 %v3365
        %v3918 = vunpack.c.l.b16 %v3375
        %v3919 = vunpack.c.l.b16 %v3389
        %v3920 = vunpack.c.l.b16 %v3399
        %v3921 = vunpack.c.l.b16 %v3409
        %v3922 = vunpack.c.l.b16 %v3423
        %v3923 = vunpack.c.l.b16 %v3433
        %v3924 = vunpack.c.l.b16 %v3443
        %v3925 = vunpack.c.l.b16 %v3457
        %v3926 = vunpack.c.l.b16 %v3467
        %v3927 = vunpack.c.l.b16 %v3477
        %v3928 = vpack.c.b16 %v3875, %v3874
        %v3929 = vpack.c.b16 %v3877, %v3876
        %v3930 = vpack.c.b16 %v3879, %v3878
        %v3931 = vpack.c.b16 %v3881, %v3880
        %v3932 = vpack.c.b16 %v3883, %v3882
        %v3933 = vpack.c.b16 %v3885, %v3884
        %v3934 = vpack.c.b16 %v3887, %v3886
        %v3935 = vpack.c.b16 %v3889, %v3888
        %v3936 = vpack.c.b16 %v3891, %v3890
        %v3937 = vpack.c.b16 %v3893, %v3892
        %v3938 = vpack.c.b16 %v3895, %v3894
        %v3939 = vpack.c.b16 %v3897, %v3896
        %v3940 = vpack.c.b16 %v3899, %v3898
        %v3941 = vpack.c.b16 %v3901, %v3900
        %v3942 = vpack.c.b16 %v3903, %v3902
        %v3943 = vpack.c.b16 %v3905, %v3904
        %v3944 = vpack.c.b16 %v3907, %v3906
        %v3945 = vpack.c.b16 %v3909, %v3908
        %v3946 = vpack.c.b16 %v3911, %v3910
        %v3947 = vpack.c.b16 %v3913, %v3912
        %v3948 = vpack.c.b16 %v3915, %v3914
        %v3949 = vpack.c.b16 %v3917, %v3916
        %v3950 = vpack.c.b16 %v3919, %v3918
        %v3951 = vpack.c.b16 %v3921, %v3920
        %v3952 = vpack.c.b16 %v3923, %v3922
        %v3953 = vpack.c.b16 %v3925, %v3924
        %v3954 = vpack.c.b16 %v3927, %v3926
        %v3982 = vunpack.c.l.b16 %v3571
        %v3983 = vunpack.c.l.b16 %v3574
        %v3984 = vunpack.c.l.b16 %v3577
        %v3985 = vunpack.c.l.b16 %v3581
        %v3986 = vunpack.c.l.b16 %v3584
        %v3987 = vunpack.c.l.b16 %v3587
        %v3988 = vunpack.c.l.b16 %v3591
        %v3989 = vunpack.c.l.b16 %v3594
        %v3990 = vunpack.c.l.b16 %v3597
        %v3991 = vunpack.c.l.b16 %v3601
        %v3992 = vunpack.c.l.b16 %v3604
        %v3993 = vunpack.c.l.b16 %v3607
        %v3994 = vunpack.c.l.b16 %v3611
        %v3995 = vunpack.c.l.b16 %v3614
        %v3996 = vunpack.c.l.b16 %v3617
        %v3997 = vunpack.c.l.b16 %v3621
        %v3998 = vunpack.c.l.b16 %v3624
        %v3999 = vunpack.c.l.b16 %v3627
        %v4000 = vunpack.c.l.b16 %v3631
        %v4001 = vunpack.c.l.b16 %v3634
        %v4002 = vunpack.c.l.b16 %v3637
        %v4003 = vunpack.c.l.b16 %v3641
        %v4004 = vunpack.c.l.b16 %v3644
        %v4005 = vunpack.c.l.b16 %v3647
        %v4006 = vunpack.c.l.b16 %v3651
        %v4007 = vunpack.c.l.b16 %v3654
        %v4008 = vunpack.c.l.b16 %v3657
        %v4009 = vunpack.c.l.b16 %v3661
        %v4010 = vunpack.c.l.b16 %v3664
        %v4011 = vunpack.c.l.b16 %v3667
        %v4012 = vunpack.c.l.b16 %v3671
        %v4013 = vunpack.c.l.b16 %v3674
        %v4014 = vunpack.c.l.b16 %v3677
        %v4015 = vunpack.c.l.b16 %v3681
        %v4016 = vunpack.c.l.b16 %v3684
        %v4017 = vunpack.c.l.b16 %v3687
        %v4018 = vunpack.c.l.b16 %v3691
        %v4019 = vunpack.c.l.b16 %v3694
        %v4020 = vunpack.c.l.b16 %v3697
        %v4021 = vunpack.c.l.b16 %v3701
        %v4022 = vunpack.c.l.b16 %v3704
        %v4023 = vunpack.c.l.b16 %v3707
        %v4024 = vunpack.c.l.b16 %v3711
        %v4025 = vunpack.c.l.b16 %v3714
        %v4026 = vunpack.c.l.b16 %v3717
        %v4027 = vunpack.c.l.b16 %v3721
        %v4028 = vunpack.c.l.b16 %v3724
        %v4029 = vunpack.c.l.b16 %v3727
        %v4030 = vunpack.c.l.b16 %v3731
        %v4031 = vunpack.c.l.b16 %v3734
        %v4032 = vunpack.c.l.b16 %v3737
        %v4033 = vunpack.c.l.b16 %v3741
        %v4034 = vunpack.c.l.b16 %v3744
        %v4035 = vunpack.c.l.b16 %v3747
        %v4036 = vpack.c.b16 %v3983, %v3982
        %v4037 = vpack.c.b16 %v3985, %v3984
        %v4038 = vpack.c.b16 %v3987, %v3986
        %v4039 = vpack.c.b16 %v3989, %v3988
        %v4040 = vpack.c.b16 %v3991, %v3990
        %v4041 = vpack.c.b16 %v3993, %v3992
        %v4042 = vpack.c.b16 %v3995, %v3994
        %v4043 = vpack.c.b16 %v3997, %v3996
        %v4044 = vpack.c.b16 %v3999, %v3998
        %v4045 = vpack.c.b16 %v4001, %v4000
        %v4046 = vpack.c.b16 %v4003, %v4002
        %v4047 = vpack.c.b16 %v4005, %v4004
        %v4048 = vpack.c.b16 %v4007, %v4006
        %v4049 = vpack.c.b16 %v4009, %v4008
        %v4050 = vpack.c.b16 %v4011, %v4010
        %v4051 = vpack.c.b16 %v4013, %v4012
        %v4052 = vpack.c.b16 %v4015, %v4014
        %v4053 = vpack.c.b16 %v4017, %v4016
        %v4054 = vpack.c.b16 %v4019, %v4018
        %v4055 = vpack.c.b16 %v4021, %v4020
        %v4056 = vpack.c.b16 %v4023, %v4022
        %v4057 = vpack.c.b16 %v4025, %v4024
        %v4058 = vpack.c.b16 %v4027, %v4026
        %v4059 = vpack.c.b16 %v4029, %v4028
        %v4060 = vpack.c.b16 %v4031, %v4030
        %v4061 = vpack.c.b16 %v4033, %v4032
        %v4062 = vpack.c.b16 %v4035, %v4034
        %v4090 = vld [vmem:[%s2 + $0xc0] sm:$0xf]
        %v4091 = vld [vmem:[%s2 + $0xc4] sm:$0xf]
        %v4092 = vld [vmem:[%s2 + $0xc8] sm:$0xf]
        %v4093 = vld [vmem:[%s2 + $0xcc] sm:$0xf]
        %v4094 = vld [vmem:[%s2 + $0xd0] sm:$0xf]
        %v4095 = vld [vmem:[%s2 + $0xd4] sm:$0xf]
        %v4096 = vld [vmem:[%s2 + $0xd8] sm:$0xf]
        %v4097 = vld [vmem:[%s2 + $0xdc] sm:$0xf]
        %v4098 = vld [vmem:[%s2 + $0xe0] sm:$0xf]
        %v4099 = vld [vmem:[%s2 + $0xe4] sm:$0xf]
        %v4100 = vld [vmem:[%s2 + $0xe8] sm:$0xf]
        %v4101 = vld [vmem:[%s2 + $0xec] sm:$0xf]
        %v4102 = vld [vmem:[%s2 + $0xf0] sm:$0xf]
        %v4103 = vld [vmem:[%s2 + $0xf4] sm:$0xf]
        %v4104 = vld [vmem:[%s2 + $0xf8] sm:$0xf]
        %v4105 = vld [vmem:[%s2 + $0xfc] sm:$0xf]
        %v4106 = vld [vmem:[%s2 + $0x100] sm:$0xf]
        %v4107 = vld [vmem:[%s2 + $0x104] sm:$0xf]
        %v4108 = vld [vmem:[%s2 + $0x108] sm:$0xf]
        %v4109 = vld [vmem:[%s2 + $0x10c] sm:$0xf]
        %v4110 = vld [vmem:[%s2 + $0x110] sm:$0xf]
        %v4111 = vld [vmem:[%s2 + $0x114] sm:$0xf]
        %v4112 = vld [vmem:[%s2 + $0x118] sm:$0xf]
        %v4113 = vld [vmem:[%s2 + $0x11c] sm:$0xf]
        %v4114 = vld [vmem:[%s2 + $0x120] sm:$0xf]
        %v4115 = vld [vmem:[%s2 + $0x124] sm:$0xf]
        %v4116 = vld [vmem:[%s2 + $0x128] sm:$0xf]
        %v4117 = vld [vmem:[%s2 + $0x12c] sm:$0xf]
        %v4118 = vld [vmem:[%s2 + $0x130] sm:$0xf]
        %v4119 = vld [vmem:[%s2 + $0x134] sm:$0xf]
        %v4120 = vld [vmem:[%s2 + $0x138] sm:$0xf]
        %v4121 = vld [vmem:[%s2 + $0x13c] sm:$0xf]
        %v4122 = vld [vmem:[%s2 + $0x140] sm:$0xf]
        %v4123 = vld [vmem:[%s2 + $0x144] sm:$0xf]
        %v4124 = vld [vmem:[%s2 + $0x148] sm:$0xf]
        %v4125 = vld [vmem:[%s2 + $0x14c] sm:$0xf]
        %v4126 = vld [vmem:[%s2 + $0x150] sm:$0xf]
        %v4127 = vld [vmem:[%s2 + $0x154] sm:$0xf]
        %v4128 = vld [vmem:[%s2 + $0x158] sm:$0xf]
        %v4129 = vld [vmem:[%s2 + $0x15c] sm:$0xf]
        %v4130 = vld [vmem:[%s2 + $0x160] sm:$0xf]
        %v4131 = vld [vmem:[%s2 + $0x164] sm:$0xf]
        %v4132 = vld [vmem:[%s2 + $0x168] sm:$0xf]
        %v4133 = vld [vmem:[%s2 + $0x16c] sm:$0xf]
        %v4134 = vld [vmem:[%s2 + $0x170] sm:$0xf]
        %v4135 = vld [vmem:[%s2 + $0x174] sm:$0xf]
        %v4136 = vld [vmem:[%s2 + $0x178] sm:$0xf]
        %v4137 = vld [vmem:[%s2 + $0x17c] sm:$0xf]
        %v4138 = vld [vmem:[#allocation3] sm:$0xff]
        %v4139 = vld [vmem:[#allocation3 + $0x8] sm:$0xff]
        %v4140 = vld [vmem:[#allocation3 + $0x10] sm:$0xff]
        %v4141 = vld [vmem:[#allocation3 + $0x18] sm:$0xff]
        %v4142 = vld [vmem:[#allocation3 + $0x20] sm:$0xff]
        %v4143 = vld [vmem:[#allocation3 + $0x28] sm:$0xff]
        %v4144 = vld [vmem:[#allocation3 + $0x30] sm:$0xff]
        %v4145 = vld [vmem:[#allocation3 + $0x38] sm:$0xff]
        %v4146 = vld [vmem:[#allocation3 + $0x40] sm:$0xff]
        %v4147 = vld [vmem:[#allocation3 + $0x48] sm:$0xff]
        %v4148 = vld [vmem:[#allocation3 + $0x50] sm:$0xff]
        %v4149 = vld [vmem:[#allocation3 + $0x58] sm:$0xff]
        %v4150 = vld [vmem:[#allocation3 + $0x60] sm:$0xff]
        %v4151 = vld [vmem:[#allocation3 + $0x68] sm:$0xff]
        %v4152 = vld [vmem:[#allocation3 + $0x70] sm:$0xff]
        %v4153 = vld [vmem:[#allocation3 + $0x78] sm:$0xff]
        %v4154 = vld [vmem:[#allocation3 + $0x80] sm:$0xff]
        %v4155 = vld [vmem:[#allocation3 + $0x88] sm:$0xff]
        %v4156 = vld [vmem:[#allocation3 + $0x90] sm:$0xff]
        %v4157 = vld [vmem:[#allocation3 + $0x98] sm:$0xff]
        %v4158 = vld [vmem:[#allocation3 + $0xa0] sm:$0xff]
        %v4159 = vld [vmem:[#allocation3 + $0xa8] sm:$0xff]
        %v4160 = vld [vmem:[#allocation3 + $0xb0] sm:$0xff]
        %v4161 = vld [vmem:[#allocation3 + $0xb8] sm:$0xff]
        %v4162 = vld [vmem:[#allocation3 + $0xc0] sm:$0xff]
        %v4163 = vld [vmem:[#allocation3 + $0xc8] sm:$0xff]
        %v4164 = vld [vmem:[#allocation3 + $0xd0] sm:$0xff]
        %v4165 = vld [vmem:[#allocation3 + $0xd8] sm:$0xff]
        %v4166 = vld [vmem:[#allocation3 + $0xe0] sm:$0xff]
        %v4167 = vld [vmem:[#allocation3 + $0xe8] sm:$0xff]
        %v4168 = vld [vmem:[#allocation3 + $0xf0] sm:$0xff]
        %v4169 = vld [vmem:[#allocation3 + $0xf8] sm:$0xff]
        %v4170 = vld [vmem:[#allocation3 + $0x100] sm:$0xff]
        %v4171 = vld [vmem:[#allocation3 + $0x108] sm:$0xff]
        %v4172 = vld [vmem:[#allocation3 + $0x110] sm:$0xff]
        %v4173 = vld [vmem:[#allocation3 + $0x118] sm:$0xff]
        %v4174 = vld [vmem:[#allocation3 + $0x120] sm:$0xff]
        %v4175 = vld [vmem:[#allocation3 + $0x128] sm:$0xff]
        %v4176 = vld [vmem:[#allocation3 + $0x130] sm:$0xff]
        %v4177 = vld [vmem:[#allocation3 + $0x138] sm:$0xff]
        %v4178 = vld [vmem:[#allocation3 + $0x140] sm:$0xff]
        %v4179 = vld [vmem:[#allocation3 + $0x148] sm:$0xff]
        %v4180 = vld [vmem:[#allocation3 + $0x150] sm:$0xff]
        %v4181 = vld [vmem:[#allocation3 + $0x158] sm:$0xff]
        %v4182 = vld [vmem:[#allocation3 + $0x160] sm:$0xff]
        %v4183 = vld [vmem:[#allocation3 + $0x168] sm:$0xff]
        %v4184 = vld [vmem:[#allocation3 + $0x170] sm:$0xff]
        %v4185 = vld [vmem:[#allocation3 + $0x178] sm:$0xff]
        %v4186 = vld [vmem:[#allocation3 + $0x180] sm:$0xff]
        %v4187 = vld [vmem:[#allocation3 + $0x188] sm:$0xff]
        %v4188 = vld [vmem:[#allocation3 + $0x190] sm:$0xff]
        %v4189 = vld [vmem:[#allocation3 + $0x198] sm:$0xff]
        %v4190 = vld [vmem:[#allocation3 + $0x1a0] sm:$0xff]
        %v4191 = vld [vmem:[#allocation3 + $0x1a8] sm:$0xff]
        %v4240 = vunpack.c.l.b16 %v4090
        %v4241 = vunpack.c.l.b16 %v4091
        %v4242 = vunpack.c.l.b16 %v4092
        %v4243 = vunpack.c.l.b16 %v4093
        %v4244 = vunpack.c.l.b16 %v4094
        %v4245 = vunpack.c.l.b16 %v4095
        %v4246 = vunpack.c.l.b16 %v4096
        %v4247 = vunpack.c.l.b16 %v4097
        %v4248 = vunpack.c.l.b16 %v4098
        %v4249 = vunpack.c.l.b16 %v4099
        %v4250 = vunpack.c.l.b16 %v4100
        %v4251 = vunpack.c.l.b16 %v4101
        %v4252 = vunpack.c.l.b16 %v4102
        %v4253 = vunpack.c.l.b16 %v4103
        %v4254 = vunpack.c.l.b16 %v4104
        %v4255 = vunpack.c.l.b16 %v4105
        %v4256 = vunpack.c.l.b16 %v4106
        %v4257 = vunpack.c.l.b16 %v4107
        %v4258 = vunpack.c.l.b16 %v4108
        %v4259 = vunpack.c.l.b16 %v4109
        %v4260 = vunpack.c.l.b16 %v4110
        %v4261 = vunpack.c.l.b16 %v4111
        %v4262 = vunpack.c.l.b16 %v4112
        %v4263 = vunpack.c.l.b16 %v4113
        %v4264 = vunpack.c.l.b16 %v4114
        %v4265 = vunpack.c.l.b16 %v4115
        %v4266 = vunpack.c.l.b16 %v4116
        %v4267 = vunpack.c.l.b16 %v4117
        %v4268 = vunpack.c.l.b16 %v4118
        %v4269 = vunpack.c.l.b16 %v4119
        %v4270 = vunpack.c.l.b16 %v4120
        %v4271 = vunpack.c.l.b16 %v4121
        %v4272 = vunpack.c.l.b16 %v4122
        %v4273 = vunpack.c.l.b16 %v4123
        %v4274 = vunpack.c.l.b16 %v4124
        %v4275 = vunpack.c.l.b16 %v4125
        %v4276 = vunpack.c.l.b16 %v4126
        %v4277 = vunpack.c.l.b16 %v4127
        %v4278 = vunpack.c.l.b16 %v4128
        %v4279 = vunpack.c.l.b16 %v4129
        %v4280 = vunpack.c.l.b16 %v4130
        %v4281 = vunpack.c.l.b16 %v4131
        %v4282 = vunpack.c.l.b16 %v4132
        %v4283 = vunpack.c.l.b16 %v4133
        %v4284 = vunpack.c.l.b16 %v4134
        %v4285 = vunpack.c.l.b16 %v4135
        %v4286 = vunpack.c.l.b16 %v4136
        %v4287 = vunpack.c.l.b16 %v4137
        %v4288 = vpack.c.b16 %v4241, %v4240
        %v4289 = vpack.c.b16 %v4243, %v4242
        %v4290 = vpack.c.b16 %v4245, %v4244
        %v4291 = vpack.c.b16 %v4247, %v4246
        %v4292 = vpack.c.b16 %v4249, %v4248
        %v4293 = vpack.c.b16 %v4251, %v4250
        %v4294 = vpack.c.b16 %v4253, %v4252
        %v4295 = vpack.c.b16 %v4255, %v4254
        %v4296 = vpack.c.b16 %v4257, %v4256
        %v4297 = vpack.c.b16 %v4259, %v4258
        %v4298 = vpack.c.b16 %v4261, %v4260
        %v4299 = vpack.c.b16 %v4263, %v4262
        %v4300 = vpack.c.b16 %v4265, %v4264
        %v4301 = vpack.c.b16 %v4267, %v4266
        %v4302 = vpack.c.b16 %v4269, %v4268
        %v4303 = vpack.c.b16 %v4271, %v4270
        %v4304 = vpack.c.b16 %v4273, %v4272
        %v4305 = vpack.c.b16 %v4275, %v4274
        %v4306 = vpack.c.b16 %v4277, %v4276
        %v4307 = vpack.c.b16 %v4279, %v4278
        %v4308 = vpack.c.b16 %v4281, %v4280
        %v4309 = vpack.c.b16 %v4283, %v4282
        %v4310 = vpack.c.b16 %v4285, %v4284
        %v4311 = vpack.c.b16 %v4287, %v4286
        %4336 = vmatprep.subr.bf16.mxu0 0
        %4337 = vmatpush1.bf16.msra.mxu0 %v4288
        %4338 = vmatprep.subr.bf16.mxu0 0
        %4339 = vmatpush1.bf16.msra.mxu0 %v4289
        %4340 = vmatprep.subr.bf16.mxu0 0
        %4341 = vmatpush1.bf16.msra.mxu0 %v4290
        %4342 = vmatprep.subr.bf16.mxu0 0
        %4343 = vmatpush1.bf16.msra.mxu0 %v4291
        %4344 = vmatprep.subr.bf16.mxu0 0
        %4345 = vmatpush1.bf16.msra.mxu0 %v4292
        %4346 = vmatprep.subr.bf16.mxu0 0
        %4347 = vmatpush1.bf16.msra.mxu0 %v4293
        %4348 = vmatprep.subr.bf16.mxu0 0
        %4349 = vmatpush1.bf16.msra.mxu0 %v4294
        %4350 = vmatprep.subr.bf16.mxu0 0
        %4351 = vmatpush1.bf16.msra.mxu0 %v4295
        %4352 = vmatprep.subr.bf16.mxu0 0
        %4353 = vmatpush1.bf16.msra.mxu0 %v4296
        %4354 = vmatprep.subr.bf16.mxu0 0
        %4355 = vmatpush1.bf16.msra.mxu0 %v4297
        %4356 = vmatprep.subr.bf16.mxu0 0
        %4357 = vmatpush1.bf16.msra.mxu0 %v4298
        %4358 = vmatprep.subr.bf16.mxu0 0
        %4359 = vmatpush1.bf16.msra.mxu0 %v4299
        %4360 = vmatprep.subr.bf16.mxu0 0
        %4361 = vmatpush1.bf16.msra.mxu0 %v4300
        %4362 = vmatprep.subr.bf16.mxu0 0
        %4363 = vmatpush1.bf16.msra.mxu0 %v4301
        %4364 = vmatprep.subr.bf16.mxu0 0
        %4365 = vmatpush1.bf16.msra.mxu0 %v4302
        %4366 = vmatprep.subr.bf16.mxu0 0
        %4367 = vmatpush1.bf16.msra.mxu0 %v4303
        %4368 = vmatprep.mubr.bf16.mxu0 %v3928
        %4369 = vmatmul.mubr.bf16.gmra.mrb[0].mxu0 %v3820
        %v4370 = vpop.f32.mrb[0].mxu0
        %v4371 = vadd.f32 0.0, %v4370
        %v4372 = vpop.f32.mrb[0].mxu0
        %v4373 = vpop.f32.mrb[0].mxu0
        %v4374 = vadd.f32 0.0, %v4373
        %v4375 = vpop.f32.mrb[0].mxu0
        %4376 = vmatprep.mubr.bf16.mxu0 %v3929
        %4377 = vmatmul.mubr.bf16.gmra.mrb[0].mxu0 %v3821
        %v4378 = vpop.f32.mrb[0].mxu0
        %v4379 = vadd.f32 0.0, %v4378
        %v4380 = vpop.f32.mrb[0].mxu0
        %v4381 = vpop.f32.mrb[0].mxu0
        %v4382 = vadd.f32 0.0, %v4381
        %v4383 = vpop.f32.mrb[0].mxu0
        %4384 = vmatprep.mubr.bf16.mxu0 %v3930
        %4385 = vmatmul.mubr.bf16.gmra.mrb[0].mxu0 %v3822
        %v4386 = vpop.f32.mrb[0].mxu0
        %v4387 = vadd.f32 0.0, %v4386
        %v4388 = vpop.f32.mrb[0].mxu0
        %v4389 = vpop.f32.mrb[0].mxu0
        %v4390 = vadd.f32 0.0, %v4389
        %v4391 = vpop.f32.mrb[0].mxu0
        %4392 = vmatprep.mubr.bf16.mxu0 %v3931
        %4393 = vmatmul.mubr.bf16.gmra.mrb[0].mxu0 %v3823
        %v4394 = vpop.f32.mrb[0].mxu0
        %v4395 = vadd.f32 0.0, %v4394
        %v4396 = vpop.f32.mrb[0].mxu0
        %v4397 = vpop.f32.mrb[0].mxu0
        %v4398 = vadd.f32 0.0, %v4397
        %v4399 = vpop.f32.mrb[0].mxu0
        %4400 = vmatprep.mubr.bf16.mxu0 %v3932
        %4401 = vmatmul.mubr.bf16.gmra.mrb[0].mxu0 %v3824
        %v4402 = vpop.f32.mrb[0].mxu0
        %v4403 = vadd.f32 0.0, %v4402
        %v4404 = vpop.f32.mrb[0].mxu0
        %v4405 = vpop.f32.mrb[0].mxu0
        %v4406 = vadd.f32 0.0, %v4405
        %v4407 = vpop.f32.mrb[0].mxu0
        %4408 = vmatprep.mubr.bf16.mxu0 %v3933
        %4409 = vmatmul.mubr.bf16.gmra.mrb[0].mxu0 %v3825
        %v4410 = vpop.f32.mrb[0].mxu0
        %v4411 = vadd.f32 0.0, %v4410
        %v4412 = vpop.f32.mrb[0].mxu0
        %v4413 = vpop.f32.mrb[0].mxu0
        %v4414 = vadd.f32 0.0, %v4413
        %v4415 = vpop.f32.mrb[0].mxu0
        %4416 = vmatprep.mubr.bf16.mxu0 %v3934
        %4417 = vmatmul.mubr.bf16.gmra.mrb[0].mxu0 %v3826
        %v4418 = vpop.f32.mrb[0].mxu0
        %v4419 = vadd.f32 0.0, %v4418
        %v4420 = vpop.f32.mrb[0].mxu0
        %v4421 = vpop.f32.mrb[0].mxu0
        %v4422 = vadd.f32 0.0, %v4421
        %v4423 = vpop.f32.mrb[0].mxu0
        %4424 = vmatprep.mubr.bf16.mxu0 %v3935
        %4425 = vmatmul.mubr.bf16.gmra.mrb[0].mxu0 %v3827
        %v4426 = vpop.f32.mrb[0].mxu0
        %v4427 = vadd.f32 0.0, %v4426
        %v4428 = vpop.f32.mrb[0].mxu0
        %v4429 = vpop.f32.mrb[0].mxu0
        %v4430 = vadd.f32 0.0, %v4429
        %v4431 = vpop.f32.mrb[0].mxu0
        %4432 = vmatprep.mubr.bf16.mxu0 %v3936
        %4433 = vmatmul.mubr.bf16.gmra.mrb[0].mxu0 %v3828
        %v4434 = vpop.f32.mrb[0].mxu0
        %v4435 = vadd.f32 0.0, %v4434
        %v4436 = vpop.f32.mrb[0].mxu0
        %v4437 = vpop.f32.mrb[0].mxu0
        %v4438 = vadd.f32 0.0, %v4437
        %v4439 = vpop.f32.mrb[0].mxu0
        %4440 = vmatprep.mubr.bf16.mxu0 %v3937
        %4441 = vmatmul.mubr.bf16.gmra.mrb[0].mxu0 %v3829
        %v4442 = vpop.f32.mrb[0].mxu0
        %v4443 = vadd.f32 0.0, %v4442
        %v4444 = vpop.f32.mrb[0].mxu0
        %v4445 = vpop.f32.mrb[0].mxu0
        %v4446 = vadd.f32 0.0, %v4445
        %v4447 = vpop.f32.mrb[0].mxu0
        %4448 = vmatprep.mubr.bf16.mxu0 %v3938
        %4449 = vmatmul.mubr.bf16.gmra.mrb[0].mxu0 %v3830
        %v4450 = vpop.f32.mrb[0].mxu0
        %v4451 = vadd.f32 0.0, %v4450
        %v4452 = vpop.f32.mrb[0].mxu0
        %v4453 = vpop.f32.mrb[0].mxu0
        %v4454 = vadd.f32 0.0, %v4453
        %v4455 = vpop.f32.mrb[0].mxu0
        %4456 = vmatprep.mubr.bf16.mxu0 %v3939
        %4457 = vmatmul.mubr.bf16.gmra.mrb[0].mxu0 %v3831
        %v4458 = vpop.f32.mrb[0].mxu0
        %v4459 = vadd.f32 0.0, %v4458
        %v4460 = vpop.f32.mrb[0].mxu0
        %v4461 = vpop.f32.mrb[0].mxu0
        %v4462 = vadd.f32 0.0, %v4461
        %v4463 = vpop.f32.mrb[0].mxu0
        %4464 = vmatprep.mubr.bf16.mxu0 %v3940
        %4465 = vmatmul.mubr.bf16.gmra.mrb[0].mxu0 %v3832
        %v4466 = vpop.f32.mrb[0].mxu0
        %v4467 = vadd.f32 0.0, %v4466
        %v4468 = vpop.f32.mrb[0].mxu0
        %v4469 = vpop.f32.mrb[0].mxu0
        %v4470 = vadd.f32 0.0, %v4469
        %v4471 = vpop.f32.mrb[0].mxu0
        %4472 = vmatprep.mubr.bf16.mxu0 %v3941
        %4473 = vmatmul.mubr.bf16.gmra.mrb[0].mxu0 %v3833
        %v4474 = vpop.f32.mrb[0].mxu0
        %v4475 = vadd.f32 0.0, %v4474
        %v4476 = vpop.f32.mrb[0].mxu0
        %v4477 = vpop.f32.mrb[0].mxu0
        %v4478 = vadd.f32 0.0, %v4477
        %v4479 = vpop.f32.mrb[0].mxu0
        %4480 = vmatprep.mubr.bf16.mxu0 %v3942
        %4481 = vmatmul.mubr.bf16.gmra.mrb[0].mxu0 %v3834
        %v4482 = vpop.f32.mrb[0].mxu0
        %v4483 = vadd.f32 0.0, %v4482
        %v4484 = vpop.f32.mrb[0].mxu0
        %v4485 = vpop.f32.mrb[0].mxu0
        %v4486 = vadd.f32 0.0, %v4485
        %v4487 = vpop.f32.mrb[0].mxu0
        %4488 = vmatprep.mubr.bf16.mxu0 %v3943
        %4489 = vmatmul.mubr.bf16.gmra.mrb[0].mxu0 %v3835
        %v4490 = vpop.f32.mrb[0].mxu0
        %v4491 = vadd.f32 0.0, %v4490
        %v4492 = vpop.f32.mrb[0].mxu0
        %v4493 = vpop.f32.mrb[0].mxu0
        %v4494 = vadd.f32 0.0, %v4493
        %v4495 = vpop.f32.mrb[0].mxu0
        %4496 = vmatprep.mubr.bf16.mxu0 %v3944
        %4497 = vmatmul.mubr.bf16.gmra.mrb[0].mxu0 %v3836
        %v4498 = vpop.f32.mrb[0].mxu0
        %v4499 = vadd.f32 0.0, %v4498
        %v4500 = vpop.f32.mrb[0].mxu0
        %v4501 = vpop.f32.mrb[0].mxu0
        %v4502 = vadd.f32 0.0, %v4501
        %v4503 = vpop.f32.mrb[0].mxu0
        %4504 = vmatprep.mubr.bf16.mxu0 %v3945
        %4505 = vmatmul.mubr.bf16.gmra.mrb[0].mxu0 %v3837
        %v4506 = vpop.f32.mrb[0].mxu0
        %v4507 = vadd.f32 0.0, %v4506
        %v4508 = vpop.f32.mrb[0].mxu0
        %v4509 = vpop.f32.mrb[0].mxu0
        %v4510 = vadd.f32 0.0, %v4509
        %v4511 = vpop.f32.mrb[0].mxu0
        %4512 = vmatprep.mubr.bf16.mxu0 %v3946
        %4513 = vmatmul.mubr.bf16.gmra.mrb[0].mxu0 %v3838
        %v4514 = vpop.f32.mrb[0].mxu0
        %v4515 = vadd.f32 0.0, %v4514
        %v4516 = vpop.f32.mrb[0].mxu0
        %v4517 = vpop.f32.mrb[0].mxu0
        %v4518 = vadd.f32 0.0, %v4517
        %v4519 = vpop.f32.mrb[0].mxu0
        %4520 = vmatprep.mubr.bf16.mxu0 %v3947
        %4521 = vmatmul.mubr.bf16.gmra.mrb[0].mxu0 %v3839
        %v4522 = vpop.f32.mrb[0].mxu0
        %v4523 = vadd.f32 0.0, %v4522
        %v4524 = vpop.f32.mrb[0].mxu0
        %v4525 = vpop.f32.mrb[0].mxu0
        %v4526 = vadd.f32 0.0, %v4525
        %v4527 = vpop.f32.mrb[0].mxu0
        %4528 = vmatprep.mubr.bf16.mxu0 %v3948
        %4529 = vmatmul.mubr.bf16.gmra.mrb[0].mxu0 %v3840
        %v4530 = vpop.f32.mrb[0].mxu0
        %v4531 = vadd.f32 0.0, %v4530
        %v4532 = vpop.f32.mrb[0].mxu0
        %v4533 = vpop.f32.mrb[0].mxu0
        %v4534 = vadd.f32 0.0, %v4533
        %v4535 = vpop.f32.mrb[0].mxu0
        %4536 = vmatprep.mubr.bf16.mxu0 %v3949
        %4537 = vmatmul.mubr.bf16.gmra.mrb[0].mxu0 %v3841
        %v4538 = vpop.f32.mrb[0].mxu0
        %v4539 = vadd.f32 0.0, %v4538
        %v4540 = vpop.f32.mrb[0].mxu0
        %v4541 = vpop.f32.mrb[0].mxu0
        %v4542 = vadd.f32 0.0, %v4541
        %v4543 = vpop.f32.mrb[0].mxu0
        %4544 = vmatprep.mubr.bf16.mxu0 %v3950
        %4545 = vmatmul.mubr.bf16.gmra.mrb[0].mxu0 %v3842
        %v4546 = vpop.f32.mrb[0].mxu0
        %v4547 = vadd.f32 0.0, %v4546
        %v4548 = vpop.f32.mrb[0].mxu0
        %v4549 = vpop.f32.mrb[0].mxu0
        %v4550 = vadd.f32 0.0, %v4549
        %v4551 = vpop.f32.mrb[0].mxu0
        %4552 = vmatprep.mubr.bf16.mxu0 %v3951
        %4553 = vmatmul.mubr.bf16.gmra.mrb[0].mxu0 %v3843
        %v4554 = vpop.f32.mrb[0].mxu0
        %v4555 = vadd.f32 0.0, %v4554
        %v4556 = vpop.f32.mrb[0].mxu0
        %v4557 = vpop.f32.mrb[0].mxu0
        %v4558 = vadd.f32 0.0, %v4557
        %v4559 = vpop.f32.mrb[0].mxu0
        %4560 = vmatprep.mubr.bf16.mxu0 %v3952
        %4561 = vmatmul.mubr.bf16.gmra.mrb[0].mxu0 %v3844
        %v4562 = vpop.f32.mrb[0].mxu0
        %v4563 = vadd.f32 0.0, %v4562
        %v4564 = vpop.f32.mrb[0].mxu0
        %v4565 = vpop.f32.mrb[0].mxu0
        %v4566 = vadd.f32 0.0, %v4565
        %v4567 = vpop.f32.mrb[0].mxu0
        %4568 = vmatprep.mubr.bf16.mxu0 %v3953
        %4569 = vmatmul.mubr.bf16.gmra.mrb[0].mxu0 %v3845
        %v4570 = vpop.f32.mrb[0].mxu0
        %v4571 = vadd.f32 0.0, %v4570
        %v4572 = vpop.f32.mrb[0].mxu0
        %v4573 = vpop.f32.mrb[0].mxu0
        %v4574 = vadd.f32 0.0, %v4573
        %v4575 = vpop.f32.mrb[0].mxu0
        %4576 = vmatprep.mubr.bf16.mxu0 %v3954
        %4577 = vmatmul.mubr.bf16.gmra.mrb[0].mxu0 %v3846
        %v4578 = vpop.f32.mrb[0].mxu0
        %v4579 = vadd.f32 0.0, %v4578
        %v4580 = vpop.f32.mrb[0].mxu0
        %v4581 = vpop.f32.mrb[0].mxu0
        %v4582 = vadd.f32 0.0, %v4581
        %v4583 = vpop.f32.mrb[0].mxu0
        %4584 = vdwg.mxu0
        %4585 = vmatprep.subr.bf16.mxu0 0
        %4586 = vmatpush1.bf16.msra.mxu0 %v4304
        %4587 = vmatprep.subr.bf16.mxu0 0
        %4588 = vmatpush1.bf16.msra.mxu0 %v4305
        %4589 = vmatprep.subr.bf16.mxu0 0
        %4590 = vmatpush1.bf16.msra.mxu0 %v4306
        %4591 = vmatprep.subr.bf16.mxu0 0
        %4592 = vmatpush1.bf16.msra.mxu0 %v4307
        %4593 = vmatprep.subr.bf16.mxu0 0
        %4594 = vmatpush1.bf16.msra.mxu0 %v4308
        %4595 = vmatprep.subr.bf16.mxu0 0
        %4596 = vmatpush1.bf16.msra.mxu0 %v4309
        %4597 = vmatprep.subr.bf16.mxu0 0
        %4598 = vmatpush1.bf16.msra.mxu0 %v4310
        %4599 = vmatprep.subr.bf16.mxu0 0
        %4600 = vmatpush1.bf16.msra.mxu0 %v4311
        %4601 = vmatprep.subr.bf16.mxu0 0
        %4602 = vmatpush1.bf16.msra.mxu0 0
        %4603 = vmatprep.subr.bf16.mxu0 0
        %4604 = vmatpush1.bf16.msra.mxu0 0
        %4605 = vmatprep.subr.bf16.mxu0 0
        %4606 = vmatpush1.bf16.msra.mxu0 0
        %4607 = vmatprep.subr.bf16.mxu0 0
        %4608 = vmatpush1.bf16.msra.mxu0 0
        %4609 = vmatprep.subr.bf16.mxu0 0
        %4610 = vmatpush1.bf16.msra.mxu0 0
        %4611 = vmatprep.subr.bf16.mxu0 0
        %4612 = vmatpush1.bf16.msra.mxu0 0
        %4613 = vmatprep.subr.bf16.mxu0 0
        %4614 = vmatpush1.bf16.msra.mxu0 0
        %4615 = vmatprep.subr.bf16.mxu0 0
        %4616 = vmatpush1.bf16.msra.mxu0 0
        %4617 = vmatprep.mubr.bf16.mxu0 0
        %4618 = vmatmul.mubr.bf16.gmra.mrb[0].mxu0 %v4036
        %v4619 = vpop.f32.mrb[0].mxu0
        %v4620 = vadd.f32 %v4371, %v4619
        %v4621 = vpop.f32.mrb[0].mxu0
        %v4622 = vpop.f32.mrb[0].mxu0
        %v4623 = vadd.f32 %v4374, %v4622
        %v4624 = vpop.f32.mrb[0].mxu0
        %4625 = vmatprep.mubr.bf16.mxu0 0
        %4626 = vmatmul.mubr.bf16.gmra.mrb[0].mxu0 %v4037
        %v4627 = vpop.f32.mrb[0].mxu0
        %v4628 = vadd.f32 %v4379, %v4627
        %v4629 = vpop.f32.mrb[0].mxu0
        %v4630 = vpop.f32.mrb[0].mxu0
        %v4631 = vadd.f32 %v4382, %v4630
        %v4632 = vpop.f32.mrb[0].mxu0
        %4633 = vmatprep.mubr.bf16.mxu0 0
        %4634 = vmatmul.mubr.bf16.gmra.mrb[0].mxu0 %v4038
        %v4635 = vpop.f32.mrb[0].mxu0
        %v4636 = vadd.f32 %v4387, %v4635
        %v4637 = vpop.f32.mrb[0].mxu0
        %v4638 = vpop.f32.mrb[0].mxu0
        %v4639 = vadd.f32 %v4390, %v4638
        %v4640 = vpop.f32.mrb[0].mxu0
        %4641 = vmatprep.mubr.bf16.mxu0 0
        %4642 = vmatmul.mubr.bf16.gmra.mrb[0].mxu0 %v4039
        %v4643 = vpop.f32.mrb[0].mxu0
        %v4644 = vadd.f32 %v4395, %v4643
        %v4645 = vpop.f32.mrb[0].mxu0
        %v4646 = vpop.f32.mrb[0].mxu0
        %v4647 = vadd.f32 %v4398, %v4646
        %v4648 = vpop.f32.mrb[0].mxu0
        %4649 = vmatprep.mubr.bf16.mxu0 0
        %4650 = vmatmul.mubr.bf16.gmra.mrb[0].mxu0 %v4040
        %v4651 = vpop.f32.mrb[0].mxu0
        %v4652 = vadd.f32 %v4403, %v4651
        %v4653 = vpop.f32.mrb[0].mxu0
        %v4654 = vpop.f32.mrb[0].mxu0
        %v4655 = vadd.f32 %v4406, %v4654
        %v4656 = vpop.f32.mrb[0].mxu0
        %4657 = vmatprep.mubr.bf16.mxu0 0
        %4658 = vmatmul.mubr.bf16.gmra.mrb[0].mxu0 %v4041
        %v4659 = vpop.f32.mrb[0].mxu0
        %v4660 = vadd.f32 %v4411, %v4659
        %v4661 = vpop.f32.mrb[0].mxu0
        %v4662 = vpop.f32.mrb[0].mxu0
        %v4663 = vadd.f32 %v4414, %v4662
        %v4664 = vpop.f32.mrb[0].mxu0
        %4665 = vmatprep.mubr.bf16.mxu0 0
        %4666 = vmatmul.mubr.bf16.gmra.mrb[0].mxu0 %v4042
        %v4667 = vpop.f32.mrb[0].mxu0
        %v4668 = vadd.f32 %v4419, %v4667
        %v4669 = vpop.f32.mrb[0].mxu0
        %v4670 = vpop.f32.mrb[0].mxu0
        %v4671 = vadd.f32 %v4422, %v4670
        %v4672 = vpop.f32.mrb[0].mxu0
        %4673 = vmatprep.mubr.bf16.mxu0 0
        %4674 = vmatmul.mubr.bf16.gmra.mrb[0].mxu0 %v4043
        %v4675 = vpop.f32.mrb[0].mxu0
        %v4676 = vadd.f32 %v4427, %v4675
        %v4677 = vpop.f32.mrb[0].mxu0
        %v4678 = vpop.f32.mrb[0].mxu0
        %v4679 = vadd.f32 %v4430, %v4678
        %v4680 = vpop.f32.mrb[0].mxu0
        %4681 = vmatprep.mubr.bf16.mxu0 0
        %4682 = vmatmul.mubr.bf16.gmra.mrb[0].mxu0 %v4044
        %v4683 = vpop.f32.mrb[0].mxu0
        %v4684 = vadd.f32 %v4435, %v4683
        %v4685 = vpop.f32.mrb[0].mxu0
        %v4686 = vpop.f32.mrb[0].mxu0
        %v4687 = vadd.f32 %v4438, %v4686
        %v4688 = vpop.f32.mrb[0].mxu0
        %4689 = vmatprep.mubr.bf16.mxu0 0
        %4690 = vmatmul.mubr.bf16.gmra.mrb[0].mxu0 %v4045
        %v4691 = vpop.f32.mrb[0].mxu0
        %v4692 = vadd.f32 %v4443, %v4691
        %v4693 = vpop.f32.mrb[0].mxu0
        %v4694 = vpop.f32.mrb[0].mxu0
        %v4695 = vadd.f32 %v4446, %v4694
        %v4696 = vpop.f32.mrb[0].mxu0
        %4697 = vmatprep.mubr.bf16.mxu0 0
        %4698 = vmatmul.mubr.bf16.gmra.mrb[0].mxu0 %v4046
        %v4699 = vpop.f32.mrb[0].mxu0
        %v4700 = vadd.f32 %v4451, %v4699
        %v4701 = vpop.f32.mrb[0].mxu0
        %v4702 = vpop.f32.mrb[0].mxu0
        %v4703 = vadd.f32 %v4454, %v4702
        %v4704 = vpop.f32.mrb[0].mxu0
        %4705 = vmatprep.mubr.bf16.mxu0 0
        %4706 = vmatmul.mubr.bf16.gmra.mrb[0].mxu0 %v4047
        %v4707 = vpop.f32.mrb[0].mxu0
        %v4708 = vadd.f32 %v4459, %v4707
        %v4709 = vpop.f32.mrb[0].mxu0
        %v4710 = vpop.f32.mrb[0].mxu0
        %v4711 = vadd.f32 %v4462, %v4710
        %v4712 = vpop.f32.mrb[0].mxu0
        %4713 = vmatprep.mubr.bf16.mxu0 0
        %4714 = vmatmul.mubr.bf16.gmra.mrb[0].mxu0 %v4048
        %v4715 = vpop.f32.mrb[0].mxu0
        %v4716 = vadd.f32 %v4467, %v4715
        %v4717 = vpop.f32.mrb[0].mxu0
        %v4718 = vpop.f32.mrb[0].mxu0
        %v4719 = vadd.f32 %v4470, %v4718
        %v4720 = vpop.f32.mrb[0].mxu0
        %4721 = vmatprep.mubr.bf16.mxu0 0
        %4722 = vmatmul.mubr.bf16.gmra.mrb[0].mxu0 %v4049
        %v4723 = vpop.f32.mrb[0].mxu0
        %v4724 = vadd.f32 %v4475, %v4723
        %v4725 = vpop.f32.mrb[0].mxu0
        %v4726 = vpop.f32.mrb[0].mxu0
        %v4727 = vadd.f32 %v4478, %v4726
        %v4728 = vpop.f32.mrb[0].mxu0
        %4729 = vmatprep.mubr.bf16.mxu0 0
        %4730 = vmatmul.mubr.bf16.gmra.mrb[0].mxu0 %v4050
        %v4731 = vpop.f32.mrb[0].mxu0
        %v4732 = vadd.f32 %v4483, %v4731
        %v4733 = vpop.f32.mrb[0].mxu0
        %v4734 = vpop.f32.mrb[0].mxu0
        %v4735 = vadd.f32 %v4486, %v4734
        %v4736 = vpop.f32.mrb[0].mxu0
        %4737 = vmatprep.mubr.bf16.mxu0 0
        %4738 = vmatmul.mubr.bf16.gmra.mrb[0].mxu0 %v4051
        %v4739 = vpop.f32.mrb[0].mxu0
        %v4740 = vadd.f32 %v4491, %v4739
        %v4741 = vpop.f32.mrb[0].mxu0
        %v4742 = vpop.f32.mrb[0].mxu0
        %v4743 = vadd.f32 %v4494, %v4742
        %v4744 = vpop.f32.mrb[0].mxu0
        %4745 = vmatprep.mubr.bf16.mxu0 0
        %4746 = vmatmul.mubr.bf16.gmra.mrb[0].mxu0 %v4052
        %v4747 = vpop.f32.mrb[0].mxu0
        %v4748 = vadd.f32 %v4499, %v4747
        %v4749 = vpop.f32.mrb[0].mxu0
        %v4750 = vpop.f32.mrb[0].mxu0
        %v4751 = vadd.f32 %v4502, %v4750
        %v4752 = vpop.f32.mrb[0].mxu0
        %4753 = vmatprep.mubr.bf16.mxu0 0
        %4754 = vmatmul.mubr.bf16.gmra.mrb[0].mxu0 %v4053
        %v4755 = vpop.f32.mrb[0].mxu0
        %v4756 = vadd.f32 %v4507, %v4755
        %v4757 = vpop.f32.mrb[0].mxu0
        %v4758 = vpop.f32.mrb[0].mxu0
        %v4759 = vadd.f32 %v4510, %v4758
        %v4760 = vpop.f32.mrb[0].mxu0
        %4761 = vmatprep.mubr.bf16.mxu0 0
        %4762 = vmatmul.mubr.bf16.gmra.mrb[0].mxu0 %v4054
        %v4763 = vpop.f32.mrb[0].mxu0
        %v4764 = vadd.f32 %v4515, %v4763
        %v4765 = vpop.f32.mrb[0].mxu0
        %v4766 = vpop.f32.mrb[0].mxu0
        %v4767 = vadd.f32 %v4518, %v4766
        %v4768 = vpop.f32.mrb[0].mxu0
        %4769 = vmatprep.mubr.bf16.mxu0 0
        %4770 = vmatmul.mubr.bf16.gmra.mrb[0].mxu0 %v4055
        %v4771 = vpop.f32.mrb[0].mxu0
        %v4772 = vadd.f32 %v4523, %v4771
        %v4773 = vpop.f32.mrb[0].mxu0
        %v4774 = vpop.f32.mrb[0].mxu0
        %v4775 = vadd.f32 %v4526, %v4774
        %v4776 = vpop.f32.mrb[0].mxu0
        %4777 = vmatprep.mubr.bf16.mxu0 0
        %4778 = vmatmul.mubr.bf16.gmra.mrb[0].mxu0 %v4056
        %v4779 = vpop.f32.mrb[0].mxu0
        %v4780 = vadd.f32 %v4531, %v4779
        %v4781 = vpop.f32.mrb[0].mxu0
        %v4782 = vpop.f32.mrb[0].mxu0
        %v4783 = vadd.f32 %v4534, %v4782
        %v4784 = vpop.f32.mrb[0].mxu0
        %4785 = vmatprep.mubr.bf16.mxu0 0
        %4786 = vmatmul.mubr.bf16.gmra.mrb[0].mxu0 %v4057
        %v4787 = vpop.f32.mrb[0].mxu0
        %v4788 = vadd.f32 %v4539, %v4787
        %v4789 = vpop.f32.mrb[0].mxu0
        %v4790 = vpop.f32.mrb[0].mxu0
        %v4791 = vadd.f32 %v4542, %v4790
        %v4792 = vpop.f32.mrb[0].mxu0
        %4793 = vmatprep.mubr.bf16.mxu0 0
        %4794 = vmatmul.mubr.bf16.gmra.mrb[0].mxu0 %v4058
        %v4795 = vpop.f32.mrb[0].mxu0
        %v4796 = vadd.f32 %v4547, %v4795
        %v4797 = vpop.f32.mrb[0].mxu0
        %v4798 = vpop.f32.mrb[0].mxu0
        %v4799 = vadd.f32 %v4550, %v4798
        %v4800 = vpop.f32.mrb[0].mxu0
        %4801 = vmatprep.mubr.bf16.mxu0 0
        %4802 = vmatmul.mubr.bf16.gmra.mrb[0].mxu0 %v4059
        %v4803 = vpop.f32.mrb[0].mxu0
        %v4804 = vadd.f32 %v4555, %v4803
        %v4805 = vpop.f32.mrb[0].mxu0
        %v4806 = vpop.f32.mrb[0].mxu0
        %v4807 = vadd.f32 %v4558, %v4806
        %v4808 = vpop.f32.mrb[0].mxu0
        %4809 = vmatprep.mubr.bf16.mxu0 0
        %4810 = vmatmul.mubr.bf16.gmra.mrb[0].mxu0 %v4060
        %v4811 = vpop.f32.mrb[0].mxu0
        %v4812 = vadd.f32 %v4563, %v4811
        %v4813 = vpop.f32.mrb[0].mxu0
        %v4814 = vpop.f32.mrb[0].mxu0
        %v4815 = vadd.f32 %v4566, %v4814
        %v4816 = vpop.f32.mrb[0].mxu0
        %4817 = vmatprep.mubr.bf16.mxu0 0
        %4818 = vmatmul.mubr.bf16.gmra.mrb[0].mxu0 %v4061
        %v4819 = vpop.f32.mrb[0].mxu0
        %v4820 = vadd.f32 %v4571, %v4819
        %v4821 = vpop.f32.mrb[0].mxu0
        %v4822 = vpop.f32.mrb[0].mxu0
        %v4823 = vadd.f32 %v4574, %v4822
        %v4824 = vpop.f32.mrb[0].mxu0
        %4825 = vmatprep.mubr.bf16.mxu0 0
        %4826 = vmatmul.mubr.bf16.gmra.mrb[0].mxu0 %v4062
        %v4827 = vpop.f32.mrb[0].mxu0
        %v4828 = vadd.f32 %v4579, %v4827
        %v4829 = vpop.f32.mrb[0].mxu0
        %v4830 = vpop.f32.mrb[0].mxu0
        %v4831 = vadd.f32 %v4582, %v4830
        %v4832 = vpop.f32.mrb[0].mxu0
        %4833 = vdwg.mxu0
        %v4834 = vadd.f32 %v4138, %v4620
        %v4835 = vadd.f32 %v4139, %v4623
        %v4836 = vadd.f32 %v4140, %v4628
        %v4837 = vadd.f32 %v4141, %v4631
        %v4838 = vadd.f32 %v4142, %v4636
        %v4839 = vadd.f32 %v4143, %v4639
        %v4840 = vadd.f32 %v4144, %v4644
        %v4841 = vadd.f32 %v4145, %v4647
        %v4842 = vadd.f32 %v4146, %v4652
        %v4843 = vadd.f32 %v4147, %v4655
        %v4844 = vadd.f32 %v4148, %v4660
        %v4845 = vadd.f32 %v4149, %v4663
        %v4846 = vadd.f32 %v4150, %v4668
        %v4847 = vadd.f32 %v4151, %v4671
        %v4848 = vadd.f32 %v4152, %v4676
        %v4849 = vadd.f32 %v4153, %v4679
        %v4850 = vadd.f32 %v4154, %v4684
        %v4851 = vadd.f32 %v4155, %v4687
        %v4852 = vadd.f32 %v4156, %v4692
        %v4853 = vadd.f32 %v4157, %v4695
        %v4854 = vadd.f32 %v4158, %v4700
        %v4855 = vadd.f32 %v4159, %v4703
        %v4856 = vadd.f32 %v4160, %v4708
        %v4857 = vadd.f32 %v4161, %v4711
        %v4858 = vadd.f32 %v4162, %v4716
        %v4859 = vadd.f32 %v4163, %v4719
        %v4860 = vadd.f32 %v4164, %v4724
        %v4861 = vadd.f32 %v4165, %v4727
        %v4862 = vadd.f32 %v4166, %v4732
        %v4863 = vadd.f32 %v4167, %v4735
        %v4864 = vadd.f32 %v4168, %v4740
        %v4865 = vadd.f32 %v4169, %v4743
        %v4866 = vadd.f32 %v4170, %v4748
        %v4867 = vadd.f32 %v4171, %v4751
        %v4868 = vadd.f32 %v4172, %v4756
        %v4869 = vadd.f32 %v4173, %v4759
        %v4870 = vadd.f32 %v4174, %v4764
        %v4871 = vadd.f32 %v4175, %v4767
        %v4872 = vadd.f32 %v4176, %v4772
        %v4873 = vadd.f32 %v4177, %v4775
        %v4874 = vadd.f32 %v4178, %v4780
        %v4875 = vadd.f32 %v4179, %v4783
        %v4876 = vadd.f32 %v4180, %v4788
        %v4877 = vadd.f32 %v4181, %v4791
        %v4878 = vadd.f32 %v4182, %v4796
        %v4879 = vadd.f32 %v4183, %v4799
        %v4880 = vadd.f32 %v4184, %v4804
        %v4881 = vadd.f32 %v4185, %v4807
        %v4882 = vadd.f32 %v4186, %v4812
        %v4883 = vadd.f32 %v4187, %v4815
        %v4884 = vadd.f32 %v4188, %v4820
        %v4885 = vadd.f32 %v4189, %v4823
        %v4886 = vadd.f32 %v4190, %v4828
        %v4887 = vadd.f32 %v4191, %v4831
        %4888 = vst [vmem:[#allocation3] sm:$0xff] %v4834
        %4889 = vst [vmem:[#allocation3 + $0x8] sm:$0xff] %v4835
        %4890 = vst [vmem:[#allocation3 + $0x10] sm:$0xff] %v4836
        %4891 = vst [vmem:[#allocation3 + $0x18] sm:$0xff] %v4837
        %4892 = vst [vmem:[#allocation3 + $0x20] sm:$0xff] %v4838
        %4893 = vst [vmem:[#allocation3 + $0x28] sm:$0xff] %v4839
        %4894 = vst [vmem:[#allocation3 + $0x30] sm:$0xff] %v4840
        %4895 = vst [vmem:[#allocation3 + $0x38] sm:$0xff] %v4841
        %4896 = vst [vmem:[#allocation3 + $0x40] sm:$0xff] %v4842
        %4897 = vst [vmem:[#allocation3 + $0x48] sm:$0xff] %v4843
        %4898 = vst [vmem:[#allocation3 + $0x50] sm:$0xff] %v4844
        %4899 = vst [vmem:[#allocation3 + $0x58] sm:$0xff] %v4845
        %4900 = vst [vmem:[#allocation3 + $0x60] sm:$0xff] %v4846
        %4901 = vst [vmem:[#allocation3 + $0x68] sm:$0xff] %v4847
        %4902 = vst [vmem:[#allocation3 + $0x70] sm:$0xff] %v4848
        %4903 = vst [vmem:[#allocation3 + $0x78] sm:$0xff] %v4849
        %4904 = vst [vmem:[#allocation3 + $0x80] sm:$0xff] %v4850
        %4905 = vst [vmem:[#allocation3 + $0x88] sm:$0xff] %v4851
        %4906 = vst [vmem:[#allocation3 + $0x90] sm:$0xff] %v4852
        %4907 = vst [vmem:[#allocation3 + $0x98] sm:$0xff] %v4853
        %4908 = vst [vmem:[#allocation3 + $0xa0] sm:$0xff] %v4854
        %4909 = vst [vmem:[#allocation3 + $0xa8] sm:$0xff] %v4855
        %4910 = vst [vmem:[#allocation3 + $0xb0] sm:$0xff] %v4856
        %4911 = vst [vmem:[#allocation3 + $0xb8] sm:$0xff] %v4857
        %4912 = vst [vmem:[#allocation3 + $0xc0] sm:$0xff] %v4858
        %4913 = vst [vmem:[#allocation3 + $0xc8] sm:$0xff] %v4859
        %4914 = vst [vmem:[#allocation3 + $0xd0] sm:$0xff] %v4860
        %4915 = vst [vmem:[#allocation3 + $0xd8] sm:$0xff] %v4861
        %4916 = vst [vmem:[#allocation3 + $0xe0] sm:$0xff] %v4862
        %4917 = vst [vmem:[#allocation3 + $0xe8] sm:$0xff] %v4863
        %4918 = vst [vmem:[#allocation3 + $0xf0] sm:$0xff] %v4864
        %4919 = vst [vmem:[#allocation3 + $0xf8] sm:$0xff] %v4865
        %4920 = vst [vmem:[#allocation3 + $0x100] sm:$0xff] %v4866
        %4921 = vst [vmem:[#allocation3 + $0x108] sm:$0xff] %v4867
        %4922 = vst [vmem:[#allocation3 + $0x110] sm:$0xff] %v4868
        %4923 = vst [vmem:[#allocation3 + $0x118] sm:$0xff] %v4869
        %4924 = vst [vmem:[#allocation3 + $0x120] sm:$0xff] %v4870
        %4925 = vst [vmem:[#allocation3 + $0x128] sm:$0xff] %v4871
        %4926 = vst [vmem:[#allocation3 + $0x130] sm:$0xff] %v4872
        %4927 = vst [vmem:[#allocation3 + $0x138] sm:$0xff] %v4873
        %4928 = vst [vmem:[#allocation3 + $0x140] sm:$0xff] %v4874
        %4929 = vst [vmem:[#allocation3 + $0x148] sm:$0xff] %v4875
        %4930 = vst [vmem:[#allocation3 + $0x150] sm:$0xff] %v4876
        %4931 = vst [vmem:[#allocation3 + $0x158] sm:$0xff] %v4877
        %4932 = vst [vmem:[#allocation3 + $0x160] sm:$0xff] %v4878
        %4933 = vst [vmem:[#allocation3 + $0x168] sm:$0xff] %v4879
        %4934 = vst [vmem:[#allocation3 + $0x170] sm:$0xff] %v4880
        %4935 = vst [vmem:[#allocation3 + $0x178] sm:$0xff] %v4881
        %4936 = vst [vmem:[#allocation3 + $0x180] sm:$0xff] %v4882
        %4937 = vst [vmem:[#allocation3 + $0x188] sm:$0xff] %v4883
        %4938 = vst [vmem:[#allocation3 + $0x190] sm:$0xff] %v4884
        %4939 = vst [vmem:[#allocation3 + $0x198] sm:$0xff] %v4885
        %4940 = vst [vmem:[#allocation3 + $0x1a0] sm:$0xff] %v4886
        %4941 = vst [vmem:[#allocation3 + $0x1a8] sm:$0xff] %v4887
        %s4942 = scalar_lea.vmem [#allocation2], 32
        %v4943 = vld [vmem:[%s4942] sm:$0xf]
        %v4944 = vld [vmem:[%s4942 + $0x4] sm:$0xf]
        %v4945 = vld [vmem:[%s4942 + $0x8] sm:$0xf]
        %v4946 = vld [vmem:[%s4942 + $0x10] sm:$0xf]
        %v4947 = vld [vmem:[%s4942 + $0x14] sm:$0xf]
        %v4948 = vld [vmem:[%s4942 + $0x18] sm:$0xf]
        %v4949 = vld [vmem:[%s4942 + $0x20] sm:$0xf]
        %v4950 = vld [vmem:[%s4942 + $0x24] sm:$0xf]
        %v4951 = vld [vmem:[%s4942 + $0x28] sm:$0xf]
        %v4952 = vld [vmem:[%s4942 + $0x30] sm:$0xf]
        %v4953 = vld [vmem:[%s4942 + $0x34] sm:$0xf]
        %v4954 = vld [vmem:[%s4942 + $0x38] sm:$0xf]
        %v4955 = vld [vmem:[%s4942 + $0x40] sm:$0xf]
        %v4956 = vld [vmem:[%s4942 + $0x44] sm:$0xf]
        %v4957 = vld [vmem:[%s4942 + $0x48] sm:$0xf]
        %v4958 = vld [vmem:[%s4942 + $0x50] sm:$0xf]
        %v4959 = vld [vmem:[%s4942 + $0x54] sm:$0xf]
        %v4960 = vld [vmem:[%s4942 + $0x58] sm:$0xf]
        %v4961 = vld [vmem:[%s4942 + $0x60] sm:$0xf]
        %v4962 = vld [vmem:[%s4942 + $0x64] sm:$0xf]
        %v4963 = vld [vmem:[%s4942 + $0x68] sm:$0xf]
        %v4964 = vld [vmem:[%s4942 + $0x70] sm:$0xf]
        %v4965 = vld [vmem:[%s4942 + $0x74] sm:$0xf]
        %v4966 = vld [vmem:[%s4942 + $0x78] sm:$0xf]
        %v4967 = vld [vmem:[%s4942 + $0x80] sm:$0xf]
        %v4968 = vld [vmem:[%s4942 + $0x84] sm:$0xf]
        %v4969 = vld [vmem:[%s4942 + $0x88] sm:$0xf]
        %v4970 = vld [vmem:[%s4942 + $0x90] sm:$0xf]
        %v4971 = vld [vmem:[%s4942 + $0x94] sm:$0xf]
        %v4972 = vld [vmem:[%s4942 + $0x98] sm:$0xf]
        %v4973 = vld [vmem:[%s4942 + $0xa0] sm:$0xf]
        %v4974 = vld [vmem:[%s4942 + $0xa4] sm:$0xf]
        %v4975 = vld [vmem:[%s4942 + $0xa8] sm:$0xf]
        %v4976 = vld [vmem:[%s4942 + $0xb0] sm:$0xf]
        %v4977 = vld [vmem:[%s4942 + $0xb4] sm:$0xf]
        %v4978 = vld [vmem:[%s4942 + $0xb8] sm:$0xf]
        %v4979 = vld [vmem:[%s4942 + $0xc0] sm:$0xf]
        %v4980 = vld [vmem:[%s4942 + $0xc4] sm:$0xf]
        %v4981 = vld [vmem:[%s4942 + $0xc8] sm:$0xf]
        %v4982 = vld [vmem:[%s4942 + $0xd0] sm:$0xf]
        %v4983 = vld [vmem:[%s4942 + $0xd4] sm:$0xf]
        %v4984 = vld [vmem:[%s4942 + $0xd8] sm:$0xf]
        %v4985 = vld [vmem:[%s4942 + $0xe0] sm:$0xf]
        %v4986 = vld [vmem:[%s4942 + $0xe4] sm:$0xf]
        %v4987 = vld [vmem:[%s4942 + $0xe8] sm:$0xf]
        %v4988 = vld [vmem:[%s4942 + $0xf0] sm:$0xf]
        %v4989 = vld [vmem:[%s4942 + $0xf4] sm:$0xf]
        %v4990 = vld [vmem:[%s4942 + $0xf8] sm:$0xf]
        %v4991 = vld [vmem:[%s4942 + $0x100] sm:$0xf]
        %v4992 = vld [vmem:[%s4942 + $0x104] sm:$0xf]
        %v4993 = vld [vmem:[%s4942 + $0x108] sm:$0xf]
        %v4994 = vld [vmem:[%s4942 + $0x110] sm:$0xf]
        %v4995 = vld [vmem:[%s4942 + $0x114] sm:$0xf]
        %v4996 = vld [vmem:[%s4942 + $0x118] sm:$0xf]
        %v4997 = vld [vmem:[%s4942 + $0xc] sm:$0x1]
        %v4998 = vld [vmem:[%s4942 + $0x1c] sm:$0x1]
        %v4999 = vld [vmem:[%s4942 + $0x2c] sm:$0x1]
        %v5000 = vld [vmem:[%s4942 + $0x3c] sm:$0x1]
        %v5001 = vld [vmem:[%s4942 + $0x4c] sm:$0x1]
        %v5002 = vld [vmem:[%s4942 + $0x5c] sm:$0x1]
        %v5003 = vld [vmem:[%s4942 + $0x6c] sm:$0x1]
        %v5004 = vld [vmem:[%s4942 + $0x7c] sm:$0x1]
        %v5005 = vld [vmem:[%s4942 + $0x8c] sm:$0x1]
        %v5006 = vld [vmem:[%s4942 + $0x9c] sm:$0x1]
        %v5007 = vld [vmem:[%s4942 + $0xac] sm:$0x1]
        %v5008 = vld [vmem:[%s4942 + $0xbc] sm:$0x1]
        %v5009 = vld [vmem:[%s4942 + $0xcc] sm:$0x1]
        %v5010 = vld [vmem:[%s4942 + $0xdc] sm:$0x1]
        %v5011 = vld [vmem:[%s4942 + $0xec] sm:$0x1]
        %v5012 = vld [vmem:[%s4942 + $0xfc] sm:$0x1]
        %v5013 = vld [vmem:[%s4942 + $0x10c] sm:$0x1]
        %v5014 = vld [vmem:[%s4942 + $0x11c] sm:$0x1]
        %v5016 = vshrl.u32 %v4943, 16
        %v5018 = vrot.slane %v5016, 4
        %v5019 = vshll.u32 %v4943, 16
        %v5021 = vrot.slane %v5019, 5
        %v5022 = vor.u32 %v5018, %v5021
        %v5023 = vrot.slane %v5022, 4
        %v5025 = vshll.u32 %v4944, 16
        %v5027 = vrot.slane %v5025, 5
        %v5028 = vsel %vm713, %v5023, %v5027
        %v5029 = vshrl.u32 %v4944, 16
        %v5031 = vrot.slane %v5029, 4
        %v5032 = vor.u32 %v5031, %v5027
        %v5033 = vrot.slane %v5032, 4
        %v5035 = vshll.u32 %v4945, 16
        %v5037 = vrot.slane %v5035, 5
        %v5038 = vsel %vm713, %v5033, %v5037
        %v5039 = vshrl.u32 %v4945, 16
        %v5041 = vrot.slane %v5039, 4
        %v5042 = vor.u32 %v5041, %v5037
        %v5043 = vrot.slane %v5042, 4
        %v5045 = vshll.u32 %v4997, 16
        %v5047 = vrot.slane %v5045, 5
        %v5048 = vsel %vm713, %v5043, %v5047
        %v5050 = vshrl.u32 %v4946, 16
        %v5052 = vrot.slane %v5050, 4
        %v5053 = vshll.u32 %v4946, 16
        %v5055 = vrot.slane %v5053, 5
        %v5056 = vor.u32 %v5052, %v5055
        %v5057 = vrot.slane %v5056, 4
        %v5059 = vshll.u32 %v4947, 16
        %v5061 = vrot.slane %v5059, 5
        %v5062 = vsel %vm713, %v5057, %v5061
        %v5063 = vshrl.u32 %v4947, 16
        %v5065 = vrot.slane %v5063, 4
        %v5066 = vor.u32 %v5065, %v5061
        %v5067 = vrot.slane %v5066, 4
        %v5069 = vshll.u32 %v4948, 16
        %v5071 = vrot.slane %v5069, 5
        %v5072 = vsel %vm713, %v5067, %v5071
        %v5073 = vshrl.u32 %v4948, 16
        %v5075 = vrot.slane %v5073, 4
        %v5076 = vor.u32 %v5075, %v5071
        %v5077 = vrot.slane %v5076, 4
        %v5079 = vshll.u32 %v4998, 16
        %v5081 = vrot.slane %v5079, 5
        %v5082 = vsel %vm713, %v5077, %v5081
        %v5084 = vshrl.u32 %v4949, 16
        %v5086 = vrot.slane %v5084, 4
        %v5087 = vshll.u32 %v4949, 16
        %v5089 = vrot.slane %v5087, 5
        %v5090 = vor.u32 %v5086, %v5089
        %v5091 = vrot.slane %v5090, 4
        %v5093 = vshll.u32 %v4950, 16
        %v5095 = vrot.slane %v5093, 5
        %v5096 = vsel %vm713, %v5091, %v5095
        %v5097 = vshrl.u32 %v4950, 16
        %v5099 = vrot.slane %v5097, 4
        %v5100 = vor.u32 %v5099, %v5095
        %v5101 = vrot.slane %v5100, 4
        %v5103 = vshll.u32 %v4951, 16
        %v5105 = vrot.slane %v5103, 5
        %v5106 = vsel %vm713, %v5101, %v5105
        %v5107 = vshrl.u32 %v4951, 16
        %v5109 = vrot.slane %v5107, 4
        %v5110 = vor.u32 %v5109, %v5105
        %v5111 = vrot.slane %v5110, 4
        %v5113 = vshll.u32 %v4999, 16
        %v5115 = vrot.slane %v5113, 5
        %v5116 = vsel %vm713, %v5111, %v5115
        %v5118 = vshrl.u32 %v4952, 16
        %v5120 = vrot.slane %v5118, 4
        %v5121 = vshll.u32 %v4952, 16
        %v5123 = vrot.slane %v5121, 5
        %v5124 = vor.u32 %v5120, %v5123
        %v5125 = vrot.slane %v5124, 4
        %v5127 = vshll.u32 %v4953, 16
        %v5129 = vrot.slane %v5127, 5
        %v5130 = vsel %vm713, %v5125, %v5129
        %v5131 = vshrl.u32 %v4953, 16
        %v5133 = vrot.slane %v5131, 4
        %v5134 = vor.u32 %v5133, %v5129
        %v5135 = vrot.slane %v5134, 4
        %v5137 = vshll.u32 %v4954, 16
        %v5139 = vrot.slane %v5137, 5
        %v5140 = vsel %vm713, %v5135, %v5139
        %v5141 = vshrl.u32 %v4954, 16
        %v5143 = vrot.slane %v5141, 4
        %v5144 = vor.u32 %v5143, %v5139
        %v5145 = vrot.slane %v5144, 4
        %v5147 = vshll.u32 %v5000, 16
        %v5149 = vrot.slane %v5147, 5
        %v5150 = vsel %vm713, %v5145, %v5149
        %v5152 = vshrl.u32 %v4955, 16
        %v5154 = vrot.slane %v5152, 4
        %v5155 = vshll.u32 %v4955, 16
        %v5157 = vrot.slane %v5155, 5
        %v5158 = vor.u32 %v5154, %v5157
        %v5159 = vrot.slane %v5158, 4
        %v5161 = vshll.u32 %v4956, 16
        %v5163 = vrot.slane %v5161, 5
        %v5164 = vsel %vm713, %v5159, %v5163
        %v5165 = vshrl.u32 %v4956, 16
        %v5167 = vrot.slane %v5165, 4
        %v5168 = vor.u32 %v5167, %v5163
        %v5169 = vrot.slane %v5168, 4
        %v5171 = vshll.u32 %v4957, 16
        %v5173 = vrot.slane %v5171, 5
        %v5174 = vsel %vm713, %v5169, %v5173
        %v5175 = vshrl.u32 %v4957, 16
        %v5177 = vrot.slane %v5175, 4
        %v5178 = vor.u32 %v5177, %v5173
        %v5179 = vrot.slane %v5178, 4
        %v5181 = vshll.u32 %v5001, 16
        %v5183 = vrot.slane %v5181, 5
        %v5184 = vsel %vm713, %v5179, %v5183
        %v5186 = vshrl.u32 %v4958, 16
        %v5188 = vrot.slane %v5186, 4
        %v5189 = vshll.u32 %v4958, 16
        %v5191 = vrot.slane %v5189, 5
        %v5192 = vor.u32 %v5188, %v5191
        %v5193 = vrot.slane %v5192, 4
        %v5195 = vshll.u32 %v4959, 16
        %v5197 = vrot.slane %v5195, 5
        %v5198 = vsel %vm713, %v5193, %v5197
        %v5199 = vshrl.u32 %v4959, 16
        %v5201 = vrot.slane %v5199, 4
        %v5202 = vor.u32 %v5201, %v5197
        %v5203 = vrot.slane %v5202, 4
        %v5205 = vshll.u32 %v4960, 16
        %v5207 = vrot.slane %v5205, 5
        %v5208 = vsel %vm713, %v5203, %v5207
        %v5209 = vshrl.u32 %v4960, 16
        %v5211 = vrot.slane %v5209, 4
        %v5212 = vor.u32 %v5211, %v5207
        %v5213 = vrot.slane %v5212, 4
        %v5215 = vshll.u32 %v5002, 16
        %v5217 = vrot.slane %v5215, 5
        %v5218 = vsel %vm713, %v5213, %v5217
        %v5220 = vshrl.u32 %v4961, 16
        %v5222 = vrot.slane %v5220, 4
        %v5223 = vshll.u32 %v4961, 16
        %v5225 = vrot.slane %v5223, 5
        %v5226 = vor.u32 %v5222, %v5225
        %v5227 = vrot.slane %v5226, 4
        %v5229 = vshll.u32 %v4962, 16
        %v5231 = vrot.slane %v5229, 5
        %v5232 = vsel %vm713, %v5227, %v5231
        %v5233 = vshrl.u32 %v4962, 16
        %v5235 = vrot.slane %v5233, 4
        %v5236 = vor.u32 %v5235, %v5231
        %v5237 = vrot.slane %v5236, 4
        %v5239 = vshll.u32 %v4963, 16
        %v5241 = vrot.slane %v5239, 5
        %v5242 = vsel %vm713, %v5237, %v5241
        %v5243 = vshrl.u32 %v4963, 16
        %v5245 = vrot.slane %v5243, 4
        %v5246 = vor.u32 %v5245, %v5241
        %v5247 = vrot.slane %v5246, 4
        %v5249 = vshll.u32 %v5003, 16
        %v5251 = vrot.slane %v5249, 5
        %v5252 = vsel %vm713, %v5247, %v5251
        %v5254 = vshrl.u32 %v4964, 16
        %v5256 = vrot.slane %v5254, 4
        %v5257 = vshll.u32 %v4964, 16
        %v5259 = vrot.slane %v5257, 5
        %v5260 = vor.u32 %v5256, %v5259
        %v5261 = vrot.slane %v5260, 4
        %v5263 = vshll.u32 %v4965, 16
        %v5265 = vrot.slane %v5263, 5
        %v5266 = vsel %vm713, %v5261, %v5265
        %v5267 = vshrl.u32 %v4965, 16
        %v5269 = vrot.slane %v5267, 4
        %v5270 = vor.u32 %v5269, %v5265
        %v5271 = vrot.slane %v5270, 4
        %v5273 = vshll.u32 %v4966, 16
        %v5275 = vrot.slane %v5273, 5
        %v5276 = vsel %vm713, %v5271, %v5275
        %v5277 = vshrl.u32 %v4966, 16
        %v5279 = vrot.slane %v5277, 4
        %v5280 = vor.u32 %v5279, %v5275
        %v5281 = vrot.slane %v5280, 4
        %v5283 = vshll.u32 %v5004, 16
        %v5285 = vrot.slane %v5283, 5
        %v5286 = vsel %vm713, %v5281, %v5285
        %v5288 = vshrl.u32 %v4967, 16
        %v5290 = vrot.slane %v5288, 4
        %v5291 = vshll.u32 %v4967, 16
        %v5293 = vrot.slane %v5291, 5
        %v5294 = vor.u32 %v5290, %v5293
        %v5295 = vrot.slane %v5294, 4
        %v5297 = vshll.u32 %v4968, 16
        %v5299 = vrot.slane %v5297, 5
        %v5300 = vsel %vm713, %v5295, %v5299
        %v5301 = vshrl.u32 %v4968, 16
        %v5303 = vrot.slane %v5301, 4
        %v5304 = vor.u32 %v5303, %v5299
        %v5305 = vrot.slane %v5304, 4
        %v5307 = vshll.u32 %v4969, 16
        %v5309 = vrot.slane %v5307, 5
        %v5310 = vsel %vm713, %v5305, %v5309
        %v5311 = vshrl.u32 %v4969, 16
        %v5313 = vrot.slane %v5311, 4
        %v5314 = vor.u32 %v5313, %v5309
        %v5315 = vrot.slane %v5314, 4
        %v5317 = vshll.u32 %v5005, 16
        %v5319 = vrot.slane %v5317, 5
        %v5320 = vsel %vm713, %v5315, %v5319
        %v5322 = vshrl.u32 %v4970, 16
        %v5324 = vrot.slane %v5322, 4
        %v5325 = vshll.u32 %v4970, 16
        %v5327 = vrot.slane %v5325, 5
        %v5328 = vor.u32 %v5324, %v5327
        %v5329 = vrot.slane %v5328, 4
        %v5331 = vshll.u32 %v4971, 16
        %v5333 = vrot.slane %v5331, 5
        %v5334 = vsel %vm713, %v5329, %v5333
        %v5335 = vshrl.u32 %v4971, 16
        %v5337 = vrot.slane %v5335, 4
        %v5338 = vor.u32 %v5337, %v5333
        %v5339 = vrot.slane %v5338, 4
        %v5341 = vshll.u32 %v4972, 16
        %v5343 = vrot.slane %v5341, 5
        %v5344 = vsel %vm713, %v5339, %v5343
        %v5345 = vshrl.u32 %v4972, 16
        %v5347 = vrot.slane %v5345, 4
        %v5348 = vor.u32 %v5347, %v5343
        %v5349 = vrot.slane %v5348, 4
        %v5351 = vshll.u32 %v5006, 16
        %v5353 = vrot.slane %v5351, 5
        %v5354 = vsel %vm713, %v5349, %v5353
        %v5356 = vshrl.u32 %v4973, 16
        %v5358 = vrot.slane %v5356, 4
        %v5359 = vshll.u32 %v4973, 16
        %v5361 = vrot.slane %v5359, 5
        %v5362 = vor.u32 %v5358, %v5361
        %v5363 = vrot.slane %v5362, 4
        %v5365 = vshll.u32 %v4974, 16
        %v5367 = vrot.slane %v5365, 5
        %v5368 = vsel %vm713, %v5363, %v5367
        %v5369 = vshrl.u32 %v4974, 16
        %v5371 = vrot.slane %v5369, 4
        %v5372 = vor.u32 %v5371, %v5367
        %v5373 = vrot.slane %v5372, 4
        %v5375 = vshll.u32 %v4975, 16
        %v5377 = vrot.slane %v5375, 5
        %v5378 = vsel %vm713, %v5373, %v5377
        %v5379 = vshrl.u32 %v4975, 16
        %v5381 = vrot.slane %v5379, 4
        %v5382 = vor.u32 %v5381, %v5377
        %v5383 = vrot.slane %v5382, 4
        %v5385 = vshll.u32 %v5007, 16
        %v5387 = vrot.slane %v5385, 5
        %v5388 = vsel %vm713, %v5383, %v5387
        %v5390 = vshrl.u32 %v4976, 16
        %v5392 = vrot.slane %v5390, 4
        %v5393 = vshll.u32 %v4976, 16
        %v5395 = vrot.slane %v5393, 5
        %v5396 = vor.u32 %v5392, %v5395
        %v5397 = vrot.slane %v5396, 4
        %v5399 = vshll.u32 %v4977, 16
        %v5401 = vrot.slane %v5399, 5
        %v5402 = vsel %vm713, %v5397, %v5401
        %v5403 = vshrl.u32 %v4977, 16
        %v5405 = vrot.slane %v5403, 4
        %v5406 = vor.u32 %v5405, %v5401
        %v5407 = vrot.slane %v5406, 4
        %v5409 = vshll.u32 %v4978, 16
        %v5411 = vrot.slane %v5409, 5
        %v5412 = vsel %vm713, %v5407, %v5411
        %v5413 = vshrl.u32 %v4978, 16
        %v5415 = vrot.slane %v5413, 4
        %v5416 = vor.u32 %v5415, %v5411
        %v5417 = vrot.slane %v5416, 4
        %v5419 = vshll.u32 %v5008, 16
        %v5421 = vrot.slane %v5419, 5
        %v5422 = vsel %vm713, %v5417, %v5421
        %v5424 = vshrl.u32 %v4979, 16
        %v5426 = vrot.slane %v5424, 4
        %v5427 = vshll.u32 %v4979, 16
        %v5429 = vrot.slane %v5427, 5
        %v5430 = vor.u32 %v5426, %v5429
        %v5431 = vrot.slane %v5430, 4
        %v5433 = vshll.u32 %v4980, 16
        %v5435 = vrot.slane %v5433, 5
        %v5436 = vsel %vm713, %v5431, %v5435
        %v5437 = vshrl.u32 %v4980, 16
        %v5439 = vrot.slane %v5437, 4
        %v5440 = vor.u32 %v5439, %v5435
        %v5441 = vrot.slane %v5440, 4
        %v5443 = vshll.u32 %v4981, 16
        %v5445 = vrot.slane %v5443, 5
        %v5446 = vsel %vm713, %v5441, %v5445
        %v5447 = vshrl.u32 %v4981, 16
        %v5449 = vrot.slane %v5447, 4
        %v5450 = vor.u32 %v5449, %v5445
        %v5451 = vrot.slane %v5450, 4
        %v5453 = vshll.u32 %v5009, 16
        %v5455 = vrot.slane %v5453, 5
        %v5456 = vsel %vm713, %v5451, %v5455
        %v5458 = vshrl.u32 %v4982, 16
        %v5460 = vrot.slane %v5458, 4
        %v5461 = vshll.u32 %v4982, 16
        %v5463 = vrot.slane %v5461, 5
        %v5464 = vor.u32 %v5460, %v5463
        %v5465 = vrot.slane %v5464, 4
        %v5467 = vshll.u32 %v4983, 16
        %v5469 = vrot.slane %v5467, 5
        %v5470 = vsel %vm713, %v5465, %v5469
        %v5471 = vshrl.u32 %v4983, 16
        %v5473 = vrot.slane %v5471, 4
        %v5474 = vor.u32 %v5473, %v5469
        %v5475 = vrot.slane %v5474, 4
        %v5477 = vshll.u32 %v4984, 16
        %v5479 = vrot.slane %v5477, 5
        %v5480 = vsel %vm713, %v5475, %v5479
        %v5481 = vshrl.u32 %v4984, 16
        %v5483 = vrot.slane %v5481, 4
        %v5484 = vor.u32 %v5483, %v5479
        %v5485 = vrot.slane %v5484, 4
        %v5487 = vshll.u32 %v5010, 16
        %v5489 = vrot.slane %v5487, 5
        %v5490 = vsel %vm713, %v5485, %v5489
        %v5492 = vshrl.u32 %v4985, 16
        %v5494 = vrot.slane %v5492, 4
        %v5495 = vshll.u32 %v4985, 16
        %v5497 = vrot.slane %v5495, 5
        %v5498 = vor.u32 %v5494, %v5497
        %v5499 = vrot.slane %v5498, 4
        %v5501 = vshll.u32 %v4986, 16
        %v5503 = vrot.slane %v5501, 5
        %v5504 = vsel %vm713, %v5499, %v5503
        %v5505 = vshrl.u32 %v4986, 16
        %v5507 = vrot.slane %v5505, 4
        %v5508 = vor.u32 %v5507, %v5503
        %v5509 = vrot.slane %v5508, 4
        %v5511 = vshll.u32 %v4987, 16
        %v5513 = vrot.slane %v5511, 5
        %v5514 = vsel %vm713, %v5509, %v5513
        %v5515 = vshrl.u32 %v4987, 16
        %v5517 = vrot.slane %v5515, 4
        %v5518 = vor.u32 %v5517, %v5513
        %v5519 = vrot.slane %v5518, 4
        %v5521 = vshll.u32 %v5011, 16
        %v5523 = vrot.slane %v5521, 5
        %v5524 = vsel %vm713, %v5519, %v5523
        %v5526 = vshrl.u32 %v4988, 16
        %v5528 = vrot.slane %v5526, 4
        %v5529 = vshll.u32 %v4988, 16
        %v5531 = vrot.slane %v5529, 5
        %v5532 = vor.u32 %v5528, %v5531
        %v5533 = vrot.slane %v5532, 4
        %v5535 = vshll.u32 %v4989, 16
        %v5537 = vrot.slane %v5535, 5
        %v5538 = vsel %vm713, %v5533, %v5537
        %v5539 = vshrl.u32 %v4989, 16
        %v5541 = vrot.slane %v5539, 4
        %v5542 = vor.u32 %v5541, %v5537
        %v5543 = vrot.slane %v5542, 4
        %v5545 = vshll.u32 %v4990, 16
        %v5547 = vrot.slane %v5545, 5
        %v5548 = vsel %vm713, %v5543, %v5547
        %v5549 = vshrl.u32 %v4990, 16
        %v5551 = vrot.slane %v5549, 4
        %v5552 = vor.u32 %v5551, %v5547
        %v5553 = vrot.slane %v5552, 4
        %v5555 = vshll.u32 %v5012, 16
        %v5557 = vrot.slane %v5555, 5
        %v5558 = vsel %vm713, %v5553, %v5557
        %v5560 = vshrl.u32 %v4991, 16
        %v5562 = vrot.slane %v5560, 4
        %v5563 = vshll.u32 %v4991, 16
        %v5565 = vrot.slane %v5563, 5
        %v5566 = vor.u32 %v5562, %v5565
        %v5567 = vrot.slane %v5566, 4
        %v5569 = vshll.u32 %v4992, 16
        %v5571 = vrot.slane %v5569, 5
        %v5572 = vsel %vm713, %v5567, %v5571
        %v5573 = vshrl.u32 %v4992, 16
        %v5575 = vrot.slane %v5573, 4
        %v5576 = vor.u32 %v5575, %v5571
        %v5577 = vrot.slane %v5576, 4
        %v5579 = vshll.u32 %v4993, 16
        %v5581 = vrot.slane %v5579, 5
        %v5582 = vsel %vm713, %v5577, %v5581
        %v5583 = vshrl.u32 %v4993, 16
        %v5585 = vrot.slane %v5583, 4
        %v5586 = vor.u32 %v5585, %v5581
        %v5587 = vrot.slane %v5586, 4
        %v5589 = vshll.u32 %v5013, 16
        %v5591 = vrot.slane %v5589, 5
        %v5592 = vsel %vm713, %v5587, %v5591
        %v5594 = vshrl.u32 %v4994, 16
        %v5596 = vrot.slane %v5594, 4
        %v5597 = vshll.u32 %v4994, 16
        %v5599 = vrot.slane %v5597, 5
        %v5600 = vor.u32 %v5596, %v5599
        %v5601 = vrot.slane %v5600, 4
        %v5603 = vshll.u32 %v4995, 16
        %v5605 = vrot.slane %v5603, 5
        %v5606 = vsel %vm713, %v5601, %v5605
        %v5607 = vshrl.u32 %v4995, 16
        %v5609 = vrot.slane %v5607, 4
        %v5610 = vor.u32 %v5609, %v5605
        %v5611 = vrot.slane %v5610, 4
        %v5613 = vshll.u32 %v4996, 16
        %v5615 = vrot.slane %v5613, 5
        %v5616 = vsel %vm713, %v5611, %v5615
        %v5617 = vshrl.u32 %v4996, 16
        %v5619 = vrot.slane %v5617, 4
        %v5620 = vor.u32 %v5619, %v5615
        %v5621 = vrot.slane %v5620, 4
        %v5623 = vshll.u32 %v5014, 16
        %v5625 = vrot.slane %v5623, 5
        %v5626 = vsel %vm713, %v5621, %v5625
        %v5627 = vld [vmem:[%s4942] sm:$0xe]
        %v5628 = vld [vmem:[%s4942 + $0x10] sm:$0xe]
        %v5629 = vld [vmem:[%s4942 + $0x20] sm:$0xe]
        %v5630 = vld [vmem:[%s4942 + $0x30] sm:$0xe]
        %v5631 = vld [vmem:[%s4942 + $0x40] sm:$0xe]
        %v5632 = vld [vmem:[%s4942 + $0x50] sm:$0xe]
        %v5633 = vld [vmem:[%s4942 + $0x60] sm:$0xe]
        %v5634 = vld [vmem:[%s4942 + $0x70] sm:$0xe]
        %v5635 = vld [vmem:[%s4942 + $0x80] sm:$0xe]
        %v5636 = vld [vmem:[%s4942 + $0x90] sm:$0xe]
        %v5637 = vld [vmem:[%s4942 + $0xa0] sm:$0xe]
        %v5638 = vld [vmem:[%s4942 + $0xb0] sm:$0xe]
        %v5639 = vld [vmem:[%s4942 + $0xc0] sm:$0xe]
        %v5640 = vld [vmem:[%s4942 + $0xd0] sm:$0xe]
        %v5641 = vld [vmem:[%s4942 + $0xe0] sm:$0xe]
        %v5642 = vld [vmem:[%s4942 + $0xf0] sm:$0xe]
        %v5643 = vld [vmem:[%s4942 + $0x100] sm:$0xe]
        %v5644 = vld [vmem:[%s4942 + $0x110] sm:$0xe]
        %v5717 = vrot.slane %v5627, 5
        %v5718 = vrot.slane %v5717, 4
        %v5719 = vrot.slane %v4944, 5
        %v5720 = vsel %vm1418, %v5718, %v5719
        %v5721 = vrot.slane %v5719, 4
        %v5722 = vrot.slane %v4945, 5
        %v5723 = vsel %vm1418, %v5721, %v5722
        %v5724 = vrot.slane %v5722, 4
        %v5725 = vrot.slane %v4997, 5
        %v5726 = vsel %vm1418, %v5724, %v5725
        %v5727 = vrot.slane %v5628, 5
        %v5728 = vrot.slane %v5727, 4
        %v5729 = vrot.slane %v4947, 5
        %v5730 = vsel %vm1418, %v5728, %v5729
        %v5731 = vrot.slane %v5729, 4
        %v5732 = vrot.slane %v4948, 5
        %v5733 = vsel %vm1418, %v5731, %v5732
        %v5734 = vrot.slane %v5732, 4
        %v5735 = vrot.slane %v4998, 5
        %v5736 = vsel %vm1418, %v5734, %v5735
        %v5737 = vrot.slane %v5629, 5
        %v5738 = vrot.slane %v5737, 4
        %v5739 = vrot.slane %v4950, 5
        %v5740 = vsel %vm1418, %v5738, %v5739
        %v5741 = vrot.slane %v5739, 4
        %v5742 = vrot.slane %v4951, 5
        %v5743 = vsel %vm1418, %v5741, %v5742
        %v5744 = vrot.slane %v5742, 4
        %v5745 = vrot.slane %v4999, 5
        %v5746 = vsel %vm1418, %v5744, %v5745
        %v5747 = vrot.slane %v5630, 5
        %v5748 = vrot.slane %v5747, 4
        %v5749 = vrot.slane %v4953, 5
        %v5750 = vsel %vm1418, %v5748, %v5749
        %v5751 = vrot.slane %v5749, 4
        %v5752 = vrot.slane %v4954, 5
        %v5753 = vsel %vm1418, %v5751, %v5752
        %v5754 = vrot.slane %v5752, 4
        %v5755 = vrot.slane %v5000, 5
        %v5756 = vsel %vm1418, %v5754, %v5755
        %v5757 = vrot.slane %v5631, 5
        %v5758 = vrot.slane %v5757, 4
        %v5759 = vrot.slane %v4956, 5
        %v5760 = vsel %vm1418, %v5758, %v5759
        %v5761 = vrot.slane %v5759, 4
        %v5762 = vrot.slane %v4957, 5
        %v5763 = vsel %vm1418, %v5761, %v5762
        %v5764 = vrot.slane %v5762, 4
        %v5765 = vrot.slane %v5001, 5
        %v5766 = vsel %vm1418, %v5764, %v5765
        %v5767 = vrot.slane %v5632, 5
        %v5768 = vrot.slane %v5767, 4
        %v5769 = vrot.slane %v4959, 5
        %v5770 = vsel %vm1418, %v5768, %v5769
        %v5771 = vrot.slane %v5769, 4
        %v5772 = vrot.slane %v4960, 5
        %v5773 = vsel %vm1418, %v5771, %v5772
        %v5774 = vrot.slane %v5772, 4
        %v5775 = vrot.slane %v5002, 5
        %v5776 = vsel %vm1418, %v5774, %v5775
        %v5777 = vrot.slane %v5633, 5
        %v5778 = vrot.slane %v5777, 4
        %v5779 = vrot.slane %v4962, 5
        %v5780 = vsel %vm1418, %v5778, %v5779
        %v5781 = vrot.slane %v5779, 4
        %v5782 = vrot.slane %v4963, 5
        %v5783 = vsel %vm1418, %v5781, %v5782
        %v5784 = vrot.slane %v5782, 4
        %v5785 = vrot.slane %v5003, 5
        %v5786 = vsel %vm1418, %v5784, %v5785
        %v5787 = vrot.slane %v5634, 5
        %v5788 = vrot.slane %v5787, 4
        %v5789 = vrot.slane %v4965, 5
        %v5790 = vsel %vm1418, %v5788, %v5789
        %v5791 = vrot.slane %v5789, 4
        %v5792 = vrot.slane %v4966, 5
        %v5793 = vsel %vm1418, %v5791, %v5792
        %v5794 = vrot.slane %v5792, 4
        %v5795 = vrot.slane %v5004, 5
        %v5796 = vsel %vm1418, %v5794, %v5795
        %v5797 = vrot.slane %v5635, 5
        %v5798 = vrot.slane %v5797, 4
        %v5799 = vrot.slane %v4968, 5
        %v5800 = vsel %vm1418, %v5798, %v5799
        %v5801 = vrot.slane %v5799, 4
        %v5802 = vrot.slane %v4969, 5
        %v5803 = vsel %vm1418, %v5801, %v5802
        %v5804 = vrot.slane %v5802, 4
        %v5805 = vrot.slane %v5005, 5
        %v5806 = vsel %vm1418, %v5804, %v5805
        %v5807 = vrot.slane %v5636, 5
        %v5808 = vrot.slane %v5807, 4
        %v5809 = vrot.slane %v4971, 5
        %v5810 = vsel %vm1418, %v5808, %v5809
        %v5811 = vrot.slane %v5809, 4
        %v5812 = vrot.slane %v4972, 5
        %v5813 = vsel %vm1418, %v5811, %v5812
        %v5814 = vrot.slane %v5812, 4
        %v5815 = vrot.slane %v5006, 5
        %v5816 = vsel %vm1418, %v5814, %v5815
        %v5817 = vrot.slane %v5637, 5
        %v5818 = vrot.slane %v5817, 4
        %v5819 = vrot.slane %v4974, 5
        %v5820 = vsel %vm1418, %v5818, %v5819
        %v5821 = vrot.slane %v5819, 4
        %v5822 = vrot.slane %v4975, 5
        %v5823 = vsel %vm1418, %v5821, %v5822
        %v5824 = vrot.slane %v5822, 4
        %v5825 = vrot.slane %v5007, 5
        %v5826 = vsel %vm1418, %v5824, %v5825
        %v5827 = vrot.slane %v5638, 5
        %v5828 = vrot.slane %v5827, 4
        %v5829 = vrot.slane %v4977, 5
        %v5830 = vsel %vm1418, %v5828, %v5829
        %v5831 = vrot.slane %v5829, 4
        %v5832 = vrot.slane %v4978, 5
        %v5833 = vsel %vm1418, %v5831, %v5832
        %v5834 = vrot.slane %v5832, 4
        %v5835 = vrot.slane %v5008, 5
        %v5836 = vsel %vm1418, %v5834, %v5835
        %v5837 = vrot.slane %v5639, 5
        %v5838 = vrot.slane %v5837, 4
        %v5839 = vrot.slane %v4980, 5
        %v5840 = vsel %vm1418, %v5838, %v5839
        %v5841 = vrot.slane %v5839, 4
        %v5842 = vrot.slane %v4981, 5
        %v5843 = vsel %vm1418, %v5841, %v5842
        %v5844 = vrot.slane %v5842, 4
        %v5845 = vrot.slane %v5009, 5
        %v5846 = vsel %vm1418, %v5844, %v5845
        %v5847 = vrot.slane %v5640, 5
        %v5848 = vrot.slane %v5847, 4
        %v5849 = vrot.slane %v4983, 5
        %v5850 = vsel %vm1418, %v5848, %v5849
        %v5851 = vrot.slane %v5849, 4
        %v5852 = vrot.slane %v4984, 5
        %v5853 = vsel %vm1418, %v5851, %v5852
        %v5854 = vrot.slane %v5852, 4
        %v5855 = vrot.slane %v5010, 5
        %v5856 = vsel %vm1418, %v5854, %v5855
        %v5857 = vrot.slane %v5641, 5
        %v5858 = vrot.slane %v5857, 4
        %v5859 = vrot.slane %v4986, 5
        %v5860 = vsel %vm1418, %v5858, %v5859
        %v5861 = vrot.slane %v5859, 4
        %v5862 = vrot.slane %v4987, 5
        %v5863 = vsel %vm1418, %v5861, %v5862
        %v5864 = vrot.slane %v5862, 4
        %v5865 = vrot.slane %v5011, 5
        %v5866 = vsel %vm1418, %v5864, %v5865
        %v5867 = vrot.slane %v5642, 5
        %v5868 = vrot.slane %v5867, 4
        %v5869 = vrot.slane %v4989, 5
        %v5870 = vsel %vm1418, %v5868, %v5869
        %v5871 = vrot.slane %v5869, 4
        %v5872 = vrot.slane %v4990, 5
        %v5873 = vsel %vm1418, %v5871, %v5872
        %v5874 = vrot.slane %v5872, 4
        %v5875 = vrot.slane %v5012, 5
        %v5876 = vsel %vm1418, %v5874, %v5875
        %v5877 = vrot.slane %v5643, 5
        %v5878 = vrot.slane %v5877, 4
        %v5879 = vrot.slane %v4992, 5
        %v5880 = vsel %vm1418, %v5878, %v5879
        %v5881 = vrot.slane %v5879, 4
        %v5882 = vrot.slane %v4993, 5
        %v5883 = vsel %vm1418, %v5881, %v5882
        %v5884 = vrot.slane %v5882, 4
        %v5885 = vrot.slane %v5013, 5
        %v5886 = vsel %vm1418, %v5884, %v5885
        %v5887 = vrot.slane %v5644, 5
        %v5888 = vrot.slane %v5887, 4
        %v5889 = vrot.slane %v4995, 5
        %v5890 = vsel %vm1418, %v5888, %v5889
        %v5891 = vrot.slane %v5889, 4
        %v5892 = vrot.slane %v4996, 5
        %v5893 = vsel %vm1418, %v5891, %v5892
        %v5894 = vrot.slane %v5892, 4
        %v5895 = vrot.slane %v5014, 5
        %v5896 = vsel %vm1418, %v5894, %v5895
        %v5915 = vunpack.c.l.b16 %v4943
        %v5916 = vunpack.c.l.b16 %v4944
        %v5917 = vunpack.c.l.b16 %v4945
        %v5918 = vunpack.c.l.b16 %v4946
        %v5919 = vunpack.c.l.b16 %v4947
        %v5920 = vunpack.c.l.b16 %v4948
        %v5921 = vunpack.c.l.b16 %v4949
        %v5922 = vunpack.c.l.b16 %v4950
        %v5923 = vunpack.c.l.b16 %v4951
        %v5924 = vunpack.c.l.b16 %v4952
        %v5925 = vunpack.c.l.b16 %v4953
        %v5926 = vunpack.c.l.b16 %v4954
        %v5927 = vunpack.c.l.b16 %v4955
        %v5928 = vunpack.c.l.b16 %v4956
        %v5929 = vunpack.c.l.b16 %v4957
        %v5930 = vunpack.c.l.b16 %v4958
        %v5931 = vunpack.c.l.b16 %v4959
        %v5932 = vunpack.c.l.b16 %v4960
        %v5933 = vunpack.c.l.b16 %v4961
        %v5934 = vunpack.c.l.b16 %v4962
        %v5935 = vunpack.c.l.b16 %v4963
        %v5936 = vunpack.c.l.b16 %v4964
        %v5937 = vunpack.c.l.b16 %v4965
        %v5938 = vunpack.c.l.b16 %v4966
        %v5939 = vunpack.c.l.b16 %v4967
        %v5940 = vunpack.c.l.b16 %v4968
        %v5941 = vunpack.c.l.b16 %v4969
        %v5942 = vunpack.c.l.b16 %v4970
        %v5943 = vunpack.c.l.b16 %v4971
        %v5944 = vunpack.c.l.b16 %v4972
        %v5945 = vunpack.c.l.b16 %v4973
        %v5946 = vunpack.c.l.b16 %v4974
        %v5947 = vunpack.c.l.b16 %v4975
        %v5948 = vunpack.c.l.b16 %v4976
        %v5949 = vunpack.c.l.b16 %v4977
        %v5950 = vunpack.c.l.b16 %v4978
        %v5951 = vunpack.c.l.b16 %v4979
        %v5952 = vunpack.c.l.b16 %v4980
        %v5953 = vunpack.c.l.b16 %v4981
        %v5954 = vunpack.c.l.b16 %v4982
        %v5955 = vunpack.c.l.b16 %v4983
        %v5956 = vunpack.c.l.b16 %v4984
        %v5957 = vunpack.c.l.b16 %v4985
        %v5958 = vunpack.c.l.b16 %v4986
        %v5959 = vunpack.c.l.b16 %v4987
        %v5960 = vunpack.c.l.b16 %v4988
        %v5961 = vunpack.c.l.b16 %v4989
        %v5962 = vunpack.c.l.b16 %v4990
        %v5963 = vunpack.c.l.b16 %v4991
        %v5964 = vunpack.c.l.b16 %v4992
        %v5965 = vunpack.c.l.b16 %v4993
        %v5966 = vunpack.c.l.b16 %v4994
        %v5967 = vunpack.c.l.b16 %v4995
        %v5968 = vunpack.c.l.b16 %v4996
        %v5969 = vpack.c.b16 %v5916, %v5915
        %v5970 = vpack.c.b16 %v5918, %v5917
        %v5971 = vpack.c.b16 %v5920, %v5919
        %v5972 = vpack.c.b16 %v5922, %v5921
        %v5973 = vpack.c.b16 %v5924, %v5923
        %v5974 = vpack.c.b16 %v5926, %v5925
        %v5975 = vpack.c.b16 %v5928, %v5927
        %v5976 = vpack.c.b16 %v5930, %v5929
        %v5977 = vpack.c.b16 %v5932, %v5931
        %v5978 = vpack.c.b16 %v5934, %v5933
        %v5979 = vpack.c.b16 %v5936, %v5935
        %v5980 = vpack.c.b16 %v5938, %v5937
        %v5981 = vpack.c.b16 %v5940, %v5939
        %v5982 = vpack.c.b16 %v5942, %v5941
        %v5983 = vpack.c.b16 %v5944, %v5943
        %v5984 = vpack.c.b16 %v5946, %v5945
        %v5985 = vpack.c.b16 %v5948, %v5947
        %v5986 = vpack.c.b16 %v5950, %v5949
        %v5987 = vpack.c.b16 %v5952, %v5951
        %v5988 = vpack.c.b16 %v5954, %v5953
        %v5989 = vpack.c.b16 %v5956, %v5955
        %v5990 = vpack.c.b16 %v5958, %v5957
        %v5991 = vpack.c.b16 %v5960, %v5959
        %v5992 = vpack.c.b16 %v5962, %v5961
        %v5993 = vpack.c.b16 %v5964, %v5963
        %v5994 = vpack.c.b16 %v5966, %v5965
        %v5995 = vpack.c.b16 %v5968, %v5967
        %v6023 = vunpack.c.l.b16 %v5028
        %v6024 = vunpack.c.l.b16 %v5038
        %v6025 = vunpack.c.l.b16 %v5048
        %v6026 = vunpack.c.l.b16 %v5062
        %v6027 = vunpack.c.l.b16 %v5072
        %v6028 = vunpack.c.l.b16 %v5082
        %v6029 = vunpack.c.l.b16 %v5096
        %v6030 = vunpack.c.l.b16 %v5106
        %v6031 = vunpack.c.l.b16 %v5116
        %v6032 = vunpack.c.l.b16 %v5130
        %v6033 = vunpack.c.l.b16 %v5140
        %v6034 = vunpack.c.l.b16 %v5150
        %v6035 = vunpack.c.l.b16 %v5164
        %v6036 = vunpack.c.l.b16 %v5174
        %v6037 = vunpack.c.l.b16 %v5184
        %v6038 = vunpack.c.l.b16 %v5198
        %v6039 = vunpack.c.l.b16 %v5208
        %v6040 = vunpack.c.l.b16 %v5218
        %v6041 = vunpack.c.l.b16 %v5232
        %v6042 = vunpack.c.l.b16 %v5242
        %v6043 = vunpack.c.l.b16 %v5252
        %v6044 = vunpack.c.l.b16 %v5266
        %v6045 = vunpack.c.l.b16 %v5276
        %v6046 = vunpack.c.l.b16 %v5286
        %v6047 = vunpack.c.l.b16 %v5300
        %v6048 = vunpack.c.l.b16 %v5310
        %v6049 = vunpack.c.l.b16 %v5320
        %v6050 = vunpack.c.l.b16 %v5334
        %v6051 = vunpack.c.l.b16 %v5344
        %v6052 = vunpack.c.l.b16 %v5354
        %v6053 = vunpack.c.l.b16 %v5368
        %v6054 = vunpack.c.l.b16 %v5378
        %v6055 = vunpack.c.l.b16 %v5388
        %v6056 = vunpack.c.l.b16 %v5402
        %v6057 = vunpack.c.l.b16 %v5412
        %v6058 = vunpack.c.l.b16 %v5422
        %v6059 = vunpack.c.l.b16 %v5436
        %v6060 = vunpack.c.l.b16 %v5446
        %v6061 = vunpack.c.l.b16 %v5456
        %v6062 = vunpack.c.l.b16 %v5470
        %v6063 = vunpack.c.l.b16 %v5480
        %v6064 = vunpack.c.l.b16 %v5490
        %v6065 = vunpack.c.l.b16 %v5504
        %v6066 = vunpack.c.l.b16 %v5514
        %v6067 = vunpack.c.l.b16 %v5524
        %v6068 = vunpack.c.l.b16 %v5538
        %v6069 = vunpack.c.l.b16 %v5548
        %v6070 = vunpack.c.l.b16 %v5558
        %v6071 = vunpack.c.l.b16 %v5572
        %v6072 = vunpack.c.l.b16 %v5582
        %v6073 = vunpack.c.l.b16 %v5592
        %v6074 = vunpack.c.l.b16 %v5606
        %v6075 = vunpack.c.l.b16 %v5616
        %v6076 = vunpack.c.l.b16 %v5626
        %v6077 = vpack.c.b16 %v6024, %v6023
        %v6078 = vpack.c.b16 %v6026, %v6025
        %v6079 = vpack.c.b16 %v6028, %v6027
        %v6080 = vpack.c.b16 %v6030, %v6029
        %v6081 = vpack.c.b16 %v6032, %v6031
        %v6082 = vpack.c.b16 %v6034, %v6033
        %v6083 = vpack.c.b16 %v6036, %v6035
        %v6084 = vpack.c.b16 %v6038, %v6037
        %v6085 = vpack.c.b16 %v6040, %v6039
        %v6086 = vpack.c.b16 %v6042, %v6041
        %v6087 = vpack.c.b16 %v6044, %v6043
        %v6088 = vpack.c.b16 %v6046, %v6045
        %v6089 = vpack.c.b16 %v6048, %v6047
        %v6090 = vpack.c.b16 %v6050, %v6049
        %v6091 = vpack.c.b16 %v6052, %v6051
        %v6092 = vpack.c.b16 %v6054, %v6053
        %v6093 = vpack.c.b16 %v6056, %v6055
        %v6094 = vpack.c.b16 %v6058, %v6057
        %v6095 = vpack.c.b16 %v6060, %v6059
        %v6096 = vpack.c.b16 %v6062, %v6061
        %v6097 = vpack.c.b16 %v6064, %v6063
        %v6098 = vpack.c.b16 %v6066, %v6065
        %v6099 = vpack.c.b16 %v6068, %v6067
        %v6100 = vpack.c.b16 %v6070, %v6069
        %v6101 = vpack.c.b16 %v6072, %v6071
        %v6102 = vpack.c.b16 %v6074, %v6073
        %v6103 = vpack.c.b16 %v6076, %v6075
        %v6131 = vunpack.c.l.b16 %v5720
        %v6132 = vunpack.c.l.b16 %v5723
        %v6133 = vunpack.c.l.b16 %v5726
        %v6134 = vunpack.c.l.b16 %v5730
        %v6135 = vunpack.c.l.b16 %v5733
        %v6136 = vunpack.c.l.b16 %v5736
        %v6137 = vunpack.c.l.b16 %v5740
        %v6138 = vunpack.c.l.b16 %v5743
        %v6139 = vunpack.c.l.b16 %v5746
        %v6140 = vunpack.c.l.b16 %v5750
        %v6141 = vunpack.c.l.b16 %v5753
        %v6142 = vunpack.c.l.b16 %v5756
        %v6143 = vunpack.c.l.b16 %v5760
        %v6144 = vunpack.c.l.b16 %v5763
        %v6145 = vunpack.c.l.b16 %v5766
        %v6146 = vunpack.c.l.b16 %v5770
        %v6147 = vunpack.c.l.b16 %v5773
        %v6148 = vunpack.c.l.b16 %v5776
        %v6149 = vunpack.c.l.b16 %v5780
        %v6150 = vunpack.c.l.b16 %v5783
        %v6151 = vunpack.c.l.b16 %v5786
        %v6152 = vunpack.c.l.b16 %v5790
        %v6153 = vunpack.c.l.b16 %v5793
        %v6154 = vunpack.c.l.b16 %v5796
        %v6155 = vunpack.c.l.b16 %v5800
        %v6156 = vunpack.c.l.b16 %v5803
        %v6157 = vunpack.c.l.b16 %v5806
        %v6158 = vunpack.c.l.b16 %v5810
        %v6159 = vunpack.c.l.b16 %v5813
        %v6160 = vunpack.c.l.b16 %v5816
        %v6161 = vunpack.c.l.b16 %v5820
        %v6162 = vunpack.c.l.b16 %v5823
        %v6163 = vunpack.c.l.b16 %v5826
        %v6164 = vunpack.c.l.b16 %v5830
        %v6165 = vunpack.c.l.b16 %v5833
        %v6166 = vunpack.c.l.b16 %v5836
        %v6167 = vunpack.c.l.b16 %v5840
        %v6168 = vunpack.c.l.b16 %v5843
        %v6169 = vunpack.c.l.b16 %v5846
        %v6170 = vunpack.c.l.b16 %v5850
        %v6171 = vunpack.c.l.b16 %v5853
        %v6172 = vunpack.c.l.b16 %v5856
        %v6173 = vunpack.c.l.b16 %v5860
        %v6174 = vunpack.c.l.b16 %v5863
        %v6175 = vunpack.c.l.b16 %v5866
        %v6176 = vunpack.c.l.b16 %v5870
        %v6177 = vunpack.c.l.b16 %v5873
        %v6178 = vunpack.c.l.b16 %v5876
        %v6179 = vunpack.c.l.b16 %v5880
        %v6180 = vunpack.c.l.b16 %v5883
        %v6181 = vunpack.c.l.b16 %v5886
        %v6182 = vunpack.c.l.b16 %v5890
        %v6183 = vunpack.c.l.b16 %v5893
        %v6184 = vunpack.c.l.b16 %v5896
        %v6185 = vpack.c.b16 %v6132, %v6131
        %v6186 = vpack.c.b16 %v6134, %v6133
        %v6187 = vpack.c.b16 %v6136, %v6135
        %v6188 = vpack.c.b16 %v6138, %v6137
        %v6189 = vpack.c.b16 %v6140, %v6139
        %v6190 = vpack.c.b16 %v6142, %v6141
        %v6191 = vpack.c.b16 %v6144, %v6143
        %v6192 = vpack.c.b16 %v6146, %v6145
        %v6193 = vpack.c.b16 %v6148, %v6147
        %v6194 = vpack.c.b16 %v6150, %v6149
        %v6195 = vpack.c.b16 %v6152, %v6151
        %v6196 = vpack.c.b16 %v6154, %v6153
        %v6197 = vpack.c.b16 %v6156, %v6155
        %v6198 = vpack.c.b16 %v6158, %v6157
        %v6199 = vpack.c.b16 %v6160, %v6159
        %v6200 = vpack.c.b16 %v6162, %v6161
        %v6201 = vpack.c.b16 %v6164, %v6163
        %v6202 = vpack.c.b16 %v6166, %v6165
        %v6203 = vpack.c.b16 %v6168, %v6167
        %v6204 = vpack.c.b16 %v6170, %v6169
        %v6205 = vpack.c.b16 %v6172, %v6171
        %v6206 = vpack.c.b16 %v6174, %v6173
        %v6207 = vpack.c.b16 %v6176, %v6175
        %v6208 = vpack.c.b16 %v6178, %v6177
        %v6209 = vpack.c.b16 %v6180, %v6179
        %v6210 = vpack.c.b16 %v6182, %v6181
        %v6211 = vpack.c.b16 %v6184, %v6183
        %v6239 = vld [vmem:[%s2 + $0x180] sm:$0xf]
        %v6240 = vld [vmem:[%s2 + $0x184] sm:$0xf]
        %v6241 = vld [vmem:[%s2 + $0x188] sm:$0xf]
        %v6242 = vld [vmem:[%s2 + $0x18c] sm:$0xf]
        %v6243 = vld [vmem:[%s2 + $0x190] sm:$0xf]
        %v6244 = vld [vmem:[%s2 + $0x194] sm:$0xf]
        %v6245 = vld [vmem:[%s2 + $0x198] sm:$0xf]
        %v6246 = vld [vmem:[%s2 + $0x19c] sm:$0xf]
        %v6247 = vld [vmem:[%s2 + $0x1a0] sm:$0xf]
        %v6248 = vld [vmem:[%s2 + $0x1a4] sm:$0xf]
        %v6249 = vld [vmem:[%s2 + $0x1a8] sm:$0xf]
        %v6250 = vld [vmem:[%s2 + $0x1ac] sm:$0xf]
        %v6251 = vld [vmem:[%s2 + $0x1b0] sm:$0xf]
        %v6252 = vld [vmem:[%s2 + $0x1b4] sm:$0xf]
        %v6253 = vld [vmem:[%s2 + $0x1b8] sm:$0xf]
        %v6254 = vld [vmem:[%s2 + $0x1bc] sm:$0xf]
        %v6255 = vld [vmem:[%s2 + $0x1c0] sm:$0xf]
        %v6256 = vld [vmem:[%s2 + $0x1c4] sm:$0xf]
        %v6257 = vld [vmem:[%s2 + $0x1c8] sm:$0xf]
        %v6258 = vld [vmem:[%s2 + $0x1cc] sm:$0xf]
        %v6259 = vld [vmem:[%s2 + $0x1d0] sm:$0xf]
        %v6260 = vld [vmem:[%s2 + $0x1d4] sm:$0xf]
        %v6261 = vld [vmem:[%s2 + $0x1d8] sm:$0xf]
        %v6262 = vld [vmem:[%s2 + $0x1dc] sm:$0xf]
        %v6263 = vld [vmem:[%s2 + $0x1e0] sm:$0xf]
        %v6264 = vld [vmem:[%s2 + $0x1e4] sm:$0xf]
        %v6265 = vld [vmem:[%s2 + $0x1e8] sm:$0xf]
        %v6266 = vld [vmem:[%s2 + $0x1ec] sm:$0xf]
        %v6267 = vld [vmem:[%s2 + $0x1f0] sm:$0xf]
        %v6268 = vld [vmem:[%s2 + $0x1f4] sm:$0xf]
        %v6269 = vld [vmem:[%s2 + $0x1f8] sm:$0xf]
        %v6270 = vld [vmem:[%s2 + $0x1fc] sm:$0xf]
        %v6271 = vld [vmem:[%s2 + $0x200] sm:$0xf]
        %v6272 = vld [vmem:[%s2 + $0x204] sm:$0xf]
        %v6273 = vld [vmem:[%s2 + $0x208] sm:$0xf]
        %v6274 = vld [vmem:[%s2 + $0x20c] sm:$0xf]
        %v6275 = vld [vmem:[%s2 + $0x210] sm:$0xf]
        %v6276 = vld [vmem:[%s2 + $0x214] sm:$0xf]
        %v6277 = vld [vmem:[%s2 + $0x218] sm:$0xf]
        %v6278 = vld [vmem:[%s2 + $0x21c] sm:$0xf]
        %v6279 = vld [vmem:[%s2 + $0x220] sm:$0xf]
        %v6280 = vld [vmem:[%s2 + $0x224] sm:$0xf]
        %v6281 = vld [vmem:[%s2 + $0x228] sm:$0xf]
        %v6282 = vld [vmem:[%s2 + $0x22c] sm:$0xf]
        %v6283 = vld [vmem:[%s2 + $0x230] sm:$0xf]
        %v6284 = vld [vmem:[%s2 + $0x234] sm:$0xf]
        %v6285 = vld [vmem:[%s2 + $0x238] sm:$0xf]
        %v6286 = vld [vmem:[%s2 + $0x23c] sm:$0xf]
        %v6287 = vld [vmem:[#allocation3] sm:$0xff]
        %v6288 = vld [vmem:[#allocation3 + $0x8] sm:$0xff]
        %v6289 = vld [vmem:[#allocation3 + $0x10] sm:$0xff]
        %v6290 = vld [vmem:[#allocation3 + $0x18] sm:$0xff]
        %v6291 = vld [vmem:[#allocation3 + $0x20] sm:$0xff]
        %v6292 = vld [vmem:[#allocation3 + $0x28] sm:$0xff]
        %v6293 = vld [vmem:[#allocation3 + $0x30] sm:$0xff]
        %v6294 = vld [vmem:[#allocation3 + $0x38] sm:$0xff]
        %v6295 = vld [vmem:[#allocation3 + $0x40] sm:$0xff]
        %v6296 = vld [vmem:[#allocation3 + $0x48] sm:$0xff]
        %v6297 = vld [vmem:[#allocation3 + $0x50] sm:$0xff]
        %v6298 = vld [vmem:[#allocation3 + $0x58] sm:$0xff]
        %v6299 = vld [vmem:[#allocation3 + $0x60] sm:$0xff]
        %v6300 = vld [vmem:[#allocation3 + $0x68] sm:$0xff]
        %v6301 = vld [vmem:[#allocation3 + $0x70] sm:$0xff]
        %v6302 = vld [vmem:[#allocation3 + $0x78] sm:$0xff]
        %v6303 = vld [vmem:[#allocation3 + $0x80] sm:$0xff]
        %v6304 = vld [vmem:[#allocation3 + $0x88] sm:$0xff]
        %v6305 = vld [vmem:[#allocation3 + $0x90] sm:$0xff]
        %v6306 = vld [vmem:[#allocation3 + $0x98] sm:$0xff]
        %v6307 = vld [vmem:[#allocation3 + $0xa0] sm:$0xff]
        %v6308 = vld [vmem:[#allocation3 + $0xa8] sm:$0xff]
        %v6309 = vld [vmem:[#allocation3 + $0xb0] sm:$0xff]
        %v6310 = vld [vmem:[#allocation3 + $0xb8] sm:$0xff]
        %v6311 = vld [vmem:[#allocation3 + $0xc0] sm:$0xff]
        %v6312 = vld [vmem:[#allocation3 + $0xc8] sm:$0xff]
        %v6313 = vld [vmem:[#allocation3 + $0xd0] sm:$0xff]
        %v6314 = vld [vmem:[#allocation3 + $0xd8] sm:$0xff]
        %v6315 = vld [vmem:[#allocation3 + $0xe0] sm:$0xff]
        %v6316 = vld [vmem:[#allocation3 + $0xe8] sm:$0xff]
        %v6317 = vld [vmem:[#allocation3 + $0xf0] sm:$0xff]
        %v6318 = vld [vmem:[#allocation3 + $0xf8] sm:$0xff]
        %v6319 = vld [vmem:[#allocation3 + $0x100] sm:$0xff]
        %v6320 = vld [vmem:[#allocation3 + $0x108] sm:$0xff]
        %v6321 = vld [vmem:[#allocation3 + $0x110] sm:$0xff]
        %v6322 = vld [vmem:[#allocation3 + $0x118] sm:$0xff]
        %v6323 = vld [vmem:[#allocation3 + $0x120] sm:$0xff]
        %v6324 = vld [vmem:[#allocation3 + $0x128] sm:$0xff]
        %v6325 = vld [vmem:[#allocation3 + $0x130] sm:$0xff]
        %v6326 = vld [vmem:[#allocation3 + $0x138] sm:$0xff]
        %v6327 = vld [vmem:[#allocation3 + $0x140] sm:$0xff]
        %v6328 = vld [vmem:[#allocation3 + $0x148] sm:$0xff]
        %v6329 = vld [vmem:[#allocation3 + $0x150] sm:$0xff]
        %v6330 = vld [vmem:[#allocation3 + $0x158] sm:$0xff]
        %v6331 = vld [vmem:[#allocation3 + $0x160] sm:$0xff]
        %v6332 = vld [vmem:[#allocation3 + $0x168] sm:$0xff]
        %v6333 = vld [vmem:[#allocation3 + $0x170] sm:$0xff]
        %v6334 = vld [vmem:[#allocation3 + $0x178] sm:$0xff]
        %v6335 = vld [vmem:[#allocation3 + $0x180] sm:$0xff]
        %v6336 = vld [vmem:[#allocation3 + $0x188] sm:$0xff]
        %v6337 = vld [vmem:[#allocation3 + $0x190] sm:$0xff]
        %v6338 = vld [vmem:[#allocation3 + $0x198] sm:$0xff]
        %v6339 = vld [vmem:[#allocation3 + $0x1a0] sm:$0xff]
        %v6340 = vld [vmem:[#allocation3 + $0x1a8] sm:$0xff]
        %v6389 = vunpack.c.l.b16 %v6239
        %v6390 = vunpack.c.l.b16 %v6240
        %v6391 = vunpack.c.l.b16 %v6241
        %v6392 = vunpack.c.l.b16 %v6242
        %v6393 = vunpack.c.l.b16 %v6243
        %v6394 = vunpack.c.l.b16 %v6244
        %v6395 = vunpack.c.l.b16 %v6245
        %v6396 = vunpack.c.l.b16 %v6246
        %v6397 = vunpack.c.l.b16 %v6247
        %v6398 = vunpack.c.l.b16 %v6248
        %v6399 = vunpack.c.l.b16 %v6249
        %v6400 = vunpack.c.l.b16 %v6250
        %v6401 = vunpack.c.l.b16 %v6251
        %v6402 = vunpack.c.l.b16 %v6252
        %v6403 = vunpack.c.l.b16 %v6253
        %v6404 = vunpack.c.l.b16 %v6254
        %v6405 = vunpack.c.l.b16 %v6255
        %v6406 = vunpack.c.l.b16 %v6256
        %v6407 = vunpack.c.l.b16 %v6257
        %v6408 = vunpack.c.l.b16 %v6258
        %v6409 = vunpack.c.l.b16 %v6259
        %v6410 = vunpack.c.l.b16 %v6260
        %v6411 = vunpack.c.l.b16 %v6261
        %v6412 = vunpack.c.l.b16 %v6262
        %v6413 = vunpack.c.l.b16 %v6263
        %v6414 = vunpack.c.l.b16 %v6264
        %v6415 = vunpack.c.l.b16 %v6265
        %v6416 = vunpack.c.l.b16 %v6266
        %v6417 = vunpack.c.l.b16 %v6267
        %v6418 = vunpack.c.l.b16 %v6268
        %v6419 = vunpack.c.l.b16 %v6269
        %v6420 = vunpack.c.l.b16 %v6270
        %v6421 = vunpack.c.l.b16 %v6271
        %v6422 = vunpack.c.l.b16 %v6272
        %v6423 = vunpack.c.l.b16 %v6273
        %v6424 = vunpack.c.l.b16 %v6274
        %v6425 = vunpack.c.l.b16 %v6275
        %v6426 = vunpack.c.l.b16 %v6276
        %v6427 = vunpack.c.l.b16 %v6277
        %v6428 = vunpack.c.l.b16 %v6278
        %v6429 = vunpack.c.l.b16 %v6279
        %v6430 = vunpack.c.l.b16 %v6280
        %v6431 = vunpack.c.l.b16 %v6281
        %v6432 = vunpack.c.l.b16 %v6282
        %v6433 = vunpack.c.l.b16 %v6283
        %v6434 = vunpack.c.l.b16 %v6284
        %v6435 = vunpack.c.l.b16 %v6285
        %v6436 = vunpack.c.l.b16 %v6286
        %v6437 = vpack.c.b16 %v6390, %v6389
        %v6438 = vpack.c.b16 %v6392, %v6391
        %v6439 = vpack.c.b16 %v6394, %v6393
        %v6440 = vpack.c.b16 %v6396, %v6395
        %v6441 = vpack.c.b16 %v6398, %v6397
        %v6442 = vpack.c.b16 %v6400, %v6399
        %v6443 = vpack.c.b16 %v6402, %v6401
        %v6444 = vpack.c.b16 %v6404, %v6403
        %v6445 = vpack.c.b16 %v6406, %v6405
        %v6446 = vpack.c.b16 %v6408, %v6407
        %v6447 = vpack.c.b16 %v6410, %v6409
        %v6448 = vpack.c.b16 %v6412, %v6411
        %v6449 = vpack.c.b16 %v6414, %v6413
        %v6450 = vpack.c.b16 %v6416, %v6415
        %v6451 = vpack.c.b16 %v6418, %v6417
        %v6452 = vpack.c.b16 %v6420, %v6419
        %v6453 = vpack.c.b16 %v6422, %v6421
        %v6454 = vpack.c.b16 %v6424, %v6423
        %v6455 = vpack.c.b16 %v6426, %v6425
        %v6456 = vpack.c.b16 %v6428, %v6427
        %v6457 = vpack.c.b16 %v6430, %v6429
        %v6458 = vpack.c.b16 %v6432, %v6431
        %v6459 = vpack.c.b16 %v6434, %v6433
        %v6460 = vpack.c.b16 %v6436, %v6435
        %6485 = vmatprep.subr.bf16.mxu0 0
        %6486 = vmatpush1.bf16.msra.mxu0 %v6437
        %6487 = vmatprep.subr.bf16.mxu0 0
        %6488 = vmatpush1.bf16.msra.mxu0 %v6438
        %6489 = vmatprep.subr.bf16.mxu0 0
        %6490 = vmatpush1.bf16.msra.mxu0 %v6439
        %6491 = vmatprep.subr.bf16.mxu0 0
        %6492 = vmatpush1.bf16.msra.mxu0 %v6440
        %6493 = vmatprep.subr.bf16.mxu0 0
        %6494 = vmatpush1.bf16.msra.mxu0 %v6441
        %6495 = vmatprep.subr.bf16.mxu0 0
        %6496 = vmatpush1.bf16.msra.mxu0 %v6442
        %6497 = vmatprep.subr.bf16.mxu0 0
        %6498 = vmatpush1.bf16.msra.mxu0 %v6443
        %6499 = vmatprep.subr.bf16.mxu0 0
        %6500 = vmatpush1.bf16.msra.mxu0 %v6444
        %6501 = vmatprep.subr.bf16.mxu0 0
        %6502 = vmatpush1.bf16.msra.mxu0 %v6445
        %6503 = vmatprep.subr.bf16.mxu0 0
        %6504 = vmatpush1.bf16.msra.mxu0 %v6446
        %6505 = vmatprep.subr.bf16.mxu0 0
        %6506 = vmatpush1.bf16.msra.mxu0 %v6447
        %6507 = vmatprep.subr.bf16.mxu0 0
        %6508 = vmatpush1.bf16.msra.mxu0 %v6448
        %6509 = vmatprep.subr.bf16.mxu0 0
        %6510 = vmatpush1.bf16.msra.mxu0 %v6449
        %6511 = vmatprep.subr.bf16.mxu0 0
        %6512 = vmatpush1.bf16.msra.mxu0 %v6450
        %6513 = vmatprep.subr.bf16.mxu0 0
        %6514 = vmatpush1.bf16.msra.mxu0 %v6451
        %6515 = vmatprep.subr.bf16.mxu0 0
        %6516 = vmatpush1.bf16.msra.mxu0 %v6452
        %6517 = vmatprep.mubr.bf16.mxu0 %v6077
        %6518 = vmatmul.mubr.bf16.gmra.mrb[0].mxu0 %v5969
        %v6519 = vpop.f32.mrb[0].mxu0
        %v6520 = vadd.f32 0.0, %v6519
        %v6521 = vpop.f32.mrb[0].mxu0
        %v6522 = vpop.f32.mrb[0].mxu0
        %v6523 = vadd.f32 0.0, %v6522
        %v6524 = vpop.f32.mrb[0].mxu0
        %6525 = vmatprep.mubr.bf16.mxu0 %v6078
        %6526 = vmatmul.mubr.bf16.gmra.mrb[0].mxu0 %v5970
        %v6527 = vpop.f32.mrb[0].mxu0
        %v6528 = vadd.f32 0.0, %v6527
        %v6529 = vpop.f32.mrb[0].mxu0
        %v6530 = vpop.f32.mrb[0].mxu0
        %v6531 = vadd.f32 0.0, %v6530
        %v6532 = vpop.f32.mrb[0].mxu0
        %6533 = vmatprep.mubr.bf16.mxu0 %v6079
        %6534 = vmatmul.mubr.bf16.gmra.mrb[0].mxu0 %v5971
        %v6535 = vpop.f32.mrb[0].mxu0
        %v6536 = vadd.f32 0.0, %v6535
        %v6537 = vpop.f32.mrb[0].mxu0
        %v6538 = vpop.f32.mrb[0].mxu0
        %v6539 = vadd.f32 0.0, %v6538
        %v6540 = vpop.f32.mrb[0].mxu0
        %6541 = vmatprep.mubr.bf16.mxu0 %v6080
        %6542 = vmatmul.mubr.bf16.gmra.mrb[0].mxu0 %v5972
        %v6543 = vpop.f32.mrb[0].mxu0
        %v6544 = vadd.f32 0.0, %v6543
        %v6545 = vpop.f32.mrb[0].mxu0
        %v6546 = vpop.f32.mrb[0].mxu0
        %v6547 = vadd.f32 0.0, %v6546
        %v6548 = vpop.f32.mrb[0].mxu0
        %6549 = vmatprep.mubr.bf16.mxu0 %v6081
        %6550 = vmatmul.mubr.bf16.gmra.mrb[0].mxu0 %v5973
        %v6551 = vpop.f32.mrb[0].mxu0
        %v6552 = vadd.f32 0.0, %v6551
        %v6553 = vpop.f32.mrb[0].mxu0
        %v6554 = vpop.f32.mrb[0].mxu0
        %v6555 = vadd.f32 0.0, %v6554
        %v6556 = vpop.f32.mrb[0].mxu0
        %6557 = vmatprep.mubr.bf16.mxu0 %v6082
        %6558 = vmatmul.mubr.bf16.gmra.mrb[0].mxu0 %v5974
        %v6559 = vpop.f32.mrb[0].mxu0
        %v6560 = vadd.f32 0.0, %v6559
        %v6561 = vpop.f32.mrb[0].mxu0
        %v6562 = vpop.f32.mrb[0].mxu0
        %v6563 = vadd.f32 0.0, %v6562
        %v6564 = vpop.f32.mrb[0].mxu0
        %6565 = vmatprep.mubr.bf16.mxu0 %v6083
        %6566 = vmatmul.mubr.bf16.gmra.mrb[0].mxu0 %v5975
        %v6567 = vpop.f32.mrb[0].mxu0
        %v6568 = vadd.f32 0.0, %v6567
        %v6569 = vpop.f32.mrb[0].mxu0
        %v6570 = vpop.f32.mrb[0].mxu0
        %v6571 = vadd.f32 0.0, %v6570
        %v6572 = vpop.f32.mrb[0].mxu0
        %6573 = vmatprep.mubr.bf16.mxu0 %v6084
        %6574 = vmatmul.mubr.bf16.gmra.mrb[0].mxu0 %v5976
        %v6575 = vpop.f32.mrb[0].mxu0
        %v6576 = vadd.f32 0.0, %v6575
        %v6577 = vpop.f32.mrb[0].mxu0
        %v6578 = vpop.f32.mrb[0].mxu0
        %v6579 = vadd.f32 0.0, %v6578
        %v6580 = vpop.f32.mrb[0].mxu0
        %6581 = vmatprep.mubr.bf16.mxu0 %v6085
        %6582 = vmatmul.mubr.bf16.gmra.mrb[0].mxu0 %v5977
        %v6583 = vpop.f32.mrb[0].mxu0
        %v6584 = vadd.f32 0.0, %v6583
        %v6585 = vpop.f32.mrb[0].mxu0
        %v6586 = vpop.f32.mrb[0].mxu0
        %v6587 = vadd.f32 0.0, %v6586
        %v6588 = vpop.f32.mrb[0].mxu0
        %6589 = vmatprep.mubr.bf16.mxu0 %v6086
        %6590 = vmatmul.mubr.bf16.gmra.mrb[0].mxu0 %v5978
        %v6591 = vpop.f32.mrb[0].mxu0
        %v6592 = vadd.f32 0.0, %v6591
        %v6593 = vpop.f32.mrb[0].mxu0
        %v6594 = vpop.f32.mrb[0].mxu0
        %v6595 = vadd.f32 0.0, %v6594
        %v6596 = vpop.f32.mrb[0].mxu0
        %6597 = vmatprep.mubr.bf16.mxu0 %v6087
        %6598 = vmatmul.mubr.bf16.gmra.mrb[0].mxu0 %v5979
        %v6599 = vpop.f32.mrb[0].mxu0
        %v6600 = vadd.f32 0.0, %v6599
        %v6601 = vpop.f32.mrb[0].mxu0
        %v6602 = vpop.f32.mrb[0].mxu0
        %v6603 = vadd.f32 0.0, %v6602
        %v6604 = vpop.f32.mrb[0].mxu0
        %6605 = vmatprep.mubr.bf16.mxu0 %v6088
        %6606 = vmatmul.mubr.bf16.gmra.mrb[0].mxu0 %v5980
        %v6607 = vpop.f32.mrb[0].mxu0
        %v6608 = vadd.f32 0.0, %v6607
        %v6609 = vpop.f32.mrb[0].mxu0
        %v6610 = vpop.f32.mrb[0].mxu0
        %v6611 = vadd.f32 0.0, %v6610
        %v6612 = vpop.f32.mrb[0].mxu0
        %6613 = vmatprep.mubr.bf16.mxu0 %v6089
        %6614 = vmatmul.mubr.bf16.gmra.mrb[0].mxu0 %v5981
        %v6615 = vpop.f32.mrb[0].mxu0
        %v6616 = vadd.f32 0.0, %v6615
        %v6617 = vpop.f32.mrb[0].mxu0
        %v6618 = vpop.f32.mrb[0].mxu0
        %v6619 = vadd.f32 0.0, %v6618
        %v6620 = vpop.f32.mrb[0].mxu0
        %6621 = vmatprep.mubr.bf16.mxu0 %v6090
        %6622 = vmatmul.mubr.bf16.gmra.mrb[0].mxu0 %v5982
        %v6623 = vpop.f32.mrb[0].mxu0
        %v6624 = vadd.f32 0.0, %v6623
        %v6625 = vpop.f32.mrb[0].mxu0
        %v6626 = vpop.f32.mrb[0].mxu0
        %v6627 = vadd.f32 0.0, %v6626
        %v6628 = vpop.f32.mrb[0].mxu0
        %6629 = vmatprep.mubr.bf16.mxu0 %v6091
        %6630 = vmatmul.mubr.bf16.gmra.mrb[0].mxu0 %v5983
        %v6631 = vpop.f32.mrb[0].mxu0
        %v6632 = vadd.f32 0.0, %v6631
        %v6633 = vpop.f32.mrb[0].mxu0
        %v6634 = vpop.f32.mrb[0].mxu0
        %v6635 = vadd.f32 0.0, %v6634
        %v6636 = vpop.f32.mrb[0].mxu0
        %6637 = vmatprep.mubr.bf16.mxu0 %v6092
        %6638 = vmatmul.mubr.bf16.gmra.mrb[0].mxu0 %v5984
        %v6639 = vpop.f32.mrb[0].mxu0
        %v6640 = vadd.f32 0.0, %v6639
        %v6641 = vpop.f32.mrb[0].mxu0
        %v6642 = vpop.f32.mrb[0].mxu0
        %v6643 = vadd.f32 0.0, %v6642
        %v6644 = vpop.f32.mrb[0].mxu0
        %6645 = vmatprep.mubr.bf16.mxu0 %v6093
        %6646 = vmatmul.mubr.bf16.gmra.mrb[0].mxu0 %v5985
        %v6647 = vpop.f32.mrb[0].mxu0
        %v6648 = vadd.f32 0.0, %v6647
        %v6649 = vpop.f32.mrb[0].mxu0
        %v6650 = vpop.f32.mrb[0].mxu0
        %v6651 = vadd.f32 0.0, %v6650
        %v6652 = vpop.f32.mrb[0].mxu0
        %6653 = vmatprep.mubr.bf16.mxu0 %v6094
        %6654 = vmatmul.mubr.bf16.gmra.mrb[0].mxu0 %v5986
        %v6655 = vpop.f32.mrb[0].mxu0
        %v6656 = vadd.f32 0.0, %v6655
        %v6657 = vpop.f32.mrb[0].mxu0
        %v6658 = vpop.f32.mrb[0].mxu0
        %v6659 = vadd.f32 0.0, %v6658
        %v6660 = vpop.f32.mrb[0].mxu0
        %6661 = vmatprep.mubr.bf16.mxu0 %v6095
        %6662 = vmatmul.mubr.bf16.gmra.mrb[0].mxu0 %v5987
        %v6663 = vpop.f32.mrb[0].mxu0
        %v6664 = vadd.f32 0.0, %v6663
        %v6665 = vpop.f32.mrb[0].mxu0
        %v6666 = vpop.f32.mrb[0].mxu0
        %v6667 = vadd.f32 0.0, %v6666
        %v6668 = vpop.f32.mrb[0].mxu0
        %6669 = vmatprep.mubr.bf16.mxu0 %v6096
        %6670 = vmatmul.mubr.bf16.gmra.mrb[0].mxu0 %v5988
        %v6671 = vpop.f32.mrb[0].mxu0
        %v6672 = vadd.f32 0.0, %v6671
        %v6673 = vpop.f32.mrb[0].mxu0
        %v6674 = vpop.f32.mrb[0].mxu0
        %v6675 = vadd.f32 0.0, %v6674
        %v6676 = vpop.f32.mrb[0].mxu0
        %6677 = vmatprep.mubr.bf16.mxu0 %v6097
        %6678 = vmatmul.mubr.bf16.gmra.mrb[0].mxu0 %v5989
        %v6679 = vpop.f32.mrb[0].mxu0
        %v6680 = vadd.f32 0.0, %v6679
        %v6681 = vpop.f32.mrb[0].mxu0
        %v6682 = vpop.f32.mrb[0].mxu0
        %v6683 = vadd.f32 0.0, %v6682
        %v6684 = vpop.f32.mrb[0].mxu0
        %6685 = vmatprep.mubr.bf16.mxu0 %v6098
        %6686 = vmatmul.mubr.bf16.gmra.mrb[0].mxu0 %v5990
        %v6687 = vpop.f32.mrb[0].mxu0
        %v6688 = vadd.f32 0.0, %v6687
        %v6689 = vpop.f32.mrb[0].mxu0
        %v6690 = vpop.f32.mrb[0].mxu0
        %v6691 = vadd.f32 0.0, %v6690
        %v6692 = vpop.f32.mrb[0].mxu0
        %6693 = vmatprep.mubr.bf16.mxu0 %v6099
        %6694 = vmatmul.mubr.bf16.gmra.mrb[0].mxu0 %v5991
        %v6695 = vpop.f32.mrb[0].mxu0
        %v6696 = vadd.f32 0.0, %v6695
        %v6697 = vpop.f32.mrb[0].mxu0
        %v6698 = vpop.f32.mrb[0].mxu0
        %v6699 = vadd.f32 0.0, %v6698
        %v6700 = vpop.f32.mrb[0].mxu0
        %6701 = vmatprep.mubr.bf16.mxu0 %v6100
        %6702 = vmatmul.mubr.bf16.gmra.mrb[0].mxu0 %v5992
        %v6703 = vpop.f32.mrb[0].mxu0
        %v6704 = vadd.f32 0.0, %v6703
        %v6705 = vpop.f32.mrb[0].mxu0
        %v6706 = vpop.f32.mrb[0].mxu0
        %v6707 = vadd.f32 0.0, %v6706
        %v6708 = vpop.f32.mrb[0].mxu0
        %6709 = vmatprep.mubr.bf16.mxu0 %v6101
        %6710 = vmatmul.mubr.bf16.gmra.mrb[0].mxu0 %v5993
        %v6711 = vpop.f32.mrb[0].mxu0
        %v6712 = vadd.f32 0.0, %v6711
        %v6713 = vpop.f32.mrb[0].mxu0
        %v6714 = vpop.f32.mrb[0].mxu0
        %v6715 = vadd.f32 0.0, %v6714
        %v6716 = vpop.f32.mrb[0].mxu0
        %6717 = vmatprep.mubr.bf16.mxu0 %v6102
        %6718 = vmatmul.mubr.bf16.gmra.mrb[0].mxu0 %v5994
        %v6719 = vpop.f32.mrb[0].mxu0
        %v6720 = vadd.f32 0.0, %v6719
        %v6721 = vpop.f32.mrb[0].mxu0
        %v6722 = vpop.f32.mrb[0].mxu0
        %v6723 = vadd.f32 0.0, %v6722
        %v6724 = vpop.f32.mrb[0].mxu0
        %6725 = vmatprep.mubr.bf16.mxu0 %v6103
        %6726 = vmatmul.mubr.bf16.gmra.mrb[0].mxu0 %v5995
        %v6727 = vpop.f32.mrb[0].mxu0
        %v6728 = vadd.f32 0.0, %v6727
        %v6729 = vpop.f32.mrb[0].mxu0
        %v6730 = vpop.f32.mrb[0].mxu0
        %v6731 = vadd.f32 0.0, %v6730
        %v6732 = vpop.f32.mrb[0].mxu0
        %6733 = vdwg.mxu0
        %6734 = vmatprep.subr.bf16.mxu0 0
        %6735 = vmatpush1.bf16.msra.mxu0 %v6453
        %6736 = vmatprep.subr.bf16.mxu0 0
        %6737 = vmatpush1.bf16.msra.mxu0 %v6454
        %6738 = vmatprep.subr.bf16.mxu0 0
        %6739 = vmatpush1.bf16.msra.mxu0 %v6455
        %6740 = vmatprep.subr.bf16.mxu0 0
        %6741 = vmatpush1.bf16.msra.mxu0 %v6456
        %6742 = vmatprep.subr.bf16.mxu0 0
        %6743 = vmatpush1.bf16.msra.mxu0 %v6457
        %6744 = vmatprep.subr.bf16.mxu0 0
        %6745 = vmatpush1.bf16.msra.mxu0 %v6458
        %6746 = vmatprep.subr.bf16.mxu0 0
        %6747 = vmatpush1.bf16.msra.mxu0 %v6459
        %6748 = vmatprep.subr.bf16.mxu0 0
        %6749 = vmatpush1.bf16.msra.mxu0 %v6460
        %6750 = vmatprep.subr.bf16.mxu0 0
        %6751 = vmatpush1.bf16.msra.mxu0 0
        %6752 = vmatprep.subr.bf16.mxu0 0
        %6753 = vmatpush1.bf16.msra.mxu0 0
        %6754 = vmatprep.subr.bf16.mxu0 0
        %6755 = vmatpush1.bf16.msra.mxu0 0
        %6756 = vmatprep.subr.bf16.mxu0 0
        %6757 = vmatpush1.bf16.msra.mxu0 0
        %6758 = vmatprep.subr.bf16.mxu0 0
        %6759 = vmatpush1.bf16.msra.mxu0 0
        %6760 = vmatprep.subr.bf16.mxu0 0
        %6761 = vmatpush1.bf16.msra.mxu0 0
        %6762 = vmatprep.subr.bf16.mxu0 0
        %6763 = vmatpush1.bf16.msra.mxu0 0
        %6764 = vmatprep.subr.bf16.mxu0 0
        %6765 = vmatpush1.bf16.msra.mxu0 0
        %6766 = vmatprep.mubr.bf16.mxu0 0
        %6767 = vmatmul.mubr.bf16.gmra.mrb[0].mxu0 %v6185
        %v6768 = vpop.f32.mrb[0].mxu0
        %v6769 = vadd.f32 %v6520, %v6768
        %v6770 = vpop.f32.mrb[0].mxu0
        %v6771 = vpop.f32.mrb[0].mxu0
        %v6772 = vadd.f32 %v6523, %v6771
        %v6773 = vpop.f32.mrb[0].mxu0
        %6774 = vmatprep.mubr.bf16.mxu0 0
        %6775 = vmatmul.mubr.bf16.gmra.mrb[0].mxu0 %v6186
        %v6776 = vpop.f32.mrb[0].mxu0
        %v6777 = vadd.f32 %v6528, %v6776
        %v6778 = vpop.f32.mrb[0].mxu0
        %v6779 = vpop.f32.mrb[0].mxu0
        %v6780 = vadd.f32 %v6531, %v6779
        %v6781 = vpop.f32.mrb[0].mxu0
        %6782 = vmatprep.mubr.bf16.mxu0 0
        %6783 = vmatmul.mubr.bf16.gmra.mrb[0].mxu0 %v6187
        %v6784 = vpop.f32.mrb[0].mxu0
        %v6785 = vadd.f32 %v6536, %v6784
        %v6786 = vpop.f32.mrb[0].mxu0
        %v6787 = vpop.f32.mrb[0].mxu0
        %v6788 = vadd.f32 %v6539, %v6787
        %v6789 = vpop.f32.mrb[0].mxu0
        %6790 = vmatprep.mubr.bf16.mxu0 0
        %6791 = vmatmul.mubr.bf16.gmra.mrb[0].mxu0 %v6188
        %v6792 = vpop.f32.mrb[0].mxu0
        %v6793 = vadd.f32 %v6544, %v6792
        %v6794 = vpop.f32.mrb[0].mxu0
        %v6795 = vpop.f32.mrb[0].mxu0
        %v6796 = vadd.f32 %v6547, %v6795
        %v6797 = vpop.f32.mrb[0].mxu0
        %6798 = vmatprep.mubr.bf16.mxu0 0
        %6799 = vmatmul.mubr.bf16.gmra.mrb[0].mxu0 %v6189
        %v6800 = vpop.f32.mrb[0].mxu0
        %v6801 = vadd.f32 %v6552, %v6800
        %v6802 = vpop.f32.mrb[0].mxu0
        %v6803 = vpop.f32.mrb[0].mxu0
        %v6804 = vadd.f32 %v6555, %v6803
        %v6805 = vpop.f32.mrb[0].mxu0
        %6806 = vmatprep.mubr.bf16.mxu0 0
        %6807 = vmatmul.mubr.bf16.gmra.mrb[0].mxu0 %v6190
        %v6808 = vpop.f32.mrb[0].mxu0
        %v6809 = vadd.f32 %v6560, %v6808
        %v6810 = vpop.f32.mrb[0].mxu0
        %v6811 = vpop.f32.mrb[0].mxu0
        %v6812 = vadd.f32 %v6563, %v6811
        %v6813 = vpop.f32.mrb[0].mxu0
        %6814 = vmatprep.mubr.bf16.mxu0 0
        %6815 = vmatmul.mubr.bf16.gmra.mrb[0].mxu0 %v6191
        %v6816 = vpop.f32.mrb[0].mxu0
        %v6817 = vadd.f32 %v6568, %v6816
        %v6818 = vpop.f32.mrb[0].mxu0
        %v6819 = vpop.f32.mrb[0].mxu0
        %v6820 = vadd.f32 %v6571, %v6819
        %v6821 = vpop.f32.mrb[0].mxu0
        %6822 = vmatprep.mubr.bf16.mxu0 0
        %6823 = vmatmul.mubr.bf16.gmra.mrb[0].mxu0 %v6192
        %v6824 = vpop.f32.mrb[0].mxu0
        %v6825 = vadd.f32 %v6576, %v6824
        %v6826 = vpop.f32.mrb[0].mxu0
        %v6827 = vpop.f32.mrb[0].mxu0
        %v6828 = vadd.f32 %v6579, %v6827
        %v6829 = vpop.f32.mrb[0].mxu0
        %6830 = vmatprep.mubr.bf16.mxu0 0
        %6831 = vmatmul.mubr.bf16.gmra.mrb[0].mxu0 %v6193
        %v6832 = vpop.f32.mrb[0].mxu0
        %v6833 = vadd.f32 %v6584, %v6832
        %v6834 = vpop.f32.mrb[0].mxu0
        %v6835 = vpop.f32.mrb[0].mxu0
        %v6836 = vadd.f32 %v6587, %v6835
        %v6837 = vpop.f32.mrb[0].mxu0
        %6838 = vmatprep.mubr.bf16.mxu0 0
        %6839 = vmatmul.mubr.bf16.gmra.mrb[0].mxu0 %v6194
        %v6840 = vpop.f32.mrb[0].mxu0
        %v6841 = vadd.f32 %v6592, %v6840
        %v6842 = vpop.f32.mrb[0].mxu0
        %v6843 = vpop.f32.mrb[0].mxu0
        %v6844 = vadd.f32 %v6595, %v6843
        %v6845 = vpop.f32.mrb[0].mxu0
        %6846 = vmatprep.mubr.bf16.mxu0 0
        %6847 = vmatmul.mubr.bf16.gmra.mrb[0].mxu0 %v6195
        %v6848 = vpop.f32.mrb[0].mxu0
        %v6849 = vadd.f32 %v6600, %v6848
        %v6850 = vpop.f32.mrb[0].mxu0
        %v6851 = vpop.f32.mrb[0].mxu0
        %v6852 = vadd.f32 %v6603, %v6851
        %v6853 = vpop.f32.mrb[0].mxu0
        %6854 = vmatprep.mubr.bf16.mxu0 0
        %6855 = vmatmul.mubr.bf16.gmra.mrb[0].mxu0 %v6196
        %v6856 = vpop.f32.mrb[0].mxu0
        %v6857 = vadd.f32 %v6608, %v6856
        %v6858 = vpop.f32.mrb[0].mxu0
        %v6859 = vpop.f32.mrb[0].mxu0
        %v6860 = vadd.f32 %v6611, %v6859
        %v6861 = vpop.f32.mrb[0].mxu0
        %6862 = vmatprep.mubr.bf16.mxu0 0
        %6863 = vmatmul.mubr.bf16.gmra.mrb[0].mxu0 %v6197
        %v6864 = vpop.f32.mrb[0].mxu0
        %v6865 = vadd.f32 %v6616, %v6864
        %v6866 = vpop.f32.mrb[0].mxu0
        %v6867 = vpop.f32.mrb[0].mxu0
        %v6868 = vadd.f32 %v6619, %v6867
        %v6869 = vpop.f32.mrb[0].mxu0
        %6870 = vmatprep.mubr.bf16.mxu0 0
        %6871 = vmatmul.mubr.bf16.gmra.mrb[0].mxu0 %v6198
        %v6872 = vpop.f32.mrb[0].mxu0
        %v6873 = vadd.f32 %v6624, %v6872
        %v6874 = vpop.f32.mrb[0].mxu0
        %v6875 = vpop.f32.mrb[0].mxu0
        %v6876 = vadd.f32 %v6627, %v6875
        %v6877 = vpop.f32.mrb[0].mxu0
        %6878 = vmatprep.mubr.bf16.mxu0 0
        %6879 = vmatmul.mubr.bf16.gmra.mrb[0].mxu0 %v6199
        %v6880 = vpop.f32.mrb[0].mxu0
        %v6881 = vadd.f32 %v6632, %v6880
        %v6882 = vpop.f32.mrb[0].mxu0
        %v6883 = vpop.f32.mrb[0].mxu0
        %v6884 = vadd.f32 %v6635, %v6883
        %v6885 = vpop.f32.mrb[0].mxu0
        %6886 = vmatprep.mubr.bf16.mxu0 0
        %6887 = vmatmul.mubr.bf16.gmra.mrb[0].mxu0 %v6200
        %v6888 = vpop.f32.mrb[0].mxu0
        %v6889 = vadd.f32 %v6640, %v6888
        %v6890 = vpop.f32.mrb[0].mxu0
        %v6891 = vpop.f32.mrb[0].mxu0
        %v6892 = vadd.f32 %v6643, %v6891
        %v6893 = vpop.f32.mrb[0].mxu0
        %6894 = vmatprep.mubr.bf16.mxu0 0
        %6895 = vmatmul.mubr.bf16.gmra.mrb[0].mxu0 %v6201
        %v6896 = vpop.f32.mrb[0].mxu0
        %v6897 = vadd.f32 %v6648, %v6896
        %v6898 = vpop.f32.mrb[0].mxu0
        %v6899 = vpop.f32.mrb[0].mxu0
        %v6900 = vadd.f32 %v6651, %v6899
        %v6901 = vpop.f32.mrb[0].mxu0
        %6902 = vmatprep.mubr.bf16.mxu0 0
        %6903 = vmatmul.mubr.bf16.gmra.mrb[0].mxu0 %v6202
        %v6904 = vpop.f32.mrb[0].mxu0
        %v6905 = vadd.f32 %v6656, %v6904
        %v6906 = vpop.f32.mrb[0].mxu0
        %v6907 = vpop.f32.mrb[0].mxu0
        %v6908 = vadd.f32 %v6659, %v6907
        %v6909 = vpop.f32.mrb[0].mxu0
        %6910 = vmatprep.mubr.bf16.mxu0 0
        %6911 = vmatmul.mubr.bf16.gmra.mrb[0].mxu0 %v6203
        %v6912 = vpop.f32.mrb[0].mxu0
        %v6913 = vadd.f32 %v6664, %v6912
        %v6914 = vpop.f32.mrb[0].mxu0
        %v6915 = vpop.f32.mrb[0].mxu0
        %v6916 = vadd.f32 %v6667, %v6915
        %v6917 = vpop.f32.mrb[0].mxu0
        %6918 = vmatprep.mubr.bf16.mxu0 0
        %6919 = vmatmul.mubr.bf16.gmra.mrb[0].mxu0 %v6204
        %v6920 = vpop.f32.mrb[0].mxu0
        %v6921 = vadd.f32 %v6672, %v6920
        %v6922 = vpop.f32.mrb[0].mxu0
        %v6923 = vpop.f32.mrb[0].mxu0
        %v6924 = vadd.f32 %v6675, %v6923
        %v6925 = vpop.f32.mrb[0].mxu0
        %6926 = vmatprep.mubr.bf16.mxu0 0
        %6927 = vmatmul.mubr.bf16.gmra.mrb[0].mxu0 %v6205
        %v6928 = vpop.f32.mrb[0].mxu0
        %v6929 = vadd.f32 %v6680, %v6928
        %v6930 = vpop.f32.mrb[0].mxu0
        %v6931 = vpop.f32.mrb[0].mxu0
        %v6932 = vadd.f32 %v6683, %v6931
        %v6933 = vpop.f32.mrb[0].mxu0
        %6934 = vmatprep.mubr.bf16.mxu0 0
        %6935 = vmatmul.mubr.bf16.gmra.mrb[0].mxu0 %v6206
        %v6936 = vpop.f32.mrb[0].mxu0
        %v6937 = vadd.f32 %v6688, %v6936
        %v6938 = vpop.f32.mrb[0].mxu0
        %v6939 = vpop.f32.mrb[0].mxu0
        %v6940 = vadd.f32 %v6691, %v6939
        %v6941 = vpop.f32.mrb[0].mxu0
        %6942 = vmatprep.mubr.bf16.mxu0 0
        %6943 = vmatmul.mubr.bf16.gmra.mrb[0].mxu0 %v6207
        %v6944 = vpop.f32.mrb[0].mxu0
        %v6945 = vadd.f32 %v6696, %v6944
        %v6946 = vpop.f32.mrb[0].mxu0
        %v6947 = vpop.f32.mrb[0].mxu0
        %v6948 = vadd.f32 %v6699, %v6947
        %v6949 = vpop.f32.mrb[0].mxu0
        %6950 = vmatprep.mubr.bf16.mxu0 0
        %6951 = vmatmul.mubr.bf16.gmra.mrb[0].mxu0 %v6208
        %v6952 = vpop.f32.mrb[0].mxu0
        %v6953 = vadd.f32 %v6704, %v6952
        %v6954 = vpop.f32.mrb[0].mxu0
        %v6955 = vpop.f32.mrb[0].mxu0
        %v6956 = vadd.f32 %v6707, %v6955
        %v6957 = vpop.f32.mrb[0].mxu0
        %6958 = vmatprep.mubr.bf16.mxu0 0
        %6959 = vmatmul.mubr.bf16.gmra.mrb[0].mxu0 %v6209
        %v6960 = vpop.f32.mrb[0].mxu0
        %v6961 = vadd.f32 %v6712, %v6960
        %v6962 = vpop.f32.mrb[0].mxu0
        %v6963 = vpop.f32.mrb[0].mxu0
        %v6964 = vadd.f32 %v6715, %v6963
        %v6965 = vpop.f32.mrb[0].mxu0
        %6966 = vmatprep.mubr.bf16.mxu0 0
        %6967 = vmatmul.mubr.bf16.gmra.mrb[0].mxu0 %v6210
        %v6968 = vpop.f32.mrb[0].mxu0
        %v6969 = vadd.f32 %v6720, %v6968
        %v6970 = vpop.f32.mrb[0].mxu0
        %v6971 = vpop.f32.mrb[0].mxu0
        %v6972 = vadd.f32 %v6723, %v6971
        %v6973 = vpop.f32.mrb[0].mxu0
        %6974 = vmatprep.mubr.bf16.mxu0 0
        %6975 = vmatmul.mubr.bf16.gmra.mrb[0].mxu0 %v6211
        %v6976 = vpop.f32.mrb[0].mxu0
        %v6977 = vadd.f32 %v6728, %v6976
        %v6978 = vpop.f32.mrb[0].mxu0
        %v6979 = vpop.f32.mrb[0].mxu0
        %v6980 = vadd.f32 %v6731, %v6979
        %v6981 = vpop.f32.mrb[0].mxu0
        %6982 = vdwg.mxu0
        %v6983 = vadd.f32 %v6287, %v6769
        %v6984 = vadd.f32 %v6288, %v6772
        %v6985 = vadd.f32 %v6289, %v6777
        %v6986 = vadd.f32 %v6290, %v6780
        %v6987 = vadd.f32 %v6291, %v6785
        %v6988 = vadd.f32 %v6292, %v6788
        %v6989 = vadd.f32 %v6293, %v6793
        %v6990 = vadd.f32 %v6294, %v6796
        %v6991 = vadd.f32 %v6295, %v6801
        %v6992 = vadd.f32 %v6296, %v6804
        %v6993 = vadd.f32 %v6297, %v6809
        %v6994 = vadd.f32 %v6298, %v6812
        %v6995 = vadd.f32 %v6299, %v6817
        %v6996 = vadd.f32 %v6300, %v6820
        %v6997 = vadd.f32 %v6301, %v6825
        %v6998 = vadd.f32 %v6302, %v6828
        %v6999 = vadd.f32 %v6303, %v6833
        %v7000 = vadd.f32 %v6304, %v6836
        %v7001 = vadd.f32 %v6305, %v6841
        %v7002 = vadd.f32 %v6306, %v6844
        %v7003 = vadd.f32 %v6307, %v6849
        %v7004 = vadd.f32 %v6308, %v6852
        %v7005 = vadd.f32 %v6309, %v6857
        %v7006 = vadd.f32 %v6310, %v6860
        %v7007 = vadd.f32 %v6311, %v6865
        %v7008 = vadd.f32 %v6312, %v6868
        %v7009 = vadd.f32 %v6313, %v6873
        %v7010 = vadd.f32 %v6314, %v6876
        %v7011 = vadd.f32 %v6315, %v6881
        %v7012 = vadd.f32 %v6316, %v6884
        %v7013 = vadd.f32 %v6317, %v6889
        %v7014 = vadd.f32 %v6318, %v6892
        %v7015 = vadd.f32 %v6319, %v6897
        %v7016 = vadd.f32 %v6320, %v6900
        %v7017 = vadd.f32 %v6321, %v6905
        %v7018 = vadd.f32 %v6322, %v6908
        %v7019 = vadd.f32 %v6323, %v6913
        %v7020 = vadd.f32 %v6324, %v6916
        %v7021 = vadd.f32 %v6325, %v6921
        %v7022 = vadd.f32 %v6326, %v6924
        %v7023 = vadd.f32 %v6327, %v6929
        %v7024 = vadd.f32 %v6328, %v6932
        %v7025 = vadd.f32 %v6329, %v6937
        %v7026 = vadd.f32 %v6330, %v6940
        %v7027 = vadd.f32 %v6331, %v6945
        %v7028 = vadd.f32 %v6332, %v6948
        %v7029 = vadd.f32 %v6333, %v6953
        %v7030 = vadd.f32 %v6334, %v6956
        %v7031 = vadd.f32 %v6335, %v6961
        %v7032 = vadd.f32 %v6336, %v6964
        %v7033 = vadd.f32 %v6337, %v6969
        %v7034 = vadd.f32 %v6338, %v6972
        %v7035 = vadd.f32 %v6339, %v6977
        %v7036 = vadd.f32 %v6340, %v6980
        %7037 = vst [vmem:[#allocation3] sm:$0xff] %v6983
        %7038 = vst [vmem:[#allocation3 + $0x8] sm:$0xff] %v6984
        %7039 = vst [vmem:[#allocation3 + $0x10] sm:$0xff] %v6985
        %7040 = vst [vmem:[#allocation3 + $0x18] sm:$0xff] %v6986
        %7041 = vst [vmem:[#allocation3 + $0x20] sm:$0xff] %v6987
        %7042 = vst [vmem:[#allocation3 + $0x28] sm:$0xff] %v6988
        %7043 = vst [vmem:[#allocation3 + $0x30] sm:$0xff] %v6989
        %7044 = vst [vmem:[#allocation3 + $0x38] sm:$0xff] %v6990
        %7045 = vst [vmem:[#allocation3 + $0x40] sm:$0xff] %v6991
        %7046 = vst [vmem:[#allocation3 + $0x48] sm:$0xff] %v6992
        %7047 = vst [vmem:[#allocation3 + $0x50] sm:$0xff] %v6993
        %7048 = vst [vmem:[#allocation3 + $0x58] sm:$0xff] %v6994
        %7049 = vst [vmem:[#allocation3 + $0x60] sm:$0xff] %v6995
        %7050 = vst [vmem:[#allocation3 + $0x68] sm:$0xff] %v6996
        %7051 = vst [vmem:[#allocation3 + $0x70] sm:$0xff] %v6997
        %7052 = vst [vmem:[#allocation3 + $0x78] sm:$0xff] %v6998
        %7053 = vst [vmem:[#allocation3 + $0x80] sm:$0xff] %v6999
        %7054 = vst [vmem:[#allocation3 + $0x88] sm:$0xff] %v7000
        %7055 = vst [vmem:[#allocation3 + $0x90] sm:$0xff] %v7001
        %7056 = vst [vmem:[#allocation3 + $0x98] sm:$0xff] %v7002
        %7057 = vst [vmem:[#allocation3 + $0xa0] sm:$0xff] %v7003
        %7058 = vst [vmem:[#allocation3 + $0xa8] sm:$0xff] %v7004
        %7059 = vst [vmem:[#allocation3 + $0xb0] sm:$0xff] %v7005
        %7060 = vst [vmem:[#allocation3 + $0xb8] sm:$0xff] %v7006
        %7061 = vst [vmem:[#allocation3 + $0xc0] sm:$0xff] %v7007
        %7062 = vst [vmem:[#allocation3 + $0xc8] sm:$0xff] %v7008
        %7063 = vst [vmem:[#allocation3 + $0xd0] sm:$0xff] %v7009
        %7064 = vst [vmem:[#allocation3 + $0xd8] sm:$0xff] %v7010
        %7065 = vst [vmem:[#allocation3 + $0xe0] sm:$0xff] %v7011
        %7066 = vst [vmem:[#allocation3 + $0xe8] sm:$0xff] %v7012
        %7067 = vst [vmem:[#allocation3 + $0xf0] sm:$0xff] %v7013
        %7068 = vst [vmem:[#allocation3 + $0xf8] sm:$0xff] %v7014
        %7069 = vst [vmem:[#allocation3 + $0x100] sm:$0xff] %v7015
        %7070 = vst [vmem:[#allocation3 + $0x108] sm:$0xff] %v7016
        %7071 = vst [vmem:[#allocation3 + $0x110] sm:$0xff] %v7017
        %7072 = vst [vmem:[#allocation3 + $0x118] sm:$0xff] %v7018
        %7073 = vst [vmem:[#allocation3 + $0x120] sm:$0xff] %v7019
        %7074 = vst [vmem:[#allocation3 + $0x128] sm:$0xff] %v7020
        %7075 = vst [vmem:[#allocation3 + $0x130] sm:$0xff] %v7021
        %7076 = vst [vmem:[#allocation3 + $0x138] sm:$0xff] %v7022
        %7077 = vst [vmem:[#allocation3 + $0x140] sm:$0xff] %v7023
        %7078 = vst [vmem:[#allocation3 + $0x148] sm:$0xff] %v7024
        %7079 = vst [vmem:[#allocation3 + $0x150] sm:$0xff] %v7025
        %7080 = vst [vmem:[#allocation3 + $0x158] sm:$0xff] %v7026
        %7081 = vst [vmem:[#allocation3 + $0x160] sm:$0xff] %v7027
        %7082 = vst [vmem:[#allocation3 + $0x168] sm:$0xff] %v7028
        %7083 = vst [vmem:[#allocation3 + $0x170] sm:$0xff] %v7029
        %7084 = vst [vmem:[#allocation3 + $0x178] sm:$0xff] %v7030
        %7085 = vst [vmem:[#allocation3 + $0x180] sm:$0xff] %v7031
        %7086 = vst [vmem:[#allocation3 + $0x188] sm:$0xff] %v7032
        %7087 = vst [vmem:[#allocation3 + $0x190] sm:$0xff] %v7033
        %7088 = vst [vmem:[#allocation3 + $0x198] sm:$0xff] %v7034
        %7089 = vst [vmem:[#allocation3 + $0x1a0] sm:$0xff] %v7035
        %7090 = vst [vmem:[#allocation3 + $0x1a8] sm:$0xff] %v7036
        %v7091 = vld [vmem:[#allocation3] sm:$0xff]
        %v7092 = vld [vmem:[#allocation3 + $0x8] sm:$0xff]
        %v7093 = vld [vmem:[#allocation3 + $0x10] sm:$0xff]
        %v7094 = vld [vmem:[#allocation3 + $0x18] sm:$0xff]
        %v7095 = vld [vmem:[#allocation3 + $0x20] sm:$0xff]
        %v7096 = vld [vmem:[#allocation3 + $0x28] sm:$0xff]
        %v7097 = vld [vmem:[#allocation3 + $0x30] sm:$0xff]
        %v7098 = vld [vmem:[#allocation3 + $0x38] sm:$0xff]
        %v7099 = vld [vmem:[#allocation3 + $0x40] sm:$0xff]
        %v7100 = vld [vmem:[#allocation3 + $0x48] sm:$0xff]
        %v7101 = vld [vmem:[#allocation3 + $0x50] sm:$0xff]
        %v7102 = vld [vmem:[#allocation3 + $0x58] sm:$0xff]
        %v7103 = vld [vmem:[#allocation3 + $0x60] sm:$0xff]
        %v7104 = vld [vmem:[#allocation3 + $0x68] sm:$0xff]
        %v7105 = vld [vmem:[#allocation3 + $0x70] sm:$0xff]
        %v7106 = vld [vmem:[#allocation3 + $0x78] sm:$0xff]
        %v7107 = vld [vmem:[#allocation3 + $0x80] sm:$0xff]
        %v7108 = vld [vmem:[#allocation3 + $0x88] sm:$0xff]
        %v7109 = vld [vmem:[#allocation3 + $0x90] sm:$0xff]
        %v7110 = vld [vmem:[#allocation3 + $0x98] sm:$0xff]
        %v7111 = vld [vmem:[#allocation3 + $0xa0] sm:$0xff]
        %v7112 = vld [vmem:[#allocation3 + $0xa8] sm:$0xff]
        %v7113 = vld [vmem:[#allocation3 + $0xb0] sm:$0xff]
        %v7114 = vld [vmem:[#allocation3 + $0xb8] sm:$0xff]
        %v7115 = vld [vmem:[#allocation3 + $0xc0] sm:$0xff]
        %v7116 = vld [vmem:[#allocation3 + $0xc8] sm:$0xff]
        %v7117 = vld [vmem:[#allocation3 + $0xd0] sm:$0xff]
        %v7118 = vld [vmem:[#allocation3 + $0xd8] sm:$0xff]
        %v7119 = vld [vmem:[#allocation3 + $0xe0] sm:$0xff]
        %v7120 = vld [vmem:[#allocation3 + $0xe8] sm:$0xff]
        %v7121 = vld [vmem:[#allocation3 + $0xf0] sm:$0xff]
        %v7122 = vld [vmem:[#allocation3 + $0xf8] sm:$0xff]
        %v7123 = vld [vmem:[#allocation3 + $0x100] sm:$0xff]
        %v7124 = vld [vmem:[#allocation3 + $0x108] sm:$0xff]
        %v7125 = vld [vmem:[#allocation3 + $0x110] sm:$0xff]
        %v7126 = vld [vmem:[#allocation3 + $0x118] sm:$0xff]
        %v7127 = vld [vmem:[#allocation3 + $0x120] sm:$0xff]
        %v7128 = vld [vmem:[#allocation3 + $0x128] sm:$0xff]
        %v7129 = vld [vmem:[#allocation3 + $0x130] sm:$0xff]
        %v7130 = vld [vmem:[#allocation3 + $0x138] sm:$0xff]
        %v7131 = vld [vmem:[#allocation3 + $0x140] sm:$0xff]
        %v7132 = vld [vmem:[#allocation3 + $0x148] sm:$0xff]
        %v7133 = vld [vmem:[#allocation3 + $0x150] sm:$0xff]
        %v7134 = vld [vmem:[#allocation3 + $0x158] sm:$0xff]
        %v7135 = vld [vmem:[#allocation3 + $0x160] sm:$0xff]
        %v7136 = vld [vmem:[#allocation3 + $0x168] sm:$0xff]
        %v7137 = vld [vmem:[#allocation3 + $0x170] sm:$0xff]
        %v7138 = vld [vmem:[#allocation3 + $0x178] sm:$0xff]
        %v7139 = vld [vmem:[#allocation3 + $0x180] sm:$0xff]
        %v7140 = vld [vmem:[#allocation3 + $0x188] sm:$0xff]
        %v7141 = vld [vmem:[#allocation3 + $0x190] sm:$0xff]
        %v7142 = vld [vmem:[#allocation3 + $0x198] sm:$0xff]
        %v7143 = vld [vmem:[#allocation3 + $0x1a0] sm:$0xff]
        %v7144 = vld [vmem:[#allocation3 + $0x1a8] sm:$0xff]
        %vm7145 = vcmp.ge.f32.partialorder %v7091, 0.0
        %vm7146 = vcmp.ge.f32.partialorder %v7092, 0.0
        %vm7147 = vcmp.ge.f32.partialorder %v7093, 0.0
        %vm7148 = vcmp.ge.f32.partialorder %v7094, 0.0
        %vm7149 = vcmp.ge.f32.partialorder %v7095, 0.0
        %vm7150 = vcmp.ge.f32.partialorder %v7096, 0.0
        %vm7151 = vcmp.ge.f32.partialorder %v7097, 0.0
        %vm7152 = vcmp.ge.f32.partialorder %v7098, 0.0
        %vm7153 = vcmp.ge.f32.partialorder %v7099, 0.0
        %vm7154 = vcmp.ge.f32.partialorder %v7100, 0.0
        %vm7155 = vcmp.ge.f32.partialorder %v7101, 0.0
        %vm7156 = vcmp.ge.f32.partialorder %v7102, 0.0
        %vm7157 = vcmp.ge.f32.partialorder %v7103, 0.0
        %vm7158 = vcmp.ge.f32.partialorder %v7104, 0.0
        %vm7159 = vcmp.ge.f32.partialorder %v7105, 0.0
        %vm7160 = vcmp.ge.f32.partialorder %v7106, 0.0
        %vm7161 = vcmp.ge.f32.partialorder %v7107, 0.0
        %vm7162 = vcmp.ge.f32.partialorder %v7108, 0.0
        %vm7163 = vcmp.ge.f32.partialorder %v7109, 0.0
        %vm7164 = vcmp.ge.f32.partialorder %v7110, 0.0
        %vm7165 = vcmp.ge.f32.partialorder %v7111, 0.0
        %vm7166 = vcmp.ge.f32.partialorder %v7112, 0.0
        %vm7167 = vcmp.ge.f32.partialorder %v7113, 0.0
        %vm7168 = vcmp.ge.f32.partialorder %v7114, 0.0
        %vm7169 = vcmp.ge.f32.partialorder %v7115, 0.0
        %vm7170 = vcmp.ge.f32.partialorder %v7116, 0.0
        %vm7171 = vcmp.ge.f32.partialorder %v7117, 0.0
        %vm7172 = vcmp.ge.f32.partialorder %v7118, 0.0
        %vm7173 = vcmp.ge.f32.partialorder %v7119, 0.0
        %vm7174 = vcmp.ge.f32.partialorder %v7120, 0.0
        %vm7175 = vcmp.ge.f32.partialorder %v7121, 0.0
        %vm7176 = vcmp.ge.f32.partialorder %v7122, 0.0
        %vm7177 = vcmp.ge.f32.partialorder %v7123, 0.0
        %vm7178 = vcmp.ge.f32.partialorder %v7124, 0.0
        %vm7179 = vcmp.ge.f32.partialorder %v7125, 0.0
        %vm7180 = vcmp.ge.f32.partialorder %v7126, 0.0
        %vm7181 = vcmp.ge.f32.partialorder %v7127, 0.0
        %vm7182 = vcmp.ge.f32.partialorder %v7128, 0.0
        %vm7183 = vcmp.ge.f32.partialorder %v7129, 0.0
        %vm7184 = vcmp.ge.f32.partialorder %v7130, 0.0
        %vm7185 = vcmp.ge.f32.partialorder %v7131, 0.0
        %vm7186 = vcmp.ge.f32.partialorder %v7132, 0.0
        %vm7187 = vcmp.ge.f32.partialorder %v7133, 0.0
        %vm7188 = vcmp.ge.f32.partialorder %v7134, 0.0
        %vm7189 = vcmp.ge.f32.partialorder %v7135, 0.0
        %vm7190 = vcmp.ge.f32.partialorder %v7136, 0.0
        %vm7191 = vcmp.ge.f32.partialorder %v7137, 0.0
        %vm7192 = vcmp.ge.f32.partialorder %v7138, 0.0
        %vm7193 = vcmp.ge.f32.partialorder %v7139, 0.0
        %vm7194 = vcmp.ge.f32.partialorder %v7140, 0.0
        %vm7195 = vcmp.ge.f32.partialorder %v7141, 0.0
        %vm7196 = vcmp.ge.f32.partialorder %v7142, 0.0
        %vm7197 = vcmp.ge.f32.partialorder %v7143, 0.0
        %vm7198 = vcmp.ge.f32.partialorder %v7144, 0.0
        %v7199 = vmul.f32 %v7091, 0.01
        %v7200 = vmul.f32 %v7092, 0.01
        %v7201 = vmul.f32 %v7093, 0.01
        %v7202 = vmul.f32 %v7094, 0.01
        %v7203 = vmul.f32 %v7095, 0.01
        %v7204 = vmul.f32 %v7096, 0.01
        %v7205 = vmul.f32 %v7097, 0.01
        %v7206 = vmul.f32 %v7098, 0.01
        %v7207 = vmul.f32 %v7099, 0.01
        %v7208 = vmul.f32 %v7100, 0.01
        %v7209 = vmul.f32 %v7101, 0.01
        %v7210 = vmul.f32 %v7102, 0.01
        %v7211 = vmul.f32 %v7103, 0.01
        %v7212 = vmul.f32 %v7104, 0.01
        %v7213 = vmul.f32 %v7105, 0.01
        %v7214 = vmul.f32 %v7106, 0.01
        %v7215 = vmul.f32 %v7107, 0.01
        %v7216 = vmul.f32 %v7108, 0.01
        %v7217 = vmul.f32 %v7109, 0.01
        %v7218 = vmul.f32 %v7110, 0.01
        %v7219 = vmul.f32 %v7111, 0.01
        %v7220 = vmul.f32 %v7112, 0.01
        %v7221 = vmul.f32 %v7113, 0.01
        %v7222 = vmul.f32 %v7114, 0.01
        %v7223 = vmul.f32 %v7115, 0.01
        %v7224 = vmul.f32 %v7116, 0.01
        %v7225 = vmul.f32 %v7117, 0.01
        %v7226 = vmul.f32 %v7118, 0.01
        %v7227 = vmul.f32 %v7119, 0.01
        %v7228 = vmul.f32 %v7120, 0.01
        %v7229 = vmul.f32 %v7121, 0.01
        %v7230 = vmul.f32 %v7122, 0.01
        %v7231 = vmul.f32 %v7123, 0.01
        %v7232 = vmul.f32 %v7124, 0.01
        %v7233 = vmul.f32 %v7125, 0.01
        %v7234 = vmul.f32 %v7126, 0.01
        %v7235 = vmul.f32 %v7127, 0.01
        %v7236 = vmul.f32 %v7128, 0.01
        %v7237 = vmul.f32 %v7129, 0.01
        %v7238 = vmul.f32 %v7130, 0.01
        %v7239 = vmul.f32 %v7131, 0.01
        %v7240 = vmul.f32 %v7132, 0.01
        %v7241 = vmul.f32 %v7133, 0.01
        %v7242 = vmul.f32 %v7134, 0.01
        %v7243 = vmul.f32 %v7135, 0.01
        %v7244 = vmul.f32 %v7136, 0.01
        %v7245 = vmul.f32 %v7137, 0.01
        %v7246 = vmul.f32 %v7138, 0.01
        %v7247 = vmul.f32 %v7139, 0.01
        %v7248 = vmul.f32 %v7140, 0.01
        %v7249 = vmul.f32 %v7141, 0.01
        %v7250 = vmul.f32 %v7142, 0.01
        %v7251 = vmul.f32 %v7143, 0.01
        %v7252 = vmul.f32 %v7144, 0.01
        %v7253 = vsel %vm7145, %v7091, %v7199
        %v7254 = vsel %vm7146, %v7092, %v7200
        %v7255 = vsel %vm7147, %v7093, %v7201
        %v7256 = vsel %vm7148, %v7094, %v7202
        %v7257 = vsel %vm7149, %v7095, %v7203
        %v7258 = vsel %vm7150, %v7096, %v7204
        %v7259 = vsel %vm7151, %v7097, %v7205
        %v7260 = vsel %vm7152, %v7098, %v7206
        %v7261 = vsel %vm7153, %v7099, %v7207
        %v7262 = vsel %vm7154, %v7100, %v7208
        %v7263 = vsel %vm7155, %v7101, %v7209
        %v7264 = vsel %vm7156, %v7102, %v7210
        %v7265 = vsel %vm7157, %v7103, %v7211
        %v7266 = vsel %vm7158, %v7104, %v7212
        %v7267 = vsel %vm7159, %v7105, %v7213
        %v7268 = vsel %vm7160, %v7106, %v7214
        %v7269 = vsel %vm7161, %v7107, %v7215
        %v7270 = vsel %vm7162, %v7108, %v7216
        %v7271 = vsel %vm7163, %v7109, %v7217
        %v7272 = vsel %vm7164, %v7110, %v7218
        %v7273 = vsel %vm7165, %v7111, %v7219
        %v7274 = vsel %vm7166, %v7112, %v7220
        %v7275 = vsel %vm7167, %v7113, %v7221
        %v7276 = vsel %vm7168, %v7114, %v7222
        %v7277 = vsel %vm7169, %v7115, %v7223
        %v7278 = vsel %vm7170, %v7116, %v7224
        %v7279 = vsel %vm7171, %v7117, %v7225
        %v7280 = vsel %vm7172, %v7118, %v7226
        %v7281 = vsel %vm7173, %v7119, %v7227
        %v7282 = vsel %vm7174, %v7120, %v7228
        %v7283 = vsel %vm7175, %v7121, %v7229
        %v7284 = vsel %vm7176, %v7122, %v7230
        %v7285 = vsel %vm7177, %v7123, %v7231
        %v7286 = vsel %vm7178, %v7124, %v7232
        %v7287 = vsel %vm7179, %v7125, %v7233
        %v7288 = vsel %vm7180, %v7126, %v7234
        %v7289 = vsel %vm7181, %v7127, %v7235
        %v7290 = vsel %vm7182, %v7128, %v7236
        %v7291 = vsel %vm7183, %v7129, %v7237
        %v7292 = vsel %vm7184, %v7130, %v7238
        %v7293 = vsel %vm7185, %v7131, %v7239
        %v7294 = vsel %vm7186, %v7132, %v7240
        %v7295 = vsel %vm7187, %v7133, %v7241
        %v7296 = vsel %vm7188, %v7134, %v7242
        %v7297 = vsel %vm7189, %v7135, %v7243
        %v7298 = vsel %vm7190, %v7136, %v7244
        %v7299 = vsel %vm7191, %v7137, %v7245
        %v7300 = vsel %vm7192, %v7138, %v7246
        %v7301 = vsel %vm7193, %v7139, %v7247
        %v7302 = vsel %vm7194, %v7140, %v7248
        %v7303 = vsel %vm7195, %v7141, %v7249
        %v7304 = vsel %vm7196, %v7142, %v7250
        %v7305 = vsel %vm7197, %v7143, %v7251
        %v7306 = vsel %vm7198, %v7144, %v7252
        %s7307 = smul.u32 %s27, 16
        %s7308 = ssub.s32 %s7307, 1
        %v7309 = vstv %s7308
        %v7310 = vadd.s32 %v7309, 1
        %v7311 = vadd.s32 %v7309, 2
        %v7312 = vadd.s32 %v7309, 3
        %v7313 = vadd.s32 %v7309, 4
        %v7314 = vadd.s32 %v7309, 5
        %v7315 = vadd.s32 %v7309, 6
        %v7316 = vadd.s32 %v7309, 7
        %v7317 = vadd.s32 %v7309, 8
        %v7318 = vadd.s32 %v7309, 9
        %v7319 = vadd.s32 %v7309, 10
        %v7320 = vadd.s32 %v7309, 11
        %v7321 = vadd.s32 %v7309, 12
        %v7322 = vadd.s32 %v7309, 13
        %v7323 = vadd.s32 %v7309, 14
        %v7324 = vadd.s32 %v7309, 15
        %v7325 = vadd.s32 %v7309, 16
        %v7326 = vadd.s32 %v7309, 17
        %v7327 = vlaneseq
        %v7328 = vshrl.u32 %v7327, 7
        %v7329 = vadd.s32 %v7328, 8
        %v7330 = vadd.s32 %v7328, 16
        %v7331 = vsub.s32 %v7328, 1
        %v7332 = vsub.s32 %v7329, 1
        %v7333 = vsub.s32 %v7330, 1
        %vm7334 = vcmp.ge.s32.totalorder %v7309, 0
        %vm7335 = vcmp.ge.s32.totalorder %v7310, 0
        %vm7336 = vcmp.ge.s32.totalorder %v7311, 0
        %vm7337 = vcmp.ge.s32.totalorder %v7312, 0
        %vm7338 = vcmp.ge.s32.totalorder %v7313, 0
        %vm7339 = vcmp.ge.s32.totalorder %v7314, 0
        %vm7340 = vcmp.ge.s32.totalorder %v7315, 0
        %vm7341 = vcmp.ge.s32.totalorder %v7316, 0
        %vm7342 = vcmp.ge.s32.totalorder %v7317, 0
        %vm7343 = vcmp.ge.s32.totalorder %v7318, 0
        %vm7344 = vcmp.ge.s32.totalorder %v7319, 0
        %vm7345 = vcmp.ge.s32.totalorder %v7320, 0
        %vm7346 = vcmp.ge.s32.totalorder %v7321, 0
        %vm7347 = vcmp.ge.s32.totalorder %v7322, 0
        %vm7348 = vcmp.ge.s32.totalorder %v7323, 0
        %vm7349 = vcmp.ge.s32.totalorder %v7324, 0
        %vm7350 = vcmp.ge.s32.totalorder %v7325, 0
        %vm7351 = vcmp.ge.s32.totalorder %v7326, 0
        %vm7352 = vcmp.lt.s32.totalorder %v7309, 16
        %vm7353 = vcmp.lt.s32.totalorder %v7310, 16
        %vm7354 = vcmp.lt.s32.totalorder %v7311, 16
        %vm7355 = vcmp.lt.s32.totalorder %v7312, 16
        %vm7356 = vcmp.lt.s32.totalorder %v7313, 16
        %vm7357 = vcmp.lt.s32.totalorder %v7314, 16
        %vm7358 = vcmp.lt.s32.totalorder %v7315, 16
        %vm7359 = vcmp.lt.s32.totalorder %v7316, 16
        %vm7360 = vcmp.lt.s32.totalorder %v7317, 16
        %vm7361 = vcmp.lt.s32.totalorder %v7318, 16
        %vm7362 = vcmp.lt.s32.totalorder %v7319, 16
        %vm7363 = vcmp.lt.s32.totalorder %v7320, 16
        %vm7364 = vcmp.lt.s32.totalorder %v7321, 16
        %vm7365 = vcmp.lt.s32.totalorder %v7322, 16
        %vm7366 = vcmp.lt.s32.totalorder %v7323, 16
        %vm7367 = vcmp.lt.s32.totalorder %v7324, 16
        %vm7368 = vcmp.lt.s32.totalorder %v7325, 16
        %vm7369 = vcmp.lt.s32.totalorder %v7326, 16
        %vm7370 = vmand %vm7334, %vm7352
        %vm7371 = vmand %vm7335, %vm7353
        %vm7372 = vmand %vm7336, %vm7354
        %vm7373 = vmand %vm7337, %vm7355
        %vm7374 = vmand %vm7338, %vm7356
        %vm7375 = vmand %vm7339, %vm7357
        %vm7376 = vmand %vm7340, %vm7358
        %vm7377 = vmand %vm7341, %vm7359
        %vm7378 = vmand %vm7342, %vm7360
        %vm7379 = vmand %vm7343, %vm7361
        %vm7380 = vmand %vm7344, %vm7362
        %vm7381 = vmand %vm7345, %vm7363
        %vm7382 = vmand %vm7346, %vm7364
        %vm7383 = vmand %vm7347, %vm7365
        %vm7384 = vmand %vm7348, %vm7366
        %vm7385 = vmand %vm7349, %vm7367
        %vm7386 = vmand %vm7350, %vm7368
        %vm7387 = vmand %vm7351, %vm7369
        %vm7388 = vcmp.ge.s32.totalorder %v7331, 0
        %vm7389 = vcmp.ge.s32.totalorder %v7332, 0
        %vm7390 = vcmp.ge.s32.totalorder %v7333, 0
        %vm7391 = vmand %vm7370, %vm7388
        %vm7392 = vmand %vm7370, %vm7389
        %vm7393 = vmand %vm7370, %vm7390
        %vm7394 = vmand %vm7371, %vm7388
        %vm7395 = vmand %vm7371, %vm7389
        %vm7396 = vmand %vm7371, %vm7390
        %vm7397 = vmand %vm7372, %vm7388
        %vm7398 = vmand %vm7372, %vm7389
        %vm7399 = vmand %vm7372, %vm7390
        %vm7400 = vmand %vm7373, %vm7388
        %vm7401 = vmand %vm7373, %vm7389
        %vm7402 = vmand %vm7373, %vm7390
        %vm7403 = vmand %vm7374, %vm7388
        %vm7404 = vmand %vm7374, %vm7389
        %vm7405 = vmand %vm7374, %vm7390
        %vm7406 = vmand %vm7375, %vm7388
        %vm7407 = vmand %vm7375, %vm7389
        %vm7408 = vmand %vm7375, %vm7390
        %vm7409 = vmand %vm7376, %vm7388
        %vm7410 = vmand %vm7376, %vm7389
        %vm7411 = vmand %vm7376, %vm7390
        %vm7412 = vmand %vm7377, %vm7388
        %vm7413 = vmand %vm7377, %vm7389
        %vm7414 = vmand %vm7377, %vm7390
        %vm7415 = vmand %vm7378, %vm7388
        %vm7416 = vmand %vm7378, %vm7389
        %vm7417 = vmand %vm7378, %vm7390
        %vm7418 = vmand %vm7379, %vm7388
        %vm7419 = vmand %vm7379, %vm7389
        %vm7420 = vmand %vm7379, %vm7390
        %vm7421 = vmand %vm7380, %vm7388
        %vm7422 = vmand %vm7380, %vm7389
        %vm7423 = vmand %vm7380, %vm7390
        %vm7424 = vmand %vm7381, %vm7388
        %vm7425 = vmand %vm7381, %vm7389
        %vm7426 = vmand %vm7381, %vm7390
        %vm7427 = vmand %vm7382, %vm7388
        %vm7428 = vmand %vm7382, %vm7389
        %vm7429 = vmand %vm7382, %vm7390
        %vm7430 = vmand %vm7383, %vm7388
        %vm7431 = vmand %vm7383, %vm7389
        %vm7432 = vmand %vm7383, %vm7390
        %vm7433 = vmand %vm7384, %vm7388
        %vm7434 = vmand %vm7384, %vm7389
        %vm7435 = vmand %vm7384, %vm7390
        %vm7436 = vmand %vm7385, %vm7388
        %vm7437 = vmand %vm7385, %vm7389
        %vm7438 = vmand %vm7385, %vm7390
        %vm7439 = vmand %vm7386, %vm7388
        %vm7440 = vmand %vm7386, %vm7389
        %vm7441 = vmand %vm7386, %vm7390
        %vm7442 = vmand %vm7387, %vm7388
        %vm7443 = vmand %vm7387, %vm7389
        %vm7444 = vmand %vm7387, %vm7390
        %vm7445 = vcmp.lt.s32.totalorder %v7331, 16
        %vm7446 = vcmp.lt.s32.totalorder %v7332, 16
        %vm7447 = vcmp.lt.s32.totalorder %v7333, 16
        %vm7448 = vmand %vm7391, %vm7445
        %vm7449 = vmand %vm7392, %vm7446
        %vm7450 = vmand %vm7393, %vm7447
        %vm7451 = vmand %vm7394, %vm7445
        %vm7452 = vmand %vm7395, %vm7446
        %vm7453 = vmand %vm7396, %vm7447
        %vm7454 = vmand %vm7397, %vm7445
        %vm7455 = vmand %vm7398, %vm7446
        %vm7456 = vmand %vm7399, %vm7447
        %vm7457 = vmand %vm7400, %vm7445
        %vm7458 = vmand %vm7401, %vm7446
        %vm7459 = vmand %vm7402, %vm7447
        %vm7460 = vmand %vm7403, %vm7445
        %vm7461 = vmand %vm7404, %vm7446
        %vm7462 = vmand %vm7405, %vm7447
        %vm7463 = vmand %vm7406, %vm7445
        %vm7464 = vmand %vm7407, %vm7446
        %vm7465 = vmand %vm7408, %vm7447
        %vm7466 = vmand %vm7409, %vm7445
        %vm7467 = vmand %vm7410, %vm7446
        %vm7468 = vmand %vm7411, %vm7447
        %vm7469 = vmand %vm7412, %vm7445
        %vm7470 = vmand %vm7413, %vm7446
        %vm7471 = vmand %vm7414, %vm7447
        %vm7472 = vmand %vm7415, %vm7445
        %vm7473 = vmand %vm7416, %vm7446
        %vm7474 = vmand %vm7417, %vm7447
        %vm7475 = vmand %vm7418, %vm7445
        %vm7476 = vmand %vm7419, %vm7446
        %vm7477 = vmand %vm7420, %vm7447
        %vm7478 = vmand %vm7421, %vm7445
        %vm7479 = vmand %vm7422, %vm7446
        %vm7480 = vmand %vm7423, %vm7447
        %vm7481 = vmand %vm7424, %vm7445
        %vm7482 = vmand %vm7425, %vm7446
        %vm7483 = vmand %vm7426, %vm7447
        %vm7484 = vmand %vm7427, %vm7445
        %vm7485 = vmand %vm7428, %vm7446
        %vm7486 = vmand %vm7429, %vm7447
        %vm7487 = vmand %vm7430, %vm7445
        %vm7488 = vmand %vm7431, %vm7446
        %vm7489 = vmand %vm7432, %vm7447
        %vm7490 = vmand %vm7433, %vm7445
        %vm7491 = vmand %vm7434, %vm7446
        %vm7492 = vmand %vm7435, %vm7447
        %vm7493 = vmand %vm7436, %vm7445
        %vm7494 = vmand %vm7437, %vm7446
        %vm7495 = vmand %vm7438, %vm7447
        %vm7496 = vmand %vm7439, %vm7445
        %vm7497 = vmand %vm7440, %vm7446
        %vm7498 = vmand %vm7441, %vm7447
        %vm7499 = vmand %vm7442, %vm7445
        %vm7500 = vmand %vm7443, %vm7446
        %vm7501 = vmand %vm7444, %vm7447
        %v7502 = vsel %vm7448, 1, 0
        %v7503 = vsel %vm7449, 1, 0
        %v7504 = vsel %vm7450, 1, 0
        %v7505 = vsel %vm7451, 1, 0
        %v7506 = vsel %vm7452, 1, 0
        %v7507 = vsel %vm7453, 1, 0
        %v7508 = vsel %vm7454, 1, 0
        %v7509 = vsel %vm7455, 1, 0
        %v7510 = vsel %vm7456, 1, 0
        %v7511 = vsel %vm7457, 1, 0
        %v7512 = vsel %vm7458, 1, 0
        %v7513 = vsel %vm7459, 1, 0
        %v7514 = vsel %vm7460, 1, 0
        %v7515 = vsel %vm7461, 1, 0
        %v7516 = vsel %vm7462, 1, 0
        %v7517 = vsel %vm7463, 1, 0
        %v7518 = vsel %vm7464, 1, 0
        %v7519 = vsel %vm7465, 1, 0
        %v7520 = vsel %vm7466, 1, 0
        %v7521 = vsel %vm7467, 1, 0
        %v7522 = vsel %vm7468, 1, 0
        %v7523 = vsel %vm7469, 1, 0
        %v7524 = vsel %vm7470, 1, 0
        %v7525 = vsel %vm7471, 1, 0
        %v7526 = vsel %vm7472, 1, 0
        %v7527 = vsel %vm7473, 1, 0
        %v7528 = vsel %vm7474, 1, 0
        %v7529 = vsel %vm7475, 1, 0
        %v7530 = vsel %vm7476, 1, 0
        %v7531 = vsel %vm7477, 1, 0
        %v7532 = vsel %vm7478, 1, 0
        %v7533 = vsel %vm7479, 1, 0
        %v7534 = vsel %vm7480, 1, 0
        %v7535 = vsel %vm7481, 1, 0
        %v7536 = vsel %vm7482, 1, 0
        %v7537 = vsel %vm7483, 1, 0
        %v7538 = vsel %vm7484, 1, 0
        %v7539 = vsel %vm7485, 1, 0
        %v7540 = vsel %vm7486, 1, 0
        %v7541 = vsel %vm7487, 1, 0
        %v7542 = vsel %vm7488, 1, 0
        %v7543 = vsel %vm7489, 1, 0
        %v7544 = vsel %vm7490, 1, 0
        %v7545 = vsel %vm7491, 1, 0
        %v7546 = vsel %vm7492, 1, 0
        %v7547 = vsel %vm7493, 1, 0
        %v7548 = vsel %vm7494, 1, 0
        %v7549 = vsel %vm7495, 1, 0
        %v7550 = vsel %vm7496, 1, 0
        %v7551 = vsel %vm7497, 1, 0
        %v7552 = vsel %vm7498, 1, 0
        %v7553 = vsel %vm7499, 1, 0
        %v7554 = vsel %vm7500, 1, 0
        %v7555 = vsel %vm7501, 1, 0
        %vm7556 = vcmp.eq.s32.totalorder %v7502, 1
        %vm7557 = vcmp.eq.s32.totalorder %v7503, 1
        %vm7558 = vcmp.eq.s32.totalorder %v7504, 1
        %vm7559 = vcmp.eq.s32.totalorder %v7505, 1
        %vm7560 = vcmp.eq.s32.totalorder %v7506, 1
        %vm7561 = vcmp.eq.s32.totalorder %v7507, 1
        %vm7562 = vcmp.eq.s32.totalorder %v7508, 1
        %vm7563 = vcmp.eq.s32.totalorder %v7509, 1
        %vm7564 = vcmp.eq.s32.totalorder %v7510, 1
        %vm7565 = vcmp.eq.s32.totalorder %v7511, 1
        %vm7566 = vcmp.eq.s32.totalorder %v7512, 1
        %vm7567 = vcmp.eq.s32.totalorder %v7513, 1
        %vm7568 = vcmp.eq.s32.totalorder %v7514, 1
        %vm7569 = vcmp.eq.s32.totalorder %v7515, 1
        %vm7570 = vcmp.eq.s32.totalorder %v7516, 1
        %vm7571 = vcmp.eq.s32.totalorder %v7517, 1
        %vm7572 = vcmp.eq.s32.totalorder %v7518, 1
        %vm7573 = vcmp.eq.s32.totalorder %v7519, 1
        %vm7574 = vcmp.eq.s32.totalorder %v7520, 1
        %vm7575 = vcmp.eq.s32.totalorder %v7521, 1
        %vm7576 = vcmp.eq.s32.totalorder %v7522, 1
        %vm7577 = vcmp.eq.s32.totalorder %v7523, 1
        %vm7578 = vcmp.eq.s32.totalorder %v7524, 1
        %vm7579 = vcmp.eq.s32.totalorder %v7525, 1
        %vm7580 = vcmp.eq.s32.totalorder %v7526, 1
        %vm7581 = vcmp.eq.s32.totalorder %v7527, 1
        %vm7582 = vcmp.eq.s32.totalorder %v7528, 1
        %vm7583 = vcmp.eq.s32.totalorder %v7529, 1
        %vm7584 = vcmp.eq.s32.totalorder %v7530, 1
        %vm7585 = vcmp.eq.s32.totalorder %v7531, 1
        %vm7586 = vcmp.eq.s32.totalorder %v7532, 1
        %vm7587 = vcmp.eq.s32.totalorder %v7533, 1
        %vm7588 = vcmp.eq.s32.totalorder %v7534, 1
        %vm7589 = vcmp.eq.s32.totalorder %v7535, 1
        %vm7590 = vcmp.eq.s32.totalorder %v7536, 1
        %vm7591 = vcmp.eq.s32.totalorder %v7537, 1
        %vm7592 = vcmp.eq.s32.totalorder %v7538, 1
        %vm7593 = vcmp.eq.s32.totalorder %v7539, 1
        %vm7594 = vcmp.eq.s32.totalorder %v7540, 1
        %vm7595 = vcmp.eq.s32.totalorder %v7541, 1
        %vm7596 = vcmp.eq.s32.totalorder %v7542, 1
        %vm7597 = vcmp.eq.s32.totalorder %v7543, 1
        %vm7598 = vcmp.eq.s32.totalorder %v7544, 1
        %vm7599 = vcmp.eq.s32.totalorder %v7545, 1
        %vm7600 = vcmp.eq.s32.totalorder %v7546, 1
        %vm7601 = vcmp.eq.s32.totalorder %v7547, 1
        %vm7602 = vcmp.eq.s32.totalorder %v7548, 1
        %vm7603 = vcmp.eq.s32.totalorder %v7549, 1
        %vm7604 = vcmp.eq.s32.totalorder %v7550, 1
        %vm7605 = vcmp.eq.s32.totalorder %v7551, 1
        %vm7606 = vcmp.eq.s32.totalorder %v7552, 1
        %vm7607 = vcmp.eq.s32.totalorder %v7553, 1
        %vm7608 = vcmp.eq.s32.totalorder %v7554, 1
        %vm7609 = vcmp.eq.s32.totalorder %v7555, 1
        %v7610 = vsel %vm7556, %v7253, 0.0
        %v7611 = vsel %vm7557, %v7254, 0.0
        %v7612 = vsel %vm7558, %v7255, 0.0
        %v7613 = vsel %vm7559, %v7256, 0.0
        %v7614 = vsel %vm7560, %v7257, 0.0
        %v7615 = vsel %vm7561, %v7258, 0.0
        %v7616 = vsel %vm7562, %v7259, 0.0
        %v7617 = vsel %vm7563, %v7260, 0.0
        %v7618 = vsel %vm7564, %v7261, 0.0
        %v7619 = vsel %vm7565, %v7262, 0.0
        %v7620 = vsel %vm7566, %v7263, 0.0
        %v7621 = vsel %vm7567, %v7264, 0.0
        %v7622 = vsel %vm7568, %v7265, 0.0
        %v7623 = vsel %vm7569, %v7266, 0.0
        %v7624 = vsel %vm7570, %v7267, 0.0
        %v7625 = vsel %vm7571, %v7268, 0.0
        %v7626 = vsel %vm7572, %v7269, 0.0
        %v7627 = vsel %vm7573, %v7270, 0.0
        %v7628 = vsel %vm7574, %v7271, 0.0
        %v7629 = vsel %vm7575, %v7272, 0.0
        %v7630 = vsel %vm7576, %v7273, 0.0
        %v7631 = vsel %vm7577, %v7274, 0.0
        %v7632 = vsel %vm7578, %v7275, 0.0
        %v7633 = vsel %vm7579, %v7276, 0.0
        %v7634 = vsel %vm7580, %v7277, 0.0
        %v7635 = vsel %vm7581, %v7278, 0.0
        %v7636 = vsel %vm7582, %v7279, 0.0
        %v7637 = vsel %vm7583, %v7280, 0.0
        %v7638 = vsel %vm7584, %v7281, 0.0
        %v7639 = vsel %vm7585, %v7282, 0.0
        %v7640 = vsel %vm7586, %v7283, 0.0
        %v7641 = vsel %vm7587, %v7284, 0.0
        %v7642 = vsel %vm7588, %v7285, 0.0
        %v7643 = vsel %vm7589, %v7286, 0.0
        %v7644 = vsel %vm7590, %v7287, 0.0
        %v7645 = vsel %vm7591, %v7288, 0.0
        %v7646 = vsel %vm7592, %v7289, 0.0
        %v7647 = vsel %vm7593, %v7290, 0.0
        %v7648 = vsel %vm7594, %v7291, 0.0
        %v7649 = vsel %vm7595, %v7292, 0.0
        %v7650 = vsel %vm7596, %v7293, 0.0
        %v7651 = vsel %vm7597, %v7294, 0.0
        %v7652 = vsel %vm7598, %v7295, 0.0
        %v7653 = vsel %vm7599, %v7296, 0.0
        %v7654 = vsel %vm7600, %v7297, 0.0
        %v7655 = vsel %vm7601, %v7298, 0.0
        %v7656 = vsel %vm7602, %v7299, 0.0
        %v7657 = vsel %vm7603, %v7300, 0.0
        %v7658 = vsel %vm7604, %v7301, 0.0
        %v7659 = vsel %vm7605, %v7302, 0.0
        %v7660 = vsel %vm7606, %v7303, 0.0
        %v7661 = vsel %vm7607, %v7304, 0.0
        %v7662 = vsel %vm7608, %v7305, 0.0
        %v7663 = vsel %vm7609, %v7306, 0.0
        %v7664 = vpack.c.bf16 %v7611, %v7610
        %v7665 = vpack.c.bf16 %v7612, %v7612
        %v7666 = vpack.c.bf16 %v7614, %v7613
        %v7667 = vpack.c.bf16 %v7615, %v7615
        %v7668 = vpack.c.bf16 %v7617, %v7616
        %v7669 = vpack.c.bf16 %v7618, %v7618
        %v7670 = vpack.c.bf16 %v7620, %v7619
        %v7671 = vpack.c.bf16 %v7621, %v7621
        %v7672 = vpack.c.bf16 %v7623, %v7622
        %v7673 = vpack.c.bf16 %v7624, %v7624
        %v7674 = vpack.c.bf16 %v7626, %v7625
        %v7675 = vpack.c.bf16 %v7627, %v7627
        %v7676 = vpack.c.bf16 %v7629, %v7628
        %v7677 = vpack.c.bf16 %v7630, %v7630
        %v7678 = vpack.c.bf16 %v7632, %v7631
        %v7679 = vpack.c.bf16 %v7633, %v7633
        %v7680 = vpack.c.bf16 %v7635, %v7634
        %v7681 = vpack.c.bf16 %v7636, %v7636
        %v7682 = vpack.c.bf16 %v7638, %v7637
        %v7683 = vpack.c.bf16 %v7639, %v7639
        %v7684 = vpack.c.bf16 %v7641, %v7640
        %v7685 = vpack.c.bf16 %v7642, %v7642
        %v7686 = vpack.c.bf16 %v7644, %v7643
        %v7687 = vpack.c.bf16 %v7645, %v7645
        %v7688 = vpack.c.bf16 %v7647, %v7646
        %v7689 = vpack.c.bf16 %v7648, %v7648
        %v7690 = vpack.c.bf16 %v7650, %v7649
        %v7691 = vpack.c.bf16 %v7651, %v7651
        %v7692 = vpack.c.bf16 %v7653, %v7652
        %v7693 = vpack.c.bf16 %v7654, %v7654
        %v7694 = vpack.c.bf16 %v7656, %v7655
        %v7695 = vpack.c.bf16 %v7657, %v7657
        %v7696 = vpack.c.bf16 %v7659, %v7658
        %v7697 = vpack.c.bf16 %v7660, %v7660
        %v7698 = vpack.c.bf16 %v7662, %v7661
        %v7699 = vpack.c.bf16 %v7663, %v7663
        %v7700 = vld [vmem:[%s5] sm:$0x1]
        %v7702 = vlaneseq
        %v7703 = vshrl.u32 %v7702, 7
        %v7704 = vsub.s32 0, %v7703
        %v7705 = vrot.slane %v7700, %v7704
        %7707 = vst [vmem:[#allocation3] sm:$0xff] %v7705
        %7708 = vst [vmem:[#allocation3 + $0x8] sm:$0xff] %v7705
        %7709 = vst [vmem:[#allocation3 + $0x10] sm:$0xff] %v7705
        %7710 = vst [vmem:[#allocation3 + $0x18] sm:$0xff] %v7705
        %7711 = vst [vmem:[#allocation3 + $0x20] sm:$0xff] %v7705
        %7712 = vst [vmem:[#allocation3 + $0x28] sm:$0xff] %v7705
        %7713 = vst [vmem:[#allocation3 + $0x30] sm:$0xff] %v7705
        %7714 = vst [vmem:[#allocation3 + $0x38] sm:$0xff] %v7705
        %7715 = vst [vmem:[#allocation3 + $0x40] sm:$0xff] %v7705
        %7716 = vst [vmem:[#allocation3 + $0x48] sm:$0xff] %v7705
        %7717 = vst [vmem:[#allocation3 + $0x50] sm:$0xff] %v7705
        %7718 = vst [vmem:[#allocation3 + $0x58] sm:$0xff] %v7705
        %7719 = vst [vmem:[#allocation3 + $0x60] sm:$0xff] %v7705
        %7720 = vst [vmem:[#allocation3 + $0x68] sm:$0xff] %v7705
        %7721 = vst [vmem:[#allocation3 + $0x70] sm:$0xff] %v7705
        %7722 = vst [vmem:[#allocation3 + $0x78] sm:$0xff] %v7705
        %7723 = vst [vmem:[#allocation3 + $0x80] sm:$0xff] %v7705
        %7724 = vst [vmem:[#allocation3 + $0x88] sm:$0xff] %v7705
        %7725 = vst [vmem:[#allocation3 + $0x90] sm:$0xff] %v7705
        %7726 = vst [vmem:[#allocation3 + $0x98] sm:$0xff] %v7705
        %7727 = vst [vmem:[#allocation3 + $0xa0] sm:$0xff] %v7705
        %7728 = vst [vmem:[#allocation3 + $0xa8] sm:$0xff] %v7705
        %7729 = vst [vmem:[#allocation3 + $0xb0] sm:$0xff] %v7705
        %7730 = vst [vmem:[#allocation3 + $0xb8] sm:$0xff] %v7705
        %7731 = vst [vmem:[#allocation3 + $0xc0] sm:$0xff] %v7705
        %7732 = vst [vmem:[#allocation3 + $0xc8] sm:$0xff] %v7705
        %7733 = vst [vmem:[#allocation3 + $0xd0] sm:$0xff] %v7705
        %7734 = vst [vmem:[#allocation3 + $0xd8] sm:$0xff] %v7705
        %7735 = vst [vmem:[#allocation3 + $0xe0] sm:$0xff] %v7705
        %7736 = vst [vmem:[#allocation3 + $0xe8] sm:$0xff] %v7705
        %7737 = vst [vmem:[#allocation3 + $0xf0] sm:$0xff] %v7705
        %7738 = vst [vmem:[#allocation3 + $0xf8] sm:$0xff] %v7705
        %vm7739 = vsmask.f32 7424
        %v7741 = vshrl.u32 %v7664, 16
        %v7743 = vshll.u32 %v7664, 16
        %v7745 = vrot.slane %v7743, 1
        %v7746 = vor.u32 %v7741, %v7745
        %v7748 = vshll.u32 %v7665, 16
        %v7750 = vrot.slane %v7748, 1
        %v7751 = vsel %vm7739, %v7746, %v7750
        %v7753 = vshrl.u32 %v7666, 16
        %v7755 = vshll.u32 %v7666, 16
        %v7757 = vrot.slane %v7755, 1
        %v7758 = vor.u32 %v7753, %v7757
        %v7760 = vshll.u32 %v7667, 16
        %v7762 = vrot.slane %v7760, 1
        %v7763 = vsel %vm7739, %v7758, %v7762
        %v7765 = vshrl.u32 %v7668, 16
        %v7767 = vshll.u32 %v7668, 16
        %v7769 = vrot.slane %v7767, 1
        %v7770 = vor.u32 %v7765, %v7769
        %v7772 = vshll.u32 %v7669, 16
        %v7774 = vrot.slane %v7772, 1
        %v7775 = vsel %vm7739, %v7770, %v7774
        %v7777 = vshrl.u32 %v7670, 16
        %v7779 = vshll.u32 %v7670, 16
        %v7781 = vrot.slane %v7779, 1
        %v7782 = vor.u32 %v7777, %v7781
        %v7784 = vshll.u32 %v7671, 16
        %v7786 = vrot.slane %v7784, 1
        %v7787 = vsel %vm7739, %v7782, %v7786
        %v7789 = vshrl.u32 %v7672, 16
        %v7791 = vshll.u32 %v7672, 16
        %v7793 = vrot.slane %v7791, 1
        %v7794 = vor.u32 %v7789, %v7793
        %v7796 = vshll.u32 %v7673, 16
        %v7798 = vrot.slane %v7796, 1
        %v7799 = vsel %vm7739, %v7794, %v7798
        %v7801 = vshrl.u32 %v7674, 16
        %v7803 = vshll.u32 %v7674, 16
        %v7805 = vrot.slane %v7803, 1
        %v7806 = vor.u32 %v7801, %v7805
        %v7808 = vshll.u32 %v7675, 16
        %v7810 = vrot.slane %v7808, 1
        %v7811 = vsel %vm7739, %v7806, %v7810
        %v7813 = vshrl.u32 %v7676, 16
        %v7815 = vshll.u32 %v7676, 16
        %v7817 = vrot.slane %v7815, 1
        %v7818 = vor.u32 %v7813, %v7817
        %v7820 = vshll.u32 %v7677, 16
        %v7822 = vrot.slane %v7820, 1
        %v7823 = vsel %vm7739, %v7818, %v7822
        %v7825 = vshrl.u32 %v7678, 16
        %v7827 = vshll.u32 %v7678, 16
        %v7829 = vrot.slane %v7827, 1
        %v7830 = vor.u32 %v7825, %v7829
        %v7832 = vshll.u32 %v7679, 16
        %v7834 = vrot.slane %v7832, 1
        %v7835 = vsel %vm7739, %v7830, %v7834
        %v7837 = vshrl.u32 %v7680, 16
        %v7839 = vshll.u32 %v7680, 16
        %v7841 = vrot.slane %v7839, 1
        %v7842 = vor.u32 %v7837, %v7841
        %v7844 = vshll.u32 %v7681, 16
        %v7846 = vrot.slane %v7844, 1
        %v7847 = vsel %vm7739, %v7842, %v7846
        %v7849 = vshrl.u32 %v7682, 16
        %v7851 = vshll.u32 %v7682, 16
        %v7853 = vrot.slane %v7851, 1
        %v7854 = vor.u32 %v7849, %v7853
        %v7856 = vshll.u32 %v7683, 16
        %v7858 = vrot.slane %v7856, 1
        %v7859 = vsel %vm7739, %v7854, %v7858
        %v7861 = vshrl.u32 %v7684, 16
        %v7863 = vshll.u32 %v7684, 16
        %v7865 = vrot.slane %v7863, 1
        %v7866 = vor.u32 %v7861, %v7865
        %v7868 = vshll.u32 %v7685, 16
        %v7870 = vrot.slane %v7868, 1
        %v7871 = vsel %vm7739, %v7866, %v7870
        %v7873 = vshrl.u32 %v7686, 16
        %v7875 = vshll.u32 %v7686, 16
        %v7877 = vrot.slane %v7875, 1
        %v7878 = vor.u32 %v7873, %v7877
        %v7880 = vshll.u32 %v7687, 16
        %v7882 = vrot.slane %v7880, 1
        %v7883 = vsel %vm7739, %v7878, %v7882
        %v7885 = vshrl.u32 %v7688, 16
        %v7887 = vshll.u32 %v7688, 16
        %v7889 = vrot.slane %v7887, 1
        %v7890 = vor.u32 %v7885, %v7889
        %v7892 = vshll.u32 %v7689, 16
        %v7894 = vrot.slane %v7892, 1
        %v7895 = vsel %vm7739, %v7890, %v7894
        %v7897 = vshrl.u32 %v7690, 16
        %v7899 = vshll.u32 %v7690, 16
        %v7901 = vrot.slane %v7899, 1
        %v7902 = vor.u32 %v7897, %v7901
        %v7904 = vshll.u32 %v7691, 16
        %v7906 = vrot.slane %v7904, 1
        %v7907 = vsel %vm7739, %v7902, %v7906
        %v7909 = vshrl.u32 %v7692, 16
        %v7911 = vshll.u32 %v7692, 16
        %v7913 = vrot.slane %v7911, 1
        %v7914 = vor.u32 %v7909, %v7913
        %v7916 = vshll.u32 %v7693, 16
        %v7918 = vrot.slane %v7916, 1
        %v7919 = vsel %vm7739, %v7914, %v7918
        %v7921 = vshrl.u32 %v7694, 16
        %v7923 = vshll.u32 %v7694, 16
        %v7925 = vrot.slane %v7923, 1
        %v7926 = vor.u32 %v7921, %v7925
        %v7928 = vshll.u32 %v7695, 16
        %v7930 = vrot.slane %v7928, 1
        %v7931 = vsel %vm7739, %v7926, %v7930
        %vm7980 = vcmask 1046528
        %v7981 = vrot.slane %v7664, 1
        %v7982 = vrot.slane %v7665, 1
        %v7983 = vsel %vm7980, %v7981, %v7982
        %v7984 = vrot.slane %v7666, 1
        %v7985 = vrot.slane %v7667, 1
        %v7986 = vsel %vm7980, %v7984, %v7985
        %v7987 = vrot.slane %v7668, 1
        %v7988 = vrot.slane %v7669, 1
        %v7989 = vsel %vm7980, %v7987, %v7988
        %v7990 = vrot.slane %v7670, 1
        %v7991 = vrot.slane %v7671, 1
        %v7992 = vsel %vm7980, %v7990, %v7991
        %v7993 = vrot.slane %v7672, 1
        %v7994 = vrot.slane %v7673, 1
        %v7995 = vsel %vm7980, %v7993, %v7994
        %v7996 = vrot.slane %v7674, 1
        %v7997 = vrot.slane %v7675, 1
        %v7998 = vsel %vm7980, %v7996, %v7997
        %v7999 = vrot.slane %v7676, 1
        %v8000 = vrot.slane %v7677, 1
        %v8001 = vsel %vm7980, %v7999, %v8000
        %v8002 = vrot.slane %v7678, 1
        %v8003 = vrot.slane %v7679, 1
        %v8004 = vsel %vm7980, %v8002, %v8003
        %v8005 = vrot.slane %v7680, 1
        %v8006 = vrot.slane %v7681, 1
        %v8007 = vsel %vm7980, %v8005, %v8006
        %v8008 = vrot.slane %v7682, 1
        %v8009 = vrot.slane %v7683, 1
        %v8010 = vsel %vm7980, %v8008, %v8009
        %v8011 = vrot.slane %v7684, 1
        %v8012 = vrot.slane %v7685, 1
        %v8013 = vsel %vm7980, %v8011, %v8012
        %v8014 = vrot.slane %v7686, 1
        %v8015 = vrot.slane %v7687, 1
        %v8016 = vsel %vm7980, %v8014, %v8015
        %v8017 = vrot.slane %v7688, 1
        %v8018 = vrot.slane %v7689, 1
        %v8019 = vsel %vm7980, %v8017, %v8018
        %v8020 = vrot.slane %v7690, 1
        %v8021 = vrot.slane %v7691, 1
        %v8022 = vsel %vm7980, %v8020, %v8021
        %v8023 = vrot.slane %v7692, 1
        %v8024 = vrot.slane %v7693, 1
        %v8025 = vsel %vm7980, %v8023, %v8024
        %v8026 = vrot.slane %v7694, 1
        %v8027 = vrot.slane %v7695, 1
        %v8028 = vsel %vm7980, %v8026, %v8027
        %v8045 = vld [vmem:[%s4] sm:$0xf]
        %v8046 = vld [vmem:[%s4 + $0x4] sm:$0xf]
        %v8047 = vld [vmem:[%s4 + $0x8] sm:$0xf]
        %v8048 = vld [vmem:[%s4 + $0xc] sm:$0xf]
        %v8049 = vld [vmem:[%s4 + $0x10] sm:$0xf]
        %v8050 = vld [vmem:[%s4 + $0x14] sm:$0xf]
        %v8051 = vld [vmem:[%s4 + $0x18] sm:$0xf]
        %v8052 = vld [vmem:[%s4 + $0x1c] sm:$0xf]
        %v8053 = vld [vmem:[%s4 + $0x20] sm:$0xf]
        %v8054 = vld [vmem:[%s4 + $0x24] sm:$0xf]
        %v8055 = vld [vmem:[%s4 + $0x28] sm:$0xf]
        %v8056 = vld [vmem:[%s4 + $0x2c] sm:$0xf]
        %v8057 = vld [vmem:[%s4 + $0x30] sm:$0xf]
        %v8058 = vld [vmem:[%s4 + $0x34] sm:$0xf]
        %v8059 = vld [vmem:[%s4 + $0x38] sm:$0xf]
        %v8060 = vld [vmem:[%s4 + $0x3c] sm:$0xf]
        %v8061 = vld [vmem:[%s4 + $0x40] sm:$0xf]
        %v8062 = vld [vmem:[%s4 + $0x44] sm:$0xf]
        %v8063 = vld [vmem:[%s4 + $0x48] sm:$0xf]
        %v8064 = vld [vmem:[%s4 + $0x4c] sm:$0xf]
        %v8065 = vld [vmem:[%s4 + $0x50] sm:$0xf]
        %v8066 = vld [vmem:[%s4 + $0x54] sm:$0xf]
        %v8067 = vld [vmem:[%s4 + $0x58] sm:$0xf]
        %v8068 = vld [vmem:[%s4 + $0x5c] sm:$0xf]
        %v8069 = vld [vmem:[%s4 + $0x60] sm:$0xf]
        %v8070 = vld [vmem:[%s4 + $0x64] sm:$0xf]
        %v8071 = vld [vmem:[%s4 + $0x68] sm:$0xf]
        %v8072 = vld [vmem:[%s4 + $0x6c] sm:$0xf]
        %v8073 = vld [vmem:[%s4 + $0x70] sm:$0xf]
        %v8074 = vld [vmem:[%s4 + $0x74] sm:$0xf]
        %v8075 = vld [vmem:[%s4 + $0x78] sm:$0xf]
        %v8076 = vld [vmem:[%s4 + $0x7c] sm:$0xf]
        %v8077 = vld [vmem:[%s4 + $0x80] sm:$0xf]
        %v8078 = vld [vmem:[%s4 + $0x84] sm:$0xf]
        %v8079 = vld [vmem:[%s4 + $0x88] sm:$0xf]
        %v8080 = vld [vmem:[%s4 + $0x8c] sm:$0xf]
        %v8081 = vld [vmem:[%s4 + $0x90] sm:$0xf]
        %v8082 = vld [vmem:[%s4 + $0x94] sm:$0xf]
        %v8083 = vld [vmem:[%s4 + $0x98] sm:$0xf]
        %v8084 = vld [vmem:[%s4 + $0x9c] sm:$0xf]
        %v8085 = vld [vmem:[%s4 + $0xa0] sm:$0xf]
        %v8086 = vld [vmem:[%s4 + $0xa4] sm:$0xf]
        %v8087 = vld [vmem:[%s4 + $0xa8] sm:$0xf]
        %v8088 = vld [vmem:[%s4 + $0xac] sm:$0xf]
        %v8089 = vld [vmem:[%s4 + $0xb0] sm:$0xf]
        %v8090 = vld [vmem:[%s4 + $0xb4] sm:$0xf]
        %v8091 = vld [vmem:[%s4 + $0xb8] sm:$0xf]
        %v8092 = vld [vmem:[%s4 + $0xbc] sm:$0xf]
        %v8093 = vld [vmem:[#allocation3] sm:$0xff]
        %v8094 = vld [vmem:[#allocation3 + $0x8] sm:$0xff]
        %v8095 = vld [vmem:[#allocation3 + $0x10] sm:$0xff]
        %v8096 = vld [vmem:[#allocation3 + $0x18] sm:$0xff]
        %v8097 = vld [vmem:[#allocation3 + $0x20] sm:$0xff]
        %v8098 = vld [vmem:[#allocation3 + $0x28] sm:$0xff]
        %v8099 = vld [vmem:[#allocation3 + $0x30] sm:$0xff]
        %v8100 = vld [vmem:[#allocation3 + $0x38] sm:$0xff]
        %v8101 = vld [vmem:[#allocation3 + $0x40] sm:$0xff]
        %v8102 = vld [vmem:[#allocation3 + $0x48] sm:$0xff]
        %v8103 = vld [vmem:[#allocation3 + $0x50] sm:$0xff]
        %v8104 = vld [vmem:[#allocation3 + $0x58] sm:$0xff]
        %v8105 = vld [vmem:[#allocation3 + $0x60] sm:$0xff]
        %v8106 = vld [vmem:[#allocation3 + $0x68] sm:$0xff]
        %v8107 = vld [vmem:[#allocation3 + $0x70] sm:$0xff]
        %v8108 = vld [vmem:[#allocation3 + $0x78] sm:$0xff]
        %v8109 = vld [vmem:[#allocation3 + $0x80] sm:$0xff]
        %v8110 = vld [vmem:[#allocation3 + $0x88] sm:$0xff]
        %v8111 = vld [vmem:[#allocation3 + $0x90] sm:$0xff]
        %v8112 = vld [vmem:[#allocation3 + $0x98] sm:$0xff]
        %v8113 = vld [vmem:[#allocation3 + $0xa0] sm:$0xff]
        %v8114 = vld [vmem:[#allocation3 + $0xa8] sm:$0xff]
        %v8115 = vld [vmem:[#allocation3 + $0xb0] sm:$0xff]
        %v8116 = vld [vmem:[#allocation3 + $0xb8] sm:$0xff]
        %v8117 = vld [vmem:[#allocation3 + $0xc0] sm:$0xff]
        %v8118 = vld [vmem:[#allocation3 + $0xc8] sm:$0xff]
        %v8119 = vld [vmem:[#allocation3 + $0xd0] sm:$0xff]
        %v8120 = vld [vmem:[#allocation3 + $0xd8] sm:$0xff]
        %v8121 = vld [vmem:[#allocation3 + $0xe0] sm:$0xff]
        %v8122 = vld [vmem:[#allocation3 + $0xe8] sm:$0xff]
        %v8123 = vld [vmem:[#allocation3 + $0xf0] sm:$0xff]
        %v8124 = vld [vmem:[#allocation3 + $0xf8] sm:$0xff]
        %v8173 = vunpack.c.l.b16 %v8045
        %v8174 = vunpack.c.l.b16 %v8046
        %v8175 = vunpack.c.l.b16 %v8047
        %v8176 = vunpack.c.l.b16 %v8048
        %v8177 = vunpack.c.l.b16 %v8049
        %v8178 = vunpack.c.l.b16 %v8050
        %v8179 = vunpack.c.l.b16 %v8051
        %v8180 = vunpack.c.l.b16 %v8052
        %v8181 = vunpack.c.l.b16 %v8053
        %v8182 = vunpack.c.l.b16 %v8054
        %v8183 = vunpack.c.l.b16 %v8055
        %v8184 = vunpack.c.l.b16 %v8056
        %v8185 = vunpack.c.l.b16 %v8057
        %v8186 = vunpack.c.l.b16 %v8058
        %v8187 = vunpack.c.l.b16 %v8059
        %v8188 = vunpack.c.l.b16 %v8060
        %v8189 = vunpack.c.l.b16 %v8061
        %v8190 = vunpack.c.l.b16 %v8062
        %v8191 = vunpack.c.l.b16 %v8063
        %v8192 = vunpack.c.l.b16 %v8064
        %v8193 = vunpack.c.l.b16 %v8065
        %v8194 = vunpack.c.l.b16 %v8066
        %v8195 = vunpack.c.l.b16 %v8067
        %v8196 = vunpack.c.l.b16 %v8068
        %v8197 = vunpack.c.l.b16 %v8069
        %v8198 = vunpack.c.l.b16 %v8070
        %v8199 = vunpack.c.l.b16 %v8071
        %v8200 = vunpack.c.l.b16 %v8072
        %v8201 = vunpack.c.l.b16 %v8073
        %v8202 = vunpack.c.l.b16 %v8074
        %v8203 = vunpack.c.l.b16 %v8075
        %v8204 = vunpack.c.l.b16 %v8076
        %v8205 = vunpack.c.l.b16 %v8077
        %v8206 = vunpack.c.l.b16 %v8078
        %v8207 = vunpack.c.l.b16 %v8079
        %v8208 = vunpack.c.l.b16 %v8080
        %v8209 = vunpack.c.l.b16 %v8081
        %v8210 = vunpack.c.l.b16 %v8082
        %v8211 = vunpack.c.l.b16 %v8083
        %v8212 = vunpack.c.l.b16 %v8084
        %v8213 = vunpack.c.l.b16 %v8085
        %v8214 = vunpack.c.l.b16 %v8086
        %v8215 = vunpack.c.l.b16 %v8087
        %v8216 = vunpack.c.l.b16 %v8088
        %v8217 = vunpack.c.l.b16 %v8089
        %v8218 = vunpack.c.l.b16 %v8090
        %v8219 = vunpack.c.l.b16 %v8091
        %v8220 = vunpack.c.l.b16 %v8092
        %v8221 = vpack.c.b16 %v8174, %v8173
        %v8222 = vpack.c.b16 %v8176, %v8175
        %v8223 = vpack.c.b16 %v8178, %v8177
        %v8224 = vpack.c.b16 %v8180, %v8179
        %v8225 = vpack.c.b16 %v8182, %v8181
        %v8226 = vpack.c.b16 %v8184, %v8183
        %v8227 = vpack.c.b16 %v8186, %v8185
        %v8228 = vpack.c.b16 %v8188, %v8187
        %v8229 = vpack.c.b16 %v8190, %v8189
        %v8230 = vpack.c.b16 %v8192, %v8191
        %v8231 = vpack.c.b16 %v8194, %v8193
        %v8232 = vpack.c.b16 %v8196, %v8195
        %v8233 = vpack.c.b16 %v8198, %v8197
        %v8234 = vpack.c.b16 %v8200, %v8199
        %v8235 = vpack.c.b16 %v8202, %v8201
        %v8236 = vpack.c.b16 %v8204, %v8203
        %v8237 = vpack.c.b16 %v8206, %v8205
        %v8238 = vpack.c.b16 %v8208, %v8207
        %v8239 = vpack.c.b16 %v8210, %v8209
        %v8240 = vpack.c.b16 %v8212, %v8211
        %v8241 = vpack.c.b16 %v8214, %v8213
        %v8242 = vpack.c.b16 %v8216, %v8215
        %v8243 = vpack.c.b16 %v8218, %v8217
        %v8244 = vpack.c.b16 %v8220, %v8219
        %8269 = vmatprep.subr.bf16.mxu0 0
        %8270 = vmatpush1.bf16.msra.mxu0 %v8221
        %8271 = vmatprep.subr.bf16.mxu0 0
        %8272 = vmatpush1.bf16.msra.mxu0 %v8222
        %8273 = vmatprep.subr.bf16.mxu0 0
        %8274 = vmatpush1.bf16.msra.mxu0 %v8223
        %8275 = vmatprep.subr.bf16.mxu0 0
        %8276 = vmatpush1.bf16.msra.mxu0 %v8224
        %8277 = vmatprep.subr.bf16.mxu0 0
        %8278 = vmatpush1.bf16.msra.mxu0 %v8225
        %8279 = vmatprep.subr.bf16.mxu0 0
        %8280 = vmatpush1.bf16.msra.mxu0 %v8226
        %8281 = vmatprep.subr.bf16.mxu0 0
        %8282 = vmatpush1.bf16.msra.mxu0 %v8227
        %8283 = vmatprep.subr.bf16.mxu0 0
        %8284 = vmatpush1.bf16.msra.mxu0 %v8228
        %8285 = vmatprep.subr.bf16.mxu0 0
        %8286 = vmatpush1.bf16.msra.mxu0 %v8229
        %8287 = vmatprep.subr.bf16.mxu0 0
        %8288 = vmatpush1.bf16.msra.mxu0 %v8230
        %8289 = vmatprep.subr.bf16.mxu0 0
        %8290 = vmatpush1.bf16.msra.mxu0 %v8231
        %8291 = vmatprep.subr.bf16.mxu0 0
        %8292 = vmatpush1.bf16.msra.mxu0 %v8232
        %8293 = vmatprep.subr.bf16.mxu0 0
        %8294 = vmatpush1.bf16.msra.mxu0 %v8233
        %8295 = vmatprep.subr.bf16.mxu0 0
        %8296 = vmatpush1.bf16.msra.mxu0 %v8234
        %8297 = vmatprep.subr.bf16.mxu0 0
        %8298 = vmatpush1.bf16.msra.mxu0 %v8235
        %8299 = vmatprep.subr.bf16.mxu0 0
        %8300 = vmatpush1.bf16.msra.mxu0 %v8236
        %8301 = vmatprep.mubr.bf16.mxu0 %v7751
        %8302 = vmatmul.mubr.bf16.gmra.mrb[0].mxu0 %v7664
        %v8303 = vpop.f32.mrb[0].mxu0
        %v8304 = vadd.f32 0.0, %v8303
        %v8305 = vpop.f32.mrb[0].mxu0
        %v8306 = vpop.f32.mrb[0].mxu0
        %v8307 = vadd.f32 0.0, %v8306
        %v8308 = vpop.f32.mrb[0].mxu0
        %8309 = vmatprep.mubr.bf16.mxu0 %v7763
        %8310 = vmatmul.mubr.bf16.gmra.mrb[0].mxu0 %v7666
        %v8311 = vpop.f32.mrb[0].mxu0
        %v8312 = vadd.f32 0.0, %v8311
        %v8313 = vpop.f32.mrb[0].mxu0
        %v8314 = vpop.f32.mrb[0].mxu0
        %v8315 = vadd.f32 0.0, %v8314
        %v8316 = vpop.f32.mrb[0].mxu0
        %8317 = vmatprep.mubr.bf16.mxu0 %v7775
        %8318 = vmatmul.mubr.bf16.gmra.mrb[0].mxu0 %v7668
        %v8319 = vpop.f32.mrb[0].mxu0
        %v8320 = vadd.f32 0.0, %v8319
        %v8321 = vpop.f32.mrb[0].mxu0
        %v8322 = vpop.f32.mrb[0].mxu0
        %v8323 = vadd.f32 0.0, %v8322
        %v8324 = vpop.f32.mrb[0].mxu0
        %8325 = vmatprep.mubr.bf16.mxu0 %v7787
        %8326 = vmatmul.mubr.bf16.gmra.mrb[0].mxu0 %v7670
        %v8327 = vpop.f32.mrb[0].mxu0
        %v8328 = vadd.f32 0.0, %v8327
        %v8329 = vpop.f32.mrb[0].mxu0
        %v8330 = vpop.f32.mrb[0].mxu0
        %v8331 = vadd.f32 0.0, %v8330
        %v8332 = vpop.f32.mrb[0].mxu0
        %8333 = vmatprep.mubr.bf16.mxu0 %v7799
        %8334 = vmatmul.mubr.bf16.gmra.mrb[0].mxu0 %v7672
        %v8335 = vpop.f32.mrb[0].mxu0
        %v8336 = vadd.f32 0.0, %v8335
        %v8337 = vpop.f32.mrb[0].mxu0
        %v8338 = vpop.f32.mrb[0].mxu0
        %v8339 = vadd.f32 0.0, %v8338
        %v8340 = vpop.f32.mrb[0].mxu0
        %8341 = vmatprep.mubr.bf16.mxu0 %v7811
        %8342 = vmatmul.mubr.bf16.gmra.mrb[0].mxu0 %v7674
        %v8343 = vpop.f32.mrb[0].mxu0
        %v8344 = vadd.f32 0.0, %v8343
        %v8345 = vpop.f32.mrb[0].mxu0
        %v8346 = vpop.f32.mrb[0].mxu0
        %v8347 = vadd.f32 0.0, %v8346
        %v8348 = vpop.f32.mrb[0].mxu0
        %8349 = vmatprep.mubr.bf16.mxu0 %v7823
        %8350 = vmatmul.mubr.bf16.gmra.mrb[0].mxu0 %v7676
        %v8351 = vpop.f32.mrb[0].mxu0
        %v8352 = vadd.f32 0.0, %v8351
        %v8353 = vpop.f32.mrb[0].mxu0
        %v8354 = vpop.f32.mrb[0].mxu0
        %v8355 = vadd.f32 0.0, %v8354
        %v8356 = vpop.f32.mrb[0].mxu0
        %8357 = vmatprep.mubr.bf16.mxu0 %v7835
        %8358 = vmatmul.mubr.bf16.gmra.mrb[0].mxu0 %v7678
        %v8359 = vpop.f32.mrb[0].mxu0
        %v8360 = vadd.f32 0.0, %v8359
        %v8361 = vpop.f32.mrb[0].mxu0
        %v8362 = vpop.f32.mrb[0].mxu0
        %v8363 = vadd.f32 0.0, %v8362
        %v8364 = vpop.f32.mrb[0].mxu0
        %8365 = vmatprep.mubr.bf16.mxu0 %v7847
        %8366 = vmatmul.mubr.bf16.gmra.mrb[0].mxu0 %v7680
        %v8367 = vpop.f32.mrb[0].mxu0
        %v8368 = vadd.f32 0.0, %v8367
        %v8369 = vpop.f32.mrb[0].mxu0
        %v8370 = vpop.f32.mrb[0].mxu0
        %v8371 = vadd.f32 0.0, %v8370
        %v8372 = vpop.f32.mrb[0].mxu0
        %8373 = vmatprep.mubr.bf16.mxu0 %v7859
        %8374 = vmatmul.mubr.bf16.gmra.mrb[0].mxu0 %v7682
        %v8375 = vpop.f32.mrb[0].mxu0
        %v8376 = vadd.f32 0.0, %v8375
        %v8377 = vpop.f32.mrb[0].mxu0
        %v8378 = vpop.f32.mrb[0].mxu0
        %v8379 = vadd.f32 0.0, %v8378
        %v8380 = vpop.f32.mrb[0].mxu0
        %8381 = vmatprep.mubr.bf16.mxu0 %v7871
        %8382 = vmatmul.mubr.bf16.gmra.mrb[0].mxu0 %v7684
        %v8383 = vpop.f32.mrb[0].mxu0
        %v8384 = vadd.f32 0.0, %v8383
        %v8385 = vpop.f32.mrb[0].mxu0
        %v8386 = vpop.f32.mrb[0].mxu0
        %v8387 = vadd.f32 0.0, %v8386
        %v8388 = vpop.f32.mrb[0].mxu0
        %8389 = vmatprep.mubr.bf16.mxu0 %v7883
        %8390 = vmatmul.mubr.bf16.gmra.mrb[0].mxu0 %v7686
        %v8391 = vpop.f32.mrb[0].mxu0
        %v8392 = vadd.f32 0.0, %v8391
        %v8393 = vpop.f32.mrb[0].mxu0
        %v8394 = vpop.f32.mrb[0].mxu0
        %v8395 = vadd.f32 0.0, %v8394
        %v8396 = vpop.f32.mrb[0].mxu0
        %8397 = vmatprep.mubr.bf16.mxu0 %v7895
        %8398 = vmatmul.mubr.bf16.gmra.mrb[0].mxu0 %v7688
        %v8399 = vpop.f32.mrb[0].mxu0
        %v8400 = vadd.f32 0.0, %v8399
        %v8401 = vpop.f32.mrb[0].mxu0
        %v8402 = vpop.f32.mrb[0].mxu0
        %v8403 = vadd.f32 0.0, %v8402
        %v8404 = vpop.f32.mrb[0].mxu0
        %8405 = vmatprep.mubr.bf16.mxu0 %v7907
        %8406 = vmatmul.mubr.bf16.gmra.mrb[0].mxu0 %v7690
        %v8407 = vpop.f32.mrb[0].mxu0
        %v8408 = vadd.f32 0.0, %v8407
        %v8409 = vpop.f32.mrb[0].mxu0
        %v8410 = vpop.f32.mrb[0].mxu0
        %v8411 = vadd.f32 0.0, %v8410
        %v8412 = vpop.f32.mrb[0].mxu0
        %8413 = vmatprep.mubr.bf16.mxu0 %v7919
        %8414 = vmatmul.mubr.bf16.gmra.mrb[0].mxu0 %v7692
        %v8415 = vpop.f32.mrb[0].mxu0
        %v8416 = vadd.f32 0.0, %v8415
        %v8417 = vpop.f32.mrb[0].mxu0
        %v8418 = vpop.f32.mrb[0].mxu0
        %v8419 = vadd.f32 0.0, %v8418
        %v8420 = vpop.f32.mrb[0].mxu0
        %8421 = vmatprep.mubr.bf16.mxu0 %v7931
        %8422 = vmatmul.mubr.bf16.gmra.mrb[0].mxu0 %v7694
        %v8423 = vpop.f32.mrb[0].mxu0
        %v8424 = vadd.f32 0.0, %v8423
        %v8425 = vpop.f32.mrb[0].mxu0
        %v8426 = vpop.f32.mrb[0].mxu0
        %v8427 = vadd.f32 0.0, %v8426
        %v8428 = vpop.f32.mrb[0].mxu0
        %8429 = vdwg.mxu0
        %8430 = vmatprep.subr.bf16.mxu0 0
        %8431 = vmatpush1.bf16.msra.mxu0 %v8237
        %8432 = vmatprep.subr.bf16.mxu0 0
        %8433 = vmatpush1.bf16.msra.mxu0 %v8238
        %8434 = vmatprep.subr.bf16.mxu0 0
        %8435 = vmatpush1.bf16.msra.mxu0 %v8239
        %8436 = vmatprep.subr.bf16.mxu0 0
        %8437 = vmatpush1.bf16.msra.mxu0 %v8240
        %8438 = vmatprep.subr.bf16.mxu0 0
        %8439 = vmatpush1.bf16.msra.mxu0 %v8241
        %8440 = vmatprep.subr.bf16.mxu0 0
        %8441 = vmatpush1.bf16.msra.mxu0 %v8242
        %8442 = vmatprep.subr.bf16.mxu0 0
        %8443 = vmatpush1.bf16.msra.mxu0 %v8243
        %8444 = vmatprep.subr.bf16.mxu0 0
        %8445 = vmatpush1.bf16.msra.mxu0 %v8244
        %8446 = vmatprep.subr.bf16.mxu0 0
        %8447 = vmatpush1.bf16.msra.mxu0 0
        %8448 = vmatprep.subr.bf16.mxu0 0
        %8449 = vmatpush1.bf16.msra.mxu0 0
        %8450 = vmatprep.subr.bf16.mxu0 0
        %8451 = vmatpush1.bf16.msra.mxu0 0
        %8452 = vmatprep.subr.bf16.mxu0 0
        %8453 = vmatpush1.bf16.msra.mxu0 0
        %8454 = vmatprep.subr.bf16.mxu0 0
        %8455 = vmatpush1.bf16.msra.mxu0 0
        %8456 = vmatprep.subr.bf16.mxu0 0
        %8457 = vmatpush1.bf16.msra.mxu0 0
        %8458 = vmatprep.subr.bf16.mxu0 0
        %8459 = vmatpush1.bf16.msra.mxu0 0
        %8460 = vmatprep.subr.bf16.mxu0 0
        %8461 = vmatpush1.bf16.msra.mxu0 0
        %8462 = vmatprep.mubr.bf16.mxu0 0
        %8463 = vmatmul.mubr.bf16.gmra.mrb[0].mxu0 %v7983
        %v8464 = vpop.f32.mrb[0].mxu0
        %v8465 = vadd.f32 %v8304, %v8464
        %v8466 = vpop.f32.mrb[0].mxu0
        %v8467 = vpop.f32.mrb[0].mxu0
        %v8468 = vadd.f32 %v8307, %v8467
        %v8469 = vpop.f32.mrb[0].mxu0
        %8470 = vmatprep.mubr.bf16.mxu0 0
        %8471 = vmatmul.mubr.bf16.gmra.mrb[0].mxu0 %v7986
        %v8472 = vpop.f32.mrb[0].mxu0
        %v8473 = vadd.f32 %v8312, %v8472
        %v8474 = vpop.f32.mrb[0].mxu0
        %v8475 = vpop.f32.mrb[0].mxu0
        %v8476 = vadd.f32 %v8315, %v8475
        %v8477 = vpop.f32.mrb[0].mxu0
        %8478 = vmatprep.mubr.bf16.mxu0 0
        %8479 = vmatmul.mubr.bf16.gmra.mrb[0].mxu0 %v7989
        %v8480 = vpop.f32.mrb[0].mxu0
        %v8481 = vadd.f32 %v8320, %v8480
        %v8482 = vpop.f32.mrb[0].mxu0
        %v8483 = vpop.f32.mrb[0].mxu0
        %v8484 = vadd.f32 %v8323, %v8483
        %v8485 = vpop.f32.mrb[0].mxu0
        %8486 = vmatprep.mubr.bf16.mxu0 0
        %8487 = vmatmul.mubr.bf16.gmra.mrb[0].mxu0 %v7992
        %v8488 = vpop.f32.mrb[0].mxu0
        %v8489 = vadd.f32 %v8328, %v8488
        %v8490 = vpop.f32.mrb[0].mxu0
        %v8491 = vpop.f32.mrb[0].mxu0
        %v8492 = vadd.f32 %v8331, %v8491
        %v8493 = vpop.f32.mrb[0].mxu0
        %8494 = vmatprep.mubr.bf16.mxu0 0
        %8495 = vmatmul.mubr.bf16.gmra.mrb[0].mxu0 %v7995
        %v8496 = vpop.f32.mrb[0].mxu0
        %v8497 = vadd.f32 %v8336, %v8496
        %v8498 = vpop.f32.mrb[0].mxu0
        %v8499 = vpop.f32.mrb[0].mxu0
        %v8500 = vadd.f32 %v8339, %v8499
        %v8501 = vpop.f32.mrb[0].mxu0
        %8502 = vmatprep.mubr.bf16.mxu0 0
        %8503 = vmatmul.mubr.bf16.gmra.mrb[0].mxu0 %v7998
        %v8504 = vpop.f32.mrb[0].mxu0
        %v8505 = vadd.f32 %v8344, %v8504
        %v8506 = vpop.f32.mrb[0].mxu0
        %v8507 = vpop.f32.mrb[0].mxu0
        %v8508 = vadd.f32 %v8347, %v8507
        %v8509 = vpop.f32.mrb[0].mxu0
        %8510 = vmatprep.mubr.bf16.mxu0 0
        %8511 = vmatmul.mubr.bf16.gmra.mrb[0].mxu0 %v8001
        %v8512 = vpop.f32.mrb[0].mxu0
        %v8513 = vadd.f32 %v8352, %v8512
        %v8514 = vpop.f32.mrb[0].mxu0
        %v8515 = vpop.f32.mrb[0].mxu0
        %v8516 = vadd.f32 %v8355, %v8515
        %v8517 = vpop.f32.mrb[0].mxu0
        %8518 = vmatprep.mubr.bf16.mxu0 0
        %8519 = vmatmul.mubr.bf16.gmra.mrb[0].mxu0 %v8004
        %v8520 = vpop.f32.mrb[0].mxu0
        %v8521 = vadd.f32 %v8360, %v8520
        %v8522 = vpop.f32.mrb[0].mxu0
        %v8523 = vpop.f32.mrb[0].mxu0
        %v8524 = vadd.f32 %v8363, %v8523
        %v8525 = vpop.f32.mrb[0].mxu0
        %8526 = vmatprep.mubr.bf16.mxu0 0
        %8527 = vmatmul.mubr.bf16.gmra.mrb[0].mxu0 %v8007
        %v8528 = vpop.f32.mrb[0].mxu0
        %v8529 = vadd.f32 %v8368, %v8528
        %v8530 = vpop.f32.mrb[0].mxu0
        %v8531 = vpop.f32.mrb[0].mxu0
        %v8532 = vadd.f32 %v8371, %v8531
        %v8533 = vpop.f32.mrb[0].mxu0
        %8534 = vmatprep.mubr.bf16.mxu0 0
        %8535 = vmatmul.mubr.bf16.gmra.mrb[0].mxu0 %v8010
        %v8536 = vpop.f32.mrb[0].mxu0
        %v8537 = vadd.f32 %v8376, %v8536
        %v8538 = vpop.f32.mrb[0].mxu0
        %v8539 = vpop.f32.mrb[0].mxu0
        %v8540 = vadd.f32 %v8379, %v8539
        %v8541 = vpop.f32.mrb[0].mxu0
        %8542 = vmatprep.mubr.bf16.mxu0 0
        %8543 = vmatmul.mubr.bf16.gmra.mrb[0].mxu0 %v8013
        %v8544 = vpop.f32.mrb[0].mxu0
        %v8545 = vadd.f32 %v8384, %v8544
        %v8546 = vpop.f32.mrb[0].mxu0
        %v8547 = vpop.f32.mrb[0].mxu0
        %v8548 = vadd.f32 %v8387, %v8547
        %v8549 = vpop.f32.mrb[0].mxu0
        %8550 = vmatprep.mubr.bf16.mxu0 0
        %8551 = vmatmul.mubr.bf16.gmra.mrb[0].mxu0 %v8016
        %v8552 = vpop.f32.mrb[0].mxu0
        %v8553 = vadd.f32 %v8392, %v8552
        %v8554 = vpop.f32.mrb[0].mxu0
        %v8555 = vpop.f32.mrb[0].mxu0
        %v8556 = vadd.f32 %v8395, %v8555
        %v8557 = vpop.f32.mrb[0].mxu0
        %8558 = vmatprep.mubr.bf16.mxu0 0
        %8559 = vmatmul.mubr.bf16.gmra.mrb[0].mxu0 %v8019
        %v8560 = vpop.f32.mrb[0].mxu0
        %v8561 = vadd.f32 %v8400, %v8560
        %v8562 = vpop.f32.mrb[0].mxu0
        %v8563 = vpop.f32.mrb[0].mxu0
        %v8564 = vadd.f32 %v8403, %v8563
        %v8565 = vpop.f32.mrb[0].mxu0
        %8566 = vmatprep.mubr.bf16.mxu0 0
        %8567 = vmatmul.mubr.bf16.gmra.mrb[0].mxu0 %v8022
        %v8568 = vpop.f32.mrb[0].mxu0
        %v8569 = vadd.f32 %v8408, %v8568
        %v8570 = vpop.f32.mrb[0].mxu0
        %v8571 = vpop.f32.mrb[0].mxu0
        %v8572 = vadd.f32 %v8411, %v8571
        %v8573 = vpop.f32.mrb[0].mxu0
        %8574 = vmatprep.mubr.bf16.mxu0 0
        %8575 = vmatmul.mubr.bf16.gmra.mrb[0].mxu0 %v8025
        %v8576 = vpop.f32.mrb[0].mxu0
        %v8577 = vadd.f32 %v8416, %v8576
        %v8578 = vpop.f32.mrb[0].mxu0
        %v8579 = vpop.f32.mrb[0].mxu0
        %v8580 = vadd.f32 %v8419, %v8579
        %v8581 = vpop.f32.mrb[0].mxu0
        %8582 = vmatprep.mubr.bf16.mxu0 0
        %8583 = vmatmul.mubr.bf16.gmra.mrb[0].mxu0 %v8028
        %v8584 = vpop.f32.mrb[0].mxu0
        %v8585 = vadd.f32 %v8424, %v8584
        %v8586 = vpop.f32.mrb[0].mxu0
        %v8587 = vpop.f32.mrb[0].mxu0
        %v8588 = vadd.f32 %v8427, %v8587
        %v8589 = vpop.f32.mrb[0].mxu0
        %8590 = vdwg.mxu0
        %v8591 = vadd.f32 %v8093, %v8465
        %v8592 = vadd.f32 %v8094, %v8468
        %v8593 = vadd.f32 %v8095, %v8473
        %v8594 = vadd.f32 %v8096, %v8476
        %v8595 = vadd.f32 %v8097, %v8481
        %v8596 = vadd.f32 %v8098, %v8484
        %v8597 = vadd.f32 %v8099, %v8489
        %v8598 = vadd.f32 %v8100, %v8492
        %v8599 = vadd.f32 %v8101, %v8497
        %v8600 = vadd.f32 %v8102, %v8500
        %v8601 = vadd.f32 %v8103, %v8505
        %v8602 = vadd.f32 %v8104, %v8508
        %v8603 = vadd.f32 %v8105, %v8513
        %v8604 = vadd.f32 %v8106, %v8516
        %v8605 = vadd.f32 %v8107, %v8521
        %v8606 = vadd.f32 %v8108, %v8524
        %v8607 = vadd.f32 %v8109, %v8529
        %v8608 = vadd.f32 %v8110, %v8532
        %v8609 = vadd.f32 %v8111, %v8537
        %v8610 = vadd.f32 %v8112, %v8540
        %v8611 = vadd.f32 %v8113, %v8545
        %v8612 = vadd.f32 %v8114, %v8548
        %v8613 = vadd.f32 %v8115, %v8553
        %v8614 = vadd.f32 %v8116, %v8556
        %v8615 = vadd.f32 %v8117, %v8561
        %v8616 = vadd.f32 %v8118, %v8564
        %v8617 = vadd.f32 %v8119, %v8569
        %v8618 = vadd.f32 %v8120, %v8572
        %v8619 = vadd.f32 %v8121, %v8577
        %v8620 = vadd.f32 %v8122, %v8580
        %v8621 = vadd.f32 %v8123, %v8585
        %v8622 = vadd.f32 %v8124, %v8588
        %8623 = vst [vmem:[#allocation3] sm:$0xff] %v8591
        %8624 = vst [vmem:[#allocation3 + $0x8] sm:$0xff] %v8592
        %8625 = vst [vmem:[#allocation3 + $0x10] sm:$0xff] %v8593
        %8626 = vst [vmem:[#allocation3 + $0x18] sm:$0xff] %v8594
        %8627 = vst [vmem:[#allocation3 + $0x20] sm:$0xff] %v8595
        %8628 = vst [vmem:[#allocation3 + $0x28] sm:$0xff] %v8596
        %8629 = vst [vmem:[#allocation3 + $0x30] sm:$0xff] %v8597
        %8630 = vst [vmem:[#allocation3 + $0x38] sm:$0xff] %v8598
        %8631 = vst [vmem:[#allocation3 + $0x40] sm:$0xff] %v8599
        %8632 = vst [vmem:[#allocation3 + $0x48] sm:$0xff] %v8600
        %8633 = vst [vmem:[#allocation3 + $0x50] sm:$0xff] %v8601
        %8634 = vst [vmem:[#allocation3 + $0x58] sm:$0xff] %v8602
        %8635 = vst [vmem:[#allocation3 + $0x60] sm:$0xff] %v8603
        %8636 = vst [vmem:[#allocation3 + $0x68] sm:$0xff] %v8604
        %8637 = vst [vmem:[#allocation3 + $0x70] sm:$0xff] %v8605
        %8638 = vst [vmem:[#allocation3 + $0x78] sm:$0xff] %v8606
        %8639 = vst [vmem:[#allocation3 + $0x80] sm:$0xff] %v8607
        %8640 = vst [vmem:[#allocation3 + $0x88] sm:$0xff] %v8608
        %8641 = vst [vmem:[#allocation3 + $0x90] sm:$0xff] %v8609
        %8642 = vst [vmem:[#allocation3 + $0x98] sm:$0xff] %v8610
        %8643 = vst [vmem:[#allocation3 + $0xa0] sm:$0xff] %v8611
        %8644 = vst [vmem:[#allocation3 + $0xa8] sm:$0xff] %v8612
        %8645 = vst [vmem:[#allocation3 + $0xb0] sm:$0xff] %v8613
        %8646 = vst [vmem:[#allocation3 + $0xb8] sm:$0xff] %v8614
        %8647 = vst [vmem:[#allocation3 + $0xc0] sm:$0xff] %v8615
        %8648 = vst [vmem:[#allocation3 + $0xc8] sm:$0xff] %v8616
        %8649 = vst [vmem:[#allocation3 + $0xd0] sm:$0xff] %v8617
        %8650 = vst [vmem:[#allocation3 + $0xd8] sm:$0xff] %v8618
        %8651 = vst [vmem:[#allocation3 + $0xe0] sm:$0xff] %v8619
        %8652 = vst [vmem:[#allocation3 + $0xe8] sm:$0xff] %v8620
        %8653 = vst [vmem:[#allocation3 + $0xf0] sm:$0xff] %v8621
        %8654 = vst [vmem:[#allocation3 + $0xf8] sm:$0xff] %v8622
        %v8656 = vshrl.u32 %v7696, 16
        %v8658 = vshll.u32 %v7696, 16
        %v8660 = vrot.slane %v8658, 1
        %v8661 = vor.u32 %v8656, %v8660
        %v8663 = vshll.u32 %v7697, 16
        %v8665 = vrot.slane %v8663, 1
        %v8666 = vsel %vm7739, %v8661, %v8665
        %v8670 = vrot.slane %v7696, 1
        %v8671 = vrot.slane %v7697, 1
        %v8672 = vsel %vm7980, %v8670, %v8671
        %v8674 = vld [vmem:[%s4 + $0xc0] sm:$0xf]
        %v8675 = vld [vmem:[%s4 + $0xc4] sm:$0xf]
        %v8676 = vld [vmem:[%s4 + $0xc8] sm:$0xf]
        %v8677 = vld [vmem:[%s4 + $0xcc] sm:$0xf]
        %v8678 = vld [vmem:[%s4 + $0xd0] sm:$0xf]
        %v8679 = vld [vmem:[%s4 + $0xd4] sm:$0xf]
        %v8680 = vld [vmem:[%s4 + $0xd8] sm:$0xf]
        %v8681 = vld [vmem:[%s4 + $0xdc] sm:$0xf]
        %v8682 = vld [vmem:[%s4 + $0xe0] sm:$0xf]
        %v8683 = vld [vmem:[%s4 + $0xe4] sm:$0xf]
        %v8684 = vld [vmem:[%s4 + $0xe8] sm:$0xf]
        %v8685 = vld [vmem:[%s4 + $0xec] sm:$0xf]
        %v8686 = vld [vmem:[%s4 + $0xf0] sm:$0xf]
        %v8687 = vld [vmem:[%s4 + $0xf4] sm:$0xf]
        %v8688 = vld [vmem:[%s4 + $0xf8] sm:$0xf]
        %v8689 = vld [vmem:[%s4 + $0xfc] sm:$0xf]
        %v8690 = vld [vmem:[%s4 + $0x100] sm:$0xf]
        %v8691 = vld [vmem:[%s4 + $0x104] sm:$0xf]
        %v8692 = vld [vmem:[%s4 + $0x108] sm:$0xf]
        %v8693 = vld [vmem:[%s4 + $0x10c] sm:$0xf]
        %v8694 = vld [vmem:[%s4 + $0x110] sm:$0xf]
        %v8695 = vld [vmem:[%s4 + $0x114] sm:$0xf]
        %v8696 = vld [vmem:[%s4 + $0x118] sm:$0xf]
        %v8697 = vld [vmem:[%s4 + $0x11c] sm:$0xf]
        %v8698 = vld [vmem:[%s4 + $0x120] sm:$0xf]
        %v8699 = vld [vmem:[%s4 + $0x124] sm:$0xf]
        %v8700 = vld [vmem:[%s4 + $0x128] sm:$0xf]
        %v8701 = vld [vmem:[%s4 + $0x12c] sm:$0xf]
        %v8702 = vld [vmem:[%s4 + $0x130] sm:$0xf]
        %v8703 = vld [vmem:[%s4 + $0x134] sm:$0xf]
        %v8704 = vld [vmem:[%s4 + $0x138] sm:$0xf]
        %v8705 = vld [vmem:[%s4 + $0x13c] sm:$0xf]
        %v8706 = vld [vmem:[%s4 + $0x140] sm:$0xf]
        %v8707 = vld [vmem:[%s4 + $0x144] sm:$0xf]
        %v8708 = vld [vmem:[%s4 + $0x148] sm:$0xf]
        %v8709 = vld [vmem:[%s4 + $0x14c] sm:$0xf]
        %v8710 = vld [vmem:[%s4 + $0x150] sm:$0xf]
        %v8711 = vld [vmem:[%s4 + $0x154] sm:$0xf]
        %v8712 = vld [vmem:[%s4 + $0x158] sm:$0xf]
        %v8713 = vld [vmem:[%s4 + $0x15c] sm:$0xf]
        %v8714 = vld [vmem:[%s4 + $0x160] sm:$0xf]
        %v8715 = vld [vmem:[%s4 + $0x164] sm:$0xf]
        %v8716 = vld [vmem:[%s4 + $0x168] sm:$0xf]
        %v8717 = vld [vmem:[%s4 + $0x16c] sm:$0xf]
        %v8718 = vld [vmem:[%s4 + $0x170] sm:$0xf]
        %v8719 = vld [vmem:[%s4 + $0x174] sm:$0xf]
        %v8720 = vld [vmem:[%s4 + $0x178] sm:$0xf]
        %v8721 = vld [vmem:[%s4 + $0x17c] sm:$0xf]
        %v8722 = vld [vmem:[#allocation3] sm:$0xff]
        %v8723 = vld [vmem:[#allocation3 + $0x8] sm:$0xff]
        %v8724 = vld [vmem:[#allocation3 + $0x10] sm:$0xff]
        %v8725 = vld [vmem:[#allocation3 + $0x18] sm:$0xff]
        %v8726 = vld [vmem:[#allocation3 + $0x20] sm:$0xff]
        %v8727 = vld [vmem:[#allocation3 + $0x28] sm:$0xff]
        %v8728 = vld [vmem:[#allocation3 + $0x30] sm:$0xff]
        %v8729 = vld [vmem:[#allocation3 + $0x38] sm:$0xff]
        %v8730 = vld [vmem:[#allocation3 + $0x40] sm:$0xff]
        %v8731 = vld [vmem:[#allocation3 + $0x48] sm:$0xff]
        %v8732 = vld [vmem:[#allocation3 + $0x50] sm:$0xff]
        %v8733 = vld [vmem:[#allocation3 + $0x58] sm:$0xff]
        %v8734 = vld [vmem:[#allocation3 + $0x60] sm:$0xff]
        %v8735 = vld [vmem:[#allocation3 + $0x68] sm:$0xff]
        %v8736 = vld [vmem:[#allocation3 + $0x70] sm:$0xff]
        %v8737 = vld [vmem:[#allocation3 + $0x78] sm:$0xff]
        %v8738 = vld [vmem:[#allocation3 + $0x80] sm:$0xff]
        %v8739 = vld [vmem:[#allocation3 + $0x88] sm:$0xff]
        %v8740 = vld [vmem:[#allocation3 + $0x90] sm:$0xff]
        %v8741 = vld [vmem:[#allocation3 + $0x98] sm:$0xff]
        %v8742 = vld [vmem:[#allocation3 + $0xa0] sm:$0xff]
        %v8743 = vld [vmem:[#allocation3 + $0xa8] sm:$0xff]
        %v8744 = vld [vmem:[#allocation3 + $0xb0] sm:$0xff]
        %v8745 = vld [vmem:[#allocation3 + $0xb8] sm:$0xff]
        %v8746 = vld [vmem:[#allocation3 + $0xc0] sm:$0xff]
        %v8747 = vld [vmem:[#allocation3 + $0xc8] sm:$0xff]
        %v8748 = vld [vmem:[#allocation3 + $0xd0] sm:$0xff]
        %v8749 = vld [vmem:[#allocation3 + $0xd8] sm:$0xff]
        %v8750 = vld [vmem:[#allocation3 + $0xe0] sm:$0xff]
        %v8751 = vld [vmem:[#allocation3 + $0xe8] sm:$0xff]
        %v8752 = vld [vmem:[#allocation3 + $0xf0] sm:$0xff]
        %v8753 = vld [vmem:[#allocation3 + $0xf8] sm:$0xff]
        %v8802 = vunpack.c.l.b16 %v8674
        %v8803 = vunpack.c.l.b16 %v8675
        %v8804 = vunpack.c.l.b16 %v8676
        %v8805 = vunpack.c.l.b16 %v8677
        %v8806 = vunpack.c.l.b16 %v8678
        %v8807 = vunpack.c.l.b16 %v8679
        %v8808 = vunpack.c.l.b16 %v8680
        %v8809 = vunpack.c.l.b16 %v8681
        %v8810 = vunpack.c.l.b16 %v8682
        %v8811 = vunpack.c.l.b16 %v8683
        %v8812 = vunpack.c.l.b16 %v8684
        %v8813 = vunpack.c.l.b16 %v8685
        %v8814 = vunpack.c.l.b16 %v8686
        %v8815 = vunpack.c.l.b16 %v8687
        %v8816 = vunpack.c.l.b16 %v8688
        %v8817 = vunpack.c.l.b16 %v8689
        %v8818 = vunpack.c.l.b16 %v8690
        %v8819 = vunpack.c.l.b16 %v8691
        %v8820 = vunpack.c.l.b16 %v8692
        %v8821 = vunpack.c.l.b16 %v8693
        %v8822 = vunpack.c.l.b16 %v8694
        %v8823 = vunpack.c.l.b16 %v8695
        %v8824 = vunpack.c.l.b16 %v8696
        %v8825 = vunpack.c.l.b16 %v8697
        %v8826 = vunpack.c.l.b16 %v8698
        %v8827 = vunpack.c.l.b16 %v8699
        %v8828 = vunpack.c.l.b16 %v8700
        %v8829 = vunpack.c.l.b16 %v8701
        %v8830 = vunpack.c.l.b16 %v8702
        %v8831 = vunpack.c.l.b16 %v8703
        %v8832 = vunpack.c.l.b16 %v8704
        %v8833 = vunpack.c.l.b16 %v8705
        %v8834 = vunpack.c.l.b16 %v8706
        %v8835 = vunpack.c.l.b16 %v8707
        %v8836 = vunpack.c.l.b16 %v8708
        %v8837 = vunpack.c.l.b16 %v8709
        %v8838 = vunpack.c.l.b16 %v8710
        %v8839 = vunpack.c.l.b16 %v8711
        %v8840 = vunpack.c.l.b16 %v8712
        %v8841 = vunpack.c.l.b16 %v8713
        %v8842 = vunpack.c.l.b16 %v8714
        %v8843 = vunpack.c.l.b16 %v8715
        %v8844 = vunpack.c.l.b16 %v8716
        %v8845 = vunpack.c.l.b16 %v8717
        %v8846 = vunpack.c.l.b16 %v8718
        %v8847 = vunpack.c.l.b16 %v8719
        %v8848 = vunpack.c.l.b16 %v8720
        %v8849 = vunpack.c.l.b16 %v8721
        %v8850 = vpack.c.b16 %v8803, %v8802
        %v8851 = vpack.c.b16 %v8805, %v8804
        %v8852 = vpack.c.b16 %v8807, %v8806
        %v8853 = vpack.c.b16 %v8809, %v8808
        %v8854 = vpack.c.b16 %v8811, %v8810
        %v8855 = vpack.c.b16 %v8813, %v8812
        %v8856 = vpack.c.b16 %v8815, %v8814
        %v8857 = vpack.c.b16 %v8817, %v8816
        %v8858 = vpack.c.b16 %v8819, %v8818
        %v8859 = vpack.c.b16 %v8821, %v8820
        %v8860 = vpack.c.b16 %v8823, %v8822
        %v8861 = vpack.c.b16 %v8825, %v8824
        %v8862 = vpack.c.b16 %v8827, %v8826
        %v8863 = vpack.c.b16 %v8829, %v8828
        %v8864 = vpack.c.b16 %v8831, %v8830
        %v8865 = vpack.c.b16 %v8833, %v8832
        %v8866 = vpack.c.b16 %v8835, %v8834
        %v8867 = vpack.c.b16 %v8837, %v8836
        %v8868 = vpack.c.b16 %v8839, %v8838
        %v8869 = vpack.c.b16 %v8841, %v8840
        %v8870 = vpack.c.b16 %v8843, %v8842
        %v8871 = vpack.c.b16 %v8845, %v8844
        %v8872 = vpack.c.b16 %v8847, %v8846
        %v8873 = vpack.c.b16 %v8849, %v8848
        %8898 = vmatprep.subr.bf16.mxu0 0
        %8899 = vmatpush1.bf16.msra.mxu0 %v8850
        %8900 = vmatprep.subr.bf16.mxu0 0
        %8901 = vmatpush1.bf16.msra.mxu0 %v8851
        %8902 = vmatprep.subr.bf16.mxu0 0
        %8903 = vmatpush1.bf16.msra.mxu0 %v8852
        %8904 = vmatprep.subr.bf16.mxu0 0
        %8905 = vmatpush1.bf16.msra.mxu0 %v8853
        %8906 = vmatprep.subr.bf16.mxu0 0
        %8907 = vmatpush1.bf16.msra.mxu0 %v8854
        %8908 = vmatprep.subr.bf16.mxu0 0
        %8909 = vmatpush1.bf16.msra.mxu0 %v8855
        %8910 = vmatprep.subr.bf16.mxu0 0
        %8911 = vmatpush1.bf16.msra.mxu0 %v8856
        %8912 = vmatprep.subr.bf16.mxu0 0
        %8913 = vmatpush1.bf16.msra.mxu0 %v8857
        %8914 = vmatprep.subr.bf16.mxu0 0
        %8915 = vmatpush1.bf16.msra.mxu0 %v8858
        %8916 = vmatprep.subr.bf16.mxu0 0
        %8917 = vmatpush1.bf16.msra.mxu0 %v8859
        %8918 = vmatprep.subr.bf16.mxu0 0
        %8919 = vmatpush1.bf16.msra.mxu0 %v8860
        %8920 = vmatprep.subr.bf16.mxu0 0
        %8921 = vmatpush1.bf16.msra.mxu0 %v8861
        %8922 = vmatprep.subr.bf16.mxu0 0
        %8923 = vmatpush1.bf16.msra.mxu0 %v8862
        %8924 = vmatprep.subr.bf16.mxu0 0
        %8925 = vmatpush1.bf16.msra.mxu0 %v8863
        %8926 = vmatprep.subr.bf16.mxu0 0
        %8927 = vmatpush1.bf16.msra.mxu0 %v8864
        %8928 = vmatprep.subr.bf16.mxu0 0
        %8929 = vmatpush1.bf16.msra.mxu0 %v8865
        %8930 = vmatprep.mubr.bf16.mxu0 %v7763
        %8931 = vmatmul.mubr.bf16.gmra.mrb[0].mxu0 %v7666
        %v8932 = vpop.f32.mrb[0].mxu0
        %v8933 = vadd.f32 0.0, %v8932
        %v8934 = vpop.f32.mrb[0].mxu0
        %v8935 = vpop.f32.mrb[0].mxu0
        %v8936 = vadd.f32 0.0, %v8935
        %v8937 = vpop.f32.mrb[0].mxu0
        %8938 = vmatprep.mubr.bf16.mxu0 %v7775
        %8939 = vmatmul.mubr.bf16.gmra.mrb[0].mxu0 %v7668
        %v8940 = vpop.f32.mrb[0].mxu0
        %v8941 = vadd.f32 0.0, %v8940
        %v8942 = vpop.f32.mrb[0].mxu0
        %v8943 = vpop.f32.mrb[0].mxu0
        %v8944 = vadd.f32 0.0, %v8943
        %v8945 = vpop.f32.mrb[0].mxu0
        %8946 = vmatprep.mubr.bf16.mxu0 %v7787
        %8947 = vmatmul.mubr.bf16.gmra.mrb[0].mxu0 %v7670
        %v8948 = vpop.f32.mrb[0].mxu0
        %v8949 = vadd.f32 0.0, %v8948
        %v8950 = vpop.f32.mrb[0].mxu0
        %v8951 = vpop.f32.mrb[0].mxu0
        %v8952 = vadd.f32 0.0, %v8951
        %v8953 = vpop.f32.mrb[0].mxu0
        %8954 = vmatprep.mubr.bf16.mxu0 %v7799
        %8955 = vmatmul.mubr.bf16.gmra.mrb[0].mxu0 %v7672
        %v8956 = vpop.f32.mrb[0].mxu0
        %v8957 = vadd.f32 0.0, %v8956
        %v8958 = vpop.f32.mrb[0].mxu0
        %v8959 = vpop.f32.mrb[0].mxu0
        %v8960 = vadd.f32 0.0, %v8959
        %v8961 = vpop.f32.mrb[0].mxu0
        %8962 = vmatprep.mubr.bf16.mxu0 %v7811
        %8963 = vmatmul.mubr.bf16.gmra.mrb[0].mxu0 %v7674
        %v8964 = vpop.f32.mrb[0].mxu0
        %v8965 = vadd.f32 0.0, %v8964
        %v8966 = vpop.f32.mrb[0].mxu0
        %v8967 = vpop.f32.mrb[0].mxu0
        %v8968 = vadd.f32 0.0, %v8967
        %v8969 = vpop.f32.mrb[0].mxu0
        %8970 = vmatprep.mubr.bf16.mxu0 %v7823
        %8971 = vmatmul.mubr.bf16.gmra.mrb[0].mxu0 %v7676
        %v8972 = vpop.f32.mrb[0].mxu0
        %v8973 = vadd.f32 0.0, %v8972
        %v8974 = vpop.f32.mrb[0].mxu0
        %v8975 = vpop.f32.mrb[0].mxu0
        %v8976 = vadd.f32 0.0, %v8975
        %v8977 = vpop.f32.mrb[0].mxu0
        %8978 = vmatprep.mubr.bf16.mxu0 %v7835
        %8979 = vmatmul.mubr.bf16.gmra.mrb[0].mxu0 %v7678
        %v8980 = vpop.f32.mrb[0].mxu0
        %v8981 = vadd.f32 0.0, %v8980
        %v8982 = vpop.f32.mrb[0].mxu0
        %v8983 = vpop.f32.mrb[0].mxu0
        %v8984 = vadd.f32 0.0, %v8983
        %v8985 = vpop.f32.mrb[0].mxu0
        %8986 = vmatprep.mubr.bf16.mxu0 %v7847
        %8987 = vmatmul.mubr.bf16.gmra.mrb[0].mxu0 %v7680
        %v8988 = vpop.f32.mrb[0].mxu0
        %v8989 = vadd.f32 0.0, %v8988
        %v8990 = vpop.f32.mrb[0].mxu0
        %v8991 = vpop.f32.mrb[0].mxu0
        %v8992 = vadd.f32 0.0, %v8991
        %v8993 = vpop.f32.mrb[0].mxu0
        %8994 = vmatprep.mubr.bf16.mxu0 %v7859
        %8995 = vmatmul.mubr.bf16.gmra.mrb[0].mxu0 %v7682
        %v8996 = vpop.f32.mrb[0].mxu0
        %v8997 = vadd.f32 0.0, %v8996
        %v8998 = vpop.f32.mrb[0].mxu0
        %v8999 = vpop.f32.mrb[0].mxu0
        %v9000 = vadd.f32 0.0, %v8999
        %v9001 = vpop.f32.mrb[0].mxu0
        %9002 = vmatprep.mubr.bf16.mxu0 %v7871
        %9003 = vmatmul.mubr.bf16.gmra.mrb[0].mxu0 %v7684
        %v9004 = vpop.f32.mrb[0].mxu0
        %v9005 = vadd.f32 0.0, %v9004
        %v9006 = vpop.f32.mrb[0].mxu0
        %v9007 = vpop.f32.mrb[0].mxu0
        %v9008 = vadd.f32 0.0, %v9007
        %v9009 = vpop.f32.mrb[0].mxu0
        %9010 = vmatprep.mubr.bf16.mxu0 %v7883
        %9011 = vmatmul.mubr.bf16.gmra.mrb[0].mxu0 %v7686
        %v9012 = vpop.f32.mrb[0].mxu0
        %v9013 = vadd.f32 0.0, %v9012
        %v9014 = vpop.f32.mrb[0].mxu0
        %v9015 = vpop.f32.mrb[0].mxu0
        %v9016 = vadd.f32 0.0, %v9015
        %v9017 = vpop.f32.mrb[0].mxu0
        %9018 = vmatprep.mubr.bf16.mxu0 %v7895
        %9019 = vmatmul.mubr.bf16.gmra.mrb[0].mxu0 %v7688
        %v9020 = vpop.f32.mrb[0].mxu0
        %v9021 = vadd.f32 0.0, %v9020
        %v9022 = vpop.f32.mrb[0].mxu0
        %v9023 = vpop.f32.mrb[0].mxu0
        %v9024 = vadd.f32 0.0, %v9023
        %v9025 = vpop.f32.mrb[0].mxu0
        %9026 = vmatprep.mubr.bf16.mxu0 %v7907
        %9027 = vmatmul.mubr.bf16.gmra.mrb[0].mxu0 %v7690
        %v9028 = vpop.f32.mrb[0].mxu0
        %v9029 = vadd.f32 0.0, %v9028
        %v9030 = vpop.f32.mrb[0].mxu0
        %v9031 = vpop.f32.mrb[0].mxu0
        %v9032 = vadd.f32 0.0, %v9031
        %v9033 = vpop.f32.mrb[0].mxu0
        %9034 = vmatprep.mubr.bf16.mxu0 %v7919
        %9035 = vmatmul.mubr.bf16.gmra.mrb[0].mxu0 %v7692
        %v9036 = vpop.f32.mrb[0].mxu0
        %v9037 = vadd.f32 0.0, %v9036
        %v9038 = vpop.f32.mrb[0].mxu0
        %v9039 = vpop.f32.mrb[0].mxu0
        %v9040 = vadd.f32 0.0, %v9039
        %v9041 = vpop.f32.mrb[0].mxu0
        %9042 = vmatprep.mubr.bf16.mxu0 %v7931
        %9043 = vmatmul.mubr.bf16.gmra.mrb[0].mxu0 %v7694
        %v9044 = vpop.f32.mrb[0].mxu0
        %v9045 = vadd.f32 0.0, %v9044
        %v9046 = vpop.f32.mrb[0].mxu0
        %v9047 = vpop.f32.mrb[0].mxu0
        %v9048 = vadd.f32 0.0, %v9047
        %v9049 = vpop.f32.mrb[0].mxu0
        %9050 = vmatprep.mubr.bf16.mxu0 %v8666
        %9051 = vmatmul.mubr.bf16.gmra.mrb[0].mxu0 %v7696
        %v9052 = vpop.f32.mrb[0].mxu0
        %v9053 = vadd.f32 0.0, %v9052
        %v9054 = vpop.f32.mrb[0].mxu0
        %v9055 = vpop.f32.mrb[0].mxu0
        %v9056 = vadd.f32 0.0, %v9055
        %v9057 = vpop.f32.mrb[0].mxu0
        %9058 = vdwg.mxu0
        %9059 = vmatprep.subr.bf16.mxu0 0
        %9060 = vmatpush1.bf16.msra.mxu0 %v8866
        %9061 = vmatprep.subr.bf16.mxu0 0
        %9062 = vmatpush1.bf16.msra.mxu0 %v8867
        %9063 = vmatprep.subr.bf16.mxu0 0
        %9064 = vmatpush1.bf16.msra.mxu0 %v8868
        %9065 = vmatprep.subr.bf16.mxu0 0
        %9066 = vmatpush1.bf16.msra.mxu0 %v8869
        %9067 = vmatprep.subr.bf16.mxu0 0
        %9068 = vmatpush1.bf16.msra.mxu0 %v8870
        %9069 = vmatprep.subr.bf16.mxu0 0
        %9070 = vmatpush1.bf16.msra.mxu0 %v8871
        %9071 = vmatprep.subr.bf16.mxu0 0
        %9072 = vmatpush1.bf16.msra.mxu0 %v8872
        %9073 = vmatprep.subr.bf16.mxu0 0
        %9074 = vmatpush1.bf16.msra.mxu0 %v8873
        %9075 = vmatprep.subr.bf16.mxu0 0
        %9076 = vmatpush1.bf16.msra.mxu0 0
        %9077 = vmatprep.subr.bf16.mxu0 0
        %9078 = vmatpush1.bf16.msra.mxu0 0
        %9079 = vmatprep.subr.bf16.mxu0 0
        %9080 = vmatpush1.bf16.msra.mxu0 0
        %9081 = vmatprep.subr.bf16.mxu0 0
        %9082 = vmatpush1.bf16.msra.mxu0 0
        %9083 = vmatprep.subr.bf16.mxu0 0
        %9084 = vmatpush1.bf16.msra.mxu0 0
        %9085 = vmatprep.subr.bf16.mxu0 0
        %9086 = vmatpush1.bf16.msra.mxu0 0
        %9087 = vmatprep.subr.bf16.mxu0 0
        %9088 = vmatpush1.bf16.msra.mxu0 0
        %9089 = vmatprep.subr.bf16.mxu0 0
        %9090 = vmatpush1.bf16.msra.mxu0 0
        %9091 = vmatprep.mubr.bf16.mxu0 0
        %9092 = vmatmul.mubr.bf16.gmra.mrb[0].mxu0 %v7986
        %v9093 = vpop.f32.mrb[0].mxu0
        %v9094 = vadd.f32 %v8933, %v9093
        %v9095 = vpop.f32.mrb[0].mxu0
        %v9096 = vpop.f32.mrb[0].mxu0
        %v9097 = vadd.f32 %v8936, %v9096
        %v9098 = vpop.f32.mrb[0].mxu0
        %9099 = vmatprep.mubr.bf16.mxu0 0
        %9100 = vmatmul.mubr.bf16.gmra.mrb[0].mxu0 %v7989
        %v9101 = vpop.f32.mrb[0].mxu0
        %v9102 = vadd.f32 %v8941, %v9101
        %v9103 = vpop.f32.mrb[0].mxu0
        %v9104 = vpop.f32.mrb[0].mxu0
        %v9105 = vadd.f32 %v8944, %v9104
        %v9106 = vpop.f32.mrb[0].mxu0
        %9107 = vmatprep.mubr.bf16.mxu0 0
        %9108 = vmatmul.mubr.bf16.gmra.mrb[0].mxu0 %v7992
        %v9109 = vpop.f32.mrb[0].mxu0
        %v9110 = vadd.f32 %v8949, %v9109
        %v9111 = vpop.f32.mrb[0].mxu0
        %v9112 = vpop.f32.mrb[0].mxu0
        %v9113 = vadd.f32 %v8952, %v9112
        %v9114 = vpop.f32.mrb[0].mxu0
        %9115 = vmatprep.mubr.bf16.mxu0 0
        %9116 = vmatmul.mubr.bf16.gmra.mrb[0].mxu0 %v7995
        %v9117 = vpop.f32.mrb[0].mxu0
        %v9118 = vadd.f32 %v8957, %v9117
        %v9119 = vpop.f32.mrb[0].mxu0
        %v9120 = vpop.f32.mrb[0].mxu0
        %v9121 = vadd.f32 %v8960, %v9120
        %v9122 = vpop.f32.mrb[0].mxu0
        %9123 = vmatprep.mubr.bf16.mxu0 0
        %9124 = vmatmul.mubr.bf16.gmra.mrb[0].mxu0 %v7998
        %v9125 = vpop.f32.mrb[0].mxu0
        %v9126 = vadd.f32 %v8965, %v9125
        %v9127 = vpop.f32.mrb[0].mxu0
        %v9128 = vpop.f32.mrb[0].mxu0
        %v9129 = vadd.f32 %v8968, %v9128
        %v9130 = vpop.f32.mrb[0].mxu0
        %9131 = vmatprep.mubr.bf16.mxu0 0
        %9132 = vmatmul.mubr.bf16.gmra.mrb[0].mxu0 %v8001
        %v9133 = vpop.f32.mrb[0].mxu0
        %v9134 = vadd.f32 %v8973, %v9133
        %v9135 = vpop.f32.mrb[0].mxu0
        %v9136 = vpop.f32.mrb[0].mxu0
        %v9137 = vadd.f32 %v8976, %v9136
        %v9138 = vpop.f32.mrb[0].mxu0
        %9139 = vmatprep.mubr.bf16.mxu0 0
        %9140 = vmatmul.mubr.bf16.gmra.mrb[0].mxu0 %v8004
        %v9141 = vpop.f32.mrb[0].mxu0
        %v9142 = vadd.f32 %v8981, %v9141
        %v9143 = vpop.f32.mrb[0].mxu0
        %v9144 = vpop.f32.mrb[0].mxu0
        %v9145 = vadd.f32 %v8984, %v9144
        %v9146 = vpop.f32.mrb[0].mxu0
        %9147 = vmatprep.mubr.bf16.mxu0 0
        %9148 = vmatmul.mubr.bf16.gmra.mrb[0].mxu0 %v8007
        %v9149 = vpop.f32.mrb[0].mxu0
        %v9150 = vadd.f32 %v8989, %v9149
        %v9151 = vpop.f32.mrb[0].mxu0
        %v9152 = vpop.f32.mrb[0].mxu0
        %v9153 = vadd.f32 %v8992, %v9152
        %v9154 = vpop.f32.mrb[0].mxu0
        %9155 = vmatprep.mubr.bf16.mxu0 0
        %9156 = vmatmul.mubr.bf16.gmra.mrb[0].mxu0 %v8010
        %v9157 = vpop.f32.mrb[0].mxu0
        %v9158 = vadd.f32 %v8997, %v9157
        %v9159 = vpop.f32.mrb[0].mxu0
        %v9160 = vpop.f32.mrb[0].mxu0
        %v9161 = vadd.f32 %v9000, %v9160
        %v9162 = vpop.f32.mrb[0].mxu0
        %9163 = vmatprep.mubr.bf16.mxu0 0
        %9164 = vmatmul.mubr.bf16.gmra.mrb[0].mxu0 %v8013
        %v9165 = vpop.f32.mrb[0].mxu0
        %v9166 = vadd.f32 %v9005, %v9165
        %v9167 = vpop.f32.mrb[0].mxu0
        %v9168 = vpop.f32.mrb[0].mxu0
        %v9169 = vadd.f32 %v9008, %v9168
        %v9170 = vpop.f32.mrb[0].mxu0
        %9171 = vmatprep.mubr.bf16.mxu0 0
        %9172 = vmatmul.mubr.bf16.gmra.mrb[0].mxu0 %v8016
        %v9173 = vpop.f32.mrb[0].mxu0
        %v9174 = vadd.f32 %v9013, %v9173
        %v9175 = vpop.f32.mrb[0].mxu0
        %v9176 = vpop.f32.mrb[0].mxu0
        %v9177 = vadd.f32 %v9016, %v9176
        %v9178 = vpop.f32.mrb[0].mxu0
        %9179 = vmatprep.mubr.bf16.mxu0 0
        %9180 = vmatmul.mubr.bf16.gmra.mrb[0].mxu0 %v8019
        %v9181 = vpop.f32.mrb[0].mxu0
        %v9182 = vadd.f32 %v9021, %v9181
        %v9183 = vpop.f32.mrb[0].mxu0
        %v9184 = vpop.f32.mrb[0].mxu0
        %v9185 = vadd.f32 %v9024, %v9184
        %v9186 = vpop.f32.mrb[0].mxu0
        %9187 = vmatprep.mubr.bf16.mxu0 0
        %9188 = vmatmul.mubr.bf16.gmra.mrb[0].mxu0 %v8022
        %v9189 = vpop.f32.mrb[0].mxu0
        %v9190 = vadd.f32 %v9029, %v9189
        %v9191 = vpop.f32.mrb[0].mxu0
        %v9192 = vpop.f32.mrb[0].mxu0
        %v9193 = vadd.f32 %v9032, %v9192
        %v9194 = vpop.f32.mrb[0].mxu0
        %9195 = vmatprep.mubr.bf16.mxu0 0
        %9196 = vmatmul.mubr.bf16.gmra.mrb[0].mxu0 %v8025
        %v9197 = vpop.f32.mrb[0].mxu0
        %v9198 = vadd.f32 %v9037, %v9197
        %v9199 = vpop.f32.mrb[0].mxu0
        %v9200 = vpop.f32.mrb[0].mxu0
        %v9201 = vadd.f32 %v9040, %v9200
        %v9202 = vpop.f32.mrb[0].mxu0
        %9203 = vmatprep.mubr.bf16.mxu0 0
        %9204 = vmatmul.mubr.bf16.gmra.mrb[0].mxu0 %v8028
        %v9205 = vpop.f32.mrb[0].mxu0
        %v9206 = vadd.f32 %v9045, %v9205
        %v9207 = vpop.f32.mrb[0].mxu0
        %v9208 = vpop.f32.mrb[0].mxu0
        %v9209 = vadd.f32 %v9048, %v9208
        %v9210 = vpop.f32.mrb[0].mxu0
        %9211 = vmatprep.mubr.bf16.mxu0 0
        %9212 = vmatmul.mubr.bf16.gmra.mrb[0].mxu0 %v8672
        %v9213 = vpop.f32.mrb[0].mxu0
        %v9214 = vadd.f32 %v9053, %v9213
        %v9215 = vpop.f32.mrb[0].mxu0
        %v9216 = vpop.f32.mrb[0].mxu0
        %v9217 = vadd.f32 %v9056, %v9216
        %v9218 = vpop.f32.mrb[0].mxu0
        %9219 = vdwg.mxu0
        %v9220 = vadd.f32 %v8722, %v9094
        %v9221 = vadd.f32 %v8723, %v9097
        %v9222 = vadd.f32 %v8724, %v9102
        %v9223 = vadd.f32 %v8725, %v9105
        %v9224 = vadd.f32 %v8726, %v9110
        %v9225 = vadd.f32 %v8727, %v9113
        %v9226 = vadd.f32 %v8728, %v9118
        %v9227 = vadd.f32 %v8729, %v9121
        %v9228 = vadd.f32 %v8730, %v9126
        %v9229 = vadd.f32 %v8731, %v9129
        %v9230 = vadd.f32 %v8732, %v9134
        %v9231 = vadd.f32 %v8733, %v9137
        %v9232 = vadd.f32 %v8734, %v9142
        %v9233 = vadd.f32 %v8735, %v9145
        %v9234 = vadd.f32 %v8736, %v9150
        %v9235 = vadd.f32 %v8737, %v9153
        %v9236 = vadd.f32 %v8738, %v9158
        %v9237 = vadd.f32 %v8739, %v9161
        %v9238 = vadd.f32 %v8740, %v9166
        %v9239 = vadd.f32 %v8741, %v9169
        %v9240 = vadd.f32 %v8742, %v9174
        %v9241 = vadd.f32 %v8743, %v9177
        %v9242 = vadd.f32 %v8744, %v9182
        %v9243 = vadd.f32 %v8745, %v9185
        %v9244 = vadd.f32 %v8746, %v9190
        %v9245 = vadd.f32 %v8747, %v9193
        %v9246 = vadd.f32 %v8748, %v9198
        %v9247 = vadd.f32 %v8749, %v9201
        %v9248 = vadd.f32 %v8750, %v9206
        %v9249 = vadd.f32 %v8751, %v9209
        %v9250 = vadd.f32 %v8752, %v9214
        %v9251 = vadd.f32 %v8753, %v9217
        %9252 = vst [vmem:[#allocation3] sm:$0xff] %v9220
        %9253 = vst [vmem:[#allocation3 + $0x8] sm:$0xff] %v9221
        %9254 = vst [vmem:[#allocation3 + $0x10] sm:$0xff] %v9222
        %9255 = vst [vmem:[#allocation3 + $0x18] sm:$0xff] %v9223
        %9256 = vst [vmem:[#allocation3 + $0x20] sm:$0xff] %v9224
        %9257 = vst [vmem:[#allocation3 + $0x28] sm:$0xff] %v9225
        %9258 = vst [vmem:[#allocation3 + $0x30] sm:$0xff] %v9226
        %9259 = vst [vmem:[#allocation3 + $0x38] sm:$0xff] %v9227
        %9260 = vst [vmem:[#allocation3 + $0x40] sm:$0xff] %v9228
        %9261 = vst [vmem:[#allocation3 + $0x48] sm:$0xff] %v9229
        %9262 = vst [vmem:[#allocation3 + $0x50] sm:$0xff] %v9230
        %9263 = vst [vmem:[#allocation3 + $0x58] sm:$0xff] %v9231
        %9264 = vst [vmem:[#allocation3 + $0x60] sm:$0xff] %v9232
        %9265 = vst [vmem:[#allocation3 + $0x68] sm:$0xff] %v9233
        %9266 = vst [vmem:[#allocation3 + $0x70] sm:$0xff] %v9234
        %9267 = vst [vmem:[#allocation3 + $0x78] sm:$0xff] %v9235
        %9268 = vst [vmem:[#allocation3 + $0x80] sm:$0xff] %v9236
        %9269 = vst [vmem:[#allocation3 + $0x88] sm:$0xff] %v9237
        %9270 = vst [vmem:[#allocation3 + $0x90] sm:$0xff] %v9238
        %9271 = vst [vmem:[#allocation3 + $0x98] sm:$0xff] %v9239
        %9272 = vst [vmem:[#allocation3 + $0xa0] sm:$0xff] %v9240
        %9273 = vst [vmem:[#allocation3 + $0xa8] sm:$0xff] %v9241
        %9274 = vst [vmem:[#allocation3 + $0xb0] sm:$0xff] %v9242
        %9275 = vst [vmem:[#allocation3 + $0xb8] sm:$0xff] %v9243
        %9276 = vst [vmem:[#allocation3 + $0xc0] sm:$0xff] %v9244
        %9277 = vst [vmem:[#allocation3 + $0xc8] sm:$0xff] %v9245
        %9278 = vst [vmem:[#allocation3 + $0xd0] sm:$0xff] %v9246
        %9279 = vst [vmem:[#allocation3 + $0xd8] sm:$0xff] %v9247
        %9280 = vst [vmem:[#allocation3 + $0xe0] sm:$0xff] %v9248
        %9281 = vst [vmem:[#allocation3 + $0xe8] sm:$0xff] %v9249
        %9282 = vst [vmem:[#allocation3 + $0xf0] sm:$0xff] %v9250
        %9283 = vst [vmem:[#allocation3 + $0xf8] sm:$0xff] %v9251
        %v9285 = vshrl.u32 %v7698, 16
        %v9287 = vshll.u32 %v7698, 16
        %v9289 = vrot.slane %v9287, 1
        %v9290 = vor.u32 %v9285, %v9289
        %v9292 = vshll.u32 %v7699, 16
        %v9294 = vrot.slane %v9292, 1
        %v9295 = vsel %vm7739, %v9290, %v9294
        %v9299 = vrot.slane %v7698, 1
        %v9300 = vrot.slane %v7699, 1
        %v9301 = vsel %vm7980, %v9299, %v9300
        %v9303 = vld [vmem:[%s4 + $0x180] sm:$0xf]
        %v9304 = vld [vmem:[%s4 + $0x184] sm:$0xf]
        %v9305 = vld [vmem:[%s4 + $0x188] sm:$0xf]
        %v9306 = vld [vmem:[%s4 + $0x18c] sm:$0xf]
        %v9307 = vld [vmem:[%s4 + $0x190] sm:$0xf]
        %v9308 = vld [vmem:[%s4 + $0x194] sm:$0xf]
        %v9309 = vld [vmem:[%s4 + $0x198] sm:$0xf]
        %v9310 = vld [vmem:[%s4 + $0x19c] sm:$0xf]
        %v9311 = vld [vmem:[%s4 + $0x1a0] sm:$0xf]
        %v9312 = vld [vmem:[%s4 + $0x1a4] sm:$0xf]
        %v9313 = vld [vmem:[%s4 + $0x1a8] sm:$0xf]
        %v9314 = vld [vmem:[%s4 + $0x1ac] sm:$0xf]
        %v9315 = vld [vmem:[%s4 + $0x1b0] sm:$0xf]
        %v9316 = vld [vmem:[%s4 + $0x1b4] sm:$0xf]
        %v9317 = vld [vmem:[%s4 + $0x1b8] sm:$0xf]
        %v9318 = vld [vmem:[%s4 + $0x1bc] sm:$0xf]
        %v9319 = vld [vmem:[%s4 + $0x1c0] sm:$0xf]
        %v9320 = vld [vmem:[%s4 + $0x1c4] sm:$0xf]
        %v9321 = vld [vmem:[%s4 + $0x1c8] sm:$0xf]
        %v9322 = vld [vmem:[%s4 + $0x1cc] sm:$0xf]
        %v9323 = vld [vmem:[%s4 + $0x1d0] sm:$0xf]
        %v9324 = vld [vmem:[%s4 + $0x1d4] sm:$0xf]
        %v9325 = vld [vmem:[%s4 + $0x1d8] sm:$0xf]
        %v9326 = vld [vmem:[%s4 + $0x1dc] sm:$0xf]
        %v9327 = vld [vmem:[%s4 + $0x1e0] sm:$0xf]
        %v9328 = vld [vmem:[%s4 + $0x1e4] sm:$0xf]
        %v9329 = vld [vmem:[%s4 + $0x1e8] sm:$0xf]
        %v9330 = vld [vmem:[%s4 + $0x1ec] sm:$0xf]
        %v9331 = vld [vmem:[%s4 + $0x1f0] sm:$0xf]
        %v9332 = vld [vmem:[%s4 + $0x1f4] sm:$0xf]
        %v9333 = vld [vmem:[%s4 + $0x1f8] sm:$0xf]
        %v9334 = vld [vmem:[%s4 + $0x1fc] sm:$0xf]
        %v9335 = vld [vmem:[%s4 + $0x200] sm:$0xf]
        %v9336 = vld [vmem:[%s4 + $0x204] sm:$0xf]
        %v9337 = vld [vmem:[%s4 + $0x208] sm:$0xf]
        %v9338 = vld [vmem:[%s4 + $0x20c] sm:$0xf]
        %v9339 = vld [vmem:[%s4 + $0x210] sm:$0xf]
        %v9340 = vld [vmem:[%s4 + $0x214] sm:$0xf]
        %v9341 = vld [vmem:[%s4 + $0x218] sm:$0xf]
        %v9342 = vld [vmem:[%s4 + $0x21c] sm:$0xf]
        %v9343 = vld [vmem:[%s4 + $0x220] sm:$0xf]
        %v9344 = vld [vmem:[%s4 + $0x224] sm:$0xf]
        %v9345 = vld [vmem:[%s4 + $0x228] sm:$0xf]
        %v9346 = vld [vmem:[%s4 + $0x22c] sm:$0xf]
        %v9347 = vld [vmem:[%s4 + $0x230] sm:$0xf]
        %v9348 = vld [vmem:[%s4 + $0x234] sm:$0xf]
        %v9349 = vld [vmem:[%s4 + $0x238] sm:$0xf]
        %v9350 = vld [vmem:[%s4 + $0x23c] sm:$0xf]
        %v9351 = vld [vmem:[#allocation3] sm:$0xff]
        %v9352 = vld [vmem:[#allocation3 + $0x8] sm:$0xff]
        %v9353 = vld [vmem:[#allocation3 + $0x10] sm:$0xff]
        %v9354 = vld [vmem:[#allocation3 + $0x18] sm:$0xff]
        %v9355 = vld [vmem:[#allocation3 + $0x20] sm:$0xff]
        %v9356 = vld [vmem:[#allocation3 + $0x28] sm:$0xff]
        %v9357 = vld [vmem:[#allocation3 + $0x30] sm:$0xff]
        %v9358 = vld [vmem:[#allocation3 + $0x38] sm:$0xff]
        %v9359 = vld [vmem:[#allocation3 + $0x40] sm:$0xff]
        %v9360 = vld [vmem:[#allocation3 + $0x48] sm:$0xff]
        %v9361 = vld [vmem:[#allocation3 + $0x50] sm:$0xff]
        %v9362 = vld [vmem:[#allocation3 + $0x58] sm:$0xff]
        %v9363 = vld [vmem:[#allocation3 + $0x60] sm:$0xff]
        %v9364 = vld [vmem:[#allocation3 + $0x68] sm:$0xff]
        %v9365 = vld [vmem:[#allocation3 + $0x70] sm:$0xff]
        %v9366 = vld [vmem:[#allocation3 + $0x78] sm:$0xff]
        %v9367 = vld [vmem:[#allocation3 + $0x80] sm:$0xff]
        %v9368 = vld [vmem:[#allocation3 + $0x88] sm:$0xff]
        %v9369 = vld [vmem:[#allocation3 + $0x90] sm:$0xff]
        %v9370 = vld [vmem:[#allocation3 + $0x98] sm:$0xff]
        %v9371 = vld [vmem:[#allocation3 + $0xa0] sm:$0xff]
        %v9372 = vld [vmem:[#allocation3 + $0xa8] sm:$0xff]
        %v9373 = vld [vmem:[#allocation3 + $0xb0] sm:$0xff]
        %v9374 = vld [vmem:[#allocation3 + $0xb8] sm:$0xff]
        %v9375 = vld [vmem:[#allocation3 + $0xc0] sm:$0xff]
        %v9376 = vld [vmem:[#allocation3 + $0xc8] sm:$0xff]
        %v9377 = vld [vmem:[#allocation3 + $0xd0] sm:$0xff]
        %v9378 = vld [vmem:[#allocation3 + $0xd8] sm:$0xff]
        %v9379 = vld [vmem:[#allocation3 + $0xe0] sm:$0xff]
        %v9380 = vld [vmem:[#allocation3 + $0xe8] sm:$0xff]
        %v9381 = vld [vmem:[#allocation3 + $0xf0] sm:$0xff]
        %v9382 = vld [vmem:[#allocation3 + $0xf8] sm:$0xff]
        %v9431 = vunpack.c.l.b16 %v9303
        %v9432 = vunpack.c.l.b16 %v9304
        %v9433 = vunpack.c.l.b16 %v9305
        %v9434 = vunpack.c.l.b16 %v9306
        %v9435 = vunpack.c.l.b16 %v9307
        %v9436 = vunpack.c.l.b16 %v9308
        %v9437 = vunpack.c.l.b16 %v9309
        %v9438 = vunpack.c.l.b16 %v9310
        %v9439 = vunpack.c.l.b16 %v9311
        %v9440 = vunpack.c.l.b16 %v9312
        %v9441 = vunpack.c.l.b16 %v9313
        %v9442 = vunpack.c.l.b16 %v9314
        %v9443 = vunpack.c.l.b16 %v9315
        %v9444 = vunpack.c.l.b16 %v9316
        %v9445 = vunpack.c.l.b16 %v9317
        %v9446 = vunpack.c.l.b16 %v9318
        %v9447 = vunpack.c.l.b16 %v9319
        %v9448 = vunpack.c.l.b16 %v9320
        %v9449 = vunpack.c.l.b16 %v9321
        %v9450 = vunpack.c.l.b16 %v9322
        %v9451 = vunpack.c.l.b16 %v9323
        %v9452 = vunpack.c.l.b16 %v9324
        %v9453 = vunpack.c.l.b16 %v9325
        %v9454 = vunpack.c.l.b16 %v9326
        %v9455 = vunpack.c.l.b16 %v9327
        %v9456 = vunpack.c.l.b16 %v9328
        %v9457 = vunpack.c.l.b16 %v9329
        %v9458 = vunpack.c.l.b16 %v9330
        %v9459 = vunpack.c.l.b16 %v9331
        %v9460 = vunpack.c.l.b16 %v9332
        %v9461 = vunpack.c.l.b16 %v9333
        %v9462 = vunpack.c.l.b16 %v9334
        %v9463 = vunpack.c.l.b16 %v9335
        %v9464 = vunpack.c.l.b16 %v9336
        %v9465 = vunpack.c.l.b16 %v9337
        %v9466 = vunpack.c.l.b16 %v9338
        %v9467 = vunpack.c.l.b16 %v9339
        %v9468 = vunpack.c.l.b16 %v9340
        %v9469 = vunpack.c.l.b16 %v9341
        %v9470 = vunpack.c.l.b16 %v9342
        %v9471 = vunpack.c.l.b16 %v9343
        %v9472 = vunpack.c.l.b16 %v9344
        %v9473 = vunpack.c.l.b16 %v9345
        %v9474 = vunpack.c.l.b16 %v9346
        %v9475 = vunpack.c.l.b16 %v9347
        %v9476 = vunpack.c.l.b16 %v9348
        %v9477 = vunpack.c.l.b16 %v9349
        %v9478 = vunpack.c.l.b16 %v9350
        %v9479 = vpack.c.b16 %v9432, %v9431
        %v9480 = vpack.c.b16 %v9434, %v9433
        %v9481 = vpack.c.b16 %v9436, %v9435
        %v9482 = vpack.c.b16 %v9438, %v9437
        %v9483 = vpack.c.b16 %v9440, %v9439
        %v9484 = vpack.c.b16 %v9442, %v9441
        %v9485 = vpack.c.b16 %v9444, %v9443
        %v9486 = vpack.c.b16 %v9446, %v9445
        %v9487 = vpack.c.b16 %v9448, %v9447
        %v9488 = vpack.c.b16 %v9450, %v9449
        %v9489 = vpack.c.b16 %v9452, %v9451
        %v9490 = vpack.c.b16 %v9454, %v9453
        %v9491 = vpack.c.b16 %v9456, %v9455
        %v9492 = vpack.c.b16 %v9458, %v9457
        %v9493 = vpack.c.b16 %v9460, %v9459
        %v9494 = vpack.c.b16 %v9462, %v9461
        %v9495 = vpack.c.b16 %v9464, %v9463
        %v9496 = vpack.c.b16 %v9466, %v9465
        %v9497 = vpack.c.b16 %v9468, %v9467
        %v9498 = vpack.c.b16 %v9470, %v9469
        %v9499 = vpack.c.b16 %v9472, %v9471
        %v9500 = vpack.c.b16 %v9474, %v9473
        %v9501 = vpack.c.b16 %v9476, %v9475
        %v9502 = vpack.c.b16 %v9478, %v9477
        %9527 = vmatprep.subr.bf16.mxu0 0
        %9528 = vmatpush1.bf16.msra.mxu0 %v9479
        %9529 = vmatprep.subr.bf16.mxu0 0
        %9530 = vmatpush1.bf16.msra.mxu0 %v9480
        %9531 = vmatprep.subr.bf16.mxu0 0
        %9532 = vmatpush1.bf16.msra.mxu0 %v9481
        %9533 = vmatprep.subr.bf16.mxu0 0
        %9534 = vmatpush1.bf16.msra.mxu0 %v9482
        %9535 = vmatprep.subr.bf16.mxu0 0
        %9536 = vmatpush1.bf16.msra.mxu0 %v9483
        %9537 = vmatprep.subr.bf16.mxu0 0
        %9538 = vmatpush1.bf16.msra.mxu0 %v9484
        %9539 = vmatprep.subr.bf16.mxu0 0
        %9540 = vmatpush1.bf16.msra.mxu0 %v9485
        %9541 = vmatprep.subr.bf16.mxu0 0
        %9542 = vmatpush1.bf16.msra.mxu0 %v9486
        %9543 = vmatprep.subr.bf16.mxu0 0
        %9544 = vmatpush1.bf16.msra.mxu0 %v9487
        %9545 = vmatprep.subr.bf16.mxu0 0
        %9546 = vmatpush1.bf16.msra.mxu0 %v9488
        %9547 = vmatprep.subr.bf16.mxu0 0
        %9548 = vmatpush1.bf16.msra.mxu0 %v9489
        %9549 = vmatprep.subr.bf16.mxu0 0
        %9550 = vmatpush1.bf16.msra.mxu0 %v9490
        %9551 = vmatprep.subr.bf16.mxu0 0
        %9552 = vmatpush1.bf16.msra.mxu0 %v9491
        %9553 = vmatprep.subr.bf16.mxu0 0
        %9554 = vmatpush1.bf16.msra.mxu0 %v9492
        %9555 = vmatprep.subr.bf16.mxu0 0
        %9556 = vmatpush1.bf16.msra.mxu0 %v9493
        %9557 = vmatprep.subr.bf16.mxu0 0
        %9558 = vmatpush1.bf16.msra.mxu0 %v9494
        %9559 = vmatprep.mubr.bf16.mxu0 %v7775
        %9560 = vmatmul.mubr.bf16.gmra.mrb[0].mxu0 %v7668
        %v9561 = vpop.f32.mrb[0].mxu0
        %v9562 = vadd.f32 0.0, %v9561
        %v9563 = vpop.f32.mrb[0].mxu0
        %v9564 = vpop.f32.mrb[0].mxu0
        %v9565 = vadd.f32 0.0, %v9564
        %v9566 = vpop.f32.mrb[0].mxu0
        %9567 = vmatprep.mubr.bf16.mxu0 %v7787
        %9568 = vmatmul.mubr.bf16.gmra.mrb[0].mxu0 %v7670
        %v9569 = vpop.f32.mrb[0].mxu0
        %v9570 = vadd.f32 0.0, %v9569
        %v9571 = vpop.f32.mrb[0].mxu0
        %v9572 = vpop.f32.mrb[0].mxu0
        %v9573 = vadd.f32 0.0, %v9572
        %v9574 = vpop.f32.mrb[0].mxu0
        %9575 = vmatprep.mubr.bf16.mxu0 %v7799
        %9576 = vmatmul.mubr.bf16.gmra.mrb[0].mxu0 %v7672
        %v9577 = vpop.f32.mrb[0].mxu0
        %v9578 = vadd.f32 0.0, %v9577
        %v9579 = vpop.f32.mrb[0].mxu0
        %v9580 = vpop.f32.mrb[0].mxu0
        %v9581 = vadd.f32 0.0, %v9580
        %v9582 = vpop.f32.mrb[0].mxu0
        %9583 = vmatprep.mubr.bf16.mxu0 %v7811
        %9584 = vmatmul.mubr.bf16.gmra.mrb[0].mxu0 %v7674
        %v9585 = vpop.f32.mrb[0].mxu0
        %v9586 = vadd.f32 0.0, %v9585
        %v9587 = vpop.f32.mrb[0].mxu0
        %v9588 = vpop.f32.mrb[0].mxu0
        %v9589 = vadd.f32 0.0, %v9588
        %v9590 = vpop.f32.mrb[0].mxu0
        %9591 = vmatprep.mubr.bf16.mxu0 %v7823
        %9592 = vmatmul.mubr.bf16.gmra.mrb[0].mxu0 %v7676
        %v9593 = vpop.f32.mrb[0].mxu0
        %v9594 = vadd.f32 0.0, %v9593
        %v9595 = vpop.f32.mrb[0].mxu0
        %v9596 = vpop.f32.mrb[0].mxu0
        %v9597 = vadd.f32 0.0, %v9596
        %v9598 = vpop.f32.mrb[0].mxu0
        %9599 = vmatprep.mubr.bf16.mxu0 %v7835
        %9600 = vmatmul.mubr.bf16.gmra.mrb[0].mxu0 %v7678
        %v9601 = vpop.f32.mrb[0].mxu0
        %v9602 = vadd.f32 0.0, %v9601
        %v9603 = vpop.f32.mrb[0].mxu0
        %v9604 = vpop.f32.mrb[0].mxu0
        %v9605 = vadd.f32 0.0, %v9604
        %v9606 = vpop.f32.mrb[0].mxu0
        %9607 = vmatprep.mubr.bf16.mxu0 %v7847
        %9608 = vmatmul.mubr.bf16.gmra.mrb[0].mxu0 %v7680
        %v9609 = vpop.f32.mrb[0].mxu0
        %v9610 = vadd.f32 0.0, %v9609
        %v9611 = vpop.f32.mrb[0].mxu0
        %v9612 = vpop.f32.mrb[0].mxu0
        %v9613 = vadd.f32 0.0, %v9612
        %v9614 = vpop.f32.mrb[0].mxu0
        %9615 = vmatprep.mubr.bf16.mxu0 %v7859
        %9616 = vmatmul.mubr.bf16.gmra.mrb[0].mxu0 %v7682
        %v9617 = vpop.f32.mrb[0].mxu0
        %v9618 = vadd.f32 0.0, %v9617
        %v9619 = vpop.f32.mrb[0].mxu0
        %v9620 = vpop.f32.mrb[0].mxu0
        %v9621 = vadd.f32 0.0, %v9620
        %v9622 = vpop.f32.mrb[0].mxu0
        %9623 = vmatprep.mubr.bf16.mxu0 %v7871
        %9624 = vmatmul.mubr.bf16.gmra.mrb[0].mxu0 %v7684
        %v9625 = vpop.f32.mrb[0].mxu0
        %v9626 = vadd.f32 0.0, %v9625
        %v9627 = vpop.f32.mrb[0].mxu0
        %v9628 = vpop.f32.mrb[0].mxu0
        %v9629 = vadd.f32 0.0, %v9628
        %v9630 = vpop.f32.mrb[0].mxu0
        %9631 = vmatprep.mubr.bf16.mxu0 %v7883
        %9632 = vmatmul.mubr.bf16.gmra.mrb[0].mxu0 %v7686
        %v9633 = vpop.f32.mrb[0].mxu0
        %v9634 = vadd.f32 0.0, %v9633
        %v9635 = vpop.f32.mrb[0].mxu0
        %v9636 = vpop.f32.mrb[0].mxu0
        %v9637 = vadd.f32 0.0, %v9636
        %v9638 = vpop.f32.mrb[0].mxu0
        %9639 = vmatprep.mubr.bf16.mxu0 %v7895
        %9640 = vmatmul.mubr.bf16.gmra.mrb[0].mxu0 %v7688
        %v9641 = vpop.f32.mrb[0].mxu0
        %v9642 = vadd.f32 0.0, %v9641
        %v9643 = vpop.f32.mrb[0].mxu0
        %v9644 = vpop.f32.mrb[0].mxu0
        %v9645 = vadd.f32 0.0, %v9644
        %v9646 = vpop.f32.mrb[0].mxu0
        %9647 = vmatprep.mubr.bf16.mxu0 %v7907
        %9648 = vmatmul.mubr.bf16.gmra.mrb[0].mxu0 %v7690
        %v9649 = vpop.f32.mrb[0].mxu0
        %v9650 = vadd.f32 0.0, %v9649
        %v9651 = vpop.f32.mrb[0].mxu0
        %v9652 = vpop.f32.mrb[0].mxu0
        %v9653 = vadd.f32 0.0, %v9652
        %v9654 = vpop.f32.mrb[0].mxu0
        %9655 = vmatprep.mubr.bf16.mxu0 %v7919
        %9656 = vmatmul.mubr.bf16.gmra.mrb[0].mxu0 %v7692
        %v9657 = vpop.f32.mrb[0].mxu0
        %v9658 = vadd.f32 0.0, %v9657
        %v9659 = vpop.f32.mrb[0].mxu0
        %v9660 = vpop.f32.mrb[0].mxu0
        %v9661 = vadd.f32 0.0, %v9660
        %v9662 = vpop.f32.mrb[0].mxu0
        %9663 = vmatprep.mubr.bf16.mxu0 %v7931
        %9664 = vmatmul.mubr.bf16.gmra.mrb[0].mxu0 %v7694
        %v9665 = vpop.f32.mrb[0].mxu0
        %v9666 = vadd.f32 0.0, %v9665
        %v9667 = vpop.f32.mrb[0].mxu0
        %v9668 = vpop.f32.mrb[0].mxu0
        %v9669 = vadd.f32 0.0, %v9668
        %v9670 = vpop.f32.mrb[0].mxu0
        %9671 = vmatprep.mubr.bf16.mxu0 %v8666
        %9672 = vmatmul.mubr.bf16.gmra.mrb[0].mxu0 %v7696
        %v9673 = vpop.f32.mrb[0].mxu0
        %v9674 = vadd.f32 0.0, %v9673
        %v9675 = vpop.f32.mrb[0].mxu0
        %v9676 = vpop.f32.mrb[0].mxu0
        %v9677 = vadd.f32 0.0, %v9676
        %v9678 = vpop.f32.mrb[0].mxu0
        %9679 = vmatprep.mubr.bf16.mxu0 %v9295
        %9680 = vmatmul.mubr.bf16.gmra.mrb[0].mxu0 %v7698
        %v9681 = vpop.f32.mrb[0].mxu0
        %v9682 = vadd.f32 0.0, %v9681
        %v9683 = vpop.f32.mrb[0].mxu0
        %v9684 = vpop.f32.mrb[0].mxu0
        %v9685 = vadd.f32 0.0, %v9684
        %v9686 = vpop.f32.mrb[0].mxu0
        %9687 = vdwg.mxu0
        %9688 = vmatprep.subr.bf16.mxu0 0
        %9689 = vmatpush1.bf16.msra.mxu0 %v9495
        %9690 = vmatprep.subr.bf16.mxu0 0
        %9691 = vmatpush1.bf16.msra.mxu0 %v9496
        %9692 = vmatprep.subr.bf16.mxu0 0
        %9693 = vmatpush1.bf16.msra.mxu0 %v9497
        %9694 = vmatprep.subr.bf16.mxu0 0
        %9695 = vmatpush1.bf16.msra.mxu0 %v9498
        %9696 = vmatprep.subr.bf16.mxu0 0
        %9697 = vmatpush1.bf16.msra.mxu0 %v9499
        %9698 = vmatprep.subr.bf16.mxu0 0
        %9699 = vmatpush1.bf16.msra.mxu0 %v9500
        %9700 = vmatprep.subr.bf16.mxu0 0
        %9701 = vmatpush1.bf16.msra.mxu0 %v9501
        %9702 = vmatprep.subr.bf16.mxu0 0
        %9703 = vmatpush1.bf16.msra.mxu0 %v9502
        %9704 = vmatprep.subr.bf16.mxu0 0
        %9705 = vmatpush1.bf16.msra.mxu0 0
        %9706 = vmatprep.subr.bf16.mxu0 0
        %9707 = vmatpush1.bf16.msra.mxu0 0
        %9708 = vmatprep.subr.bf16.mxu0 0
        %9709 = vmatpush1.bf16.msra.mxu0 0
        %9710 = vmatprep.subr.bf16.mxu0 0
        %9711 = vmatpush1.bf16.msra.mxu0 0
        %9712 = vmatprep.subr.bf16.mxu0 0
        %9713 = vmatpush1.bf16.msra.mxu0 0
        %9714 = vmatprep.subr.bf16.mxu0 0
        %9715 = vmatpush1.bf16.msra.mxu0 0
        %9716 = vmatprep.subr.bf16.mxu0 0
        %9717 = vmatpush1.bf16.msra.mxu0 0
        %9718 = vmatprep.subr.bf16.mxu0 0
        %9719 = vmatpush1.bf16.msra.mxu0 0
        %9720 = vmatprep.mubr.bf16.mxu0 0
        %9721 = vmatmul.mubr.bf16.gmra.mrb[0].mxu0 %v7989
        %v9722 = vpop.f32.mrb[0].mxu0
        %v9723 = vadd.f32 %v9562, %v9722
        %v9724 = vpop.f32.mrb[0].mxu0
        %v9725 = vpop.f32.mrb[0].mxu0
        %v9726 = vadd.f32 %v9565, %v9725
        %v9727 = vpop.f32.mrb[0].mxu0
        %9728 = vmatprep.mubr.bf16.mxu0 0
        %9729 = vmatmul.mubr.bf16.gmra.mrb[0].mxu0 %v7992
        %v9730 = vpop.f32.mrb[0].mxu0
        %v9731 = vadd.f32 %v9570, %v9730
        %v9732 = vpop.f32.mrb[0].mxu0
        %v9733 = vpop.f32.mrb[0].mxu0
        %v9734 = vadd.f32 %v9573, %v9733
        %v9735 = vpop.f32.mrb[0].mxu0
        %9736 = vmatprep.mubr.bf16.mxu0 0
        %9737 = vmatmul.mubr.bf16.gmra.mrb[0].mxu0 %v7995
        %v9738 = vpop.f32.mrb[0].mxu0
        %v9739 = vadd.f32 %v9578, %v9738
        %v9740 = vpop.f32.mrb[0].mxu0
        %v9741 = vpop.f32.mrb[0].mxu0
        %v9742 = vadd.f32 %v9581, %v9741
        %v9743 = vpop.f32.mrb[0].mxu0
        %9744 = vmatprep.mubr.bf16.mxu0 0
        %9745 = vmatmul.mubr.bf16.gmra.mrb[0].mxu0 %v7998
        %v9746 = vpop.f32.mrb[0].mxu0
        %v9747 = vadd.f32 %v9586, %v9746
        %v9748 = vpop.f32.mrb[0].mxu0
        %v9749 = vpop.f32.mrb[0].mxu0
        %v9750 = vadd.f32 %v9589, %v9749
        %v9751 = vpop.f32.mrb[0].mxu0
        %9752 = vmatprep.mubr.bf16.mxu0 0
        %9753 = vmatmul.mubr.bf16.gmra.mrb[0].mxu0 %v8001
        %v9754 = vpop.f32.mrb[0].mxu0
        %v9755 = vadd.f32 %v9594, %v9754
        %v9756 = vpop.f32.mrb[0].mxu0
        %v9757 = vpop.f32.mrb[0].mxu0
        %v9758 = vadd.f32 %v9597, %v9757
        %v9759 = vpop.f32.mrb[0].mxu0
        %9760 = vmatprep.mubr.bf16.mxu0 0
        %9761 = vmatmul.mubr.bf16.gmra.mrb[0].mxu0 %v8004
        %v9762 = vpop.f32.mrb[0].mxu0
        %v9763 = vadd.f32 %v9602, %v9762
        %v9764 = vpop.f32.mrb[0].mxu0
        %v9765 = vpop.f32.mrb[0].mxu0
        %v9766 = vadd.f32 %v9605, %v9765
        %v9767 = vpop.f32.mrb[0].mxu0
        %9768 = vmatprep.mubr.bf16.mxu0 0
        %9769 = vmatmul.mubr.bf16.gmra.mrb[0].mxu0 %v8007
        %v9770 = vpop.f32.mrb[0].mxu0
        %v9771 = vadd.f32 %v9610, %v9770
        %v9772 = vpop.f32.mrb[0].mxu0
        %v9773 = vpop.f32.mrb[0].mxu0
        %v9774 = vadd.f32 %v9613, %v9773
        %v9775 = vpop.f32.mrb[0].mxu0
        %9776 = vmatprep.mubr.bf16.mxu0 0
        %9777 = vmatmul.mubr.bf16.gmra.mrb[0].mxu0 %v8010
        %v9778 = vpop.f32.mrb[0].mxu0
        %v9779 = vadd.f32 %v9618, %v9778
        %v9780 = vpop.f32.mrb[0].mxu0
        %v9781 = vpop.f32.mrb[0].mxu0
        %v9782 = vadd.f32 %v9621, %v9781
        %v9783 = vpop.f32.mrb[0].mxu0
        %9784 = vmatprep.mubr.bf16.mxu0 0
        %9785 = vmatmul.mubr.bf16.gmra.mrb[0].mxu0 %v8013
        %v9786 = vpop.f32.mrb[0].mxu0
        %v9787 = vadd.f32 %v9626, %v9786
        %v9788 = vpop.f32.mrb[0].mxu0
        %v9789 = vpop.f32.mrb[0].mxu0
        %v9790 = vadd.f32 %v9629, %v9789
        %v9791 = vpop.f32.mrb[0].mxu0
        %9792 = vmatprep.mubr.bf16.mxu0 0
        %9793 = vmatmul.mubr.bf16.gmra.mrb[0].mxu0 %v8016
        %v9794 = vpop.f32.mrb[0].mxu0
        %v9795 = vadd.f32 %v9634, %v9794
        %v9796 = vpop.f32.mrb[0].mxu0
        %v9797 = vpop.f32.mrb[0].mxu0
        %v9798 = vadd.f32 %v9637, %v9797
        %v9799 = vpop.f32.mrb[0].mxu0
        %9800 = vmatprep.mubr.bf16.mxu0 0
        %9801 = vmatmul.mubr.bf16.gmra.mrb[0].mxu0 %v8019
        %v9802 = vpop.f32.mrb[0].mxu0
        %v9803 = vadd.f32 %v9642, %v9802
        %v9804 = vpop.f32.mrb[0].mxu0
        %v9805 = vpop.f32.mrb[0].mxu0
        %v9806 = vadd.f32 %v9645, %v9805
        %v9807 = vpop.f32.mrb[0].mxu0
        %9808 = vmatprep.mubr.bf16.mxu0 0
        %9809 = vmatmul.mubr.bf16.gmra.mrb[0].mxu0 %v8022
        %v9810 = vpop.f32.mrb[0].mxu0
        %v9811 = vadd.f32 %v9650, %v9810
        %v9812 = vpop.f32.mrb[0].mxu0
        %v9813 = vpop.f32.mrb[0].mxu0
        %v9814 = vadd.f32 %v9653, %v9813
        %v9815 = vpop.f32.mrb[0].mxu0
        %9816 = vmatprep.mubr.bf16.mxu0 0
        %9817 = vmatmul.mubr.bf16.gmra.mrb[0].mxu0 %v8025
        %v9818 = vpop.f32.mrb[0].mxu0
        %v9819 = vadd.f32 %v9658, %v9818
        %v9820 = vpop.f32.mrb[0].mxu0
        %v9821 = vpop.f32.mrb[0].mxu0
        %v9822 = vadd.f32 %v9661, %v9821
        %v9823 = vpop.f32.mrb[0].mxu0
        %9824 = vmatprep.mubr.bf16.mxu0 0
        %9825 = vmatmul.mubr.bf16.gmra.mrb[0].mxu0 %v8028
        %v9826 = vpop.f32.mrb[0].mxu0
        %v9827 = vadd.f32 %v9666, %v9826
        %v9828 = vpop.f32.mrb[0].mxu0
        %v9829 = vpop.f32.mrb[0].mxu0
        %v9830 = vadd.f32 %v9669, %v9829
        %v9831 = vpop.f32.mrb[0].mxu0
        %9832 = vmatprep.mubr.bf16.mxu0 0
        %9833 = vmatmul.mubr.bf16.gmra.mrb[0].mxu0 %v8672
        %v9834 = vpop.f32.mrb[0].mxu0
        %v9835 = vadd.f32 %v9674, %v9834
        %v9836 = vpop.f32.mrb[0].mxu0
        %v9837 = vpop.f32.mrb[0].mxu0
        %v9838 = vadd.f32 %v9677, %v9837
        %v9839 = vpop.f32.mrb[0].mxu0
        %9840 = vmatprep.mubr.bf16.mxu0 0
        %9841 = vmatmul.mubr.bf16.gmra.mrb[0].mxu0 %v9301
        %v9842 = vpop.f32.mrb[0].mxu0
        %v9843 = vadd.f32 %v9682, %v9842
        %v9844 = vpop.f32.mrb[0].mxu0
        %v9845 = vpop.f32.mrb[0].mxu0
        %v9846 = vadd.f32 %v9685, %v9845
        %v9847 = vpop.f32.mrb[0].mxu0
        %9848 = vdwg.mxu0
        %v9849 = vadd.f32 %v9351, %v9723
        %v9850 = vadd.f32 %v9352, %v9726
        %v9851 = vadd.f32 %v9353, %v9731
        %v9852 = vadd.f32 %v9354, %v9734
        %v9853 = vadd.f32 %v9355, %v9739
        %v9854 = vadd.f32 %v9356, %v9742
        %v9855 = vadd.f32 %v9357, %v9747
        %v9856 = vadd.f32 %v9358, %v9750
        %v9857 = vadd.f32 %v9359, %v9755
        %v9858 = vadd.f32 %v9360, %v9758
        %v9859 = vadd.f32 %v9361, %v9763
        %v9860 = vadd.f32 %v9362, %v9766
        %v9861 = vadd.f32 %v9363, %v9771
        %v9862 = vadd.f32 %v9364, %v9774
        %v9863 = vadd.f32 %v9365, %v9779
        %v9864 = vadd.f32 %v9366, %v9782
        %v9865 = vadd.f32 %v9367, %v9787
        %v9866 = vadd.f32 %v9368, %v9790
        %v9867 = vadd.f32 %v9369, %v9795
        %v9868 = vadd.f32 %v9370, %v9798
        %v9869 = vadd.f32 %v9371, %v9803
        %v9870 = vadd.f32 %v9372, %v9806
        %v9871 = vadd.f32 %v9373, %v9811
        %v9872 = vadd.f32 %v9374, %v9814
        %v9873 = vadd.f32 %v9375, %v9819
        %v9874 = vadd.f32 %v9376, %v9822
        %v9875 = vadd.f32 %v9377, %v9827
        %v9876 = vadd.f32 %v9378, %v9830
        %v9877 = vadd.f32 %v9379, %v9835
        %v9878 = vadd.f32 %v9380, %v9838
        %v9879 = vadd.f32 %v9381, %v9843
        %v9880 = vadd.f32 %v9382, %v9846
        %9881 = vst [vmem:[#allocation3] sm:$0xff] %v9849
        %9882 = vst [vmem:[#allocation3 + $0x8] sm:$0xff] %v9850
        %9883 = vst [vmem:[#allocation3 + $0x10] sm:$0xff] %v9851
        %9884 = vst [vmem:[#allocation3 + $0x18] sm:$0xff] %v9852
        %9885 = vst [vmem:[#allocation3 + $0x20] sm:$0xff] %v9853
        %9886 = vst [vmem:[#allocation3 + $0x28] sm:$0xff] %v9854
        %9887 = vst [vmem:[#allocation3 + $0x30] sm:$0xff] %v9855
        %9888 = vst [vmem:[#allocation3 + $0x38] sm:$0xff] %v9856
        %9889 = vst [vmem:[#allocation3 + $0x40] sm:$0xff] %v9857
        %9890 = vst [vmem:[#allocation3 + $0x48] sm:$0xff] %v9858
        %9891 = vst [vmem:[#allocation3 + $0x50] sm:$0xff] %v9859
        %9892 = vst [vmem:[#allocation3 + $0x58] sm:$0xff] %v9860
        %9893 = vst [vmem:[#allocation3 + $0x60] sm:$0xff] %v9861
        %9894 = vst [vmem:[#allocation3 + $0x68] sm:$0xff] %v9862
        %9895 = vst [vmem:[#allocation3 + $0x70] sm:$0xff] %v9863
        %9896 = vst [vmem:[#allocation3 + $0x78] sm:$0xff] %v9864
        %9897 = vst [vmem:[#allocation3 + $0x80] sm:$0xff] %v9865
        %9898 = vst [vmem:[#allocation3 + $0x88] sm:$0xff] %v9866
        %9899 = vst [vmem:[#allocation3 + $0x90] sm:$0xff] %v9867
        %9900 = vst [vmem:[#allocation3 + $0x98] sm:$0xff] %v9868
        %9901 = vst [vmem:[#allocation3 + $0xa0] sm:$0xff] %v9869
        %9902 = vst [vmem:[#allocation3 + $0xa8] sm:$0xff] %v9870
        %9903 = vst [vmem:[#allocation3 + $0xb0] sm:$0xff] %v9871
        %9904 = vst [vmem:[#allocation3 + $0xb8] sm:$0xff] %v9872
        %9905 = vst [vmem:[#allocation3 + $0xc0] sm:$0xff] %v9873
        %9906 = vst [vmem:[#allocation3 + $0xc8] sm:$0xff] %v9874
        %9907 = vst [vmem:[#allocation3 + $0xd0] sm:$0xff] %v9875
        %9908 = vst [vmem:[#allocation3 + $0xd8] sm:$0xff] %v9876
        %9909 = vst [vmem:[#allocation3 + $0xe0] sm:$0xff] %v9877
        %9910 = vst [vmem:[#allocation3 + $0xe8] sm:$0xff] %v9878
        %9911 = vst [vmem:[#allocation3 + $0xf0] sm:$0xff] %v9879
        %9912 = vst [vmem:[#allocation3 + $0xf8] sm:$0xff] %v9880
        %v9913 = vld [vmem:[#allocation3] sm:$0xff]
        %v9914 = vld [vmem:[#allocation3 + $0x8] sm:$0xff]
        %v9915 = vld [vmem:[#allocation3 + $0x10] sm:$0xff]
        %v9916 = vld [vmem:[#allocation3 + $0x18] sm:$0xff]
        %v9917 = vld [vmem:[#allocation3 + $0x20] sm:$0xff]
        %v9918 = vld [vmem:[#allocation3 + $0x28] sm:$0xff]
        %v9919 = vld [vmem:[#allocation3 + $0x30] sm:$0xff]
        %v9920 = vld [vmem:[#allocation3 + $0x38] sm:$0xff]
        %v9921 = vld [vmem:[#allocation3 + $0x40] sm:$0xff]
        %v9922 = vld [vmem:[#allocation3 + $0x48] sm:$0xff]
        %v9923 = vld [vmem:[#allocation3 + $0x50] sm:$0xff]
        %v9924 = vld [vmem:[#allocation3 + $0x58] sm:$0xff]
        %v9925 = vld [vmem:[#allocation3 + $0x60] sm:$0xff]
        %v9926 = vld [vmem:[#allocation3 + $0x68] sm:$0xff]
        %v9927 = vld [vmem:[#allocation3 + $0x70] sm:$0xff]
        %v9928 = vld [vmem:[#allocation3 + $0x78] sm:$0xff]
        %v9929 = vld [vmem:[#allocation3 + $0x80] sm:$0xff]
        %v9930 = vld [vmem:[#allocation3 + $0x88] sm:$0xff]
        %v9931 = vld [vmem:[#allocation3 + $0x90] sm:$0xff]
        %v9932 = vld [vmem:[#allocation3 + $0x98] sm:$0xff]
        %v9933 = vld [vmem:[#allocation3 + $0xa0] sm:$0xff]
        %v9934 = vld [vmem:[#allocation3 + $0xa8] sm:$0xff]
        %v9935 = vld [vmem:[#allocation3 + $0xb0] sm:$0xff]
        %v9936 = vld [vmem:[#allocation3 + $0xb8] sm:$0xff]
        %v9937 = vld [vmem:[#allocation3 + $0xc0] sm:$0xff]
        %v9938 = vld [vmem:[#allocation3 + $0xc8] sm:$0xff]
        %v9939 = vld [vmem:[#allocation3 + $0xd0] sm:$0xff]
        %v9940 = vld [vmem:[#allocation3 + $0xd8] sm:$0xff]
        %v9941 = vld [vmem:[#allocation3 + $0xe0] sm:$0xff]
        %v9942 = vld [vmem:[#allocation3 + $0xe8] sm:$0xff]
        %v9943 = vld [vmem:[#allocation3 + $0xf0] sm:$0xff]
        %v9944 = vld [vmem:[#allocation3 + $0xf8] sm:$0xff]
        %vm9945 = vcmp.ge.f32.partialorder %v9913, 0.0
        %vm9946 = vcmp.ge.f32.partialorder %v9914, 0.0
        %vm9947 = vcmp.ge.f32.partialorder %v9915, 0.0
        %vm9948 = vcmp.ge.f32.partialorder %v9916, 0.0
        %vm9949 = vcmp.ge.f32.partialorder %v9917, 0.0
        %vm9950 = vcmp.ge.f32.partialorder %v9918, 0.0
        %vm9951 = vcmp.ge.f32.partialorder %v9919, 0.0
        %vm9952 = vcmp.ge.f32.partialorder %v9920, 0.0
        %vm9953 = vcmp.ge.f32.partialorder %v9921, 0.0
        %vm9954 = vcmp.ge.f32.partialorder %v9922, 0.0
        %vm9955 = vcmp.ge.f32.partialorder %v9923, 0.0
        %vm9956 = vcmp.ge.f32.partialorder %v9924, 0.0
        %vm9957 = vcmp.ge.f32.partialorder %v9925, 0.0
        %vm9958 = vcmp.ge.f32.partialorder %v9926, 0.0
        %vm9959 = vcmp.ge.f32.partialorder %v9927, 0.0
        %vm9960 = vcmp.ge.f32.partialorder %v9928, 0.0
        %vm9961 = vcmp.ge.f32.partialorder %v9929, 0.0
        %vm9962 = vcmp.ge.f32.partialorder %v9930, 0.0
        %vm9963 = vcmp.ge.f32.partialorder %v9931, 0.0
        %vm9964 = vcmp.ge.f32.partialorder %v9932, 0.0
        %vm9965 = vcmp.ge.f32.partialorder %v9933, 0.0
        %vm9966 = vcmp.ge.f32.partialorder %v9934, 0.0
        %vm9967 = vcmp.ge.f32.partialorder %v9935, 0.0
        %vm9968 = vcmp.ge.f32.partialorder %v9936, 0.0
        %vm9969 = vcmp.ge.f32.partialorder %v9937, 0.0
        %vm9970 = vcmp.ge.f32.partialorder %v9938, 0.0
        %vm9971 = vcmp.ge.f32.partialorder %v9939, 0.0
        %vm9972 = vcmp.ge.f32.partialorder %v9940, 0.0
        %vm9973 = vcmp.ge.f32.partialorder %v9941, 0.0
        %vm9974 = vcmp.ge.f32.partialorder %v9942, 0.0
        %vm9975 = vcmp.ge.f32.partialorder %v9943, 0.0
        %vm9976 = vcmp.ge.f32.partialorder %v9944, 0.0
        %v9977 = vmul.f32 %v9913, 0.01
        %v9978 = vmul.f32 %v9914, 0.01
        %v9979 = vmul.f32 %v9915, 0.01
        %v9980 = vmul.f32 %v9916, 0.01
        %v9981 = vmul.f32 %v9917, 0.01
        %v9982 = vmul.f32 %v9918, 0.01
        %v9983 = vmul.f32 %v9919, 0.01
        %v9984 = vmul.f32 %v9920, 0.01
        %v9985 = vmul.f32 %v9921, 0.01
        %v9986 = vmul.f32 %v9922, 0.01
        %v9987 = vmul.f32 %v9923, 0.01
        %v9988 = vmul.f32 %v9924, 0.01
        %v9989 = vmul.f32 %v9925, 0.01
        %v9990 = vmul.f32 %v9926, 0.01
        %v9991 = vmul.f32 %v9927, 0.01
        %v9992 = vmul.f32 %v9928, 0.01
        %v9993 = vmul.f32 %v9929, 0.01
        %v9994 = vmul.f32 %v9930, 0.01
        %v9995 = vmul.f32 %v9931, 0.01
        %v9996 = vmul.f32 %v9932, 0.01
        %v9997 = vmul.f32 %v9933, 0.01
        %v9998 = vmul.f32 %v9934, 0.01
        %v9999 = vmul.f32 %v9935, 0.01
        %v10000 = vmul.f32 %v9936, 0.01
        %v10001 = vmul.f32 %v9937, 0.01
        %v10002 = vmul.f32 %v9938, 0.01
        %v10003 = vmul.f32 %v9939, 0.01
        %v10004 = vmul.f32 %v9940, 0.01
        %v10005 = vmul.f32 %v9941, 0.01
        %v10006 = vmul.f32 %v9942, 0.01
        %v10007 = vmul.f32 %v9943, 0.01
        %v10008 = vmul.f32 %v9944, 0.01
        %v10009 = vsel %vm9945, %v9913, %v9977
        %v10010 = vsel %vm9946, %v9914, %v9978
        %v10011 = vsel %vm9947, %v9915, %v9979
        %v10012 = vsel %vm9948, %v9916, %v9980
        %v10013 = vsel %vm9949, %v9917, %v9981
        %v10014 = vsel %vm9950, %v9918, %v9982
        %v10015 = vsel %vm9951, %v9919, %v9983
        %v10016 = vsel %vm9952, %v9920, %v9984
        %v10017 = vsel %vm9953, %v9921, %v9985
        %v10018 = vsel %vm9954, %v9922, %v9986
        %v10019 = vsel %vm9955, %v9923, %v9987
        %v10020 = vsel %vm9956, %v9924, %v9988
        %v10021 = vsel %vm9957, %v9925, %v9989
        %v10022 = vsel %vm9958, %v9926, %v9990
        %v10023 = vsel %vm9959, %v9927, %v9991
        %v10024 = vsel %vm9960, %v9928, %v9992
        %v10025 = vsel %vm9961, %v9929, %v9993
        %v10026 = vsel %vm9962, %v9930, %v9994
        %v10027 = vsel %vm9963, %v9931, %v9995
        %v10028 = vsel %vm9964, %v9932, %v9996
        %v10029 = vsel %vm9965, %v9933, %v9997
        %v10030 = vsel %vm9966, %v9934, %v9998
        %v10031 = vsel %vm9967, %v9935, %v9999
        %v10032 = vsel %vm9968, %v9936, %v10000
        %v10033 = vsel %vm9969, %v9937, %v10001
        %v10034 = vsel %vm9970, %v9938, %v10002
        %v10035 = vsel %vm9971, %v9939, %v10003
        %v10036 = vsel %vm9972, %v9940, %v10004
        %v10037 = vsel %vm9973, %v9941, %v10005
        %v10038 = vsel %vm9974, %v9942, %v10006
        %v10039 = vsel %vm9975, %v9943, %v10007
        %v10040 = vsel %vm9976, %v9944, %v10008
        %v10041 = vld [vmem:[%s4942] sm:$0xe]
        %v10042 = vld [vmem:[%s4942 + $0x4] sm:$0xf]
        %v10043 = vld [vmem:[%s4942 + $0x8] sm:$0x1]
        %v10044 = vld [vmem:[%s4942 + $0x10] sm:$0xe]
        %v10045 = vld [vmem:[%s4942 + $0x14] sm:$0xf]
        %v10046 = vld [vmem:[%s4942 + $0x18] sm:$0x1]
        %v10047 = vld [vmem:[%s4942 + $0x20] sm:$0xe]
        %v10048 = vld [vmem:[%s4942 + $0x24] sm:$0xf]
        %v10049 = vld [vmem:[%s4942 + $0x28] sm:$0x1]
        %v10050 = vld [vmem:[%s4942 + $0x30] sm:$0xe]
        %v10051 = vld [vmem:[%s4942 + $0x34] sm:$0xf]
        %v10052 = vld [vmem:[%s4942 + $0x38] sm:$0x1]
        %v10053 = vld [vmem:[%s4942 + $0x40] sm:$0xe]
        %v10054 = vld [vmem:[%s4942 + $0x44] sm:$0xf]
        %v10055 = vld [vmem:[%s4942 + $0x48] sm:$0x1]
        %v10056 = vld [vmem:[%s4942 + $0x50] sm:$0xe]
        %v10057 = vld [vmem:[%s4942 + $0x54] sm:$0xf]
        %v10058 = vld [vmem:[%s4942 + $0x58] sm:$0x1]
        %v10059 = vld [vmem:[%s4942 + $0x60] sm:$0xe]
        %v10060 = vld [vmem:[%s4942 + $0x64] sm:$0xf]
        %v10061 = vld [vmem:[%s4942 + $0x68] sm:$0x1]
        %v10062 = vld [vmem:[%s4942 + $0x70] sm:$0xe]
        %v10063 = vld [vmem:[%s4942 + $0x74] sm:$0xf]
        %v10064 = vld [vmem:[%s4942 + $0x78] sm:$0x1]
        %v10065 = vld [vmem:[%s4942 + $0x80] sm:$0xe]
        %v10066 = vld [vmem:[%s4942 + $0x84] sm:$0xf]
        %v10067 = vld [vmem:[%s4942 + $0x88] sm:$0x1]
        %v10068 = vld [vmem:[%s4942 + $0x90] sm:$0xe]
        %v10069 = vld [vmem:[%s4942 + $0x94] sm:$0xf]
        %v10070 = vld [vmem:[%s4942 + $0x98] sm:$0x1]
        %v10071 = vld [vmem:[%s4942 + $0xa0] sm:$0xe]
        %v10072 = vld [vmem:[%s4942 + $0xa4] sm:$0xf]
        %v10073 = vld [vmem:[%s4942 + $0xa8] sm:$0x1]
        %v10074 = vld [vmem:[%s4942 + $0xb0] sm:$0xe]
        %v10075 = vld [vmem:[%s4942 + $0xb4] sm:$0xf]
        %v10076 = vld [vmem:[%s4942 + $0xb8] sm:$0x1]
        %v10077 = vld [vmem:[%s4942 + $0xc0] sm:$0xe]
        %v10078 = vld [vmem:[%s4942 + $0xc4] sm:$0xf]
        %v10079 = vld [vmem:[%s4942 + $0xc8] sm:$0x1]
        %v10080 = vld [vmem:[%s4942 + $0xd0] sm:$0xe]
        %v10081 = vld [vmem:[%s4942 + $0xd4] sm:$0xf]
        %v10082 = vld [vmem:[%s4942 + $0xd8] sm:$0x1]
        %v10083 = vld [vmem:[%s4942 + $0xe0] sm:$0xe]
        %v10084 = vld [vmem:[%s4942 + $0xe4] sm:$0xf]
        %v10085 = vld [vmem:[%s4942 + $0xe8] sm:$0x1]
        %v10086 = vld [vmem:[%s4942 + $0xf0] sm:$0xe]
        %v10087 = vld [vmem:[%s4942 + $0xf4] sm:$0xf]
        %v10088 = vld [vmem:[%s4942 + $0xf8] sm:$0x1]
        %v10137 = vrot.slane %v10041, 5
        %v10138 = vrot.slane %v10137, 4
        %v10139 = vrot.slane %v10042, 5
        %v10140 = vsel %vm1418, %v10138, %v10139
        %v10141 = vrot.slane %v10139, 4
        %v10142 = vrot.slane %v10043, 5
        %v10143 = vsel %vm1418, %v10141, %v10142
        %v10144 = vrot.slane %v10044, 5
        %v10145 = vrot.slane %v10144, 4
        %v10146 = vrot.slane %v10045, 5
        %v10147 = vsel %vm1418, %v10145, %v10146
        %v10148 = vrot.slane %v10146, 4
        %v10149 = vrot.slane %v10046, 5
        %v10150 = vsel %vm1418, %v10148, %v10149
        %v10151 = vrot.slane %v10047, 5
        %v10152 = vrot.slane %v10151, 4
        %v10153 = vrot.slane %v10048, 5
        %v10154 = vsel %vm1418, %v10152, %v10153
        %v10155 = vrot.slane %v10153, 4
        %v10156 = vrot.slane %v10049, 5
        %v10157 = vsel %vm1418, %v10155, %v10156
        %v10158 = vrot.slane %v10050, 5
        %v10159 = vrot.slane %v10158, 4
        %v10160 = vrot.slane %v10051, 5
        %v10161 = vsel %vm1418, %v10159, %v10160
        %v10162 = vrot.slane %v10160, 4
        %v10163 = vrot.slane %v10052, 5
        %v10164 = vsel %vm1418, %v10162, %v10163
        %v10165 = vrot.slane %v10053, 5
        %v10166 = vrot.slane %v10165, 4
        %v10167 = vrot.slane %v10054, 5
        %v10168 = vsel %vm1418, %v10166, %v10167
        %v10169 = vrot.slane %v10167, 4
        %v10170 = vrot.slane %v10055, 5
        %v10171 = vsel %vm1418, %v10169, %v10170
        %v10172 = vrot.slane %v10056, 5
        %v10173 = vrot.slane %v10172, 4
        %v10174 = vrot.slane %v10057, 5
        %v10175 = vsel %vm1418, %v10173, %v10174
        %v10176 = vrot.slane %v10174, 4
        %v10177 = vrot.slane %v10058, 5
        %v10178 = vsel %vm1418, %v10176, %v10177
        %v10179 = vrot.slane %v10059, 5
        %v10180 = vrot.slane %v10179, 4
        %v10181 = vrot.slane %v10060, 5
        %v10182 = vsel %vm1418, %v10180, %v10181
        %v10183 = vrot.slane %v10181, 4
        %v10184 = vrot.slane %v10061, 5
        %v10185 = vsel %vm1418, %v10183, %v10184
        %v10186 = vrot.slane %v10062, 5
        %v10187 = vrot.slane %v10186, 4
        %v10188 = vrot.slane %v10063, 5
        %v10189 = vsel %vm1418, %v10187, %v10188
        %v10190 = vrot.slane %v10188, 4
        %v10191 = vrot.slane %v10064, 5
        %v10192 = vsel %vm1418, %v10190, %v10191
        %v10193 = vrot.slane %v10065, 5
        %v10194 = vrot.slane %v10193, 4
        %v10195 = vrot.slane %v10066, 5
        %v10196 = vsel %vm1418, %v10194, %v10195
        %v10197 = vrot.slane %v10195, 4
        %v10198 = vrot.slane %v10067, 5
        %v10199 = vsel %vm1418, %v10197, %v10198
        %v10200 = vrot.slane %v10068, 5
        %v10201 = vrot.slane %v10200, 4
        %v10202 = vrot.slane %v10069, 5
        %v10203 = vsel %vm1418, %v10201, %v10202
        %v10204 = vrot.slane %v10202, 4
        %v10205 = vrot.slane %v10070, 5
        %v10206 = vsel %vm1418, %v10204, %v10205
        %v10207 = vrot.slane %v10071, 5
        %v10208 = vrot.slane %v10207, 4
        %v10209 = vrot.slane %v10072, 5
        %v10210 = vsel %vm1418, %v10208, %v10209
        %v10211 = vrot.slane %v10209, 4
        %v10212 = vrot.slane %v10073, 5
        %v10213 = vsel %vm1418, %v10211, %v10212
        %v10214 = vrot.slane %v10074, 5
        %v10215 = vrot.slane %v10214, 4
        %v10216 = vrot.slane %v10075, 5
        %v10217 = vsel %vm1418, %v10215, %v10216
        %v10218 = vrot.slane %v10216, 4
        %v10219 = vrot.slane %v10076, 5
        %v10220 = vsel %vm1418, %v10218, %v10219
        %v10221 = vrot.slane %v10077, 5
        %v10222 = vrot.slane %v10221, 4
        %v10223 = vrot.slane %v10078, 5
        %v10224 = vsel %vm1418, %v10222, %v10223
        %v10225 = vrot.slane %v10223, 4
        %v10226 = vrot.slane %v10079, 5
        %v10227 = vsel %vm1418, %v10225, %v10226
        %v10228 = vrot.slane %v10080, 5
        %v10229 = vrot.slane %v10228, 4
        %v10230 = vrot.slane %v10081, 5
        %v10231 = vsel %vm1418, %v10229, %v10230
        %v10232 = vrot.slane %v10230, 4
        %v10233 = vrot.slane %v10082, 5
        %v10234 = vsel %vm1418, %v10232, %v10233
        %v10235 = vrot.slane %v10083, 5
        %v10236 = vrot.slane %v10235, 4
        %v10237 = vrot.slane %v10084, 5
        %v10238 = vsel %vm1418, %v10236, %v10237
        %v10239 = vrot.slane %v10237, 4
        %v10240 = vrot.slane %v10085, 5
        %v10241 = vsel %vm1418, %v10239, %v10240
        %v10242 = vrot.slane %v10086, 5
        %v10243 = vrot.slane %v10242, 4
        %v10244 = vrot.slane %v10087, 5
        %v10245 = vsel %vm1418, %v10243, %v10244
        %v10246 = vrot.slane %v10244, 4
        %v10247 = vrot.slane %v10088, 5
        %v10248 = vsel %vm1418, %v10246, %v10247
        %v10249 = vld [vmem:[%s6] sm:$0xf]
        %v10250 = vld [vmem:[%s6 + $0x4] sm:$0xf]
        %v10251 = vld [vmem:[%s6 + $0x8] sm:$0xf]
        %v10252 = vld [vmem:[%s6 + $0xc] sm:$0xf]
        %v10253 = vld [vmem:[%s6 + $0x10] sm:$0xf]
        %v10254 = vld [vmem:[%s6 + $0x14] sm:$0xf]
        %v10255 = vld [vmem:[%s6 + $0x18] sm:$0xf]
        %v10256 = vld [vmem:[%s6 + $0x1c] sm:$0xf]
        %v10257 = vld [vmem:[%s6 + $0x20] sm:$0xf]
        %v10258 = vld [vmem:[%s6 + $0x24] sm:$0xf]
        %v10259 = vld [vmem:[%s6 + $0x28] sm:$0xf]
        %v10260 = vld [vmem:[%s6 + $0x2c] sm:$0xf]
        %v10261 = vld [vmem:[%s6 + $0x30] sm:$0xf]
        %v10262 = vld [vmem:[%s6 + $0x34] sm:$0xf]
        %v10263 = vld [vmem:[%s6 + $0x38] sm:$0xf]
        %v10264 = vld [vmem:[%s6 + $0x3c] sm:$0xf]
        %v10265 = vld [vmem:[%s7] sm:$0x1]
        %v10267 = vlaneseq
        %v10268 = vshrl.u32 %v10267, 7
        %v10269 = vsub.s32 0, %v10268
        %v10270 = vrot.slane %v10265, %v10269
        %v10272 = vunpack.c.l.b16 %v10140
        %v10273 = vunpack.c.l.b16 %v10143
        %v10274 = vunpack.c.l.b16 %v10147
        %v10275 = vunpack.c.l.b16 %v10150
        %v10276 = vunpack.c.l.b16 %v10154
        %v10277 = vunpack.c.l.b16 %v10157
        %v10278 = vunpack.c.l.b16 %v10161
        %v10279 = vunpack.c.l.b16 %v10164
        %v10280 = vunpack.c.l.b16 %v10168
        %v10281 = vunpack.c.l.b16 %v10171
        %v10282 = vunpack.c.l.b16 %v10175
        %v10283 = vunpack.c.l.b16 %v10178
        %v10284 = vunpack.c.l.b16 %v10182
        %v10285 = vunpack.c.l.b16 %v10185
        %v10286 = vunpack.c.l.b16 %v10189
        %v10287 = vunpack.c.l.b16 %v10192
        %v10288 = vunpack.c.l.b16 %v10196
        %v10289 = vunpack.c.l.b16 %v10199
        %v10290 = vunpack.c.l.b16 %v10203
        %v10291 = vunpack.c.l.b16 %v10206
        %v10292 = vunpack.c.l.b16 %v10210
        %v10293 = vunpack.c.l.b16 %v10213
        %v10294 = vunpack.c.l.b16 %v10217
        %v10295 = vunpack.c.l.b16 %v10220
        %v10296 = vunpack.c.l.b16 %v10224
        %v10297 = vunpack.c.l.b16 %v10227
        %v10298 = vunpack.c.l.b16 %v10231
        %v10299 = vunpack.c.l.b16 %v10234
        %v10300 = vunpack.c.l.b16 %v10238
        %v10301 = vunpack.c.l.b16 %v10241
        %v10302 = vunpack.c.l.b16 %v10245
        %v10303 = vunpack.c.l.b16 %v10248
        %v10304 = vpack.c.b16 %v10273, %v10272
        %v10305 = vpack.c.b16 %v10275, %v10274
        %v10306 = vpack.c.b16 %v10277, %v10276
        %v10307 = vpack.c.b16 %v10279, %v10278
        %v10308 = vpack.c.b16 %v10281, %v10280
        %v10309 = vpack.c.b16 %v10283, %v10282
        %v10310 = vpack.c.b16 %v10285, %v10284
        %v10311 = vpack.c.b16 %v10287, %v10286
        %v10312 = vpack.c.b16 %v10289, %v10288
        %v10313 = vpack.c.b16 %v10291, %v10290
        %v10314 = vpack.c.b16 %v10293, %v10292
        %v10315 = vpack.c.b16 %v10295, %v10294
        %v10316 = vpack.c.b16 %v10297, %v10296
        %v10317 = vpack.c.b16 %v10299, %v10298
        %v10318 = vpack.c.b16 %v10301, %v10300
        %v10319 = vpack.c.b16 %v10303, %v10302
        %v10352 = vunpack.c.l.b16 %v10249
        %v10353 = vunpack.c.l.b16 %v10250
        %v10354 = vunpack.c.l.b16 %v10251
        %v10355 = vunpack.c.l.b16 %v10252
        %v10356 = vunpack.c.l.b16 %v10253
        %v10357 = vunpack.c.l.b16 %v10254
        %v10358 = vunpack.c.l.b16 %v10255
        %v10359 = vunpack.c.l.b16 %v10256
        %v10360 = vunpack.c.l.b16 %v10257
        %v10361 = vunpack.c.l.b16 %v10258
        %v10362 = vunpack.c.l.b16 %v10259
        %v10363 = vunpack.c.l.b16 %v10260
        %v10364 = vunpack.c.l.b16 %v10261
        %v10365 = vunpack.c.l.b16 %v10262
        %v10366 = vunpack.c.l.b16 %v10263
        %v10367 = vunpack.c.l.b16 %v10264
        %v10368 = vpack.c.b16 %v10353, %v10352
        %v10369 = vpack.c.b16 %v10355, %v10354
        %v10370 = vpack.c.b16 %v10357, %v10356
        %v10371 = vpack.c.b16 %v10359, %v10358
        %v10372 = vpack.c.b16 %v10361, %v10360
        %v10373 = vpack.c.b16 %v10363, %v10362
        %v10374 = vpack.c.b16 %v10365, %v10364
        %v10375 = vpack.c.b16 %v10367, %v10366
        %10384 = vmatprep.subr.bf16.mxu0 0
        %10385 = vmatpush1.bf16.msra.mxu0 %v10368
        %10386 = vmatprep.subr.bf16.mxu0 0
        %10387 = vmatpush1.bf16.msra.mxu0 %v10369
        %10388 = vmatprep.subr.bf16.mxu0 0
        %10389 = vmatpush1.bf16.msra.mxu0 %v10370
        %10390 = vmatprep.subr.bf16.mxu0 0
        %10391 = vmatpush1.bf16.msra.mxu0 %v10371
        %10392 = vmatprep.subr.bf16.mxu0 0
        %10393 = vmatpush1.bf16.msra.mxu0 %v10372
        %10394 = vmatprep.subr.bf16.mxu0 0
        %10395 = vmatpush1.bf16.msra.mxu0 %v10373
        %10396 = vmatprep.subr.bf16.mxu0 0
        %10397 = vmatpush1.bf16.msra.mxu0 %v10374
        %10398 = vmatprep.subr.bf16.mxu0 0
        %10399 = vmatpush1.bf16.msra.mxu0 %v10375
        %10400 = vmatprep.subr.bf16.mxu0 0
        %10401 = vmatpush1.bf16.msra.mxu0 0
        %10402 = vmatprep.subr.bf16.mxu0 0
        %10403 = vmatpush1.bf16.msra.mxu0 0
        %10404 = vmatprep.subr.bf16.mxu0 0
        %10405 = vmatpush1.bf16.msra.mxu0 0
        %10406 = vmatprep.subr.bf16.mxu0 0
        %10407 = vmatpush1.bf16.msra.mxu0 0
        %10408 = vmatprep.subr.bf16.mxu0 0
        %10409 = vmatpush1.bf16.msra.mxu0 0
        %10410 = vmatprep.subr.bf16.mxu0 0
        %10411 = vmatpush1.bf16.msra.mxu0 0
        %10412 = vmatprep.subr.bf16.mxu0 0
        %10413 = vmatpush1.bf16.msra.mxu0 0
        %10414 = vmatprep.subr.bf16.mxu0 0
        %10415 = vmatpush1.bf16.msra.mxu0 0
        %10416 = vmatprep.mubr.bf16.mxu0 0
        %10417 = vmatmul.mubr.bf16.gmra.mrb[0].mxu0 %v10304
        %v10418 = vpop.f32.mrb[0].mxu0
        %v10419 = vadd.f32 %v10270, %v10418
        %v10420 = vpop.f32.mrb[0].mxu0
        %v10421 = vpop.f32.mrb[0].mxu0
        %v10422 = vadd.f32 %v10270, %v10421
        %v10423 = vpop.f32.mrb[0].mxu0
        %10424 = vmatprep.mubr.bf16.mxu0 0
        %10425 = vmatmul.mubr.bf16.gmra.mrb[0].mxu0 %v10305
        %v10426 = vpop.f32.mrb[0].mxu0
        %v10427 = vadd.f32 %v10270, %v10426
        %v10428 = vpop.f32.mrb[0].mxu0
        %v10429 = vpop.f32.mrb[0].mxu0
        %v10430 = vadd.f32 %v10270, %v10429
        %v10431 = vpop.f32.mrb[0].mxu0
        %10432 = vmatprep.mubr.bf16.mxu0 0
        %10433 = vmatmul.mubr.bf16.gmra.mrb[0].mxu0 %v10306
        %v10434 = vpop.f32.mrb[0].mxu0
        %v10435 = vadd.f32 %v10270, %v10434
        %v10436 = vpop.f32.mrb[0].mxu0
        %v10437 = vpop.f32.mrb[0].mxu0
        %v10438 = vadd.f32 %v10270, %v10437
        %v10439 = vpop.f32.mrb[0].mxu0
        %10440 = vmatprep.mubr.bf16.mxu0 0
        %10441 = vmatmul.mubr.bf16.gmra.mrb[0].mxu0 %v10307
        %v10442 = vpop.f32.mrb[0].mxu0
        %v10443 = vadd.f32 %v10270, %v10442
        %v10444 = vpop.f32.mrb[0].mxu0
        %v10445 = vpop.f32.mrb[0].mxu0
        %v10446 = vadd.f32 %v10270, %v10445
        %v10447 = vpop.f32.mrb[0].mxu0
        %10448 = vmatprep.mubr.bf16.mxu0 0
        %10449 = vmatmul.mubr.bf16.gmra.mrb[0].mxu0 %v10308
        %v10450 = vpop.f32.mrb[0].mxu0
        %v10451 = vadd.f32 %v10270, %v10450
        %v10452 = vpop.f32.mrb[0].mxu0
        %v10453 = vpop.f32.mrb[0].mxu0
        %v10454 = vadd.f32 %v10270, %v10453
        %v10455 = vpop.f32.mrb[0].mxu0
        %10456 = vmatprep.mubr.bf16.mxu0 0
        %10457 = vmatmul.mubr.bf16.gmra.mrb[0].mxu0 %v10309
        %v10458 = vpop.f32.mrb[0].mxu0
        %v10459 = vadd.f32 %v10270, %v10458
        %v10460 = vpop.f32.mrb[0].mxu0
        %v10461 = vpop.f32.mrb[0].mxu0
        %v10462 = vadd.f32 %v10270, %v10461
        %v10463 = vpop.f32.mrb[0].mxu0
        %10464 = vmatprep.mubr.bf16.mxu0 0
        %10465 = vmatmul.mubr.bf16.gmra.mrb[0].mxu0 %v10310
        %v10466 = vpop.f32.mrb[0].mxu0
        %v10467 = vadd.f32 %v10270, %v10466
        %v10468 = vpop.f32.mrb[0].mxu0
        %v10469 = vpop.f32.mrb[0].mxu0
        %v10470 = vadd.f32 %v10270, %v10469
        %v10471 = vpop.f32.mrb[0].mxu0
        %10472 = vmatprep.mubr.bf16.mxu0 0
        %10473 = vmatmul.mubr.bf16.gmra.mrb[0].mxu0 %v10311
        %v10474 = vpop.f32.mrb[0].mxu0
        %v10475 = vadd.f32 %v10270, %v10474
        %v10476 = vpop.f32.mrb[0].mxu0
        %v10477 = vpop.f32.mrb[0].mxu0
        %v10478 = vadd.f32 %v10270, %v10477
        %v10479 = vpop.f32.mrb[0].mxu0
        %10480 = vmatprep.mubr.bf16.mxu0 0
        %10481 = vmatmul.mubr.bf16.gmra.mrb[0].mxu0 %v10312
        %v10482 = vpop.f32.mrb[0].mxu0
        %v10483 = vadd.f32 %v10270, %v10482
        %v10484 = vpop.f32.mrb[0].mxu0
        %v10485 = vpop.f32.mrb[0].mxu0
        %v10486 = vadd.f32 %v10270, %v10485
        %v10487 = vpop.f32.mrb[0].mxu0
        %10488 = vmatprep.mubr.bf16.mxu0 0
        %10489 = vmatmul.mubr.bf16.gmra.mrb[0].mxu0 %v10313
        %v10490 = vpop.f32.mrb[0].mxu0
        %v10491 = vadd.f32 %v10270, %v10490
        %v10492 = vpop.f32.mrb[0].mxu0
        %v10493 = vpop.f32.mrb[0].mxu0
        %v10494 = vadd.f32 %v10270, %v10493
        %v10495 = vpop.f32.mrb[0].mxu0
        %10496 = vmatprep.mubr.bf16.mxu0 0
        %10497 = vmatmul.mubr.bf16.gmra.mrb[0].mxu0 %v10314
        %v10498 = vpop.f32.mrb[0].mxu0
        %v10499 = vadd.f32 %v10270, %v10498
        %v10500 = vpop.f32.mrb[0].mxu0
        %v10501 = vpop.f32.mrb[0].mxu0
        %v10502 = vadd.f32 %v10270, %v10501
        %v10503 = vpop.f32.mrb[0].mxu0
        %10504 = vmatprep.mubr.bf16.mxu0 0
        %10505 = vmatmul.mubr.bf16.gmra.mrb[0].mxu0 %v10315
        %v10506 = vpop.f32.mrb[0].mxu0
        %v10507 = vadd.f32 %v10270, %v10506
        %v10508 = vpop.f32.mrb[0].mxu0
        %v10509 = vpop.f32.mrb[0].mxu0
        %v10510 = vadd.f32 %v10270, %v10509
        %v10511 = vpop.f32.mrb[0].mxu0
        %10512 = vmatprep.mubr.bf16.mxu0 0
        %10513 = vmatmul.mubr.bf16.gmra.mrb[0].mxu0 %v10316
        %v10514 = vpop.f32.mrb[0].mxu0
        %v10515 = vadd.f32 %v10270, %v10514
        %v10516 = vpop.f32.mrb[0].mxu0
        %v10517 = vpop.f32.mrb[0].mxu0
        %v10518 = vadd.f32 %v10270, %v10517
        %v10519 = vpop.f32.mrb[0].mxu0
        %10520 = vmatprep.mubr.bf16.mxu0 0
        %10521 = vmatmul.mubr.bf16.gmra.mrb[0].mxu0 %v10317
        %v10522 = vpop.f32.mrb[0].mxu0
        %v10523 = vadd.f32 %v10270, %v10522
        %v10524 = vpop.f32.mrb[0].mxu0
        %v10525 = vpop.f32.mrb[0].mxu0
        %v10526 = vadd.f32 %v10270, %v10525
        %v10527 = vpop.f32.mrb[0].mxu0
        %10528 = vmatprep.mubr.bf16.mxu0 0
        %10529 = vmatmul.mubr.bf16.gmra.mrb[0].mxu0 %v10318
        %v10530 = vpop.f32.mrb[0].mxu0
        %v10531 = vadd.f32 %v10270, %v10530
        %v10532 = vpop.f32.mrb[0].mxu0
        %v10533 = vpop.f32.mrb[0].mxu0
        %v10534 = vadd.f32 %v10270, %v10533
        %v10535 = vpop.f32.mrb[0].mxu0
        %10536 = vmatprep.mubr.bf16.mxu0 0
        %10537 = vmatmul.mubr.bf16.gmra.mrb[0].mxu0 %v10319
        %v10538 = vpop.f32.mrb[0].mxu0
        %v10539 = vadd.f32 %v10270, %v10538
        %v10540 = vpop.f32.mrb[0].mxu0
        %v10541 = vpop.f32.mrb[0].mxu0
        %v10542 = vadd.f32 %v10270, %v10541
        %v10543 = vpop.f32.mrb[0].mxu0
        %10544 = vdwg.mxu0
        %v10545 = vadd.f32 %v10009, %v10419
        %v10546 = vadd.f32 %v10010, %v10422
        %v10547 = vadd.f32 %v10011, %v10427
        %v10548 = vadd.f32 %v10012, %v10430
        %v10549 = vadd.f32 %v10013, %v10435
        %v10550 = vadd.f32 %v10014, %v10438
        %v10551 = vadd.f32 %v10015, %v10443
        %v10552 = vadd.f32 %v10016, %v10446
        %v10553 = vadd.f32 %v10017, %v10451
        %v10554 = vadd.f32 %v10018, %v10454
        %v10555 = vadd.f32 %v10019, %v10459
        %v10556 = vadd.f32 %v10020, %v10462
        %v10557 = vadd.f32 %v10021, %v10467
        %v10558 = vadd.f32 %v10022, %v10470
        %v10559 = vadd.f32 %v10023, %v10475
        %v10560 = vadd.f32 %v10024, %v10478
        %v10561 = vadd.f32 %v10025, %v10483
        %v10562 = vadd.f32 %v10026, %v10486
        %v10563 = vadd.f32 %v10027, %v10491
        %v10564 = vadd.f32 %v10028, %v10494
        %v10565 = vadd.f32 %v10029, %v10499
        %v10566 = vadd.f32 %v10030, %v10502
        %v10567 = vadd.f32 %v10031, %v10507
        %v10568 = vadd.f32 %v10032, %v10510
        %v10569 = vadd.f32 %v10033, %v10515
        %v10570 = vadd.f32 %v10034, %v10518
        %v10571 = vadd.f32 %v10035, %v10523
        %v10572 = vadd.f32 %v10036, %v10526
        %v10573 = vadd.f32 %v10037, %v10531
        %v10574 = vadd.f32 %v10038, %v10534
        %v10575 = vadd.f32 %v10039, %v10539
        %v10576 = vadd.f32 %v10040, %v10542
        %v10577 = vpack.c.bf16 %v10546, %v10545
        %v10578 = vpack.c.bf16 %v10548, %v10547
        %v10579 = vpack.c.bf16 %v10550, %v10549
        %v10580 = vpack.c.bf16 %v10552, %v10551
        %v10581 = vpack.c.bf16 %v10554, %v10553
        %v10582 = vpack.c.bf16 %v10556, %v10555
        %v10583 = vpack.c.bf16 %v10558, %v10557
        %v10584 = vpack.c.bf16 %v10560, %v10559
        %v10585 = vpack.c.bf16 %v10562, %v10561
        %v10586 = vpack.c.bf16 %v10564, %v10563
        %v10587 = vpack.c.bf16 %v10566, %v10565
        %v10588 = vpack.c.bf16 %v10568, %v10567
        %v10589 = vpack.c.bf16 %v10570, %v10569
        %v10590 = vpack.c.bf16 %v10572, %v10571
        %v10591 = vpack.c.bf16 %v10574, %v10573
        %v10592 = vpack.c.bf16 %v10576, %v10575
        %v10609 = vunpack.c.l.b16 %v10577
        %v10610 = vunpack.c.h.b16 %v10577
        %v10611 = vunpack.c.l.b16 %v10578
        %v10612 = vunpack.c.h.b16 %v10578
        %v10613 = vunpack.c.l.b16 %v10579
        %v10614 = vunpack.c.h.b16 %v10579
        %v10615 = vunpack.c.l.b16 %v10580
        %v10616 = vunpack.c.h.b16 %v10580
        %v10617 = vunpack.c.l.b16 %v10581
        %v10618 = vunpack.c.h.b16 %v10581
        %v10619 = vunpack.c.l.b16 %v10582
        %v10620 = vunpack.c.h.b16 %v10582
        %v10621 = vunpack.c.l.b16 %v10583
        %v10622 = vunpack.c.h.b16 %v10583
        %v10623 = vunpack.c.l.b16 %v10584
        %v10624 = vunpack.c.h.b16 %v10584
        %v10625 = vunpack.c.l.b16 %v10585
        %v10626 = vunpack.c.h.b16 %v10585
        %v10627 = vunpack.c.l.b16 %v10586
        %v10628 = vunpack.c.h.b16 %v10586
        %v10629 = vunpack.c.l.b16 %v10587
        %v10630 = vunpack.c.h.b16 %v10587
        %v10631 = vunpack.c.l.b16 %v10588
        %v10632 = vunpack.c.h.b16 %v10588
        %v10633 = vunpack.c.l.b16 %v10589
        %v10634 = vunpack.c.h.b16 %v10589
        %v10635 = vunpack.c.l.b16 %v10590
        %v10636 = vunpack.c.h.b16 %v10590
        %v10637 = vunpack.c.l.b16 %v10591
        %v10638 = vunpack.c.h.b16 %v10591
        %v10639 = vunpack.c.l.b16 %v10592
        %v10640 = vunpack.c.h.b16 %v10592
        %v10641 = vpack.c.b16 %v10609, %v10609
        %v10642 = vpack.c.b16 %v10610, %v10610
        %v10643 = vpack.c.b16 %v10611, %v10611
        %v10644 = vpack.c.b16 %v10612, %v10612
        %v10645 = vpack.c.b16 %v10613, %v10613
        %v10646 = vpack.c.b16 %v10614, %v10614
        %v10647 = vpack.c.b16 %v10615, %v10615
        %v10648 = vpack.c.b16 %v10616, %v10616
        %v10649 = vpack.c.b16 %v10617, %v10617
        %v10650 = vpack.c.b16 %v10618, %v10618
        %v10651 = vpack.c.b16 %v10619, %v10619
        %v10652 = vpack.c.b16 %v10620, %v10620
        %v10653 = vpack.c.b16 %v10621, %v10621
        %v10654 = vpack.c.b16 %v10622, %v10622
        %v10655 = vpack.c.b16 %v10623, %v10623
        %v10656 = vpack.c.b16 %v10624, %v10624
        %v10657 = vpack.c.b16 %v10625, %v10625
        %v10658 = vpack.c.b16 %v10626, %v10626
        %v10659 = vpack.c.b16 %v10627, %v10627
        %v10660 = vpack.c.b16 %v10628, %v10628
        %v10661 = vpack.c.b16 %v10629, %v10629
        %v10662 = vpack.c.b16 %v10630, %v10630
        %v10663 = vpack.c.b16 %v10631, %v10631
        %v10664 = vpack.c.b16 %v10632, %v10632
        %v10665 = vpack.c.b16 %v10633, %v10633
        %v10666 = vpack.c.b16 %v10634, %v10634
        %v10667 = vpack.c.b16 %v10635, %v10635
        %v10668 = vpack.c.b16 %v10636, %v10636
        %v10669 = vpack.c.b16 %v10637, %v10637
        %v10670 = vpack.c.b16 %v10638, %v10638
        %v10671 = vpack.c.b16 %v10639, %v10639
        %v10672 = vpack.c.b16 %v10640, %v10640
        %10705 = vst [vmem:[%s378] sm:$0xf] %v10641
        %10706 = vst [vmem:[%s378 + $0x4] sm:$0xf] %v10642
        %10707 = vst [vmem:[%s378 + $0x8] sm:$0xf] %v10643
        %10708 = vst [vmem:[%s378 + $0xc] sm:$0xf] %v10644
        %10709 = vst [vmem:[%s378 + $0x10] sm:$0xf] %v10645
        %10710 = vst [vmem:[%s378 + $0x14] sm:$0xf] %v10646
        %10711 = vst [vmem:[%s378 + $0x18] sm:$0xf] %v10647
        %10712 = vst [vmem:[%s378 + $0x1c] sm:$0xf] %v10648
        %10713 = vst [vmem:[%s378 + $0x20] sm:$0xf] %v10649
        %10714 = vst [vmem:[%s378 + $0x24] sm:$0xf] %v10650
        %10715 = vst [vmem:[%s378 + $0x28] sm:$0xf] %v10651
        %10716 = vst [vmem:[%s378 + $0x2c] sm:$0xf] %v10652
        %10717 = vst [vmem:[%s378 + $0x30] sm:$0xf] %v10653
        %10718 = vst [vmem:[%s378 + $0x34] sm:$0xf] %v10654
        %10719 = vst [vmem:[%s378 + $0x38] sm:$0xf] %v10655
        %10720 = vst [vmem:[%s378 + $0x3c] sm:$0xf] %v10656
        %10721 = vst [vmem:[%s378 + $0x40] sm:$0xf] %v10657
        %10722 = vst [vmem:[%s378 + $0x44] sm:$0xf] %v10658
        %10723 = vst [vmem:[%s378 + $0x48] sm:$0xf] %v10659
        %10724 = vst [vmem:[%s378 + $0x4c] sm:$0xf] %v10660
        %10725 = vst [vmem:[%s378 + $0x50] sm:$0xf] %v10661
        %10726 = vst [vmem:[%s378 + $0x54] sm:$0xf] %v10662
        %10727 = vst [vmem:[%s378 + $0x58] sm:$0xf] %v10663
        %10728 = vst [vmem:[%s378 + $0x5c] sm:$0xf] %v10664
        %10729 = vst [vmem:[%s378 + $0x60] sm:$0xf] %v10665
        %10730 = vst [vmem:[%s378 + $0x64] sm:$0xf] %v10666
        %10731 = vst [vmem:[%s378 + $0x68] sm:$0xf] %v10667
        %10732 = vst [vmem:[%s378 + $0x6c] sm:$0xf] %v10668
        %10733 = vst [vmem:[%s378 + $0x70] sm:$0xf] %v10669
        %10734 = vst [vmem:[%s378 + $0x74] sm:$0xf] %v10670
        %10735 = vst [vmem:[%s378 + $0x78] sm:$0xf] %v10671
        %10736 = vst [vmem:[%s378 + $0x7c] sm:$0xf] %v10672
        %s10737 = sand.u32 %s230, 1
        %s10738 = scalar_lea.sflag [#allocation5], %s10737
        %s10739 = sand.u32 %s230, 1
        %s10740 = smul.addr %s10739, 128
        %s10741 = scalar_lea.vmem [#allocation4], %s10740
        // Predicated region
        $region53: #{tpu_custom_call.1} parent=51 // pred_check
          %p10742 = pneg %p240
        $region54: #{tpu_custom_call.1} parent=51 // pred_check_branch
          %10744 = sbr.rel (%p10742) target = $region56
        $region55: #{tpu_custom_call.1} parent=51 // pred_region
          %s10745 = smul.u32 16, %s27
          %s10747 = ssub.s32 2048, 2048
          %10748 = vsyncadd %s10738, %s10747
          %s10749 = smul.addr %s10745, 2
          %s10750 = smul.addr %s26, 32
          %s10751 = sadd.s32 %s10749, %s10750
          %s10752 = smul.addr %s10751, 64
          %s10753 = scalar_lea.hbm %s8, %s10752
          %s10754 = sshll.u32 %s10741, 4
          %s10755 = int_to_ptr.vmem [resolvable:$true] %s10754
          %10760 = dma.vmem_to_hbm [thread:$0]  %s10755, 2048, %s10753, %s10738, 64, 64, 4
        $region56: #{tpu_custom_call.1} parent=51 // pred_fallthru
          _
      $region52: #{tpu_custom_call.1} parent=5 // pred_fallthru
        _
      %p10761 = scmp.le.s32.totalorder 2, %s17
      // Predicated region
      $region57: #{tpu_custom_call.1} parent=5 // pred_check
        %p10762 = pneg %p10761
      $region58: #{tpu_custom_call.1} parent=5 // pred_check_branch
        %10764 = sbr.rel (%p10762) target = $region60
      $region59: #{tpu_custom_call.1} parent=5 // pred_region
        %s10765 = ssub.s32 %s17, 2
        // Predicated region
        $region61: #{tpu_custom_call.1} parent=59 // pred_check
          %p10766 = pneg %p246
        $region62: #{tpu_custom_call.1} parent=59 // pred_check_branch
          %10768 = sbr.rel (%p10766) target = $region64
        $region63: #{tpu_custom_call.1} parent=59 // pred_region
          %s10769 = sand.u32 %s231, 1
          %s10770 = scalar_lea.sflag [#allocation5], %s10769
          %s10771 = sand.u32 %s231, 1
          %s10772 = smul.addr %s10771, 128
          %s10773 = scalar_lea.vmem [#allocation4], %s10772
          %10774 = dma.done %s10770, 2048
        $region64: #{tpu_custom_call.1} parent=59 // pred_fallthru
          _
      $region60: #{tpu_custom_call.1} parent=5 // pred_fallthru
        _
    $region6: #{tpu_custom_call.1} parent=1 // loop_footer
      %s21 = sadd.s32 1, %s17
    $region7: #{tpu_custom_call.1} parent=1 // loop_footer_branch
      %16 = sbr.rel target = $region3
    $region8: #{tpu_custom_call.1} parent=1 // loop_exit
      _
    %10775 = vsyncpa [#allocation5], 1
    %s10776 = scalar_lea.sflag [#allocation5], 1
    %10777 = vsyncpa %s10776, 1

</llo_original>
